<compile_context>
chip_gen: v7x
topology: tpu7x:2x2x1
jax: 0.10.0
libtpu: 0.0.40
codegen_flags: <defaults>
</compile_context>

<pallas_src>
import functools
import math

import jax
import jax.numpy as jnp
from jax.experimental import pallas as pl
from jax.experimental.pallas import tpu as pltpu


_KH = 4
_KW = 4
_FULL_IM2COL_MAX_CIN = 64          # full 16-tap im2col (K = 16*Cin) up to this Cin
_LHS_BYTES_TARGET = 256 * 1024     # target bf16 lhs chunk bytes
_MAX_CHUNK_FLAT_ROWS = 2048        # cap on flat conv rows per in-kernel chunk
_VMEM_SOFT_LIMIT = 12 * 1024 * 1024


def _cdiv(a, b):
    return -(-a // b)


def _round_up(a, b):
    return _cdiv(a, b) * b


def _buf_bytes(rows, cols, itemsize):
    """Rough VMEM footprint of a (rows, cols) buffer (lane pad 128, sublane pad 8)."""
    return _round_up(max(rows, 1), 8) * _round_up(max(cols, 1), 128) * itemsize


@functools.lru_cache(maxsize=1)
def _vmem_cap_bytes():
    cap = 64 * 1024 * 1024          # assume the smallest generation (v7x) if query fails
    try:
        cap = int(pltpu.get_tpu_info().vmem_capacity_bytes)
    except Exception:
        pass
    return cap * 3 // 4


def _vmem_limit_for(est):
    if est <= _VMEM_SOFT_LIMIT:
        return None
    # TODO(synk): if `est` exceeds the generation cap (very large inputs) a two-pass
    #             conv->HBM->norm spill path would be needed; clamp for now.
    return int(min(_vmem_cap_bytes(), max(int(est * 1.25), 16 * 1024 * 1024)))


# ---------------------------------------------------------------------------
# Fused DownBlock kernel
# ---------------------------------------------------------------------------
def _down_block_kernel(*refs, NG, RT, TR, Wp, OW, OH, PW,
                       use_norm, use_pool, has_head, count,
                       eps=1e-5, slope=0.2):
    """One grid step == one sample: conv + [IN] + LeakyReLU + [pool] + [1x1 head].

    refs (in order): x, w, b, [gamma, beta], [sel], [head_w, head_b],
                     o, [pred], [y_scratch]
    """
    it = iter(refs)
    x_ref = next(it)                       # (1, Hp*Wp, K)        bf16 stacked input
    w_ref = next(it)                       # (NG, K, Cout)        bf16 tap-stacked weights
    b_ref = next(it)                       # (1, Cout)            f32 conv bias
    gamma_ref = beta_ref = sel_ref = hw_ref = hb_ref = None
    if use_norm:
        gamma_ref = next(it)               # (1, Cout) f32
        beta_ref = next(it)                # (1, Cout) f32
    if use_pool:
        sel_ref = next(it)                 # (PW, Wp) bf16 pooling selection (0.25 taps)
    if has_head:
        hw_ref = next(it)                  # (1, Cout, 128) bf16
        hb_ref = next(it)                  # (1, 128) f32
    o_ref = next(it)                       # (1, out_rows, Cout) bf16
    pred_ref = next(it) if has_head else None   # (1, out_rows, 128) f32
    y_scr = next(it) if use_norm else None      # (Rpad*Wp, Cout) bf16 VMEM scratch

    TP = TR * Wp
    Cout = o_ref.shape[-1]
    bias = b_ref[...]                                           # (1, Cout)
    sel = sel_ref[...] if use_pool else None                    # (PW, Wp) bf16
    if has_head:
        hw = hw_ref[0]                                          # (Cout, 128) bf16
        hb = hb_ref[...]                                        # (1, 128)

    def conv_chunk(t):
        """Conv output rows [t*TR, (t+1)*TR) as a (TP, Cout) f32 value."""
        row0 = t * TR
        acc = None
        for g in range(NG):                                     # static unroll (1 or 4)
            start = (row0 + g) * Wp                             # static, Wp-aligned
            lhs = x_ref[0, start:start + TP, :]                 # (TP, K) bf16
            d = jnp.dot(lhs, w_ref[g], preferred_element_type=jnp.float32)
            acc = d if acc is None else acc + d
        return acc + bias

    def finalize_chunk(t, y):
        y = jnp.maximum(y, slope * y)                           # LeakyReLU(0.2)
        if use_pool:
            pieces = []
            for p in range(TR // 2):                            # static unroll
                pair = y[p * 2 * Wp:(p + 1) * 2 * Wp, :]
                v = (pair[:Wp, :] + pair[Wp:, :]).astype(jnp.bfloat16)
                pieces.append(jnp.dot(sel, v, preferred_element_type=jnp.float32))
            chunk = pieces[0] if len(pieces) == 1 else jnp.concatenate(pieces, axis=0)
            r0 = t * (TR // 2) * PW
            o_ref[0, r0:r0 + (TR // 2) * PW, :] = chunk.astype(o_ref.dtype)
        else:
            pieces = [y[r * Wp:r * Wp + OW, :] for r in range(TR)]
            chunk = pieces[0] if len(pieces) == 1 else jnp.concatenate(pieces, axis=0)
            cb = chunk.astype(jnp.bfloat16)
            r0 = t * TR * OW
            o_ref[0, r0:r0 + TR * OW, :] = cb
            if has_head:                                        # fused 1x1 prediction head
                pred = jnp.dot(cb, hw, preferred_element_type=jnp.float32) + hb
                pred_ref[0, r0:r0 + TR * OW, :] = pred.astype(pred_ref.dtype)

    if use_norm:
        # Validity indices (built in-kernel; column pattern identical for all chunks).
        flat_i = jax.lax.broadcasted_iota(jnp.int32, (TP, 1), 0)
        col_ok = (flat_i % Wp) < OW
        lrow = flat_i // Wp

        s = jnp.zeros((1, Cout), jnp.float32)
        ss = jnp.zeros((1, Cout), jnp.float32)
        for t in range(RT):                                     # pass 1: conv + exact stats
            acc = conv_chunk(t)
            valid = jnp.logical_and(col_ok, lrow < (OH - t * TR))
            acc = jnp.where(valid, acc, 0.0)
            s = s + jnp.sum(acc, axis=0, keepdims=True)
            ss = ss + jnp.sum(acc * acc, axis=0, keepdims=True)
            y_scr[t * TP:(t + 1) * TP, :] = acc.astype(y_scr.dtype)

        inv_n = 1.0 / count
        mean = s * inv_n
        var = jnp.maximum(ss * inv_n - mean * mean, 0.0)
        scale = gamma_ref[...] * jax.lax.rsqrt(var + eps)       # computed once per sample
        shift = beta_ref[...] - mean * scale
        for t in range(RT):                                     # pass 2: apply + finalize
            y = y_scr[t * TP:(t + 1) * TP, :].astype(jnp.float32) * scale + shift
            finalize_chunk(t, y)
    else:
        for t in range(RT):                                     # fully streaming (no scratch)
            finalize_chunk(t, conv_chunk(t))


# ---------------------------------------------------------------------------
# Wrapper-side layout prep (im2col / KW-stacking) and the pallas_call driver
# ---------------------------------------------------------------------------
def _stack_taps(x, Wp, Hp, full):
    """Stack conv taps along channels.  full: all 16 taps (K = 16*Cin); else KW taps."""
    N, H, W, Cin = x.shape
    if full:
        xp = jnp.pad(x, ((0, 0), (0, Hp + _KH - 1 - H), (0, Wp + _KW - 1 - W), (0, 0)))
        cols = [xp[:, kh:kh + Hp, kw:kw + Wp, :]
                for kh in range(_KH) for kw in range(_KW)]
    else:
        xp = jnp.pad(x, ((0, 0), (0, Hp - H), (0, Wp + _KW - 1 - W), (0, 0)))
        cols = [xp[:, :, kw:kw + Wp, :] for kw in range(_KW)]
    xs = jnp.concatenate(cols, axis=-1)                         # (N, Hp, Wp, K)
    return xs.reshape(N, Hp * Wp, xs.shape[-1])


def down_block(x, blk, head=None):
    """x: (N, H, W, Cin) bf16 NHWC -> (N, Hout, Wout, Cout) bf16 NHWC [, pred NHWC f32]."""
    N, H, W, Cin = x.shape
    OH, OW = H - _KH + 1, W - _KW + 1
    assert OH >= 1 and OW >= 1, "input too small for this DownBlock"
    use_norm, use_pool = blk['norm'], blk['pool']
    has_head = head is not None
    assert not (has_head and use_pool)
    Cout = blk['cout']
    full, NG = blk['full'], blk['ng']
    K = blk['w'].shape[1]

    Wp = max(16, _round_up(W, 16))
    assert Wp >= 16 and Wp % 16 == 0

    # In-kernel chunking over conv output rows.
    rows_by_bytes = max(1, _LHS_BYTES_TARGET // (2 * max(K, 1)))
    rows_cap = min(rows_by_bytes, _MAX_CHUNK_FLAT_ROWS)
    TR = max(1, min(OH, rows_cap // Wp))
    if use_pool:
        TR = TR + (TR % 2)                                      # even so pool pairs don't straddle
    RT = _cdiv(OH, TR)
    Rpad = RT * TR
    TP = TR * Wp

    Hp = Rpad if full else Rpad + _KH
    xs = _stack_taps(x, Wp, Hp, full)                           # (N, Hp*Wp, K) bf16

    PH, PW = OH // 2, OW // 2
    if use_pool:
        assert PH >= 1 and PW >= 1
        q = jnp.arange(PW)[:, None]
        j = jnp.arange(Wp)[None, :]
        sel = jnp.where((j == 2 * q) | (j == 2 * q + 1), 0.25, 0.0).astype(jnp.bfloat16)

    out_rows = (Rpad // 2) * PW if use_pool else Rpad * OW

    kern = functools.partial(
        _down_block_kernel, NG=NG, RT=RT, TR=TR, Wp=Wp, OW=OW, OH=OH, PW=PW,
        use_norm=use_norm, use_pool=use_pool, has_head=has_head,
        count=float(OH * OW))

    in_list = [xs, blk['w'], blk['b']]
    in_specs = [pl.BlockSpec((1, Hp * Wp, K), lambda n: (n, 0, 0)),
                pl.BlockSpec((NG, K, Cout), lambda n: (0, 0, 0)),
                pl.BlockSpec((1, Cout), lambda n: (0, 0))]
    if use_norm:
        in_list += [blk['gamma'], blk['beta']]
        in_specs += [pl.BlockSpec((1, Cout), lambda n: (0, 0)),
                     pl.BlockSpec((1, Cout), lambda n: (0, 0))]
    if use_pool:
        in_list += [sel]
        in_specs += [pl.BlockSpec((PW, Wp), lambda n: (0, 0))]
    if has_head:
        hw, hb = head
        in_list += [hw, hb]
        in_specs += [pl.BlockSpec((1, Cout, 128), lambda n: (0, 0, 0)),
                     pl.BlockSpec((1, 128), lambda n: (0, 0))]

    out_shapes = [jax.ShapeDtypeStruct((N, out_rows, Cout), jnp.bfloat16)]
    out_specs = [pl.BlockSpec((1, out_rows, Cout), lambda n: (n, 0, 0))]
    if has_head:
        out_shapes += [jax.ShapeDtypeStruct((N, out_rows, 128), jnp.float32)]
        out_specs += [pl.BlockSpec((1, out_rows, 128), lambda n: (n, 0, 0))]

    scratch = [pltpu.VMEM((Rpad * Wp, Cout), jnp.bfloat16)] if use_norm else []

    # Cost / VMEM bookkeeping.
    conv_flops = 2 * N * Rpad * Wp * NG * K * Cout
    pool_flops = (2 * N * (Rpad // 2) * PW * Wp * Cout) if use_pool else 0
    head_flops = (2 * N * Rpad * OW * Cout * 128) if has_head else 0
    bytes_accessed = int(xs.size * 2 + blk['w'].size * 2 + N * out_rows * Cout * 2
                         + (N * out_rows * 128 * 4 if has_head else 0))
    vmem_est = (2 * _buf_bytes(Hp * Wp, K, 2)                   # stacked input (double-buffered)
                + 2 * NG * _buf_bytes(K, Cout, 2)               # weights
                + 2 * _buf_bytes(out_rows, Cout, 2)             # bf16 output
                + (2 * _buf_bytes(out_rows, 128, 4) + _buf_bytes(Cout, 128, 2)
                   if has_head else 0)
                + (_buf_bytes(Rpad * Wp, Cout, 2) if use_norm else 0)
                + _buf_bytes(TP, K, 2)                          # lhs chunk value
                + 2 * _buf_bytes(TP, Cout, 4)                   # f32 acc / finalize chunk
                + _buf_bytes(TP, Cout, 2)
                + 8 * _buf_bytes(8, max(Cout, 128), 4))

    res = pl.pallas_call(
        kern,
        out_shape=tuple(out_shapes),
        grid=(N,),
        in_specs=in_specs,
        out_specs=tuple(out_specs),
        scratch_shapes=scratch,
        compiler_params=pltpu.CompilerParams(
            dimension_semantics=("parallel",),
            vmem_limit_bytes=_vmem_limit_for(vmem_est)),
        cost_estimate=pl.CostEstimate(
            flops=int(conv_flops + pool_flops + head_flops),
            transcendentals=int(N * Cout if use_norm else 0),
            bytes_accessed=bytes_accessed),
    )(*in_list)

    o = res[0]
    if use_pool:
        o = o.reshape(N, Rpad // 2, PW, Cout)[:, :PH]
    else:
        o = o.reshape(N, Rpad, OW, Cout)[:, :OH]
    if has_head:
        pred = res[1].reshape(N, Rpad, OW, 128)[:, :OH, :, 0:1]
        return o, pred
    return o


# ---------------------------------------------------------------------------
# The Discriminator module
# ---------------------------------------------------------------------------
class DiscriminatorPallas:
    """JAX/Pallas port of the PyTorch Discriminator (defaults: sn/use_kp/AdaIN off)."""

    def __init__(self, key, num_channels=3, block_expansion=64, num_blocks=4,
                 max_features=512, sn=False, use_kp=False, num_kp=10,
                 kp_variance=0.01, AdaINc=0):
        assert not sn       # TODO(synk): spectral_norm weight normalization not implemented
        assert not use_kp   # TODO(synk): kp2gaussian heatmap concatenation not implemented
        assert AdaINc == 0  # TODO(synk): AdaIN expression head (to_exp MLP) not implemented
        self.kernel_size = _KH
        self.blocks = []
        for i in range(num_blocks):
            cin = num_channels if i == 0 else min(max_features, block_expansion * 2 ** i)
            cout = min(max_features, block_expansion * 2 ** (i + 1))
            key, k_w, k_b = jax.random.split(key, 3)
            fan_in = cin * _KH * _KW
            bound = 1.0 / math.sqrt(fan_in)
            # PyTorch conv weight (OC, IC, KH, KW) -> tap-stacked (NG, KS*IC, OC)
            w = jax.random.uniform(k_w, (cout, cin, _KH, _KW), jnp.float32, -bound, bound)
            wt = jnp.transpose(w, (2, 3, 1, 0))                 # (KH, KW, IC, OC)
            full = cin <= _FULL_IM2COL_MAX_CIN
            ng = 1 if full else _KH
            w_g = wt.reshape(ng, (_KH * _KW // ng) * cin, cout).astype(jnp.bfloat16)
            b = jax.random.uniform(k_b, (1, cout), jnp.float32, -bound, bound)
            self.blocks.append(dict(
                w=w_g, b=b, ng=ng, full=full,
                gamma=jnp.ones((1, cout), jnp.float32),          # InstanceNorm affine init
                beta=jnp.zeros((1, cout), jnp.float32),
                cin=cin, cout=cout, norm=(i != 0), pool=(i != num_blocks - 1)))

        c_last = self.blocks[-1]['cout']
        key, k_w, k_b = jax.random.split(key, 3)
        bound = 1.0 / math.sqrt(c_last)
        wf = jax.random.uniform(k_w, (1, c_last, 1, 1), jnp.float32, -bound, bound)
        bf = jax.random.uniform(k_b, (1, 1), jnp.float32, -bound, bound)
        # Pad head Cout 1 -> 128 (zero channels) so its fused stores are lane dense.
        hw = jnp.zeros((1, c_last, 128), jnp.float32).at[0, :, 0].set(wf[0, :, 0, 0])
        self.hw = hw.astype(jnp.bfloat16)
        self.hb = jnp.zeros((1, 128), jnp.float32).at[0, 0].set(bf[0, 0])

    def __call__(self, x_nchw, channels_last=False):
        # One NCHW->NHWC transpose at the entry; everything stays NHWC bf16 inside.
        out = jnp.transpose(x_nchw.astype(jnp.float32), (0, 2, 3, 1)).astype(jnp.bfloat16)
        fmaps_nhwc = []
        pred_nhwc = None
        n_blocks = len(self.blocks)
        for i, blk in enumerate(self.blocks):
            if i == n_blocks - 1:
                out, pred_nhwc = down_block(out, blk, head=(self.hw, self.hb))
            else:
                out = down_block(out, blk)
            fmaps_nhwc.append(out)
        if channels_last:
            feature_maps = [f.astype(jnp.float32) for f in fmaps_nhwc]
            prediction_map = pred_nhwc
        else:
            # Interface fidelity with PyTorch: convert to NCHW once, at the end.
            feature_maps = [jnp.transpose(f.astype(jnp.float32), (0, 3, 1, 2))
                            for f in fmaps_nhwc]
            prediction_map = jnp.transpose(pred_nhwc, (0, 3, 1, 2))
        exp = None   # AdaINc == 0
        return feature_maps, prediction_map, exp


# ---------------------------------------------------------------------------
# Pure-JAX reference (mirrors the kernel's bf16 storage choices) for sanity check
# ---------------------------------------------------------------------------
def _reference_forward(disc, x_nchw):
    out = jnp.transpose(x_nchw.astype(jnp.float32), (0, 2, 3, 1))
    out = out.astype(jnp.bfloat16).astype(jnp.float32)
    fmaps = []
    for blk in disc.blocks:
        w = blk['w'].astype(jnp.float32).reshape(_KH, _KW, blk['cin'], blk['cout'])
        y = jax.lax.conv_general_dilated(
            out, w, window_strides=(1, 1), padding='VALID',
            dimension_numbers=('NHWC', 'HWIO', 'NHWC'))
        y = y + blk['b'][0]
        if blk['norm']:
            mean = jnp.mean(y, axis=(1, 2), keepdims=True)
            var = jnp.mean((y - mean) ** 2, axis=(1, 2), keepdims=True)
            y = (y - mean) * jax.lax.rsqrt(var + 1e-5)
            y = y * blk['gamma'][0] + blk['beta'][0]
        y = jnp.maximum(y, 0.2 * y)
        if blk['pool']:
            n, hh, ww, c = y.shape
            y = y[:, :hh // 2 * 2, :ww // 2 * 2, :]
            y = y.reshape(n, hh // 2, 2, ww // 2, 2, c).mean(axis=(2, 4))
        y = y.astype(jnp.bfloat16).astype(jnp.float32)
        fmaps.append(jnp.transpose(y, (0, 3, 1, 2)))
        out = y
    wf = disc.hw.astype(jnp.float32)[0, :, 0]
    pred = jnp.einsum('nhwc,c->nhw', out, wf) + disc.hb[0, 0]
    pred = jnp.transpose(pred[..., None], (0, 3, 1, 2))
    return fmaps, pred


# ---------------------------------------------------------------------------
if __name__ == "__main__":
    key = jax.random.PRNGKey(0)
    key_p, key_x = jax.random.split(key)

    # Small-but-consistent config: 4 DownBlocks with 4x4 valid convs need >= 53 px,
    # so spatial = 64; channels scaled down (block_expansion=16, max_features=64).
    disc = DiscriminatorPallas(key_p, num_channels=3, block_expansion=16,
                               num_blocks=4, max_features=64)
    x = jax.random.normal(key_x, (2, 3, 64, 64), dtype=jnp.float32)   # NCHW like PyTorch

    feature_maps, prediction_map, exp = disc(x)
    for fm in feature_maps:
        jax.block_until_ready(fm)
    jax.block_until_ready(prediction_map)

    assert exp is None
    assert prediction_map.shape == (2, 1, 2, 2)
    assert [tuple(f.shape) for f in feature_maps] == [
        (2, 32, 30, 30), (2, 64, 13, 13), (2, 64, 5, 5), (2, 64, 2, 2)]

    # Numerical sanity check against the pure-JAX reference (bf16-tolerant bound).
    ref_fmaps, ref_pred = _reference_forward(disc, x)
    for got, ref in zip(feature_maps + [prediction_map], ref_fmaps + [ref_pred]):
        err = float(jnp.max(jnp.abs(got - ref)))
        scale = float(jnp.max(jnp.abs(ref))) + 1.0
        assert err <= 0.15 * scale, (err, scale)

    print("KERNEL_OK")
</pallas_src>

<mosaic_0001>
module attributes {stable_mosaic.version = 11 : i64} {
  func.func @_down_block_kernel(%arg0: i32, %arg1: memref<1x4096x48xbf16, #tpu.memory_space<vmem>>, %arg2: memref<1x48x32xbf16, #tpu.memory_space<vmem>>, %arg3: memref<1x32xf32, #tpu.memory_space<vmem>>, %arg4: memref<30x64xbf16, #tpu.memory_space<vmem>>, %arg5: memref<1x960x32xbf16, #tpu.memory_space<vmem>>) attributes {dimension_semantics = [#tpu.dimension_semantics<parallel>], iteration_bounds = array<i64: 2>, scalar_prefetch = 0 : i64, scratch_operands = 0 : i64, tpu.core_type = #tpu.core_type<tc>, window_params = [{transform_indices = @transform_0, window_bounds = array<i64: 1, 4096, 48>}, {pipeline_mode = #tpu.pipeline_mode<synchronous>, transform_indices = @transform_1, window_bounds = array<i64: 1, 48, 32>}, {pipeline_mode = #tpu.pipeline_mode<synchronous>, transform_indices = @transform_2, window_bounds = array<i64: 1, 32>}, {pipeline_mode = #tpu.pipeline_mode<synchronous>, transform_indices = @transform_3, window_bounds = array<i64: 30, 64>}, {transform_indices = @transform_4, window_bounds = array<i64: 1, 960, 32>}]} {
    %c0 = arith.constant 0 : index
    %c0_0 = arith.constant 0 : index
    %0 = vector.load %arg3[%c0, %c0_0] : memref<1x32xf32, #tpu.memory_space<vmem>>, vector<1x32xf32>
    %c0_1 = arith.constant 0 : index
    %c0_2 = arith.constant 0 : index
    %1 = vector.load %arg4[%c0_1, %c0_2] : memref<30x64xbf16, #tpu.memory_space<vmem>>, vector<30x64xbf16>
    %c0_3 = arith.constant 0 : index
    %c0_4 = arith.constant 0 : index
    %c0_5 = arith.constant 0 : index
    %2 = vector.load %arg1[%c0_3, %c0_4, %c0_5] : memref<1x4096x48xbf16, #tpu.memory_space<vmem>>, vector<1x2048x48xbf16>
    %3 = vector.shape_cast %2 : vector<1x2048x48xbf16> to vector<2048x48xbf16>
    %c0_6 = arith.constant 0 : index
    %c0_7 = arith.constant 0 : index
    %c0_8 = arith.constant 0 : index
    %4 = vector.load %arg2[%c0_6, %c0_7, %c0_8] : memref<1x48x32xbf16, #tpu.memory_space<vmem>>, vector<1x48x32xbf16>
    %5 = vector.shape_cast %4 : vector<1x48x32xbf16> to vector<48x32xbf16>
    %cst = arith.constant dense<0.000000e+00> : vector<2048x32xf32>
    %6 = tpu.matmul %3, %5, %cst {dimension_numbers = #tpu.dot_dimension_numbers<[1], [0], [0], [1], [0, 0, 1, 1], [], []>} : vector<2048x48xbf16>, vector<48x32xbf16>, vector<2048x32xf32> -> vector<2048x32xf32>
    %7 = vector.broadcast %0 : vector<1x32xf32> to vector<2048x32xf32>
    %8 = arith.addf %6, %7 : vector<2048x32xf32>
    %cst_9 = arith.constant 2.000000e-01 : f32
    %9 = vector.broadcast %cst_9 : f32 to vector<2048x32xf32>
    %10 = arith.mulf %9, %8 : vector<2048x32xf32>
    %11 = arith.maximumf %8, %10 : vector<2048x32xf32>
    %12 = vector.extract_strided_slice %11 {offsets = [0, 0], sizes = [128, 32], strides = [1, 1]} : vector<2048x32xf32> to vector<128x32xf32>
    %13 = vector.extract_strided_slice %12 {offsets = [0, 0], sizes = [64, 32], strides = [1, 1]} : vector<128x32xf32> to vector<64x32xf32>
    %14 = vector.extract_strided_slice %12 {offsets = [64, 0], sizes = [64, 32], strides = [1, 1]} : vector<128x32xf32> to vector<64x32xf32>
    %15 = arith.addf %13, %14 : vector<64x32xf32>
    %16 = arith.truncf %15 : vector<64x32xf32> to vector<64x32xbf16>
    %cst_10 = arith.constant dense<0.000000e+00> : vector<30x32xf32>
    %17 = tpu.matmul %1, %16, %cst_10 {dimension_numbers = #tpu.dot_dimension_numbers<[1], [0], [0], [1], [0, 0, 1, 1], [], []>} : vector<30x64xbf16>, vector<64x32xbf16>, vector<30x32xf32> -> vector<30x32xf32>
    %18 = vector.extract_strided_slice %11 {offsets = [128, 0], sizes = [128, 32], strides = [1, 1]} : vector<2048x32xf32> to vector<128x32xf32>
    %19 = vector.extract_strided_slice %18 {offsets = [0, 0], sizes = [64, 32], strides = [1, 1]} : vector<128x32xf32> to vector<64x32xf32>
    %20 = vector.extract_strided_slice %18 {offsets = [64, 0], sizes = [64, 32], strides = [1, 1]} : vector<128x32xf32> to vector<64x32xf32>
    %21 = arith.addf %19, %20 : vector<64x32xf32>
    %22 = arith.truncf %21 : vector<64x32xf32> to vector<64x32xbf16>
    %cst_11 = arith.constant dense<0.000000e+00> : vector<30x32xf32>
    %23 = tpu.matmul %1, %22, %cst_11 {dimension_numbers = #tpu.dot_dimension_numbers<[1], [0], [0], [1], [0, 0, 1, 1], [], []>} : vector<30x64xbf16>, vector<64x32xbf16>, vector<30x32xf32> -> vector<30x32xf32>
    %24 = vector.extract_strided_slice %11 {offsets = [256, 0], sizes = [128, 32], strides = [1, 1]} : vector<2048x32xf32> to vector<128x32xf32>
    %25 = vector.extract_strided_slice %24 {offsets = [0, 0], sizes = [64, 32], strides = [1, 1]} : vector<128x32xf32> to vector<64x32xf32>
    %26 = vector.extract_strided_slice %24 {offsets = [64, 0], sizes = [64, 32], strides = [1, 1]} : vector<128x32xf32> to vector<64x32xf32>
    %27 = arith.addf %25, %26 : vector<64x32xf32>
    %28 = arith.truncf %27 : vector<64x32xf32> to vector<64x32xbf16>
    %cst_12 = arith.constant dense<0.000000e+00> : vector<30x32xf32>
    %29 = tpu.matmul %1, %28, %cst_12 {dimension_numbers = #tpu.dot_dimension_numbers<[1], [0], [0], [1], [0, 0, 1, 1], [], []>} : vector<30x64xbf16>, vector<64x32xbf16>, vector<30x32xf32> -> vector<30x32xf32>
    %30 = vector.extract_strided_slice %11 {offsets = [384, 0], sizes = [128, 32], strides = [1, 1]} : vector<2048x32xf32> to vector<128x32xf32>
    %31 = vector.extract_strided_slice %30 {offsets = [0, 0], sizes = [64, 32], strides = [1, 1]} : vector<128x32xf32> to vector<64x32xf32>
    %32 = vector.extract_strided_slice %30 {offsets = [64, 0], sizes = [64, 32], strides = [1, 1]} : vector<128x32xf32> to vector<64x32xf32>
    %33 = arith.addf %31, %32 : vector<64x32xf32>
    %34 = arith.truncf %33 : vector<64x32xf32> to vector<64x32xbf16>
    %cst_13 = arith.constant dense<0.000000e+00> : vector<30x32xf32>
    %35 = tpu.matmul %1, %34, %cst_13 {dimension_numbers = #tpu.dot_dimension_numbers<[1], [0], [0], [1], [0, 0, 1, 1], [], []>} : vector<30x64xbf16>, vector<64x32xbf16>, vector<30x32xf32> -> vector<30x32xf32>
    %36 = vector.extract_strided_slice %11 {offsets = [512, 0], sizes = [128, 32], strides = [1, 1]} : vector<2048x32xf32> to vector<128x32xf32>
    %37 = vector.extract_strided_slice %36 {offsets = [0, 0], sizes = [64, 32], strides = [1, 1]} : vector<128x32xf32> to vector<64x32xf32>
    %38 = vector.extract_strided_slice %36 {offsets = [64, 0], sizes = [64, 32], strides = [1, 1]} : vector<128x32xf32> to vector<64x32xf32>
    %39 = arith.addf %37, %38 : vector<64x32xf32>
    %40 = arith.truncf %39 : vector<64x32xf32> to vector<64x32xbf16>
    %cst_14 = arith.constant dense<0.000000e+00> : vector<30x32xf32>
    %41 = tpu.matmul %1, %40, %cst_14 {dimension_numbers = #tpu.dot_dimension_numbers<[1], [0], [0], [1], [0, 0, 1, 1], [], []>} : vector<30x64xbf16>, vector<64x32xbf16>, vector<30x32xf32> -> vector<30x32xf32>
    %42 = vector.extract_strided_slice %11 {offsets = [640, 0], sizes = [128, 32], strides = [1, 1]} : vector<2048x32xf32> to vector<128x32xf32>
    %43 = vector.extract_strided_slice %42 {offsets = [0, 0], sizes = [64, 32], strides = [1, 1]} : vector<128x32xf32> to vector<64x32xf32>
    %44 = vector.extract_strided_slice %42 {offsets = [64, 0], sizes = [64, 32], strides = [1, 1]} : vector<128x32xf32> to vector<64x32xf32>
    %45 = arith.addf %43, %44 : vector<64x32xf32>
    %46 = arith.truncf %45 : vector<64x32xf32> to vector<64x32xbf16>
    %cst_15 = arith.constant dense<0.000000e+00> : vector<30x32xf32>
    %47 = tpu.matmul %1, %46, %cst_15 {dimension_numbers = #tpu.dot_dimension_numbers<[1], [0], [0], [1], [0, 0, 1, 1], [], []>} : vector<30x64xbf16>, vector<64x32xbf16>, vector<30x32xf32> -> vector<30x32xf32>
    %48 = vector.extract_strided_slice %11 {offsets = [768, 0], sizes = [128, 32], strides = [1, 1]} : vector<2048x32xf32> to vector<128x32xf32>
    %49 = vector.extract_strided_slice %48 {offsets = [0, 0], sizes = [64, 32], strides = [1, 1]} : vector<128x32xf32> to vector<64x32xf32>
    %50 = vector.extract_strided_slice %48 {offsets = [64, 0], sizes = [64, 32], strides = [1, 1]} : vector<128x32xf32> to vector<64x32xf32>
    %51 = arith.addf %49, %50 : vector<64x32xf32>
    %52 = arith.truncf %51 : vector<64x32xf32> to vector<64x32xbf16>
    %cst_16 = arith.constant dense<0.000000e+00> : vector<30x32xf32>
    %53 = tpu.matmul %1, %52, %cst_16 {dimension_numbers = #tpu.dot_dimension_numbers<[1], [0], [0], [1], [0, 0, 1, 1], [], []>} : vector<30x64xbf16>, vector<64x32xbf16>, vector<30x32xf32> -> vector<30x32xf32>
    %54 = vector.extract_strided_slice %11 {offsets = [896, 0], sizes = [128, 32], strides = [1, 1]} : vector<2048x32xf32> to vector<128x32xf32>
    %55 = vector.extract_strided_slice %54 {offsets = [0, 0], sizes = [64, 32], strides = [1, 1]} : vector<128x32xf32> to vector<64x32xf32>
    %56 = vector.extract_strided_slice %54 {offsets = [64, 0], sizes = [64, 32], strides = [1, 1]} : vector<128x32xf32> to vector<64x32xf32>
    %57 = arith.addf %55, %56 : vector<64x32xf32>
    %58 = arith.truncf %57 : vector<64x32xf32> to vector<64x32xbf16>
    %cst_17 = arith.constant dense<0.000000e+00> : vector<30x32xf32>
    %59 = tpu.matmul %1, %58, %cst_17 {dimension_numbers = #tpu.dot_dimension_numbers<[1], [0], [0], [1], [0, 0, 1, 1], [], []>} : vector<30x64xbf16>, vector<64x32xbf16>, vector<30x32xf32> -> vector<30x32xf32>
    %60 = vector.extract_strided_slice %11 {offsets = [1024, 0], sizes = [128, 32], strides = [1, 1]} : vector<2048x32xf32> to vector<128x32xf32>
    %61 = vector.extract_strided_slice %60 {offsets = [0, 0], sizes = [64, 32], strides = [1, 1]} : vector<128x32xf32> to vector<64x32xf32>
    %62 = vector.extract_strided_slice %60 {offsets = [64, 0], sizes = [64, 32], strides = [1, 1]} : vector<128x32xf32> to vector<64x32xf32>
    %63 = arith.addf %61, %62 : vector<64x32xf32>
    %64 = arith.truncf %63 : vector<64x32xf32> to vector<64x32xbf16>
    %cst_18 = arith.constant dense<0.000000e+00> : vector<30x32xf32>
    %65 = tpu.matmul %1, %64, %cst_18 {dimension_numbers = #tpu.dot_dimension_numbers<[1], [0], [0], [1], [0, 0, 1, 1], [], []>} : vector<30x64xbf16>, vector<64x32xbf16>, vector<30x32xf32> -> vector<30x32xf32>
    %66 = vector.extract_strided_slice %11 {offsets = [1152, 0], sizes = [128, 32], strides = [1, 1]} : vector<2048x32xf32> to vector<128x32xf32>
    %67 = vector.extract_strided_slice %66 {offsets = [0, 0], sizes = [64, 32], strides = [1, 1]} : vector<128x32xf32> to vector<64x32xf32>
    %68 = vector.extract_strided_slice %66 {offsets = [64, 0], sizes = [64, 32], strides = [1, 1]} : vector<128x32xf32> to vector<64x32xf32>
    %69 = arith.addf %67, %68 : vector<64x32xf32>
    %70 = arith.truncf %69 : vector<64x32xf32> to vector<64x32xbf16>
    %cst_19 = arith.constant dense<0.000000e+00> : vector<30x32xf32>
    %71 = tpu.matmul %1, %70, %cst_19 {dimension_numbers = #tpu.dot_dimension_numbers<[1], [0], [0], [1], [0, 0, 1, 1], [], []>} : vector<30x64xbf16>, vector<64x32xbf16>, vector<30x32xf32> -> vector<30x32xf32>
    %72 = vector.extract_strided_slice %11 {offsets = [1280, 0], sizes = [128, 32], strides = [1, 1]} : vector<2048x32xf32> to vector<128x32xf32>
    %73 = vector.extract_strided_slice %72 {offsets = [0, 0], sizes = [64, 32], strides = [1, 1]} : vector<128x32xf32> to vector<64x32xf32>
    %74 = vector.extract_strided_slice %72 {offsets = [64, 0], sizes = [64, 32], strides = [1, 1]} : vector<128x32xf32> to vector<64x32xf32>
    %75 = arith.addf %73, %74 : vector<64x32xf32>
    %76 = arith.truncf %75 : vector<64x32xf32> to vector<64x32xbf16>
    %cst_20 = arith.constant dense<0.000000e+00> : vector<30x32xf32>
    %77 = tpu.matmul %1, %76, %cst_20 {dimension_numbers = #tpu.dot_dimension_numbers<[1], [0], [0], [1], [0, 0, 1, 1], [], []>} : vector<30x64xbf16>, vector<64x32xbf16>, vector<30x32xf32> -> vector<30x32xf32>
    %78 = vector.extract_strided_slice %11 {offsets = [1408, 0], sizes = [128, 32], strides = [1, 1]} : vector<2048x32xf32> to vector<128x32xf32>
    %79 = vector.extract_strided_slice %78 {offsets = [0, 0], sizes = [64, 32], strides = [1, 1]} : vector<128x32xf32> to vector<64x32xf32>
    %80 = vector.extract_strided_slice %78 {offsets = [64, 0], sizes = [64, 32], strides = [1, 1]} : vector<128x32xf32> to vector<64x32xf32>
    %81 = arith.addf %79, %80 : vector<64x32xf32>
    %82 = arith.truncf %81 : vector<64x32xf32> to vector<64x32xbf16>
    %cst_21 = arith.constant dense<0.000000e+00> : vector<30x32xf32>
    %83 = tpu.matmul %1, %82, %cst_21 {dimension_numbers = #tpu.dot_dimension_numbers<[1], [0], [0], [1], [0, 0, 1, 1], [], []>} : vector<30x64xbf16>, vector<64x32xbf16>, vector<30x32xf32> -> vector<30x32xf32>
    %84 = vector.extract_strided_slice %11 {offsets = [1536, 0], sizes = [128, 32], strides = [1, 1]} : vector<2048x32xf32> to vector<128x32xf32>
    %85 = vector.extract_strided_slice %84 {offsets = [0, 0], sizes = [64, 32], strides = [1, 1]} : vector<128x32xf32> to vector<64x32xf32>
    %86 = vector.extract_strided_slice %84 {offsets = [64, 0], sizes = [64, 32], strides = [1, 1]} : vector<128x32xf32> to vector<64x32xf32>
    %87 = arith.addf %85, %86 : vector<64x32xf32>
    %88 = arith.truncf %87 : vector<64x32xf32> to vector<64x32xbf16>
    %cst_22 = arith.constant dense<0.000000e+00> : vector<30x32xf32>
    %89 = tpu.matmul %1, %88, %cst_22 {dimension_numbers = #tpu.dot_dimension_numbers<[1], [0], [0], [1], [0, 0, 1, 1], [], []>} : vector<30x64xbf16>, vector<64x32xbf16>, vector<30x32xf32> -> vector<30x32xf32>
    %90 = vector.extract_strided_slice %11 {offsets = [1664, 0], sizes = [128, 32], strides = [1, 1]} : vector<2048x32xf32> to vector<128x32xf32>
    %91 = vector.extract_strided_slice %90 {offsets = [0, 0], sizes = [64, 32], strides = [1, 1]} : vector<128x32xf32> to vector<64x32xf32>
    %92 = vector.extract_strided_slice %90 {offsets = [64, 0], sizes = [64, 32], strides = [1, 1]} : vector<128x32xf32> to vector<64x32xf32>
    %93 = arith.addf %91, %92 : vector<64x32xf32>
    %94 = arith.truncf %93 : vector<64x32xf32> to vector<64x32xbf16>
    %cst_23 = arith.constant dense<0.000000e+00> : vector<30x32xf32>
    %95 = tpu.matmul %1, %94, %cst_23 {dimension_numbers = #tpu.dot_dimension_numbers<[1], [0], [0], [1], [0, 0, 1, 1], [], []>} : vector<30x64xbf16>, vector<64x32xbf16>, vector<30x32xf32> -> vector<30x32xf32>
    %96 = vector.extract_strided_slice %11 {offsets = [1792, 0], sizes = [128, 32], strides = [1, 1]} : vector<2048x32xf32> to vector<128x32xf32>
    %97 = vector.extract_strided_slice %96 {offsets = [0, 0], sizes = [64, 32], strides = [1, 1]} : vector<128x32xf32> to vector<64x32xf32>
    %98 = vector.extract_strided_slice %96 {offsets = [64, 0], sizes = [64, 32], strides = [1, 1]} : vector<128x32xf32> to vector<64x32xf32>
    %99 = arith.addf %97, %98 : vector<64x32xf32>
    %100 = arith.truncf %99 : vector<64x32xf32> to vector<64x32xbf16>
    %cst_24 = arith.constant dense<0.000000e+00> : vector<30x32xf32>
    %101 = tpu.matmul %1, %100, %cst_24 {dimension_numbers = #tpu.dot_dimension_numbers<[1], [0], [0], [1], [0, 0, 1, 1], [], []>} : vector<30x64xbf16>, vector<64x32xbf16>, vector<30x32xf32> -> vector<30x32xf32>
    %102 = vector.extract_strided_slice %11 {offsets = [1920, 0], sizes = [128, 32], strides = [1, 1]} : vector<2048x32xf32> to vector<128x32xf32>
    %103 = vector.extract_strided_slice %102 {offsets = [0, 0], sizes = [64, 32], strides = [1, 1]} : vector<128x32xf32> to vector<64x32xf32>
    %104 = vector.extract_strided_slice %102 {offsets = [64, 0], sizes = [64, 32], strides = [1, 1]} : vector<128x32xf32> to vector<64x32xf32>
    %105 = arith.addf %103, %104 : vector<64x32xf32>
    %106 = arith.truncf %105 : vector<64x32xf32> to vector<64x32xbf16>
    %cst_25 = arith.constant dense<0.000000e+00> : vector<30x32xf32>
    %107 = tpu.matmul %1, %106, %cst_25 {dimension_numbers = #tpu.dot_dimension_numbers<[1], [0], [0], [1], [0, 0, 1, 1], [], []>} : vector<30x64xbf16>, vector<64x32xbf16>, vector<30x32xf32> -> vector<30x32xf32>
    %108 = tpu.concatenate %17, %23, %29, %35, %41, %47, %53, %59, %65, %71, %77, %83, %89, %95, %101, %107 in 0 : vector<30x32xf32>, vector<30x32xf32>, vector<30x32xf32>, vector<30x32xf32>, vector<30x32xf32>, vector<30x32xf32>, vector<30x32xf32>, vector<30x32xf32>, vector<30x32xf32>, vector<30x32xf32>, vector<30x32xf32>, vector<30x32xf32>, vector<30x32xf32>, vector<30x32xf32>, vector<30x32xf32>, vector<30x32xf32> -> vector<480x32xf32>
    %109 = arith.truncf %108 : vector<480x32xf32> to vector<480x32xbf16>
    %c0_26 = arith.constant 0 : index
    %c0_27 = arith.constant 0 : index
    %c0_28 = arith.constant 0 : index
    %110 = vector.load %arg5[%c0_26, %c0_27, %c0_28] : memref<1x960x32xbf16, #tpu.memory_space<vmem>>, vector<1x480x32xbf16>
    %111 = vector.shape_cast %110 : vector<1x480x32xbf16> to vector<480x32xbf16>
    %112 = vector.shape_cast %109 : vector<480x32xbf16> to vector<1x480x32xbf16>
    tpu.vector_store %arg5[%c0_26, %c0_27, %c0_28], %112 {strides = array<i32>} : memref<1x960x32xbf16, #tpu.memory_space<vmem>>, vector<1x480x32xbf16>,
    %c0_29 = arith.constant 0 : index
    %c2048 = arith.constant 2048 : index
    %c0_30 = arith.constant 0 : index
    %113 = vector.load %arg1[%c0_29, %c2048, %c0_30] : memref<1x4096x48xbf16, #tpu.memory_space<vmem>>, vector<1x2048x48xbf16>
    %114 = vector.shape_cast %113 : vector<1x2048x48xbf16> to vector<2048x48xbf16>
    %c0_31 = arith.constant 0 : index
    %c0_32 = arith.constant 0 : index
    %c0_33 = arith.constant 0 : index
    %115 = vector.load %arg2[%c0_31, %c0_32, %c0_33] : memref<1x48x32xbf16, #tpu.memory_space<vmem>>, vector<1x48x32xbf16>
    %116 = vector.shape_cast %115 : vector<1x48x32xbf16> to vector<48x32xbf16>
    %cst_34 = arith.constant dense<0.000000e+00> : vector<2048x32xf32>
    %117 = tpu.matmul %114, %116, %cst_34 {dimension_numbers = #tpu.dot_dimension_numbers<[1], [0], [0], [1], [0, 0, 1, 1], [], []>} : vector<2048x48xbf16>, vector<48x32xbf16>, vector<2048x32xf32> -> vector<2048x32xf32>
    %118 = vector.broadcast %0 : vector<1x32xf32> to vector<2048x32xf32>
    %119 = arith.addf %117, %118 : vector<2048x32xf32>
    %cst_35 = arith.constant 2.000000e-01 : f32
    %120 = vector.broadcast %cst_35 : f32 to vector<2048x32xf32>
    %121 = arith.mulf %120, %119 : vector<2048x32xf32>
    %122 = arith.maximumf %119, %121 : vector<2048x32xf32>
    %123 = vector.extract_strided_slice %122 {offsets = [0, 0], sizes = [128, 32], strides = [1, 1]} : vector<2048x32xf32> to vector<128x32xf32>
    %124 = vector.extract_strided_slice %123 {offsets = [0, 0], sizes = [64, 32], strides = [1, 1]} : vector<128x32xf32> to vector<64x32xf32>
    %125 = vector.extract_strided_slice %123 {offsets = [64, 0], sizes = [64, 32], strides = [1, 1]} : vector<128x32xf32> to vector<64x32xf32>
    %126 = arith.addf %124, %125 : vector<64x32xf32>
    %127 = arith.truncf %126 : vector<64x32xf32> to vector<64x32xbf16>
    %cst_36 = arith.constant dense<0.000000e+00> : vector<30x32xf32>
    %128 = tpu.matmul %1, %127, %cst_36 {dimension_numbers = #tpu.dot_dimension_numbers<[1], [0], [0], [1], [0, 0, 1, 1], [], []>} : vector<30x64xbf16>, vector<64x32xbf16>, vector<30x32xf32> -> vector<30x32xf32>
    %129 = vector.extract_strided_slice %122 {offsets = [128, 0], sizes = [128, 32], strides = [1, 1]} : vector<2048x32xf32> to vector<128x32xf32>
    %130 = vector.extract_strided_slice %129 {offsets = [0, 0], sizes = [64, 32], strides = [1, 1]} : vector<128x32xf32> to vector<64x32xf32>
    %131 = vector.extract_strided_slice %129 {offsets = [64, 0], sizes = [64, 32], strides = [1, 1]} : vector<128x32xf32> to vector<64x32xf32>
    %132 = arith.addf %130, %131 : vector<64x32xf32>
    %133 = arith.truncf %132 : vector<64x32xf32> to vector<64x32xbf16>
    %cst_37 = arith.constant dense<0.000000e+00> : vector<30x32xf32>
    %134 = tpu.matmul %1, %133, %cst_37 {dimension_numbers = #tpu.dot_dimension_numbers<[1], [0], [0], [1], [0, 0, 1, 1], [], []>} : vector<30x64xbf16>, vector<64x32xbf16>, vector<30x32xf32> -> vector<30x32xf32>
    %135 = vector.extract_strided_slice %122 {offsets = [256, 0], sizes = [128, 32], strides = [1, 1]} : vector<2048x32xf32> to vector<128x32xf32>
    %136 = vector.extract_strided_slice %135 {offsets = [0, 0], sizes = [64, 32], strides = [1, 1]} : vector<128x32xf32> to vector<64x32xf32>
    %137 = vector.extract_strided_slice %135 {offsets = [64, 0], sizes = [64, 32], strides = [1, 1]} : vector<128x32xf32> to vector<64x32xf32>
    %138 = arith.addf %136, %137 : vector<64x32xf32>
    %139 = arith.truncf %138 : vector<64x32xf32> to vector<64x32xbf16>
    %cst_38 = arith.constant dense<0.000000e+00> : vector<30x32xf32>
    %140 = tpu.matmul %1, %139, %cst_38 {dimension_numbers = #tpu.dot_dimension_numbers<[1], [0], [0], [1], [0, 0, 1, 1], [], []>} : vector<30x64xbf16>, vector<64x32xbf16>, vector<30x32xf32> -> vector<30x32xf32>
    %141 = vector.extract_strided_slice %122 {offsets = [384, 0], sizes = [128, 32], strides = [1, 1]} : vector<2048x32xf32> to vector<128x32xf32>
    %142 = vector.extract_strided_slice %141 {offsets = [0, 0], sizes = [64, 32], strides = [1, 1]} : vector<128x32xf32> to vector<64x32xf32>
    %143 = vector.extract_strided_slice %141 {offsets = [64, 0], sizes = [64, 32], strides = [1, 1]} : vector<128x32xf32> to vector<64x32xf32>
    %144 = arith.addf %142, %143 : vector<64x32xf32>
    %145 = arith.truncf %144 : vector<64x32xf32> to vector<64x32xbf16>
    %cst_39 = arith.constant dense<0.000000e+00> : vector<30x32xf32>
    %146 = tpu.matmul %1, %145, %cst_39 {dimension_numbers = #tpu.dot_dimension_numbers<[1], [0], [0], [1], [0, 0, 1, 1], [], []>} : vector<30x64xbf16>, vector<64x32xbf16>, vector<30x32xf32> -> vector<30x32xf32>
    %147 = vector.extract_strided_slice %122 {offsets = [512, 0], sizes = [128, 32], strides = [1, 1]} : vector<2048x32xf32> to vector<128x32xf32>
    %148 = vector.extract_strided_slice %147 {offsets = [0, 0], sizes = [64, 32], strides = [1, 1]} : vector<128x32xf32> to vector<64x32xf32>
    %149 = vector.extract_strided_slice %147 {offsets = [64, 0], sizes = [64, 32], strides = [1, 1]} : vector<128x32xf32> to vector<64x32xf32>
    %150 = arith.addf %148, %149 : vector<64x32xf32>
    %151 = arith.truncf %150 : vector<64x32xf32> to vector<64x32xbf16>
    %cst_40 = arith.constant dense<0.000000e+00> : vector<30x32xf32>
    %152 = tpu.matmul %1, %151, %cst_40 {dimension_numbers = #tpu.dot_dimension_numbers<[1], [0], [0], [1], [0, 0, 1, 1], [], []>} : vector<30x64xbf16>, vector<64x32xbf16>, vector<30x32xf32> -> vector<30x32xf32>
    %153 = vector.extract_strided_slice %122 {offsets = [640, 0], sizes = [128, 32], strides = [1, 1]} : vector<2048x32xf32> to vector<128x32xf32>
    %154 = vector.extract_strided_slice %153 {offsets = [0, 0], sizes = [64, 32], strides = [1, 1]} : vector<128x32xf32> to vector<64x32xf32>
    %155 = vector.extract_strided_slice %153 {offsets = [64, 0], sizes = [64, 32], strides = [1, 1]} : vector<128x32xf32> to vector<64x32xf32>
    %156 = arith.addf %154, %155 : vector<64x32xf32>
    %157 = arith.truncf %156 : vector<64x32xf32> to vector<64x32xbf16>
    %cst_41 = arith.constant dense<0.000000e+00> : vector<30x32xf32>
    %158 = tpu.matmul %1, %157, %cst_41 {dimension_numbers = #tpu.dot_dimension_numbers<[1], [0], [0], [1], [0, 0, 1, 1], [], []>} : vector<30x64xbf16>, vector<64x32xbf16>, vector<30x32xf32> -> vector<30x32xf32>
    %159 = vector.extract_strided_slice %122 {offsets = [768, 0], sizes = [128, 32], strides = [1, 1]} : vector<2048x32xf32> to vector<128x32xf32>
    %160 = vector.extract_strided_slice %159 {offsets = [0, 0], sizes = [64, 32], strides = [1, 1]} : vector<128x32xf32> to vector<64x32xf32>
    %161 = vector.extract_strided_slice %159 {offsets = [64, 0], sizes = [64, 32], strides = [1, 1]} : vector<128x32xf32> to vector<64x32xf32>
    %162 = arith.addf %160, %161 : vector<64x32xf32>
    %163 = arith.truncf %162 : vector<64x32xf32> to vector<64x32xbf16>
    %cst_42 = arith.constant dense<0.000000e+00> : vector<30x32xf32>
    %164 = tpu.matmul %1, %163, %cst_42 {dimension_numbers = #tpu.dot_dimension_numbers<[1], [0], [0], [1], [0, 0, 1, 1], [], []>} : vector<30x64xbf16>, vector<64x32xbf16>, vector<30x32xf32> -> vector<30x32xf32>
    %165 = vector.extract_strided_slice %122 {offsets = [896, 0], sizes = [128, 32], strides = [1, 1]} : vector<2048x32xf32> to vector<128x32xf32>
    %166 = vector.extract_strided_slice %165 {offsets = [0, 0], sizes = [64, 32], strides = [1, 1]} : vector<128x32xf32> to vector<64x32xf32>
    %167 = vector.extract_strided_slice %165 {offsets = [64, 0], sizes = [64, 32], strides = [1, 1]} : vector<128x32xf32> to vector<64x32xf32>
    %168 = arith.addf %166, %167 : vector<64x32xf32>
    %169 = arith.truncf %168 : vector<64x32xf32> to vector<64x32xbf16>
    %cst_43 = arith.constant dense<0.000000e+00> : vector<30x32xf32>
    %170 = tpu.matmul %1, %169, %cst_43 {dimension_numbers = #tpu.dot_dimension_numbers<[1], [0], [0], [1], [0, 0, 1, 1], [], []>} : vector<30x64xbf16>, vector<64x32xbf16>, vector<30x32xf32> -> vector<30x32xf32>
    %171 = vector.extract_strided_slice %122 {offsets = [1024, 0], sizes = [128, 32], strides = [1, 1]} : vector<2048x32xf32> to vector<128x32xf32>
    %172 = vector.extract_strided_slice %171 {offsets = [0, 0], sizes = [64, 32], strides = [1, 1]} : vector<128x32xf32> to vector<64x32xf32>
    %173 = vector.extract_strided_slice %171 {offsets = [64, 0], sizes = [64, 32], strides = [1, 1]} : vector<128x32xf32> to vector<64x32xf32>
    %174 = arith.addf %172, %173 : vector<64x32xf32>
    %175 = arith.truncf %174 : vector<64x32xf32> to vector<64x32xbf16>
    %cst_44 = arith.constant dense<0.000000e+00> : vector<30x32xf32>
    %176 = tpu.matmul %1, %175, %cst_44 {dimension_numbers = #tpu.dot_dimension_numbers<[1], [0], [0], [1], [0, 0, 1, 1], [], []>} : vector<30x64xbf16>, vector<64x32xbf16>, vector<30x32xf32> -> vector<30x32xf32>
    %177 = vector.extract_strided_slice %122 {offsets = [1152, 0], sizes = [128, 32], strides = [1, 1]} : vector<2048x32xf32> to vector<128x32xf32>
    %178 = vector.extract_strided_slice %177 {offsets = [0, 0], sizes = [64, 32], strides = [1, 1]} : vector<128x32xf32> to vector<64x32xf32>
    %179 = vector.extract_strided_slice %177 {offsets = [64, 0], sizes = [64, 32], strides = [1, 1]} : vector<128x32xf32> to vector<64x32xf32>
    %180 = arith.addf %178, %179 : vector<64x32xf32>
    %181 = arith.truncf %180 : vector<64x32xf32> to vector<64x32xbf16>
    %cst_45 = arith.constant dense<0.000000e+00> : vector<30x32xf32>
    %182 = tpu.matmul %1, %181, %cst_45 {dimension_numbers = #tpu.dot_dimension_numbers<[1], [0], [0], [1], [0, 0, 1, 1], [], []>} : vector<30x64xbf16>, vector<64x32xbf16>, vector<30x32xf32> -> vector<30x32xf32>
    %183 = vector.extract_strided_slice %122 {offsets = [1280, 0], sizes = [128, 32], strides = [1, 1]} : vector<2048x32xf32> to vector<128x32xf32>
    %184 = vector.extract_strided_slice %183 {offsets = [0, 0], sizes = [64, 32], strides = [1, 1]} : vector<128x32xf32> to vector<64x32xf32>
    %185 = vector.extract_strided_slice %183 {offsets = [64, 0], sizes = [64, 32], strides = [1, 1]} : vector<128x32xf32> to vector<64x32xf32>
    %186 = arith.addf %184, %185 : vector<64x32xf32>
    %187 = arith.truncf %186 : vector<64x32xf32> to vector<64x32xbf16>
    %cst_46 = arith.constant dense<0.000000e+00> : vector<30x32xf32>
    %188 = tpu.matmul %1, %187, %cst_46 {dimension_numbers = #tpu.dot_dimension_numbers<[1], [0], [0], [1], [0, 0, 1, 1], [], []>} : vector<30x64xbf16>, vector<64x32xbf16>, vector<30x32xf32> -> vector<30x32xf32>
    %189 = vector.extract_strided_slice %122 {offsets = [1408, 0], sizes = [128, 32], strides = [1, 1]} : vector<2048x32xf32> to vector<128x32xf32>
    %190 = vector.extract_strided_slice %189 {offsets = [0, 0], sizes = [64, 32], strides = [1, 1]} : vector<128x32xf32> to vector<64x32xf32>
    %191 = vector.extract_strided_slice %189 {offsets = [64, 0], sizes = [64, 32], strides = [1, 1]} : vector<128x32xf32> to vector<64x32xf32>
    %192 = arith.addf %190, %191 : vector<64x32xf32>
    %193 = arith.truncf %192 : vector<64x32xf32> to vector<64x32xbf16>
    %cst_47 = arith.constant dense<0.000000e+00> : vector<30x32xf32>
    %194 = tpu.matmul %1, %193, %cst_47 {dimension_numbers = #tpu.dot_dimension_numbers<[1], [0], [0], [1], [0, 0, 1, 1], [], []>} : vector<30x64xbf16>, vector<64x32xbf16>, vector<30x32xf32> -> vector<30x32xf32>
    %195 = vector.extract_strided_slice %122 {offsets = [1536, 0], sizes = [128, 32], strides = [1, 1]} : vector<2048x32xf32> to vector<128x32xf32>
    %196 = vector.extract_strided_slice %195 {offsets = [0, 0], sizes = [64, 32], strides = [1, 1]} : vector<128x32xf32> to vector<64x32xf32>
    %197 = vector.extract_strided_slice %195 {offsets = [64, 0], sizes = [64, 32], strides = [1, 1]} : vector<128x32xf32> to vector<64x32xf32>
    %198 = arith.addf %196, %197 : vector<64x32xf32>
    %199 = arith.truncf %198 : vector<64x32xf32> to vector<64x32xbf16>
    %cst_48 = arith.constant dense<0.000000e+00> : vector<30x32xf32>
    %200 = tpu.matmul %1, %199, %cst_48 {dimension_numbers = #tpu.dot_dimension_numbers<[1], [0], [0], [1], [0, 0, 1, 1], [], []>} : vector<30x64xbf16>, vector<64x32xbf16>, vector<30x32xf32> -> vector<30x32xf32>
    %201 = vector.extract_strided_slice %122 {offsets = [1664, 0], sizes = [128, 32], strides = [1, 1]} : vector<2048x32xf32> to vector<128x32xf32>
    %202 = vector.extract_strided_slice %201 {offsets = [0, 0], sizes = [64, 32], strides = [1, 1]} : vector<128x32xf32> to vector<64x32xf32>
    %203 = vector.extract_strided_slice %201 {offsets = [64, 0], sizes = [64, 32], strides = [1, 1]} : vector<128x32xf32> to vector<64x32xf32>
    %204 = arith.addf %202, %203 : vector<64x32xf32>
    %205 = arith.truncf %204 : vector<64x32xf32> to vector<64x32xbf16>
    %cst_49 = arith.constant dense<0.000000e+00> : vector<30x32xf32>
    %206 = tpu.matmul %1, %205, %cst_49 {dimension_numbers = #tpu.dot_dimension_numbers<[1], [0], [0], [1], [0, 0, 1, 1], [], []>} : vector<30x64xbf16>, vector<64x32xbf16>, vector<30x32xf32> -> vector<30x32xf32>
    %207 = vector.extract_strided_slice %122 {offsets = [1792, 0], sizes = [128, 32], strides = [1, 1]} : vector<2048x32xf32> to vector<128x32xf32>
    %208 = vector.extract_strided_slice %207 {offsets = [0, 0], sizes = [64, 32], strides = [1, 1]} : vector<128x32xf32> to vector<64x32xf32>
    %209 = vector.extract_strided_slice %207 {offsets = [64, 0], sizes = [64, 32], strides = [1, 1]} : vector<128x32xf32> to vector<64x32xf32>
    %210 = arith.addf %208, %209 : vector<64x32xf32>
    %211 = arith.truncf %210 : vector<64x32xf32> to vector<64x32xbf16>
    %cst_50 = arith.constant dense<0.000000e+00> : vector<30x32xf32>
    %212 = tpu.matmul %1, %211, %cst_50 {dimension_numbers = #tpu.dot_dimension_numbers<[1], [0], [0], [1], [0, 0, 1, 1], [], []>} : vector<30x64xbf16>, vector<64x32xbf16>, vector<30x32xf32> -> vector<30x32xf32>
    %213 = vector.extract_strided_slice %122 {offsets = [1920, 0], sizes = [128, 32], strides = [1, 1]} : vector<2048x32xf32> to vector<128x32xf32>
    %214 = vector.extract_strided_slice %213 {offsets = [0, 0], sizes = [64, 32], strides = [1, 1]} : vector<128x32xf32> to vector<64x32xf32>
    %215 = vector.extract_strided_slice %213 {offsets = [64, 0], sizes = [64, 32], strides = [1, 1]} : vector<128x32xf32> to vector<64x32xf32>
    %216 = arith.addf %214, %215 : vector<64x32xf32>
    %217 = arith.truncf %216 : vector<64x32xf32> to vector<64x32xbf16>
    %cst_51 = arith.constant dense<0.000000e+00> : vector<30x32xf32>
    %218 = tpu.matmul %1, %217, %cst_51 {dimension_numbers = #tpu.dot_dimension_numbers<[1], [0], [0], [1], [0, 0, 1, 1], [], []>} : vector<30x64xbf16>, vector<64x32xbf16>, vector<30x32xf32> -> vector<30x32xf32>
    %219 = tpu.concatenate %128, %134, %140, %146, %152, %158, %164, %170, %176, %182, %188, %194, %200, %206, %212, %218 in 0 : vector<30x32xf32>, vector<30x32xf32>, vector<30x32xf32>, vector<30x32xf32>, vector<30x32xf32>, vector<30x32xf32>, vector<30x32xf32>, vector<30x32xf32>, vector<30x32xf32>, vector<30x32xf32>, vector<30x32xf32>, vector<30x32xf32>, vector<30x32xf32>, vector<30x32xf32>, vector<30x32xf32>, vector<30x32xf32> -> vector<480x32xf32>
    %220 = arith.truncf %219 : vector<480x32xf32> to vector<480x32xbf16>
    %c0_52 = arith.constant 0 : index
    %c480 = arith.constant 480 : index
    %c0_53 = arith.constant 0 : index
    %221 = vector.load %arg5[%c0_52, %c480, %c0_53] : memref<1x960x32xbf16, #tpu.memory_space<vmem>>, vector<1x480x32xbf16>
    %222 = vector.shape_cast %221 : vector<1x480x32xbf16> to vector<480x32xbf16>
    %223 = vector.shape_cast %220 : vector<480x32xbf16> to vector<1x480x32xbf16>
    tpu.vector_store %arg5[%c0_52, %c480, %c0_53], %223 {strides = array<i32>} : memref<1x960x32xbf16, #tpu.memory_space<vmem>>, vector<1x480x32xbf16>,
    return
  }
  func.func @transform_0(%arg0: i32) -> (i32, i32, i32) {
    %c0_i32 = arith.constant 0 : i32
    %c0_i32_0 = arith.constant 0 : i32
    %c0_i32_1 = arith.constant 0 : i32
    return %arg0, %c0_i32, %c0_i32_0 : i32, i32, i32
  }
  func.func @transform_1(%arg0: i32) -> (i32, i32, i32) {
    %c0_i32 = arith.constant 0 : i32
    %c0_i32_0 = arith.constant 0 : i32
    %c0_i32_1 = arith.constant 0 : i32
    %c0_i32_2 = arith.constant 0 : i32
    return %c0_i32, %c0_i32_0, %c0_i32_1 : i32, i32, i32
  }
  func.func @transform_2(%arg0: i32) -> (i32, i32) {
    %c0_i32 = arith.constant 0 : i32
    %c0_i32_0 = arith.constant 0 : i32
    %c0_i32_1 = arith.constant 0 : i32
    return %c0_i32, %c0_i32_0 : i32, i32
  }
  func.func @transform_3(%arg0: i32) -> (i32, i32) {
    %c0_i32 = arith.constant 0 : i32
    %c0_i32_0 = arith.constant 0 : i32
    %c0_i32_1 = arith.constant 0 : i32
    return %c0_i32, %c0_i32_0 : i32, i32
  }
  func.func @transform_4(%arg0: i32) -> (i32, i32, i32) {
    %c0_i32 = arith.constant 0 : i32
    %c0_i32_0 = arith.constant 0 : i32
    %c0_i32_1 = arith.constant 0 : i32
    return %arg0, %c0_i32, %c0_i32_0 : i32, i32, i32
  }
}

</mosaic_0001>

<llo_original>
// kernel: tpu_custom_call.1
$region0: #{tpu_custom_call.1}
  #allocation0 [shape = 'u32[]', space=smem, size = 0x4, offset = 0x4, fixed_abs, tag = 'smem constant byte address 0x4 - core index']
  #allocation1 [shape = 'u32[144,128]{1,0:T(1,128)}', space=vmem, size = 0x12000, scoped, tag = 'internal scratch']
  %s0 = inlined_call_operand.vmem [shape: bf16[2,4096,48], index: 0, kind: input, shape index: {}]
  %s1 = inlined_call_operand.vmem [shape: bf16[1,48,32], index: 1, kind: input, shape index: {}]
  %s2 = inlined_call_operand.vmem [shape: f32[1,32], index: 2, kind: input, shape index: {}]
  %s3 = inlined_call_operand.vmem [shape: bf16[30,64], index: 3, kind: input, shape index: {}]
  %s4 = inlined_call_operand.vmem [shape: bf16[2,960,32], index: 4, kind: output, shape index: {}]
  %s5 = sld [smem:[#allocation0]]
  $region49: #{tpu_custom_call.1} parent=0
    _
  %s7 = ssub.s32 1, %s5
  %s8 = scalar_select 0, %s7, %s5
  loop: start=0, step=1, limit=4
  $region2: #{tpu_custom_call.1} parent=0 // loop_pre_header
    _
  $region3: #{tpu_custom_call.1} parent=0 // loop_header
    %s10 = sphi 0, %s14
    %p11 = scmp.ge.s32.totalorder %s10, 4
    %s20 = sphi 0, %s22
    %s23 = sphi 0, %s20
    %s24 = sphi 0, %s23
    %s40 = sphi 0, %s24
    %s44 = sphi 0, %s44
    %s46 = sphi 0, %s44
    %s47 = sphi 0, %s46
    %s61 = sphi 0, %s47
    %s65 = sphi 0, %s65
    %s67 = sphi 0, %s65
    %s68 = sphi 0, %s67
    %s82 = sphi 0, %s68
    %s86 = sphi 0, %s86
    %s88 = sphi 0, %s86
    %s89 = sphi 0, %s88
    %s103 = sphi 0, %s89
    %s109 = sphi 0, %s111
    %s112 = sphi 0, %s109
    %s113 = sphi 0, %s112
    %s129 = sphi 0, %s113
  $region4: #{tpu_custom_call.1} parent=0 // loop_header_branch
    %13 = sbr.rel (%p11) target = $region8
  $region5: #{tpu_custom_call.1} parent=0 // loop_body
    %s15 = ssub.s32 %s10, 1
    %s16 = ssub.s32 %s10, 2
    %s17 = sadd.s32 %s10, 1
    %s18 = ssub.s32 %s10, %s17
    %p19 = scmp.eq.s32.totalorder %s18, 0
    %s21 = sadd.s32 %s20, 1
    %s22 = scalar_select %p19, %s20, %s21
    %p25 = pneg %p19
    %p26 = scmp.eq.s32.totalorder %s10, 1
    %p27 = por %p25, %p26
    %p28 = scmp.ne.s32.totalorder %s20, %s23
    %p29 = scmp.eq.s32.totalorder %s10, 0
    %p30 = por %p28, %p29
    %p31 = scmp.ne.s32.totalorder %s20, %s23
    %p32 = scmp.eq.s32.totalorder %s15, 1
    %p33 = por %p31, %p32
    %p34 = scmp.ne.s32.totalorder %s23, %s24
    %p35 = scmp.eq.s32.totalorder %s15, 0
    %p36 = por %p34, %p35
    %p37 = scmp.ne.s32.totalorder %s23, %s24
    %p38 = scmp.eq.s32.totalorder %s16, 1
    %p39 = por %p37, %p38
    %p41 = scmp.ne.s32.totalorder %s24, %s40
    %p42 = scmp.eq.s32.totalorder %s16, 0
    %p43 = por %p41, %p42
    %s45 = sadd.s32 %s44, 1
    %p48 = scmp.eq.s32.totalorder %s10, 1
    %p49 = scmp.ne.s32.totalorder %s44, %s46
    %p50 = scmp.eq.s32.totalorder %s10, 0
    %p51 = por %p49, %p50
    %p52 = scmp.ne.s32.totalorder %s44, %s46
    %p53 = scmp.eq.s32.totalorder %s15, 1
    %p54 = por %p52, %p53
    %p55 = scmp.ne.s32.totalorder %s46, %s47
    %p56 = scmp.eq.s32.totalorder %s15, 0
    %p57 = por %p55, %p56
    %p58 = scmp.ne.s32.totalorder %s46, %s47
    %p59 = scmp.eq.s32.totalorder %s16, 1
    %p60 = por %p58, %p59
    %p62 = scmp.ne.s32.totalorder %s47, %s61
    %p63 = scmp.eq.s32.totalorder %s16, 0
    %p64 = por %p62, %p63
    %s66 = sadd.s32 %s65, 1
    %p69 = scmp.eq.s32.totalorder %s10, 1
    %p70 = scmp.ne.s32.totalorder %s65, %s67
    %p71 = scmp.eq.s32.totalorder %s10, 0
    %p72 = por %p70, %p71
    %p73 = scmp.ne.s32.totalorder %s65, %s67
    %p74 = scmp.eq.s32.totalorder %s15, 1
    %p75 = por %p73, %p74
    %p76 = scmp.ne.s32.totalorder %s67, %s68
    %p77 = scmp.eq.s32.totalorder %s15, 0
    %p78 = por %p76, %p77
    %p79 = scmp.ne.s32.totalorder %s67, %s68
    %p80 = scmp.eq.s32.totalorder %s16, 1
    %p81 = por %p79, %p80
    %p83 = scmp.ne.s32.totalorder %s68, %s82
    %p84 = scmp.eq.s32.totalorder %s16, 0
    %p85 = por %p83, %p84
    %s87 = sadd.s32 %s86, 1
    %p90 = scmp.eq.s32.totalorder %s10, 1
    %p91 = scmp.ne.s32.totalorder %s86, %s88
    %p92 = scmp.eq.s32.totalorder %s10, 0
    %p93 = por %p91, %p92
    %p94 = scmp.ne.s32.totalorder %s86, %s88
    %p95 = scmp.eq.s32.totalorder %s15, 1
    %p96 = por %p94, %p95
    %p97 = scmp.ne.s32.totalorder %s88, %s89
    %p98 = scmp.eq.s32.totalorder %s15, 0
    %p99 = por %p97, %p98
    %p100 = scmp.ne.s32.totalorder %s88, %s89
    %p101 = scmp.eq.s32.totalorder %s16, 1
    %p102 = por %p100, %p101
    %p104 = scmp.ne.s32.totalorder %s89, %s103
    %p105 = scmp.eq.s32.totalorder %s16, 0
    %p106 = por %p104, %p105
    %s107 = ssub.s32 %s10, %s17
    %p108 = scmp.eq.s32.totalorder %s107, 0
    %s110 = sadd.s32 %s109, 1
    %s111 = scalar_select %p108, %s109, %s110
    %p114 = pneg %p108
    %p115 = scmp.eq.s32.totalorder %s10, 1
    %p116 = por %p114, %p115
    %p117 = scmp.ne.s32.totalorder %s109, %s112
    %p118 = scmp.eq.s32.totalorder %s10, 0
    %p119 = por %p117, %p118
    %p120 = scmp.ne.s32.totalorder %s109, %s112
    %p121 = scmp.eq.s32.totalorder %s15, 1
    %p122 = por %p120, %p121
    %p123 = scmp.ne.s32.totalorder %s112, %s113
    %p124 = scmp.eq.s32.totalorder %s15, 0
    %p125 = por %p123, %p124
    %p126 = scmp.ne.s32.totalorder %s112, %s113
    %p127 = scmp.eq.s32.totalorder %s16, 1
    %p128 = por %p126, %p127
    %p130 = scmp.ne.s32.totalorder %s113, %s129
    %p131 = scmp.eq.s32.totalorder %s16, 0
    %p132 = por %p130, %p131
    %p133 = scmp.le.s32.totalorder 1, %s10
    %p134 = scmp.lt.s32.totalorder %s10, 3
    %p135 = pnand %p133, %p134
    %p136 = pneg %p135
    // Predicated region
    $region9: #{tpu_custom_call.1} parent=5 // pred_check
      _
    $region10: #{tpu_custom_call.1} parent=5 // pred_check_branch
      %138 = sbr.rel (%p135) target = $region12
    $region11: #{tpu_custom_call.1} parent=5 // pred_region
      %s139 = ssub.s32 %s10, 1
      // Predicated region
      $region13: #{tpu_custom_call.1} parent=11 // pred_check
        %p140 = pneg %p57
      $region14: #{tpu_custom_call.1} parent=11 // pred_check_branch
        %142 = sbr.rel (%p140) target = $region16
      $region15: #{tpu_custom_call.1} parent=11 // pred_region
        _
      $region16: #{tpu_custom_call.1} parent=11 // pred_fallthru
        _
      // Predicated region
      $region17: #{tpu_custom_call.1} parent=11 // pred_check
        %p143 = pneg %p78
      $region18: #{tpu_custom_call.1} parent=11 // pred_check_branch
        %145 = sbr.rel (%p143) target = $region20
      $region19: #{tpu_custom_call.1} parent=11 // pred_region
        _
      $region20: #{tpu_custom_call.1} parent=11 // pred_fallthru
        _
      // Predicated region
      $region21: #{tpu_custom_call.1} parent=11 // pred_check
        %p146 = pneg %p99
      $region22: #{tpu_custom_call.1} parent=11 // pred_check_branch
        %148 = sbr.rel (%p146) target = $region24
      $region23: #{tpu_custom_call.1} parent=11 // pred_region
        _
      $region24: #{tpu_custom_call.1} parent=11 // pred_fallthru
        _
    $region12: #{tpu_custom_call.1} parent=5 // pred_fallthru
      _
    %p149 = scmp.lt.s32.totalorder %s10, 2
    // Predicated region
    $region25: #{tpu_custom_call.1} parent=5 // pred_check
      %p150 = pneg %p149
    $region26: #{tpu_custom_call.1} parent=5 // pred_check_branch
      %152 = sbr.rel (%p150) target = $region28
    $region27: #{tpu_custom_call.1} parent=5 // pred_region
      // Predicated region
      $region29: #{tpu_custom_call.1} parent=27 // pred_check
        %p153 = pneg %p30
      $region30: #{tpu_custom_call.1} parent=27 // pred_check_branch
        %155 = sbr.rel (%p153) target = $region32
      $region31: #{tpu_custom_call.1} parent=27 // pred_region
        %p156 = scmp.lt.s32.totalorder %s10, 1
        %s157 = scalar_select %p156, %s10, 1
        %s158 = smul.addr %s157, 512
        %s159 = smul.addr %s158, 4
        %s160 = scalar_lea.vmem %s0, %s159
      $region32: #{tpu_custom_call.1} parent=27 // pred_fallthru
        _
    $region28: #{tpu_custom_call.1} parent=5 // pred_fallthru
      _
    %p161 = scmp.le.s32.totalorder 1, %s10
    %p162 = scmp.lt.s32.totalorder %s10, 3
    %p163 = pnand %p161, %p162
    %p164 = pneg %p163
    // Predicated region
    $region33: #{tpu_custom_call.1} parent=5 // pred_check
      _
    $region34: #{tpu_custom_call.1} parent=5 // pred_check_branch
      %166 = sbr.rel (%p163) target = $region36
    $region35: #{tpu_custom_call.1} parent=5 // pred_region
      %s167 = ssub.s32 %s10, 1
      %p168 = scmp.lt.s32.totalorder %s15, 1
      %s169 = scalar_select %p168, %s15, 1
      %s170 = smul.addr %s169, 512
      %s171 = smul.addr %s170, 4
      %s172 = scalar_lea.vmem %s0, %s171
      %p173 = pneg %p36
      %p174 = pneg %p33
      %p175 = pneg %p57
      %p176 = pneg %p54
      %p177 = pneg %p78
      %p178 = pneg %p75
      %p179 = pneg %p99
      %p180 = pneg %p96
      %p181 = pneg %p125
      %p182 = pneg %p122
      %p183 = scmp.lt.s32.totalorder %s15, 1
      %s184 = scalar_select %p183, %s15, 1
      %s185 = smul.addr %s184, 120
      %s186 = smul.addr %s185, 4
      %s187 = scalar_lea.vmem %s4, %s186
      %p188 = scmp.lt.s32.totalorder %s15, 1
      %s189 = scalar_select %p188, %s15, 1
      %s190 = smul.addr %s189, 512
      %s191 = smul.addr %s190, 4
      %s192 = scalar_lea.vmem %s0, %s191
      %p193 = scmp.lt.s32.totalorder %s15, 1
      %s194 = scalar_select %p193, %s15, 1
      %s195 = smul.addr %s194, 120
      %s196 = smul.addr %s195, 4
      %s197 = scalar_lea.vmem %s4, %s196
      %v199 = vld [vmem:[%s2] sm:$0x1]
      %v200 = vld [vmem:[%s3] sm:$0xf]
      %v201 = vld [vmem:[%s3 + $0x4] sm:$0xf]
      %v202 = vld [vmem:[%s3 + $0x8] sm:$0xf]
      %v203 = vld [vmem:[%s3 + $0xc] sm:$0x7]
      %v204 = vld [vmem:[%s192] sm:$0xf]
      %v205 = vld [vmem:[%s192 + $0x4] sm:$0xf]
      %v206 = vld [vmem:[%s192 + $0x8] sm:$0xf]
      %v207 = vld [vmem:[%s192 + $0xc] sm:$0xf]
      %v208 = vld [vmem:[%s192 + $0x10] sm:$0xf]
      %v209 = vld [vmem:[%s192 + $0x14] sm:$0xf]
      %v210 = vld [vmem:[%s192 + $0x18] sm:$0xf]
      %v211 = vld [vmem:[%s192 + $0x1c] sm:$0xf]
      %v212 = vld [vmem:[%s192 + $0x20] sm:$0xf]
      %v213 = vld [vmem:[%s192 + $0x24] sm:$0xf]
      %v214 = vld [vmem:[%s192 + $0x28] sm:$0xf]
      %v215 = vld [vmem:[%s192 + $0x2c] sm:$0xf]
      %v216 = vld [vmem:[%s192 + $0x30] sm:$0xf]
      %v217 = vld [vmem:[%s192 + $0x34] sm:$0xf]
      %v218 = vld [vmem:[%s192 + $0x38] sm:$0xf]
      %v219 = vld [vmem:[%s192 + $0x3c] sm:$0xf]
      %v220 = vld [vmem:[%s192 + $0x40] sm:$0xf]
      %v221 = vld [vmem:[%s192 + $0x44] sm:$0xf]
      %v222 = vld [vmem:[%s192 + $0x48] sm:$0xf]
      %v223 = vld [vmem:[%s192 + $0x4c] sm:$0xf]
      %v224 = vld [vmem:[%s192 + $0x50] sm:$0xf]
      %v225 = vld [vmem:[%s192 + $0x54] sm:$0xf]
      %v226 = vld [vmem:[%s192 + $0x58] sm:$0xf]
      %v227 = vld [vmem:[%s192 + $0x5c] sm:$0xf]
      %v228 = vld [vmem:[%s192 + $0x60] sm:$0xf]
      %v229 = vld [vmem:[%s192 + $0x64] sm:$0xf]
      %v230 = vld [vmem:[%s192 + $0x68] sm:$0xf]
      %v231 = vld [vmem:[%s192 + $0x6c] sm:$0xf]
      %v232 = vld [vmem:[%s192 + $0x70] sm:$0xf]
      %v233 = vld [vmem:[%s192 + $0x74] sm:$0xf]
      %v234 = vld [vmem:[%s192 + $0x78] sm:$0xf]
      %v235 = vld [vmem:[%s192 + $0x7c] sm:$0xf]
      %v236 = vld [vmem:[%s192 + $0x80] sm:$0xf]
      %v237 = vld [vmem:[%s192 + $0x84] sm:$0xf]
      %v238 = vld [vmem:[%s192 + $0x88] sm:$0xf]
      %v239 = vld [vmem:[%s192 + $0x8c] sm:$0xf]
      %v240 = vld [vmem:[%s192 + $0x90] sm:$0xf]
      %v241 = vld [vmem:[%s192 + $0x94] sm:$0xf]
      %v242 = vld [vmem:[%s192 + $0x98] sm:$0xf]
      %v243 = vld [vmem:[%s192 + $0x9c] sm:$0xf]
      %v244 = vld [vmem:[%s192 + $0xa0] sm:$0xf]
      %v245 = vld [vmem:[%s192 + $0xa4] sm:$0xf]
      %v246 = vld [vmem:[%s192 + $0xa8] sm:$0xf]
      %v247 = vld [vmem:[%s192 + $0xac] sm:$0xf]
      %v248 = vld [vmem:[%s192 + $0xb0] sm:$0xf]
      %v249 = vld [vmem:[%s192 + $0xb4] sm:$0xf]
      %v250 = vld [vmem:[%s192 + $0xb8] sm:$0xf]
      %v251 = vld [vmem:[%s192 + $0xbc] sm:$0xf]
      %v252 = vld [vmem:[%s192 + $0xc0] sm:$0xf]
      %v253 = vld [vmem:[%s192 + $0xc4] sm:$0xf]
      %v254 = vld [vmem:[%s192 + $0xc8] sm:$0xf]
      %v255 = vld [vmem:[%s192 + $0xcc] sm:$0xf]
      %v256 = vld [vmem:[%s192 + $0xd0] sm:$0xf]
      %v257 = vld [vmem:[%s192 + $0xd4] sm:$0xf]
      %v258 = vld [vmem:[%s192 + $0xd8] sm:$0xf]
      %v259 = vld [vmem:[%s192 + $0xdc] sm:$0xf]
      %v260 = vld [vmem:[%s192 + $0xe0] sm:$0xf]
      %v261 = vld [vmem:[%s192 + $0xe4] sm:$0xf]
      %v262 = vld [vmem:[%s192 + $0xe8] sm:$0xf]
      %v263 = vld [vmem:[%s192 + $0xec] sm:$0xf]
      %v264 = vld [vmem:[%s192 + $0xf0] sm:$0xf]
      %v265 = vld [vmem:[%s192 + $0xf4] sm:$0xf]
      %v266 = vld [vmem:[%s192 + $0xf8] sm:$0xf]
      %v267 = vld [vmem:[%s192 + $0xfc] sm:$0xf]
      %v268 = vld [vmem:[%s192 + $0x100] sm:$0xf]
      %v269 = vld [vmem:[%s192 + $0x104] sm:$0xf]
      %v270 = vld [vmem:[%s192 + $0x108] sm:$0xf]
      %v271 = vld [vmem:[%s192 + $0x10c] sm:$0xf]
      %v272 = vld [vmem:[%s192 + $0x110] sm:$0xf]
      %v273 = vld [vmem:[%s192 + $0x114] sm:$0xf]
      %v274 = vld [vmem:[%s192 + $0x118] sm:$0xf]
      %v275 = vld [vmem:[%s192 + $0x11c] sm:$0xf]
      %v276 = vld [vmem:[%s192 + $0x120] sm:$0xf]
      %v277 = vld [vmem:[%s192 + $0x124] sm:$0xf]
      %v278 = vld [vmem:[%s192 + $0x128] sm:$0xf]
      %v279 = vld [vmem:[%s192 + $0x12c] sm:$0xf]
      %v280 = vld [vmem:[%s192 + $0x130] sm:$0xf]
      %v281 = vld [vmem:[%s192 + $0x134] sm:$0xf]
      %v282 = vld [vmem:[%s192 + $0x138] sm:$0xf]
      %v283 = vld [vmem:[%s192 + $0x13c] sm:$0xf]
      %v284 = vld [vmem:[%s192 + $0x140] sm:$0xf]
      %v285 = vld [vmem:[%s192 + $0x144] sm:$0xf]
      %v286 = vld [vmem:[%s192 + $0x148] sm:$0xf]
      %v287 = vld [vmem:[%s192 + $0x14c] sm:$0xf]
      %v288 = vld [vmem:[%s192 + $0x150] sm:$0xf]
      %v289 = vld [vmem:[%s192 + $0x154] sm:$0xf]
      %v290 = vld [vmem:[%s192 + $0x158] sm:$0xf]
      %v291 = vld [vmem:[%s192 + $0x15c] sm:$0xf]
      %v292 = vld [vmem:[%s192 + $0x160] sm:$0xf]
      %v293 = vld [vmem:[%s192 + $0x164] sm:$0xf]
      %v294 = vld [vmem:[%s192 + $0x168] sm:$0xf]
      %v295 = vld [vmem:[%s192 + $0x16c] sm:$0xf]
      %v296 = vld [vmem:[%s192 + $0x170] sm:$0xf]
      %v297 = vld [vmem:[%s192 + $0x174] sm:$0xf]
      %v298 = vld [vmem:[%s192 + $0x178] sm:$0xf]
      %v299 = vld [vmem:[%s192 + $0x17c] sm:$0xf]
      %v300 = vld [vmem:[%s192 + $0x180] sm:$0xf]
      %v301 = vld [vmem:[%s192 + $0x184] sm:$0xf]
      %v302 = vld [vmem:[%s192 + $0x188] sm:$0xf]
      %v303 = vld [vmem:[%s192 + $0x18c] sm:$0xf]
      %v304 = vld [vmem:[%s192 + $0x190] sm:$0xf]
      %v305 = vld [vmem:[%s192 + $0x194] sm:$0xf]
      %v306 = vld [vmem:[%s192 + $0x198] sm:$0xf]
      %v307 = vld [vmem:[%s192 + $0x19c] sm:$0xf]
      %v308 = vld [vmem:[%s192 + $0x1a0] sm:$0xf]
      %v309 = vld [vmem:[%s192 + $0x1a4] sm:$0xf]
      %v310 = vld [vmem:[%s192 + $0x1a8] sm:$0xf]
      %v311 = vld [vmem:[%s192 + $0x1ac] sm:$0xf]
      %v312 = vld [vmem:[%s192 + $0x1b0] sm:$0xf]
      %v313 = vld [vmem:[%s192 + $0x1b4] sm:$0xf]
      %v314 = vld [vmem:[%s192 + $0x1b8] sm:$0xf]
      %v315 = vld [vmem:[%s192 + $0x1bc] sm:$0xf]
      %v316 = vld [vmem:[%s192 + $0x1c0] sm:$0xf]
      %v317 = vld [vmem:[%s192 + $0x1c4] sm:$0xf]
      %v318 = vld [vmem:[%s192 + $0x1c8] sm:$0xf]
      %v319 = vld [vmem:[%s192 + $0x1cc] sm:$0xf]
      %v320 = vld [vmem:[%s192 + $0x1d0] sm:$0xf]
      %v321 = vld [vmem:[%s192 + $0x1d4] sm:$0xf]
      %v322 = vld [vmem:[%s192 + $0x1d8] sm:$0xf]
      %v323 = vld [vmem:[%s192 + $0x1dc] sm:$0xf]
      %v324 = vld [vmem:[%s192 + $0x1e0] sm:$0xf]
      %v325 = vld [vmem:[%s192 + $0x1e4] sm:$0xf]
      %v326 = vld [vmem:[%s192 + $0x1e8] sm:$0xf]
      %v327 = vld [vmem:[%s192 + $0x1ec] sm:$0xf]
      %v328 = vld [vmem:[%s192 + $0x1f0] sm:$0xf]
      %v329 = vld [vmem:[%s192 + $0x1f4] sm:$0xf]
      %v330 = vld [vmem:[%s192 + $0x1f8] sm:$0xf]
      %v331 = vld [vmem:[%s192 + $0x1fc] sm:$0xf]
      %v332 = vld [vmem:[%s192 + $0x200] sm:$0xf]
      %v333 = vld [vmem:[%s192 + $0x204] sm:$0xf]
      %v334 = vld [vmem:[%s192 + $0x208] sm:$0xf]
      %v335 = vld [vmem:[%s192 + $0x20c] sm:$0xf]
      %v336 = vld [vmem:[%s192 + $0x210] sm:$0xf]
      %v337 = vld [vmem:[%s192 + $0x214] sm:$0xf]
      %v338 = vld [vmem:[%s192 + $0x218] sm:$0xf]
      %v339 = vld [vmem:[%s192 + $0x21c] sm:$0xf]
      %v340 = vld [vmem:[%s192 + $0x220] sm:$0xf]
      %v341 = vld [vmem:[%s192 + $0x224] sm:$0xf]
      %v342 = vld [vmem:[%s192 + $0x228] sm:$0xf]
      %v343 = vld [vmem:[%s192 + $0x22c] sm:$0xf]
      %v344 = vld [vmem:[%s192 + $0x230] sm:$0xf]
      %v345 = vld [vmem:[%s192 + $0x234] sm:$0xf]
      %v346 = vld [vmem:[%s192 + $0x238] sm:$0xf]
      %v347 = vld [vmem:[%s192 + $0x23c] sm:$0xf]
      %v348 = vld [vmem:[%s192 + $0x240] sm:$0xf]
      %v349 = vld [vmem:[%s192 + $0x244] sm:$0xf]
      %v350 = vld [vmem:[%s192 + $0x248] sm:$0xf]
      %v351 = vld [vmem:[%s192 + $0x24c] sm:$0xf]
      %v352 = vld [vmem:[%s192 + $0x250] sm:$0xf]
      %v353 = vld [vmem:[%s192 + $0x254] sm:$0xf]
      %v354 = vld [vmem:[%s192 + $0x258] sm:$0xf]
      %v355 = vld [vmem:[%s192 + $0x25c] sm:$0xf]
      %v356 = vld [vmem:[%s192 + $0x260] sm:$0xf]
      %v357 = vld [vmem:[%s192 + $0x264] sm:$0xf]
      %v358 = vld [vmem:[%s192 + $0x268] sm:$0xf]
      %v359 = vld [vmem:[%s192 + $0x26c] sm:$0xf]
      %v360 = vld [vmem:[%s192 + $0x270] sm:$0xf]
      %v361 = vld [vmem:[%s192 + $0x274] sm:$0xf]
      %v362 = vld [vmem:[%s192 + $0x278] sm:$0xf]
      %v363 = vld [vmem:[%s192 + $0x27c] sm:$0xf]
      %v364 = vld [vmem:[%s192 + $0x280] sm:$0xf]
      %v365 = vld [vmem:[%s192 + $0x284] sm:$0xf]
      %v366 = vld [vmem:[%s192 + $0x288] sm:$0xf]
      %v367 = vld [vmem:[%s192 + $0x28c] sm:$0xf]
      %v368 = vld [vmem:[%s192 + $0x290] sm:$0xf]
      %v369 = vld [vmem:[%s192 + $0x294] sm:$0xf]
      %v370 = vld [vmem:[%s192 + $0x298] sm:$0xf]
      %v371 = vld [vmem:[%s192 + $0x29c] sm:$0xf]
      %v372 = vld [vmem:[%s192 + $0x2a0] sm:$0xf]
      %v373 = vld [vmem:[%s192 + $0x2a4] sm:$0xf]
      %v374 = vld [vmem:[%s192 + $0x2a8] sm:$0xf]
      %v375 = vld [vmem:[%s192 + $0x2ac] sm:$0xf]
      %v376 = vld [vmem:[%s192 + $0x2b0] sm:$0xf]
      %v377 = vld [vmem:[%s192 + $0x2b4] sm:$0xf]
      %v378 = vld [vmem:[%s192 + $0x2b8] sm:$0xf]
      %v379 = vld [vmem:[%s192 + $0x2bc] sm:$0xf]
      %v380 = vld [vmem:[%s192 + $0x2c0] sm:$0xf]
      %v381 = vld [vmem:[%s192 + $0x2c4] sm:$0xf]
      %v382 = vld [vmem:[%s192 + $0x2c8] sm:$0xf]
      %v383 = vld [vmem:[%s192 + $0x2cc] sm:$0xf]
      %v384 = vld [vmem:[%s192 + $0x2d0] sm:$0xf]
      %v385 = vld [vmem:[%s192 + $0x2d4] sm:$0xf]
      %v386 = vld [vmem:[%s192 + $0x2d8] sm:$0xf]
      %v387 = vld [vmem:[%s192 + $0x2dc] sm:$0xf]
      %v388 = vld [vmem:[%s192 + $0x2e0] sm:$0xf]
      %v389 = vld [vmem:[%s192 + $0x2e4] sm:$0xf]
      %v390 = vld [vmem:[%s192 + $0x2e8] sm:$0xf]
      %v391 = vld [vmem:[%s192 + $0x2ec] sm:$0xf]
      %v392 = vld [vmem:[%s192 + $0x2f0] sm:$0xf]
      %v393 = vld [vmem:[%s192 + $0x2f4] sm:$0xf]
      %v394 = vld [vmem:[%s192 + $0x2f8] sm:$0xf]
      %v395 = vld [vmem:[%s192 + $0x2fc] sm:$0xf]
      %v396 = vld [vmem:[%s192 + $0x300] sm:$0xf]
      %v397 = vld [vmem:[%s192 + $0x304] sm:$0xf]
      %v398 = vld [vmem:[%s192 + $0x308] sm:$0xf]
      %v399 = vld [vmem:[%s192 + $0x30c] sm:$0xf]
      %v400 = vld [vmem:[%s192 + $0x310] sm:$0xf]
      %v401 = vld [vmem:[%s192 + $0x314] sm:$0xf]
      %v402 = vld [vmem:[%s192 + $0x318] sm:$0xf]
      %v403 = vld [vmem:[%s192 + $0x31c] sm:$0xf]
      %v404 = vld [vmem:[%s192 + $0x320] sm:$0xf]
      %v405 = vld [vmem:[%s192 + $0x324] sm:$0xf]
      %v406 = vld [vmem:[%s192 + $0x328] sm:$0xf]
      %v407 = vld [vmem:[%s192 + $0x32c] sm:$0xf]
      %v408 = vld [vmem:[%s192 + $0x330] sm:$0xf]
      %v409 = vld [vmem:[%s192 + $0x334] sm:$0xf]
      %v410 = vld [vmem:[%s192 + $0x338] sm:$0xf]
      %v411 = vld [vmem:[%s192 + $0x33c] sm:$0xf]
      %v412 = vld [vmem:[%s192 + $0x340] sm:$0xf]
      %v413 = vld [vmem:[%s192 + $0x344] sm:$0xf]
      %v414 = vld [vmem:[%s192 + $0x348] sm:$0xf]
      %v415 = vld [vmem:[%s192 + $0x34c] sm:$0xf]
      %v416 = vld [vmem:[%s192 + $0x350] sm:$0xf]
      %v417 = vld [vmem:[%s192 + $0x354] sm:$0xf]
      %v418 = vld [vmem:[%s192 + $0x358] sm:$0xf]
      %v419 = vld [vmem:[%s192 + $0x35c] sm:$0xf]
      %v420 = vld [vmem:[%s192 + $0x360] sm:$0xf]
      %v421 = vld [vmem:[%s192 + $0x364] sm:$0xf]
      %v422 = vld [vmem:[%s192 + $0x368] sm:$0xf]
      %v423 = vld [vmem:[%s192 + $0x36c] sm:$0xf]
      %v424 = vld [vmem:[%s192 + $0x370] sm:$0xf]
      %v425 = vld [vmem:[%s192 + $0x374] sm:$0xf]
      %v426 = vld [vmem:[%s192 + $0x378] sm:$0xf]
      %v427 = vld [vmem:[%s192 + $0x37c] sm:$0xf]
      %v428 = vld [vmem:[%s192 + $0x380] sm:$0xf]
      %v429 = vld [vmem:[%s192 + $0x384] sm:$0xf]
      %v430 = vld [vmem:[%s192 + $0x388] sm:$0xf]
      %v431 = vld [vmem:[%s192 + $0x38c] sm:$0xf]
      %v432 = vld [vmem:[%s192 + $0x390] sm:$0xf]
      %v433 = vld [vmem:[%s192 + $0x394] sm:$0xf]
      %v434 = vld [vmem:[%s192 + $0x398] sm:$0xf]
      %v435 = vld [vmem:[%s192 + $0x39c] sm:$0xf]
      %v436 = vld [vmem:[%s192 + $0x3a0] sm:$0xf]
      %v437 = vld [vmem:[%s192 + $0x3a4] sm:$0xf]
      %v438 = vld [vmem:[%s192 + $0x3a8] sm:$0xf]
      %v439 = vld [vmem:[%s192 + $0x3ac] sm:$0xf]
      %v440 = vld [vmem:[%s192 + $0x3b0] sm:$0xf]
      %v441 = vld [vmem:[%s192 + $0x3b4] sm:$0xf]
      %v442 = vld [vmem:[%s192 + $0x3b8] sm:$0xf]
      %v443 = vld [vmem:[%s192 + $0x3bc] sm:$0xf]
      %v444 = vld [vmem:[%s192 + $0x3c0] sm:$0xf]
      %v445 = vld [vmem:[%s192 + $0x3c4] sm:$0xf]
      %v446 = vld [vmem:[%s192 + $0x3c8] sm:$0xf]
      %v447 = vld [vmem:[%s192 + $0x3cc] sm:$0xf]
      %v448 = vld [vmem:[%s192 + $0x3d0] sm:$0xf]
      %v449 = vld [vmem:[%s192 + $0x3d4] sm:$0xf]
      %v450 = vld [vmem:[%s192 + $0x3d8] sm:$0xf]
      %v451 = vld [vmem:[%s192 + $0x3dc] sm:$0xf]
      %v452 = vld [vmem:[%s192 + $0x3e0] sm:$0xf]
      %v453 = vld [vmem:[%s192 + $0x3e4] sm:$0xf]
      %v454 = vld [vmem:[%s192 + $0x3e8] sm:$0xf]
      %v455 = vld [vmem:[%s192 + $0x3ec] sm:$0xf]
      %v456 = vld [vmem:[%s192 + $0x3f0] sm:$0xf]
      %v457 = vld [vmem:[%s192 + $0x3f4] sm:$0xf]
      %v458 = vld [vmem:[%s192 + $0x3f8] sm:$0xf]
      %v459 = vld [vmem:[%s192 + $0x3fc] sm:$0xf]
      %v460 = vld [vmem:[%s1] sm:$0xf]
      %v461 = vld [vmem:[%s1 + $0x4] sm:$0xf]
      %v462 = vld [vmem:[%s1 + $0x8] sm:$0xf]
      %v463 = vld [vmem:[%s1 + $0xc] sm:$0xf]
      %v464 = vld [vmem:[%s1 + $0x10] sm:$0xf]
      %v465 = vld [vmem:[%s1 + $0x14] sm:$0xf]
      %v467 = vlaneseq
      %v468 = vshrl.u32 %v467, 7
      %v469 = vsub.s32 0, %v468
      %v470 = vrot.slane %v199, %v469
      %v728 = vunpack.c.l.b16 %v204
      %v729 = vunpack.c.l.b16 %v205
      %v730 = vunpack.c.l.b16 %v206
      %v731 = vunpack.c.l.b16 %v207
      %v732 = vunpack.c.l.b16 %v208
      %v733 = vunpack.c.l.b16 %v209
      %v734 = vunpack.c.l.b16 %v210
      %v735 = vunpack.c.l.b16 %v211
      %v736 = vunpack.c.l.b16 %v212
      %v737 = vunpack.c.l.b16 %v213
      %v738 = vunpack.c.l.b16 %v214
      %v739 = vunpack.c.l.b16 %v215
      %v740 = vunpack.c.l.b16 %v216
      %v741 = vunpack.c.l.b16 %v217
      %v742 = vunpack.c.l.b16 %v218
      %v743 = vunpack.c.l.b16 %v219
      %v744 = vunpack.c.l.b16 %v220
      %v745 = vunpack.c.l.b16 %v221
      %v746 = vunpack.c.l.b16 %v222
      %v747 = vunpack.c.l.b16 %v223
      %v748 = vunpack.c.l.b16 %v224
      %v749 = vunpack.c.l.b16 %v225
      %v750 = vunpack.c.l.b16 %v226
      %v751 = vunpack.c.l.b16 %v227
      %v752 = vunpack.c.l.b16 %v228
      %v753 = vunpack.c.l.b16 %v229
      %v754 = vunpack.c.l.b16 %v230
      %v755 = vunpack.c.l.b16 %v231
      %v756 = vunpack.c.l.b16 %v232
      %v757 = vunpack.c.l.b16 %v233
      %v758 = vunpack.c.l.b16 %v234
      %v759 = vunpack.c.l.b16 %v235
      %v760 = vunpack.c.l.b16 %v236
      %v761 = vunpack.c.l.b16 %v237
      %v762 = vunpack.c.l.b16 %v238
      %v763 = vunpack.c.l.b16 %v239
      %v764 = vunpack.c.l.b16 %v240
      %v765 = vunpack.c.l.b16 %v241
      %v766 = vunpack.c.l.b16 %v242
      %v767 = vunpack.c.l.b16 %v243
      %v768 = vunpack.c.l.b16 %v244
      %v769 = vunpack.c.l.b16 %v245
      %v770 = vunpack.c.l.b16 %v246
      %v771 = vunpack.c.l.b16 %v247
      %v772 = vunpack.c.l.b16 %v248
      %v773 = vunpack.c.l.b16 %v249
      %v774 = vunpack.c.l.b16 %v250
      %v775 = vunpack.c.l.b16 %v251
      %v776 = vunpack.c.l.b16 %v252
      %v777 = vunpack.c.l.b16 %v253
      %v778 = vunpack.c.l.b16 %v254
      %v779 = vunpack.c.l.b16 %v255
      %v780 = vunpack.c.l.b16 %v256
      %v781 = vunpack.c.l.b16 %v257
      %v782 = vunpack.c.l.b16 %v258
      %v783 = vunpack.c.l.b16 %v259
      %v784 = vunpack.c.l.b16 %v260
      %v785 = vunpack.c.l.b16 %v261
      %v786 = vunpack.c.l.b16 %v262
      %v787 = vunpack.c.l.b16 %v263
      %v788 = vunpack.c.l.b16 %v264
      %v789 = vunpack.c.l.b16 %v265
      %v790 = vunpack.c.l.b16 %v266
      %v791 = vunpack.c.l.b16 %v267
      %v792 = vunpack.c.l.b16 %v268
      %v793 = vunpack.c.l.b16 %v269
      %v794 = vunpack.c.l.b16 %v270
      %v795 = vunpack.c.l.b16 %v271
      %v796 = vunpack.c.l.b16 %v272
      %v797 = vunpack.c.l.b16 %v273
      %v798 = vunpack.c.l.b16 %v274
      %v799 = vunpack.c.l.b16 %v275
      %v800 = vunpack.c.l.b16 %v276
      %v801 = vunpack.c.l.b16 %v277
      %v802 = vunpack.c.l.b16 %v278
      %v803 = vunpack.c.l.b16 %v279
      %v804 = vunpack.c.l.b16 %v280
      %v805 = vunpack.c.l.b16 %v281
      %v806 = vunpack.c.l.b16 %v282
      %v807 = vunpack.c.l.b16 %v283
      %v808 = vunpack.c.l.b16 %v284
      %v809 = vunpack.c.l.b16 %v285
      %v810 = vunpack.c.l.b16 %v286
      %v811 = vunpack.c.l.b16 %v287
      %v812 = vunpack.c.l.b16 %v288
      %v813 = vunpack.c.l.b16 %v289
      %v814 = vunpack.c.l.b16 %v290
      %v815 = vunpack.c.l.b16 %v291
      %v816 = vunpack.c.l.b16 %v292
      %v817 = vunpack.c.l.b16 %v293
      %v818 = vunpack.c.l.b16 %v294
      %v819 = vunpack.c.l.b16 %v295
      %v820 = vunpack.c.l.b16 %v296
      %v821 = vunpack.c.l.b16 %v297
      %v822 = vunpack.c.l.b16 %v298
      %v823 = vunpack.c.l.b16 %v299
      %v824 = vunpack.c.l.b16 %v300
      %v825 = vunpack.c.l.b16 %v301
      %v826 = vunpack.c.l.b16 %v302
      %v827 = vunpack.c.l.b16 %v303
      %v828 = vunpack.c.l.b16 %v304
      %v829 = vunpack.c.l.b16 %v305
      %v830 = vunpack.c.l.b16 %v306
      %v831 = vunpack.c.l.b16 %v307
      %v832 = vunpack.c.l.b16 %v308
      %v833 = vunpack.c.l.b16 %v309
      %v834 = vunpack.c.l.b16 %v310
      %v835 = vunpack.c.l.b16 %v311
      %v836 = vunpack.c.l.b16 %v312
      %v837 = vunpack.c.l.b16 %v313
      %v838 = vunpack.c.l.b16 %v314
      %v839 = vunpack.c.l.b16 %v315
      %v840 = vunpack.c.l.b16 %v316
      %v841 = vunpack.c.l.b16 %v317
      %v842 = vunpack.c.l.b16 %v318
      %v843 = vunpack.c.l.b16 %v319
      %v844 = vunpack.c.l.b16 %v320
      %v845 = vunpack.c.l.b16 %v321
      %v846 = vunpack.c.l.b16 %v322
      %v847 = vunpack.c.l.b16 %v323
      %v848 = vunpack.c.l.b16 %v324
      %v849 = vunpack.c.l.b16 %v325
      %v850 = vunpack.c.l.b16 %v326
      %v851 = vunpack.c.l.b16 %v327
      %v852 = vunpack.c.l.b16 %v328
      %v853 = vunpack.c.l.b16 %v329
      %v854 = vunpack.c.l.b16 %v330
      %v855 = vunpack.c.l.b16 %v331
      %v856 = vunpack.c.l.b16 %v332
      %v857 = vunpack.c.l.b16 %v333
      %v858 = vunpack.c.l.b16 %v334
      %v859 = vunpack.c.l.b16 %v335
      %v860 = vunpack.c.l.b16 %v336
      %v861 = vunpack.c.l.b16 %v337
      %v862 = vunpack.c.l.b16 %v338
      %v863 = vunpack.c.l.b16 %v339
      %v864 = vunpack.c.l.b16 %v340
      %v865 = vunpack.c.l.b16 %v341
      %v866 = vunpack.c.l.b16 %v342
      %v867 = vunpack.c.l.b16 %v343
      %v868 = vunpack.c.l.b16 %v344
      %v869 = vunpack.c.l.b16 %v345
      %v870 = vunpack.c.l.b16 %v346
      %v871 = vunpack.c.l.b16 %v347
      %v872 = vunpack.c.l.b16 %v348
      %v873 = vunpack.c.l.b16 %v349
      %v874 = vunpack.c.l.b16 %v350
      %v875 = vunpack.c.l.b16 %v351
      %v876 = vunpack.c.l.b16 %v352
      %v877 = vunpack.c.l.b16 %v353
      %v878 = vunpack.c.l.b16 %v354
      %v879 = vunpack.c.l.b16 %v355
      %v880 = vunpack.c.l.b16 %v356
      %v881 = vunpack.c.l.b16 %v357
      %v882 = vunpack.c.l.b16 %v358
      %v883 = vunpack.c.l.b16 %v359
      %v884 = vunpack.c.l.b16 %v360
      %v885 = vunpack.c.l.b16 %v361
      %v886 = vunpack.c.l.b16 %v362
      %v887 = vunpack.c.l.b16 %v363
      %v888 = vunpack.c.l.b16 %v364
      %v889 = vunpack.c.l.b16 %v365
      %v890 = vunpack.c.l.b16 %v366
      %v891 = vunpack.c.l.b16 %v367
      %v892 = vunpack.c.l.b16 %v368
      %v893 = vunpack.c.l.b16 %v369
      %v894 = vunpack.c.l.b16 %v370
      %v895 = vunpack.c.l.b16 %v371
      %v896 = vunpack.c.l.b16 %v372
      %v897 = vunpack.c.l.b16 %v373
      %v898 = vunpack.c.l.b16 %v374
      %v899 = vunpack.c.l.b16 %v375
      %v900 = vunpack.c.l.b16 %v376
      %v901 = vunpack.c.l.b16 %v377
      %v902 = vunpack.c.l.b16 %v378
      %v903 = vunpack.c.l.b16 %v379
      %v904 = vunpack.c.l.b16 %v380
      %v905 = vunpack.c.l.b16 %v381
      %v906 = vunpack.c.l.b16 %v382
      %v907 = vunpack.c.l.b16 %v383
      %v908 = vunpack.c.l.b16 %v384
      %v909 = vunpack.c.l.b16 %v385
      %v910 = vunpack.c.l.b16 %v386
      %v911 = vunpack.c.l.b16 %v387
      %v912 = vunpack.c.l.b16 %v388
      %v913 = vunpack.c.l.b16 %v389
      %v914 = vunpack.c.l.b16 %v390
      %v915 = vunpack.c.l.b16 %v391
      %v916 = vunpack.c.l.b16 %v392
      %v917 = vunpack.c.l.b16 %v393
      %v918 = vunpack.c.l.b16 %v394
      %v919 = vunpack.c.l.b16 %v395
      %v920 = vunpack.c.l.b16 %v396
      %v921 = vunpack.c.l.b16 %v397
      %v922 = vunpack.c.l.b16 %v398
      %v923 = vunpack.c.l.b16 %v399
      %v924 = vunpack.c.l.b16 %v400
      %v925 = vunpack.c.l.b16 %v401
      %v926 = vunpack.c.l.b16 %v402
      %v927 = vunpack.c.l.b16 %v403
      %v928 = vunpack.c.l.b16 %v404
      %v929 = vunpack.c.l.b16 %v405
      %v930 = vunpack.c.l.b16 %v406
      %v931 = vunpack.c.l.b16 %v407
      %v932 = vunpack.c.l.b16 %v408
      %v933 = vunpack.c.l.b16 %v409
      %v934 = vunpack.c.l.b16 %v410
      %v935 = vunpack.c.l.b16 %v411
      %v936 = vunpack.c.l.b16 %v412
      %v937 = vunpack.c.l.b16 %v413
      %v938 = vunpack.c.l.b16 %v414
      %v939 = vunpack.c.l.b16 %v415
      %v940 = vunpack.c.l.b16 %v416
      %v941 = vunpack.c.l.b16 %v417
      %v942 = vunpack.c.l.b16 %v418
      %v943 = vunpack.c.l.b16 %v419
      %v944 = vunpack.c.l.b16 %v420
      %v945 = vunpack.c.l.b16 %v421
      %v946 = vunpack.c.l.b16 %v422
      %v947 = vunpack.c.l.b16 %v423
      %v948 = vunpack.c.l.b16 %v424
      %v949 = vunpack.c.l.b16 %v425
      %v950 = vunpack.c.l.b16 %v426
      %v951 = vunpack.c.l.b16 %v427
      %v952 = vunpack.c.l.b16 %v428
      %v953 = vunpack.c.l.b16 %v429
      %v954 = vunpack.c.l.b16 %v430
      %v955 = vunpack.c.l.b16 %v431
      %v956 = vunpack.c.l.b16 %v432
      %v957 = vunpack.c.l.b16 %v433
      %v958 = vunpack.c.l.b16 %v434
      %v959 = vunpack.c.l.b16 %v435
      %v960 = vunpack.c.l.b16 %v436
      %v961 = vunpack.c.l.b16 %v437
      %v962 = vunpack.c.l.b16 %v438
      %v963 = vunpack.c.l.b16 %v439
      %v964 = vunpack.c.l.b16 %v440
      %v965 = vunpack.c.l.b16 %v441
      %v966 = vunpack.c.l.b16 %v442
      %v967 = vunpack.c.l.b16 %v443
      %v968 = vunpack.c.l.b16 %v444
      %v969 = vunpack.c.l.b16 %v445
      %v970 = vunpack.c.l.b16 %v446
      %v971 = vunpack.c.l.b16 %v447
      %v972 = vunpack.c.l.b16 %v448
      %v973 = vunpack.c.l.b16 %v449
      %v974 = vunpack.c.l.b16 %v450
      %v975 = vunpack.c.l.b16 %v451
      %v976 = vunpack.c.l.b16 %v452
      %v977 = vunpack.c.l.b16 %v453
      %v978 = vunpack.c.l.b16 %v454
      %v979 = vunpack.c.l.b16 %v455
      %v980 = vunpack.c.l.b16 %v456
      %v981 = vunpack.c.l.b16 %v457
      %v982 = vunpack.c.l.b16 %v458
      %v983 = vunpack.c.l.b16 %v459
      %v984 = vpack.c.b16 %v729, %v728
      %v985 = vpack.c.b16 %v731, %v730
      %v986 = vpack.c.b16 %v733, %v732
      %v987 = vpack.c.b16 %v735, %v734
      %v988 = vpack.c.b16 %v737, %v736
      %v989 = vpack.c.b16 %v739, %v738
      %v990 = vpack.c.b16 %v741, %v740
      %v991 = vpack.c.b16 %v743, %v742
      %v992 = vpack.c.b16 %v745, %v744
      %v993 = vpack.c.b16 %v747, %v746
      %v994 = vpack.c.b16 %v749, %v748
      %v995 = vpack.c.b16 %v751, %v750
      %v996 = vpack.c.b16 %v753, %v752
      %v997 = vpack.c.b16 %v755, %v754
      %v998 = vpack.c.b16 %v757, %v756
      %v999 = vpack.c.b16 %v759, %v758
      %v1000 = vpack.c.b16 %v761, %v760
      %v1001 = vpack.c.b16 %v763, %v762
      %v1002 = vpack.c.b16 %v765, %v764
      %v1003 = vpack.c.b16 %v767, %v766
      %v1004 = vpack.c.b16 %v769, %v768
      %v1005 = vpack.c.b16 %v771, %v770
      %v1006 = vpack.c.b16 %v773, %v772
      %v1007 = vpack.c.b16 %v775, %v774
      %v1008 = vpack.c.b16 %v777, %v776
      %v1009 = vpack.c.b16 %v779, %v778
      %v1010 = vpack.c.b16 %v781, %v780
      %v1011 = vpack.c.b16 %v783, %v782
      %v1012 = vpack.c.b16 %v785, %v784
      %v1013 = vpack.c.b16 %v787, %v786
      %v1014 = vpack.c.b16 %v789, %v788
      %v1015 = vpack.c.b16 %v791, %v790
      %v1016 = vpack.c.b16 %v793, %v792
      %v1017 = vpack.c.b16 %v795, %v794
      %v1018 = vpack.c.b16 %v797, %v796
      %v1019 = vpack.c.b16 %v799, %v798
      %v1020 = vpack.c.b16 %v801, %v800
      %v1021 = vpack.c.b16 %v803, %v802
      %v1022 = vpack.c.b16 %v805, %v804
      %v1023 = vpack.c.b16 %v807, %v806
      %v1024 = vpack.c.b16 %v809, %v808
      %v1025 = vpack.c.b16 %v811, %v810
      %v1026 = vpack.c.b16 %v813, %v812
      %v1027 = vpack.c.b16 %v815, %v814
      %v1028 = vpack.c.b16 %v817, %v816
      %v1029 = vpack.c.b16 %v819, %v818
      %v1030 = vpack.c.b16 %v821, %v820
      %v1031 = vpack.c.b16 %v823, %v822
      %v1032 = vpack.c.b16 %v825, %v824
      %v1033 = vpack.c.b16 %v827, %v826
      %v1034 = vpack.c.b16 %v829, %v828
      %v1035 = vpack.c.b16 %v831, %v830
      %v1036 = vpack.c.b16 %v833, %v832
      %v1037 = vpack.c.b16 %v835, %v834
      %v1038 = vpack.c.b16 %v837, %v836
      %v1039 = vpack.c.b16 %v839, %v838
      %v1040 = vpack.c.b16 %v841, %v840
      %v1041 = vpack.c.b16 %v843, %v842
      %v1042 = vpack.c.b16 %v845, %v844
      %v1043 = vpack.c.b16 %v847, %v846
      %v1044 = vpack.c.b16 %v849, %v848
      %v1045 = vpack.c.b16 %v851, %v850
      %v1046 = vpack.c.b16 %v853, %v852
      %v1047 = vpack.c.b16 %v855, %v854
      %v1048 = vpack.c.b16 %v857, %v856
      %v1049 = vpack.c.b16 %v859, %v858
      %v1050 = vpack.c.b16 %v861, %v860
      %v1051 = vpack.c.b16 %v863, %v862
      %v1052 = vpack.c.b16 %v865, %v864
      %v1053 = vpack.c.b16 %v867, %v866
      %v1054 = vpack.c.b16 %v869, %v868
      %v1055 = vpack.c.b16 %v871, %v870
      %v1056 = vpack.c.b16 %v873, %v872
      %v1057 = vpack.c.b16 %v875, %v874
      %v1058 = vpack.c.b16 %v877, %v876
      %v1059 = vpack.c.b16 %v879, %v878
      %v1060 = vpack.c.b16 %v881, %v880
      %v1061 = vpack.c.b16 %v883, %v882
      %v1062 = vpack.c.b16 %v885, %v884
      %v1063 = vpack.c.b16 %v887, %v886
      %v1064 = vpack.c.b16 %v889, %v888
      %v1065 = vpack.c.b16 %v891, %v890
      %v1066 = vpack.c.b16 %v893, %v892
      %v1067 = vpack.c.b16 %v895, %v894
      %v1068 = vpack.c.b16 %v897, %v896
      %v1069 = vpack.c.b16 %v899, %v898
      %v1070 = vpack.c.b16 %v901, %v900
      %v1071 = vpack.c.b16 %v903, %v902
      %v1072 = vpack.c.b16 %v905, %v904
      %v1073 = vpack.c.b16 %v907, %v906
      %v1074 = vpack.c.b16 %v909, %v908
      %v1075 = vpack.c.b16 %v911, %v910
      %v1076 = vpack.c.b16 %v913, %v912
      %v1077 = vpack.c.b16 %v915, %v914
      %v1078 = vpack.c.b16 %v917, %v916
      %v1079 = vpack.c.b16 %v919, %v918
      %v1080 = vpack.c.b16 %v921, %v920
      %v1081 = vpack.c.b16 %v923, %v922
      %v1082 = vpack.c.b16 %v925, %v924
      %v1083 = vpack.c.b16 %v927, %v926
      %v1084 = vpack.c.b16 %v929, %v928
      %v1085 = vpack.c.b16 %v931, %v930
      %v1086 = vpack.c.b16 %v933, %v932
      %v1087 = vpack.c.b16 %v935, %v934
      %v1088 = vpack.c.b16 %v937, %v936
      %v1089 = vpack.c.b16 %v939, %v938
      %v1090 = vpack.c.b16 %v941, %v940
      %v1091 = vpack.c.b16 %v943, %v942
      %v1092 = vpack.c.b16 %v945, %v944
      %v1093 = vpack.c.b16 %v947, %v946
      %v1094 = vpack.c.b16 %v949, %v948
      %v1095 = vpack.c.b16 %v951, %v950
      %v1096 = vpack.c.b16 %v953, %v952
      %v1097 = vpack.c.b16 %v955, %v954
      %v1098 = vpack.c.b16 %v957, %v956
      %v1099 = vpack.c.b16 %v959, %v958
      %v1100 = vpack.c.b16 %v961, %v960
      %v1101 = vpack.c.b16 %v963, %v962
      %v1102 = vpack.c.b16 %v965, %v964
      %v1103 = vpack.c.b16 %v967, %v966
      %v1104 = vpack.c.b16 %v969, %v968
      %v1105 = vpack.c.b16 %v971, %v970
      %v1106 = vpack.c.b16 %v973, %v972
      %v1107 = vpack.c.b16 %v975, %v974
      %v1108 = vpack.c.b16 %v977, %v976
      %v1109 = vpack.c.b16 %v979, %v978
      %v1110 = vpack.c.b16 %v981, %v980
      %v1111 = vpack.c.b16 %v983, %v982
      %v1118 = vunpack.c.l.b16 %v460
      %v1119 = vunpack.c.l.b16 %v461
      %v1120 = vunpack.c.l.b16 %v462
      %v1121 = vunpack.c.l.b16 %v463
      %v1122 = vunpack.c.l.b16 %v464
      %v1123 = vunpack.c.l.b16 %v465
      %v1124 = vpack.c.b16 %v1119, %v1118
      %v1125 = vpack.c.b16 %v1121, %v1120
      %v1126 = vpack.c.b16 %v1123, %v1122
      %vm1130 = vcmask 392192
      %v1132 = vsel %vm1130, %v984, 0
      %v1135 = vsel %vm1130, %v985, 0
      %v1138 = vsel %vm1130, %v986, 0
      %v1141 = vsel %vm1130, %v987, 0
      %v1144 = vsel %vm1130, %v988, 0
      %v1147 = vsel %vm1130, %v989, 0
      %v1150 = vsel %vm1130, %v990, 0
      %v1153 = vsel %vm1130, %v991, 0
      %v1156 = vsel %vm1130, %v992, 0
      %v1159 = vsel %vm1130, %v993, 0
      %v1162 = vsel %vm1130, %v994, 0
      %v1165 = vsel %vm1130, %v995, 0
      %v1168 = vsel %vm1130, %v996, 0
      %v1171 = vsel %vm1130, %v997, 0
      %v1174 = vsel %vm1130, %v998, 0
      %v1177 = vsel %vm1130, %v999, 0
      %v1180 = vsel %vm1130, %v1000, 0
      %v1183 = vsel %vm1130, %v1001, 0
      %v1186 = vsel %vm1130, %v1002, 0
      %v1189 = vsel %vm1130, %v1003, 0
      %v1192 = vsel %vm1130, %v1004, 0
      %v1195 = vsel %vm1130, %v1005, 0
      %v1198 = vsel %vm1130, %v1006, 0
      %v1201 = vsel %vm1130, %v1007, 0
      %v1204 = vsel %vm1130, %v1008, 0
      %v1207 = vsel %vm1130, %v1009, 0
      %v1210 = vsel %vm1130, %v1010, 0
      %v1213 = vsel %vm1130, %v1011, 0
      %v1216 = vsel %vm1130, %v1012, 0
      %v1219 = vsel %vm1130, %v1013, 0
      %v1222 = vsel %vm1130, %v1014, 0
      %v1225 = vsel %vm1130, %v1015, 0
      %v1228 = vsel %vm1130, %v1016, 0
      %v1231 = vsel %vm1130, %v1017, 0
      %v1234 = vsel %vm1130, %v1018, 0
      %v1237 = vsel %vm1130, %v1019, 0
      %v1240 = vsel %vm1130, %v1020, 0
      %v1243 = vsel %vm1130, %v1021, 0
      %v1246 = vsel %vm1130, %v1022, 0
      %v1249 = vsel %vm1130, %v1023, 0
      %v1252 = vsel %vm1130, %v1024, 0
      %v1255 = vsel %vm1130, %v1025, 0
      %v1258 = vsel %vm1130, %v1026, 0
      %v1261 = vsel %vm1130, %v1027, 0
      %v1264 = vsel %vm1130, %v1028, 0
      %v1267 = vsel %vm1130, %v1029, 0
      %v1270 = vsel %vm1130, %v1030, 0
      %v1273 = vsel %vm1130, %v1031, 0
      %v1276 = vsel %vm1130, %v1032, 0
      %v1279 = vsel %vm1130, %v1033, 0
      %v1282 = vsel %vm1130, %v1034, 0
      %v1285 = vsel %vm1130, %v1035, 0
      %v1288 = vsel %vm1130, %v1036, 0
      %v1291 = vsel %vm1130, %v1037, 0
      %v1294 = vsel %vm1130, %v1038, 0
      %v1297 = vsel %vm1130, %v1039, 0
      %v1300 = vsel %vm1130, %v1040, 0
      %v1303 = vsel %vm1130, %v1041, 0
      %v1306 = vsel %vm1130, %v1042, 0
      %v1309 = vsel %vm1130, %v1043, 0
      %v1312 = vsel %vm1130, %v1044, 0
      %v1315 = vsel %vm1130, %v1045, 0
      %v1318 = vsel %vm1130, %v1046, 0
      %v1321 = vsel %vm1130, %v1047, 0
      %v1324 = vsel %vm1130, %v1048, 0
      %v1327 = vsel %vm1130, %v1049, 0
      %v1330 = vsel %vm1130, %v1050, 0
      %v1333 = vsel %vm1130, %v1051, 0
      %v1336 = vsel %vm1130, %v1052, 0
      %v1339 = vsel %vm1130, %v1053, 0
      %v1342 = vsel %vm1130, %v1054, 0
      %v1345 = vsel %vm1130, %v1055, 0
      %v1348 = vsel %vm1130, %v1056, 0
      %v1351 = vsel %vm1130, %v1057, 0
      %v1354 = vsel %vm1130, %v1058, 0
      %v1357 = vsel %vm1130, %v1059, 0
      %v1360 = vsel %vm1130, %v1060, 0
      %v1363 = vsel %vm1130, %v1061, 0
      %v1366 = vsel %vm1130, %v1062, 0
      %v1369 = vsel %vm1130, %v1063, 0
      %v1372 = vsel %vm1130, %v1064, 0
      %v1375 = vsel %vm1130, %v1065, 0
      %v1378 = vsel %vm1130, %v1066, 0
      %v1381 = vsel %vm1130, %v1067, 0
      %v1384 = vsel %vm1130, %v1068, 0
      %v1387 = vsel %vm1130, %v1069, 0
      %v1390 = vsel %vm1130, %v1070, 0
      %v1393 = vsel %vm1130, %v1071, 0
      %v1396 = vsel %vm1130, %v1072, 0
      %v1399 = vsel %vm1130, %v1073, 0
      %v1402 = vsel %vm1130, %v1074, 0
      %v1405 = vsel %vm1130, %v1075, 0
      %v1408 = vsel %vm1130, %v1076, 0
      %v1411 = vsel %vm1130, %v1077, 0
      %v1414 = vsel %vm1130, %v1078, 0
      %v1417 = vsel %vm1130, %v1079, 0
      %v1420 = vsel %vm1130, %v1080, 0
      %v1423 = vsel %vm1130, %v1081, 0
      %v1426 = vsel %vm1130, %v1082, 0
      %v1429 = vsel %vm1130, %v1083, 0
      %v1432 = vsel %vm1130, %v1084, 0
      %v1435 = vsel %vm1130, %v1085, 0
      %v1438 = vsel %vm1130, %v1086, 0
      %v1441 = vsel %vm1130, %v1087, 0
      %v1444 = vsel %vm1130, %v1088, 0
      %v1447 = vsel %vm1130, %v1089, 0
      %v1450 = vsel %vm1130, %v1090, 0
      %v1453 = vsel %vm1130, %v1091, 0
      %v1456 = vsel %vm1130, %v1092, 0
      %v1459 = vsel %vm1130, %v1093, 0
      %v1462 = vsel %vm1130, %v1094, 0
      %v1465 = vsel %vm1130, %v1095, 0
      %v1468 = vsel %vm1130, %v1096, 0
      %v1471 = vsel %vm1130, %v1097, 0
      %v1474 = vsel %vm1130, %v1098, 0
      %v1477 = vsel %vm1130, %v1099, 0
      %v1480 = vsel %vm1130, %v1100, 0
      %v1483 = vsel %vm1130, %v1101, 0
      %v1486 = vsel %vm1130, %v1102, 0
      %v1489 = vsel %vm1130, %v1103, 0
      %v1492 = vsel %vm1130, %v1104, 0
      %v1495 = vsel %vm1130, %v1105, 0
      %v1498 = vsel %vm1130, %v1106, 0
      %v1501 = vsel %vm1130, %v1107, 0
      %v1504 = vsel %vm1130, %v1108, 0
      %v1507 = vsel %vm1130, %v1109, 0
      %v1510 = vsel %vm1130, %v1110, 0
      %v1513 = vsel %vm1130, %v1111, 0
      %1515 = vmatprep.subr.bf16.mxu0 0
      %1516 = vmatpush1.bf16.msra.mxu0 %v1124
      %1517 = vmatprep.subr.bf16.mxu0 0
      %1518 = vmatpush1.bf16.msra.mxu0 %v1125
      %1519 = vmatprep.subr.bf16.mxu0 0
      %1520 = vmatpush1.bf16.msra.mxu0 %v1126
      %1521 = vmatprep.subr.bf16.mxu0 0
      %1522 = vmatpush1.bf16.msra.mxu0 0
      %1523 = vmatprep.subr.bf16.mxu0 0
      %1524 = vmatpush1.bf16.msra.mxu0 0
      %1525 = vmatprep.subr.bf16.mxu0 0
      %1526 = vmatpush1.bf16.msra.mxu0 0
      %1527 = vmatprep.subr.bf16.mxu0 0
      %1528 = vmatpush1.bf16.msra.mxu0 0
      %1529 = vmatprep.subr.bf16.mxu0 0
      %1530 = vmatpush1.bf16.msra.mxu0 0
      %1531 = vmatprep.subr.bf16.mxu0 0
      %1532 = vmatpush1.bf16.msra.mxu0 0
      %1533 = vmatprep.subr.bf16.mxu0 0
      %1534 = vmatpush1.bf16.msra.mxu0 0
      %1535 = vmatprep.subr.bf16.mxu0 0
      %1536 = vmatpush1.bf16.msra.mxu0 0
      %1537 = vmatprep.subr.bf16.mxu0 0
      %1538 = vmatpush1.bf16.msra.mxu0 0
      %1539 = vmatprep.subr.bf16.mxu0 0
      %1540 = vmatpush1.bf16.msra.mxu0 0
      %1541 = vmatprep.subr.bf16.mxu0 0
      %1542 = vmatpush1.bf16.msra.mxu0 0
      %1543 = vmatprep.subr.bf16.mxu0 0
      %1544 = vmatpush1.bf16.msra.mxu0 0
      %1545 = vmatprep.subr.bf16.mxu0 0
      %1546 = vmatpush1.bf16.msra.mxu0 0
      %1547 = vmatprep.mubr.bf16.mxu0 0
      %1548 = vmatmul.mubr.bf16.gmra.mrb[0].mxu0 %v1132
      %v1549 = vpop.f32.mrb[0].mxu0
      %v1550 = vadd.f32 %v470, %v1549
      %v1551 = vpop.f32.mrb[0].mxu0
      %v1552 = vpop.f32.mrb[0].mxu0
      %v1553 = vadd.f32 %v470, %v1552
      %v1554 = vpop.f32.mrb[0].mxu0
      %1555 = vmatprep.mubr.bf16.mxu0 0
      %1556 = vmatmul.mubr.bf16.gmra.mrb[0].mxu0 %v1135
      %v1557 = vpop.f32.mrb[0].mxu0
      %v1558 = vadd.f32 %v470, %v1557
      %v1559 = vpop.f32.mrb[0].mxu0
      %v1560 = vpop.f32.mrb[0].mxu0
      %v1561 = vadd.f32 %v470, %v1560
      %v1562 = vpop.f32.mrb[0].mxu0
      %1563 = vmatprep.mubr.bf16.mxu0 0
      %1564 = vmatmul.mubr.bf16.gmra.mrb[0].mxu0 %v1138
      %v1565 = vpop.f32.mrb[0].mxu0
      %v1566 = vadd.f32 %v470, %v1565
      %v1567 = vpop.f32.mrb[0].mxu0
      %v1568 = vpop.f32.mrb[0].mxu0
      %v1569 = vadd.f32 %v470, %v1568
      %v1570 = vpop.f32.mrb[0].mxu0
      %1571 = vmatprep.mubr.bf16.mxu0 0
      %1572 = vmatmul.mubr.bf16.gmra.mrb[0].mxu0 %v1141
      %v1573 = vpop.f32.mrb[0].mxu0
      %v1574 = vadd.f32 %v470, %v1573
      %v1575 = vpop.f32.mrb[0].mxu0
      %v1576 = vpop.f32.mrb[0].mxu0
      %v1577 = vadd.f32 %v470, %v1576
      %v1578 = vpop.f32.mrb[0].mxu0
      %1579 = vmatprep.mubr.bf16.mxu0 0
      %1580 = vmatmul.mubr.bf16.gmra.mrb[0].mxu0 %v1144
      %v1581 = vpop.f32.mrb[0].mxu0
      %v1582 = vadd.f32 %v470, %v1581
      %v1583 = vpop.f32.mrb[0].mxu0
      %v1584 = vpop.f32.mrb[0].mxu0
      %v1585 = vadd.f32 %v470, %v1584
      %v1586 = vpop.f32.mrb[0].mxu0
      %1587 = vmatprep.mubr.bf16.mxu0 0
      %1588 = vmatmul.mubr.bf16.gmra.mrb[0].mxu0 %v1147
      %v1589 = vpop.f32.mrb[0].mxu0
      %v1590 = vadd.f32 %v470, %v1589
      %v1591 = vpop.f32.mrb[0].mxu0
      %v1592 = vpop.f32.mrb[0].mxu0
      %v1593 = vadd.f32 %v470, %v1592
      %v1594 = vpop.f32.mrb[0].mxu0
      %1595 = vmatprep.mubr.bf16.mxu0 0
      %1596 = vmatmul.mubr.bf16.gmra.mrb[0].mxu0 %v1150
      %v1597 = vpop.f32.mrb[0].mxu0
      %v1598 = vadd.f32 %v470, %v1597
      %v1599 = vpop.f32.mrb[0].mxu0
      %v1600 = vpop.f32.mrb[0].mxu0
      %v1601 = vadd.f32 %v470, %v1600
      %v1602 = vpop.f32.mrb[0].mxu0
      %1603 = vmatprep.mubr.bf16.mxu0 0
      %1604 = vmatmul.mubr.bf16.gmra.mrb[0].mxu0 %v1153
      %v1605 = vpop.f32.mrb[0].mxu0
      %v1606 = vadd.f32 %v470, %v1605
      %v1607 = vpop.f32.mrb[0].mxu0
      %v1608 = vpop.f32.mrb[0].mxu0
      %v1609 = vadd.f32 %v470, %v1608
      %v1610 = vpop.f32.mrb[0].mxu0
      %1611 = vmatprep.mubr.bf16.mxu0 0
      %1612 = vmatmul.mubr.bf16.gmra.mrb[0].mxu0 %v1156
      %v1613 = vpop.f32.mrb[0].mxu0
      %v1614 = vadd.f32 %v470, %v1613
      %v1615 = vpop.f32.mrb[0].mxu0
      %v1616 = vpop.f32.mrb[0].mxu0
      %v1617 = vadd.f32 %v470, %v1616
      %v1618 = vpop.f32.mrb[0].mxu0
      %1619 = vmatprep.mubr.bf16.mxu0 0
      %1620 = vmatmul.mubr.bf16.gmra.mrb[0].mxu0 %v1159
      %v1621 = vpop.f32.mrb[0].mxu0
      %v1622 = vadd.f32 %v470, %v1621
      %v1623 = vpop.f32.mrb[0].mxu0
      %v1624 = vpop.f32.mrb[0].mxu0
      %v1625 = vadd.f32 %v470, %v1624
      %v1626 = vpop.f32.mrb[0].mxu0
      %1627 = vmatprep.mubr.bf16.mxu0 0
      %1628 = vmatmul.mubr.bf16.gmra.mrb[0].mxu0 %v1162
      %v1629 = vpop.f32.mrb[0].mxu0
      %v1630 = vadd.f32 %v470, %v1629
      %v1631 = vpop.f32.mrb[0].mxu0
      %v1632 = vpop.f32.mrb[0].mxu0
      %v1633 = vadd.f32 %v470, %v1632
      %v1634 = vpop.f32.mrb[0].mxu0
      %1635 = vmatprep.mubr.bf16.mxu0 0
      %1636 = vmatmul.mubr.bf16.gmra.mrb[0].mxu0 %v1165
      %v1637 = vpop.f32.mrb[0].mxu0
      %v1638 = vadd.f32 %v470, %v1637
      %v1639 = vpop.f32.mrb[0].mxu0
      %v1640 = vpop.f32.mrb[0].mxu0
      %v1641 = vadd.f32 %v470, %v1640
      %v1642 = vpop.f32.mrb[0].mxu0
      %1643 = vmatprep.mubr.bf16.mxu0 0
      %1644 = vmatmul.mubr.bf16.gmra.mrb[0].mxu0 %v1168
      %v1645 = vpop.f32.mrb[0].mxu0
      %v1646 = vadd.f32 %v470, %v1645
      %v1647 = vpop.f32.mrb[0].mxu0
      %v1648 = vpop.f32.mrb[0].mxu0
      %v1649 = vadd.f32 %v470, %v1648
      %v1650 = vpop.f32.mrb[0].mxu0
      %1651 = vmatprep.mubr.bf16.mxu0 0
      %1652 = vmatmul.mubr.bf16.gmra.mrb[0].mxu0 %v1171
      %v1653 = vpop.f32.mrb[0].mxu0
      %v1654 = vadd.f32 %v470, %v1653
      %v1655 = vpop.f32.mrb[0].mxu0
      %v1656 = vpop.f32.mrb[0].mxu0
      %v1657 = vadd.f32 %v470, %v1656
      %v1658 = vpop.f32.mrb[0].mxu0
      %1659 = vmatprep.mubr.bf16.mxu0 0
      %1660 = vmatmul.mubr.bf16.gmra.mrb[0].mxu0 %v1174
      %v1661 = vpop.f32.mrb[0].mxu0
      %v1662 = vadd.f32 %v470, %v1661
      %v1663 = vpop.f32.mrb[0].mxu0
      %v1664 = vpop.f32.mrb[0].mxu0
      %v1665 = vadd.f32 %v470, %v1664
      %v1666 = vpop.f32.mrb[0].mxu0
      %1667 = vmatprep.mubr.bf16.mxu0 0
      %1668 = vmatmul.mubr.bf16.gmra.mrb[0].mxu0 %v1177
      %v1669 = vpop.f32.mrb[0].mxu0
      %v1670 = vadd.f32 %v470, %v1669
      %v1671 = vpop.f32.mrb[0].mxu0
      %v1672 = vpop.f32.mrb[0].mxu0
      %v1673 = vadd.f32 %v470, %v1672
      %v1674 = vpop.f32.mrb[0].mxu0
      %1675 = vmatprep.mubr.bf16.mxu0 0
      %1676 = vmatmul.mubr.bf16.gmra.mrb[0].mxu0 %v1180
      %v1677 = vpop.f32.mrb[0].mxu0
      %v1678 = vadd.f32 %v470, %v1677
      %v1679 = vpop.f32.mrb[0].mxu0
      %v1680 = vpop.f32.mrb[0].mxu0
      %v1681 = vadd.f32 %v470, %v1680
      %v1682 = vpop.f32.mrb[0].mxu0
      %1683 = vmatprep.mubr.bf16.mxu0 0
      %1684 = vmatmul.mubr.bf16.gmra.mrb[0].mxu0 %v1183
      %v1685 = vpop.f32.mrb[0].mxu0
      %v1686 = vadd.f32 %v470, %v1685
      %v1687 = vpop.f32.mrb[0].mxu0
      %v1688 = vpop.f32.mrb[0].mxu0
      %v1689 = vadd.f32 %v470, %v1688
      %v1690 = vpop.f32.mrb[0].mxu0
      %1691 = vmatprep.mubr.bf16.mxu0 0
      %1692 = vmatmul.mubr.bf16.gmra.mrb[0].mxu0 %v1186
      %v1693 = vpop.f32.mrb[0].mxu0
      %v1694 = vadd.f32 %v470, %v1693
      %v1695 = vpop.f32.mrb[0].mxu0
      %v1696 = vpop.f32.mrb[0].mxu0
      %v1697 = vadd.f32 %v470, %v1696
      %v1698 = vpop.f32.mrb[0].mxu0
      %1699 = vmatprep.mubr.bf16.mxu0 0
      %1700 = vmatmul.mubr.bf16.gmra.mrb[0].mxu0 %v1189
      %v1701 = vpop.f32.mrb[0].mxu0
      %v1702 = vadd.f32 %v470, %v1701
      %v1703 = vpop.f32.mrb[0].mxu0
      %v1704 = vpop.f32.mrb[0].mxu0
      %v1705 = vadd.f32 %v470, %v1704
      %v1706 = vpop.f32.mrb[0].mxu0
      %1707 = vmatprep.mubr.bf16.mxu0 0
      %1708 = vmatmul.mubr.bf16.gmra.mrb[0].mxu0 %v1192
      %v1709 = vpop.f32.mrb[0].mxu0
      %v1710 = vadd.f32 %v470, %v1709
      %v1711 = vpop.f32.mrb[0].mxu0
      %v1712 = vpop.f32.mrb[0].mxu0
      %v1713 = vadd.f32 %v470, %v1712
      %v1714 = vpop.f32.mrb[0].mxu0
      %1715 = vmatprep.mubr.bf16.mxu0 0
      %1716 = vmatmul.mubr.bf16.gmra.mrb[0].mxu0 %v1195
      %v1717 = vpop.f32.mrb[0].mxu0
      %v1718 = vadd.f32 %v470, %v1717
      %v1719 = vpop.f32.mrb[0].mxu0
      %v1720 = vpop.f32.mrb[0].mxu0
      %v1721 = vadd.f32 %v470, %v1720
      %v1722 = vpop.f32.mrb[0].mxu0
      %1723 = vmatprep.mubr.bf16.mxu0 0
      %1724 = vmatmul.mubr.bf16.gmra.mrb[0].mxu0 %v1198
      %v1725 = vpop.f32.mrb[0].mxu0
      %v1726 = vadd.f32 %v470, %v1725
      %v1727 = vpop.f32.mrb[0].mxu0
      %v1728 = vpop.f32.mrb[0].mxu0
      %v1729 = vadd.f32 %v470, %v1728
      %v1730 = vpop.f32.mrb[0].mxu0
      %1731 = vmatprep.mubr.bf16.mxu0 0
      %1732 = vmatmul.mubr.bf16.gmra.mrb[0].mxu0 %v1201
      %v1733 = vpop.f32.mrb[0].mxu0
      %v1734 = vadd.f32 %v470, %v1733
      %v1735 = vpop.f32.mrb[0].mxu0
      %v1736 = vpop.f32.mrb[0].mxu0
      %v1737 = vadd.f32 %v470, %v1736
      %v1738 = vpop.f32.mrb[0].mxu0
      %1739 = vmatprep.mubr.bf16.mxu0 0
      %1740 = vmatmul.mubr.bf16.gmra.mrb[0].mxu0 %v1204
      %v1741 = vpop.f32.mrb[0].mxu0
      %v1742 = vadd.f32 %v470, %v1741
      %v1743 = vpop.f32.mrb[0].mxu0
      %v1744 = vpop.f32.mrb[0].mxu0
      %v1745 = vadd.f32 %v470, %v1744
      %v1746 = vpop.f32.mrb[0].mxu0
      %1747 = vmatprep.mubr.bf16.mxu0 0
      %1748 = vmatmul.mubr.bf16.gmra.mrb[0].mxu0 %v1207
      %v1749 = vpop.f32.mrb[0].mxu0
      %v1750 = vadd.f32 %v470, %v1749
      %v1751 = vpop.f32.mrb[0].mxu0
      %v1752 = vpop.f32.mrb[0].mxu0
      %v1753 = vadd.f32 %v470, %v1752
      %v1754 = vpop.f32.mrb[0].mxu0
      %1755 = vmatprep.mubr.bf16.mxu0 0
      %1756 = vmatmul.mubr.bf16.gmra.mrb[0].mxu0 %v1210
      %v1757 = vpop.f32.mrb[0].mxu0
      %v1758 = vadd.f32 %v470, %v1757
      %v1759 = vpop.f32.mrb[0].mxu0
      %v1760 = vpop.f32.mrb[0].mxu0
      %v1761 = vadd.f32 %v470, %v1760
      %v1762 = vpop.f32.mrb[0].mxu0
      %1763 = vmatprep.mubr.bf16.mxu0 0
      %1764 = vmatmul.mubr.bf16.gmra.mrb[0].mxu0 %v1213
      %v1765 = vpop.f32.mrb[0].mxu0
      %v1766 = vadd.f32 %v470, %v1765
      %v1767 = vpop.f32.mrb[0].mxu0
      %v1768 = vpop.f32.mrb[0].mxu0
      %v1769 = vadd.f32 %v470, %v1768
      %v1770 = vpop.f32.mrb[0].mxu0
      %1771 = vmatprep.mubr.bf16.mxu0 0
      %1772 = vmatmul.mubr.bf16.gmra.mrb[0].mxu0 %v1216
      %v1773 = vpop.f32.mrb[0].mxu0
      %v1774 = vadd.f32 %v470, %v1773
      %v1775 = vpop.f32.mrb[0].mxu0
      %v1776 = vpop.f32.mrb[0].mxu0
      %v1777 = vadd.f32 %v470, %v1776
      %v1778 = vpop.f32.mrb[0].mxu0
      %1779 = vmatprep.mubr.bf16.mxu0 0
      %1780 = vmatmul.mubr.bf16.gmra.mrb[0].mxu0 %v1219
      %v1781 = vpop.f32.mrb[0].mxu0
      %v1782 = vadd.f32 %v470, %v1781
      %v1783 = vpop.f32.mrb[0].mxu0
      %v1784 = vpop.f32.mrb[0].mxu0
      %v1785 = vadd.f32 %v470, %v1784
      %v1786 = vpop.f32.mrb[0].mxu0
      %1787 = vmatprep.mubr.bf16.mxu0 0
      %1788 = vmatmul.mubr.bf16.gmra.mrb[0].mxu0 %v1222
      %v1789 = vpop.f32.mrb[0].mxu0
      %v1790 = vadd.f32 %v470, %v1789
      %v1791 = vpop.f32.mrb[0].mxu0
      %v1792 = vpop.f32.mrb[0].mxu0
      %v1793 = vadd.f32 %v470, %v1792
      %v1794 = vpop.f32.mrb[0].mxu0
      %1795 = vmatprep.mubr.bf16.mxu0 0
      %1796 = vmatmul.mubr.bf16.gmra.mrb[0].mxu0 %v1225
      %v1797 = vpop.f32.mrb[0].mxu0
      %v1798 = vadd.f32 %v470, %v1797
      %v1799 = vpop.f32.mrb[0].mxu0
      %v1800 = vpop.f32.mrb[0].mxu0
      %v1801 = vadd.f32 %v470, %v1800
      %v1802 = vpop.f32.mrb[0].mxu0
      %1803 = vmatprep.mubr.bf16.mxu0 0
      %1804 = vmatmul.mubr.bf16.gmra.mrb[0].mxu0 %v1228
      %v1805 = vpop.f32.mrb[0].mxu0
      %v1806 = vadd.f32 %v470, %v1805
      %v1807 = vpop.f32.mrb[0].mxu0
      %v1808 = vpop.f32.mrb[0].mxu0
      %v1809 = vadd.f32 %v470, %v1808
      %v1810 = vpop.f32.mrb[0].mxu0
      %1811 = vmatprep.mubr.bf16.mxu0 0
      %1812 = vmatmul.mubr.bf16.gmra.mrb[0].mxu0 %v1231
      %v1813 = vpop.f32.mrb[0].mxu0
      %v1814 = vadd.f32 %v470, %v1813
      %v1815 = vpop.f32.mrb[0].mxu0
      %v1816 = vpop.f32.mrb[0].mxu0
      %v1817 = vadd.f32 %v470, %v1816
      %v1818 = vpop.f32.mrb[0].mxu0
      %1819 = vmatprep.mubr.bf16.mxu0 0
      %1820 = vmatmul.mubr.bf16.gmra.mrb[0].mxu0 %v1234
      %v1821 = vpop.f32.mrb[0].mxu0
      %v1822 = vadd.f32 %v470, %v1821
      %v1823 = vpop.f32.mrb[0].mxu0
      %v1824 = vpop.f32.mrb[0].mxu0
      %v1825 = vadd.f32 %v470, %v1824
      %v1826 = vpop.f32.mrb[0].mxu0
      %1827 = vmatprep.mubr.bf16.mxu0 0
      %1828 = vmatmul.mubr.bf16.gmra.mrb[0].mxu0 %v1237
      %v1829 = vpop.f32.mrb[0].mxu0
      %v1830 = vadd.f32 %v470, %v1829
      %v1831 = vpop.f32.mrb[0].mxu0
      %v1832 = vpop.f32.mrb[0].mxu0
      %v1833 = vadd.f32 %v470, %v1832
      %v1834 = vpop.f32.mrb[0].mxu0
      %1835 = vmatprep.mubr.bf16.mxu0 0
      %1836 = vmatmul.mubr.bf16.gmra.mrb[0].mxu0 %v1240
      %v1837 = vpop.f32.mrb[0].mxu0
      %v1838 = vadd.f32 %v470, %v1837
      %v1839 = vpop.f32.mrb[0].mxu0
      %v1840 = vpop.f32.mrb[0].mxu0
      %v1841 = vadd.f32 %v470, %v1840
      %v1842 = vpop.f32.mrb[0].mxu0
      %1843 = vmatprep.mubr.bf16.mxu0 0
      %1844 = vmatmul.mubr.bf16.gmra.mrb[0].mxu0 %v1243
      %v1845 = vpop.f32.mrb[0].mxu0
      %v1846 = vadd.f32 %v470, %v1845
      %v1847 = vpop.f32.mrb[0].mxu0
      %v1848 = vpop.f32.mrb[0].mxu0
      %v1849 = vadd.f32 %v470, %v1848
      %v1850 = vpop.f32.mrb[0].mxu0
      %1851 = vmatprep.mubr.bf16.mxu0 0
      %1852 = vmatmul.mubr.bf16.gmra.mrb[0].mxu0 %v1246
      %v1853 = vpop.f32.mrb[0].mxu0
      %v1854 = vadd.f32 %v470, %v1853
      %v1855 = vpop.f32.mrb[0].mxu0
      %v1856 = vpop.f32.mrb[0].mxu0
      %v1857 = vadd.f32 %v470, %v1856
      %v1858 = vpop.f32.mrb[0].mxu0
      %1859 = vmatprep.mubr.bf16.mxu0 0
      %1860 = vmatmul.mubr.bf16.gmra.mrb[0].mxu0 %v1249
      %v1861 = vpop.f32.mrb[0].mxu0
      %v1862 = vadd.f32 %v470, %v1861
      %v1863 = vpop.f32.mrb[0].mxu0
      %v1864 = vpop.f32.mrb[0].mxu0
      %v1865 = vadd.f32 %v470, %v1864
      %v1866 = vpop.f32.mrb[0].mxu0
      %1867 = vmatprep.mubr.bf16.mxu0 0
      %1868 = vmatmul.mubr.bf16.gmra.mrb[0].mxu0 %v1252
      %v1869 = vpop.f32.mrb[0].mxu0
      %v1870 = vadd.f32 %v470, %v1869
      %v1871 = vpop.f32.mrb[0].mxu0
      %v1872 = vpop.f32.mrb[0].mxu0
      %v1873 = vadd.f32 %v470, %v1872
      %v1874 = vpop.f32.mrb[0].mxu0
      %1875 = vmatprep.mubr.bf16.mxu0 0
      %1876 = vmatmul.mubr.bf16.gmra.mrb[0].mxu0 %v1255
      %v1877 = vpop.f32.mrb[0].mxu0
      %v1878 = vadd.f32 %v470, %v1877
      %v1879 = vpop.f32.mrb[0].mxu0
      %v1880 = vpop.f32.mrb[0].mxu0
      %v1881 = vadd.f32 %v470, %v1880
      %v1882 = vpop.f32.mrb[0].mxu0
      %1883 = vmatprep.mubr.bf16.mxu0 0
      %1884 = vmatmul.mubr.bf16.gmra.mrb[0].mxu0 %v1258
      %v1885 = vpop.f32.mrb[0].mxu0
      %v1886 = vadd.f32 %v470, %v1885
      %v1887 = vpop.f32.mrb[0].mxu0
      %v1888 = vpop.f32.mrb[0].mxu0
      %v1889 = vadd.f32 %v470, %v1888
      %v1890 = vpop.f32.mrb[0].mxu0
      %1891 = vmatprep.mubr.bf16.mxu0 0
      %1892 = vmatmul.mubr.bf16.gmra.mrb[0].mxu0 %v1261
      %v1893 = vpop.f32.mrb[0].mxu0
      %v1894 = vadd.f32 %v470, %v1893
      %v1895 = vpop.f32.mrb[0].mxu0
      %v1896 = vpop.f32.mrb[0].mxu0
      %v1897 = vadd.f32 %v470, %v1896
      %v1898 = vpop.f32.mrb[0].mxu0
      %1899 = vmatprep.mubr.bf16.mxu0 0
      %1900 = vmatmul.mubr.bf16.gmra.mrb[0].mxu0 %v1264
      %v1901 = vpop.f32.mrb[0].mxu0
      %v1902 = vadd.f32 %v470, %v1901
      %v1903 = vpop.f32.mrb[0].mxu0
      %v1904 = vpop.f32.mrb[0].mxu0
      %v1905 = vadd.f32 %v470, %v1904
      %v1906 = vpop.f32.mrb[0].mxu0
      %1907 = vmatprep.mubr.bf16.mxu0 0
      %1908 = vmatmul.mubr.bf16.gmra.mrb[0].mxu0 %v1267
      %v1909 = vpop.f32.mrb[0].mxu0
      %v1910 = vadd.f32 %v470, %v1909
      %v1911 = vpop.f32.mrb[0].mxu0
      %v1912 = vpop.f32.mrb[0].mxu0
      %v1913 = vadd.f32 %v470, %v1912
      %v1914 = vpop.f32.mrb[0].mxu0
      %1915 = vmatprep.mubr.bf16.mxu0 0
      %1916 = vmatmul.mubr.bf16.gmra.mrb[0].mxu0 %v1270
      %v1917 = vpop.f32.mrb[0].mxu0
      %v1918 = vadd.f32 %v470, %v1917
      %v1919 = vpop.f32.mrb[0].mxu0
      %v1920 = vpop.f32.mrb[0].mxu0
      %v1921 = vadd.f32 %v470, %v1920
      %v1922 = vpop.f32.mrb[0].mxu0
      %1923 = vmatprep.mubr.bf16.mxu0 0
      %1924 = vmatmul.mubr.bf16.gmra.mrb[0].mxu0 %v1273
      %v1925 = vpop.f32.mrb[0].mxu0
      %v1926 = vadd.f32 %v470, %v1925
      %v1927 = vpop.f32.mrb[0].mxu0
      %v1928 = vpop.f32.mrb[0].mxu0
      %v1929 = vadd.f32 %v470, %v1928
      %v1930 = vpop.f32.mrb[0].mxu0
      %1931 = vmatprep.mubr.bf16.mxu0 0
      %1932 = vmatmul.mubr.bf16.gmra.mrb[0].mxu0 %v1276
      %v1933 = vpop.f32.mrb[0].mxu0
      %v1934 = vadd.f32 %v470, %v1933
      %v1935 = vpop.f32.mrb[0].mxu0
      %v1936 = vpop.f32.mrb[0].mxu0
      %v1937 = vadd.f32 %v470, %v1936
      %v1938 = vpop.f32.mrb[0].mxu0
      %1939 = vmatprep.mubr.bf16.mxu0 0
      %1940 = vmatmul.mubr.bf16.gmra.mrb[0].mxu0 %v1279
      %v1941 = vpop.f32.mrb[0].mxu0
      %v1942 = vadd.f32 %v470, %v1941
      %v1943 = vpop.f32.mrb[0].mxu0
      %v1944 = vpop.f32.mrb[0].mxu0
      %v1945 = vadd.f32 %v470, %v1944
      %v1946 = vpop.f32.mrb[0].mxu0
      %1947 = vmatprep.mubr.bf16.mxu0 0
      %1948 = vmatmul.mubr.bf16.gmra.mrb[0].mxu0 %v1282
      %v1949 = vpop.f32.mrb[0].mxu0
      %v1950 = vadd.f32 %v470, %v1949
      %v1951 = vpop.f32.mrb[0].mxu0
      %v1952 = vpop.f32.mrb[0].mxu0
      %v1953 = vadd.f32 %v470, %v1952
      %v1954 = vpop.f32.mrb[0].mxu0
      %1955 = vmatprep.mubr.bf16.mxu0 0
      %1956 = vmatmul.mubr.bf16.gmra.mrb[0].mxu0 %v1285
      %v1957 = vpop.f32.mrb[0].mxu0
      %v1958 = vadd.f32 %v470, %v1957
      %v1959 = vpop.f32.mrb[0].mxu0
      %v1960 = vpop.f32.mrb[0].mxu0
      %v1961 = vadd.f32 %v470, %v1960
      %v1962 = vpop.f32.mrb[0].mxu0
      %1963 = vmatprep.mubr.bf16.mxu0 0
      %1964 = vmatmul.mubr.bf16.gmra.mrb[0].mxu0 %v1288
      %v1965 = vpop.f32.mrb[0].mxu0
      %v1966 = vadd.f32 %v470, %v1965
      %v1967 = vpop.f32.mrb[0].mxu0
      %v1968 = vpop.f32.mrb[0].mxu0
      %v1969 = vadd.f32 %v470, %v1968
      %v1970 = vpop.f32.mrb[0].mxu0
      %1971 = vmatprep.mubr.bf16.mxu0 0
      %1972 = vmatmul.mubr.bf16.gmra.mrb[0].mxu0 %v1291
      %v1973 = vpop.f32.mrb[0].mxu0
      %v1974 = vadd.f32 %v470, %v1973
      %v1975 = vpop.f32.mrb[0].mxu0
      %v1976 = vpop.f32.mrb[0].mxu0
      %v1977 = vadd.f32 %v470, %v1976
      %v1978 = vpop.f32.mrb[0].mxu0
      %1979 = vmatprep.mubr.bf16.mxu0 0
      %1980 = vmatmul.mubr.bf16.gmra.mrb[0].mxu0 %v1294
      %v1981 = vpop.f32.mrb[0].mxu0
      %v1982 = vadd.f32 %v470, %v1981
      %v1983 = vpop.f32.mrb[0].mxu0
      %v1984 = vpop.f32.mrb[0].mxu0
      %v1985 = vadd.f32 %v470, %v1984
      %v1986 = vpop.f32.mrb[0].mxu0
      %1987 = vmatprep.mubr.bf16.mxu0 0
      %1988 = vmatmul.mubr.bf16.gmra.mrb[0].mxu0 %v1297
      %v1989 = vpop.f32.mrb[0].mxu0
      %v1990 = vadd.f32 %v470, %v1989
      %v1991 = vpop.f32.mrb[0].mxu0
      %v1992 = vpop.f32.mrb[0].mxu0
      %v1993 = vadd.f32 %v470, %v1992
      %v1994 = vpop.f32.mrb[0].mxu0
      %1995 = vmatprep.mubr.bf16.mxu0 0
      %1996 = vmatmul.mubr.bf16.gmra.mrb[0].mxu0 %v1300
      %v1997 = vpop.f32.mrb[0].mxu0
      %v1998 = vadd.f32 %v470, %v1997
      %v1999 = vpop.f32.mrb[0].mxu0
      %v2000 = vpop.f32.mrb[0].mxu0
      %v2001 = vadd.f32 %v470, %v2000
      %v2002 = vpop.f32.mrb[0].mxu0
      %2003 = vmatprep.mubr.bf16.mxu0 0
      %2004 = vmatmul.mubr.bf16.gmra.mrb[0].mxu0 %v1303
      %v2005 = vpop.f32.mrb[0].mxu0
      %v2006 = vadd.f32 %v470, %v2005
      %v2007 = vpop.f32.mrb[0].mxu0
      %v2008 = vpop.f32.mrb[0].mxu0
      %v2009 = vadd.f32 %v470, %v2008
      %v2010 = vpop.f32.mrb[0].mxu0
      %2011 = vmatprep.mubr.bf16.mxu0 0
      %2012 = vmatmul.mubr.bf16.gmra.mrb[0].mxu0 %v1306
      %v2013 = vpop.f32.mrb[0].mxu0
      %v2014 = vadd.f32 %v470, %v2013
      %v2015 = vpop.f32.mrb[0].mxu0
      %v2016 = vpop.f32.mrb[0].mxu0
      %v2017 = vadd.f32 %v470, %v2016
      %v2018 = vpop.f32.mrb[0].mxu0
      %2019 = vmatprep.mubr.bf16.mxu0 0
      %2020 = vmatmul.mubr.bf16.gmra.mrb[0].mxu0 %v1309
      %v2021 = vpop.f32.mrb[0].mxu0
      %v2022 = vadd.f32 %v470, %v2021
      %v2023 = vpop.f32.mrb[0].mxu0
      %v2024 = vpop.f32.mrb[0].mxu0
      %v2025 = vadd.f32 %v470, %v2024
      %v2026 = vpop.f32.mrb[0].mxu0
      %2027 = vmatprep.mubr.bf16.mxu0 0
      %2028 = vmatmul.mubr.bf16.gmra.mrb[0].mxu0 %v1312
      %v2029 = vpop.f32.mrb[0].mxu0
      %v2030 = vadd.f32 %v470, %v2029
      %v2031 = vpop.f32.mrb[0].mxu0
      %v2032 = vpop.f32.mrb[0].mxu0
      %v2033 = vadd.f32 %v470, %v2032
      %v2034 = vpop.f32.mrb[0].mxu0
      %2035 = vmatprep.mubr.bf16.mxu0 0
      %2036 = vmatmul.mubr.bf16.gmra.mrb[0].mxu0 %v1315
      %v2037 = vpop.f32.mrb[0].mxu0
      %v2038 = vadd.f32 %v470, %v2037
      %v2039 = vpop.f32.mrb[0].mxu0
      %v2040 = vpop.f32.mrb[0].mxu0
      %v2041 = vadd.f32 %v470, %v2040
      %v2042 = vpop.f32.mrb[0].mxu0
      %2043 = vmatprep.mubr.bf16.mxu0 0
      %2044 = vmatmul.mubr.bf16.gmra.mrb[0].mxu0 %v1318
      %v2045 = vpop.f32.mrb[0].mxu0
      %v2046 = vadd.f32 %v470, %v2045
      %v2047 = vpop.f32.mrb[0].mxu0
      %v2048 = vpop.f32.mrb[0].mxu0
      %v2049 = vadd.f32 %v470, %v2048
      %v2050 = vpop.f32.mrb[0].mxu0
      %2051 = vmatprep.mubr.bf16.mxu0 0
      %2052 = vmatmul.mubr.bf16.gmra.mrb[0].mxu0 %v1321
      %v2053 = vpop.f32.mrb[0].mxu0
      %v2054 = vadd.f32 %v470, %v2053
      %v2055 = vpop.f32.mrb[0].mxu0
      %v2056 = vpop.f32.mrb[0].mxu0
      %v2057 = vadd.f32 %v470, %v2056
      %v2058 = vpop.f32.mrb[0].mxu0
      %2059 = vmatprep.mubr.bf16.mxu0 0
      %2060 = vmatmul.mubr.bf16.gmra.mrb[0].mxu0 %v1324
      %v2061 = vpop.f32.mrb[0].mxu0
      %v2062 = vadd.f32 %v470, %v2061
      %v2063 = vpop.f32.mrb[0].mxu0
      %v2064 = vpop.f32.mrb[0].mxu0
      %v2065 = vadd.f32 %v470, %v2064
      %v2066 = vpop.f32.mrb[0].mxu0
      %2067 = vmatprep.mubr.bf16.mxu0 0
      %2068 = vmatmul.mubr.bf16.gmra.mrb[0].mxu0 %v1327
      %v2069 = vpop.f32.mrb[0].mxu0
      %v2070 = vadd.f32 %v470, %v2069
      %v2071 = vpop.f32.mrb[0].mxu0
      %v2072 = vpop.f32.mrb[0].mxu0
      %v2073 = vadd.f32 %v470, %v2072
      %v2074 = vpop.f32.mrb[0].mxu0
      %2075 = vmatprep.mubr.bf16.mxu0 0
      %2076 = vmatmul.mubr.bf16.gmra.mrb[0].mxu0 %v1330
      %v2077 = vpop.f32.mrb[0].mxu0
      %v2078 = vadd.f32 %v470, %v2077
      %v2079 = vpop.f32.mrb[0].mxu0
      %v2080 = vpop.f32.mrb[0].mxu0
      %v2081 = vadd.f32 %v470, %v2080
      %v2082 = vpop.f32.mrb[0].mxu0
      %2083 = vmatprep.mubr.bf16.mxu0 0
      %2084 = vmatmul.mubr.bf16.gmra.mrb[0].mxu0 %v1333
      %v2085 = vpop.f32.mrb[0].mxu0
      %v2086 = vadd.f32 %v470, %v2085
      %v2087 = vpop.f32.mrb[0].mxu0
      %v2088 = vpop.f32.mrb[0].mxu0
      %v2089 = vadd.f32 %v470, %v2088
      %v2090 = vpop.f32.mrb[0].mxu0
      %2091 = vmatprep.mubr.bf16.mxu0 0
      %2092 = vmatmul.mubr.bf16.gmra.mrb[0].mxu0 %v1336
      %v2093 = vpop.f32.mrb[0].mxu0
      %v2094 = vadd.f32 %v470, %v2093
      %v2095 = vpop.f32.mrb[0].mxu0
      %v2096 = vpop.f32.mrb[0].mxu0
      %v2097 = vadd.f32 %v470, %v2096
      %v2098 = vpop.f32.mrb[0].mxu0
      %2099 = vmatprep.mubr.bf16.mxu0 0
      %2100 = vmatmul.mubr.bf16.gmra.mrb[0].mxu0 %v1339
      %v2101 = vpop.f32.mrb[0].mxu0
      %v2102 = vadd.f32 %v470, %v2101
      %v2103 = vpop.f32.mrb[0].mxu0
      %v2104 = vpop.f32.mrb[0].mxu0
      %v2105 = vadd.f32 %v470, %v2104
      %v2106 = vpop.f32.mrb[0].mxu0
      %2107 = vmatprep.mubr.bf16.mxu0 0
      %2108 = vmatmul.mubr.bf16.gmra.mrb[0].mxu0 %v1342
      %v2109 = vpop.f32.mrb[0].mxu0
      %v2110 = vadd.f32 %v470, %v2109
      %v2111 = vpop.f32.mrb[0].mxu0
      %v2112 = vpop.f32.mrb[0].mxu0
      %v2113 = vadd.f32 %v470, %v2112
      %v2114 = vpop.f32.mrb[0].mxu0
      %2115 = vmatprep.mubr.bf16.mxu0 0
      %2116 = vmatmul.mubr.bf16.gmra.mrb[0].mxu0 %v1345
      %v2117 = vpop.f32.mrb[0].mxu0
      %v2118 = vadd.f32 %v470, %v2117
      %v2119 = vpop.f32.mrb[0].mxu0
      %v2120 = vpop.f32.mrb[0].mxu0
      %v2121 = vadd.f32 %v470, %v2120
      %v2122 = vpop.f32.mrb[0].mxu0
      %2123 = vmatprep.mubr.bf16.mxu0 0
      %2124 = vmatmul.mubr.bf16.gmra.mrb[0].mxu0 %v1348
      %v2125 = vpop.f32.mrb[0].mxu0
      %v2126 = vadd.f32 %v470, %v2125
      %v2127 = vpop.f32.mrb[0].mxu0
      %v2128 = vpop.f32.mrb[0].mxu0
      %v2129 = vadd.f32 %v470, %v2128
      %v2130 = vpop.f32.mrb[0].mxu0
      %2131 = vmatprep.mubr.bf16.mxu0 0
      %2132 = vmatmul.mubr.bf16.gmra.mrb[0].mxu0 %v1351
      %v2133 = vpop.f32.mrb[0].mxu0
      %v2134 = vadd.f32 %v470, %v2133
      %v2135 = vpop.f32.mrb[0].mxu0
      %v2136 = vpop.f32.mrb[0].mxu0
      %v2137 = vadd.f32 %v470, %v2136
      %v2138 = vpop.f32.mrb[0].mxu0
      %2139 = vmatprep.mubr.bf16.mxu0 0
      %2140 = vmatmul.mubr.bf16.gmra.mrb[0].mxu0 %v1354
      %v2141 = vpop.f32.mrb[0].mxu0
      %v2142 = vadd.f32 %v470, %v2141
      %v2143 = vpop.f32.mrb[0].mxu0
      %v2144 = vpop.f32.mrb[0].mxu0
      %v2145 = vadd.f32 %v470, %v2144
      %v2146 = vpop.f32.mrb[0].mxu0
      %2147 = vmatprep.mubr.bf16.mxu0 0
      %2148 = vmatmul.mubr.bf16.gmra.mrb[0].mxu0 %v1357
      %v2149 = vpop.f32.mrb[0].mxu0
      %v2150 = vadd.f32 %v470, %v2149
      %v2151 = vpop.f32.mrb[0].mxu0
      %v2152 = vpop.f32.mrb[0].mxu0
      %v2153 = vadd.f32 %v470, %v2152
      %v2154 = vpop.f32.mrb[0].mxu0
      %2155 = vmatprep.mubr.bf16.mxu0 0
      %2156 = vmatmul.mubr.bf16.gmra.mrb[0].mxu0 %v1360
      %v2157 = vpop.f32.mrb[0].mxu0
      %v2158 = vadd.f32 %v470, %v2157
      %v2159 = vpop.f32.mrb[0].mxu0
      %v2160 = vpop.f32.mrb[0].mxu0
      %v2161 = vadd.f32 %v470, %v2160
      %v2162 = vpop.f32.mrb[0].mxu0
      %2163 = vmatprep.mubr.bf16.mxu0 0
      %2164 = vmatmul.mubr.bf16.gmra.mrb[0].mxu0 %v1363
      %v2165 = vpop.f32.mrb[0].mxu0
      %v2166 = vadd.f32 %v470, %v2165
      %v2167 = vpop.f32.mrb[0].mxu0
      %v2168 = vpop.f32.mrb[0].mxu0
      %v2169 = vadd.f32 %v470, %v2168
      %v2170 = vpop.f32.mrb[0].mxu0
      %2171 = vmatprep.mubr.bf16.mxu0 0
      %2172 = vmatmul.mubr.bf16.gmra.mrb[0].mxu0 %v1366
      %v2173 = vpop.f32.mrb[0].mxu0
      %v2174 = vadd.f32 %v470, %v2173
      %v2175 = vpop.f32.mrb[0].mxu0
      %v2176 = vpop.f32.mrb[0].mxu0
      %v2177 = vadd.f32 %v470, %v2176
      %v2178 = vpop.f32.mrb[0].mxu0
      %2179 = vmatprep.mubr.bf16.mxu0 0
      %2180 = vmatmul.mubr.bf16.gmra.mrb[0].mxu0 %v1369
      %v2181 = vpop.f32.mrb[0].mxu0
      %v2182 = vadd.f32 %v470, %v2181
      %v2183 = vpop.f32.mrb[0].mxu0
      %v2184 = vpop.f32.mrb[0].mxu0
      %v2185 = vadd.f32 %v470, %v2184
      %v2186 = vpop.f32.mrb[0].mxu0
      %2187 = vmatprep.mubr.bf16.mxu0 0
      %2188 = vmatmul.mubr.bf16.gmra.mrb[0].mxu0 %v1372
      %v2189 = vpop.f32.mrb[0].mxu0
      %v2190 = vadd.f32 %v470, %v2189
      %v2191 = vpop.f32.mrb[0].mxu0
      %v2192 = vpop.f32.mrb[0].mxu0
      %v2193 = vadd.f32 %v470, %v2192
      %v2194 = vpop.f32.mrb[0].mxu0
      %2195 = vmatprep.mubr.bf16.mxu0 0
      %2196 = vmatmul.mubr.bf16.gmra.mrb[0].mxu0 %v1375
      %v2197 = vpop.f32.mrb[0].mxu0
      %v2198 = vadd.f32 %v470, %v2197
      %v2199 = vpop.f32.mrb[0].mxu0
      %v2200 = vpop.f32.mrb[0].mxu0
      %v2201 = vadd.f32 %v470, %v2200
      %v2202 = vpop.f32.mrb[0].mxu0
      %2203 = vmatprep.mubr.bf16.mxu0 0
      %2204 = vmatmul.mubr.bf16.gmra.mrb[0].mxu0 %v1378
      %v2205 = vpop.f32.mrb[0].mxu0
      %v2206 = vadd.f32 %v470, %v2205
      %v2207 = vpop.f32.mrb[0].mxu0
      %v2208 = vpop.f32.mrb[0].mxu0
      %v2209 = vadd.f32 %v470, %v2208
      %v2210 = vpop.f32.mrb[0].mxu0
      %2211 = vmatprep.mubr.bf16.mxu0 0
      %2212 = vmatmul.mubr.bf16.gmra.mrb[0].mxu0 %v1381
      %v2213 = vpop.f32.mrb[0].mxu0
      %v2214 = vadd.f32 %v470, %v2213
      %v2215 = vpop.f32.mrb[0].mxu0
      %v2216 = vpop.f32.mrb[0].mxu0
      %v2217 = vadd.f32 %v470, %v2216
      %v2218 = vpop.f32.mrb[0].mxu0
      %2219 = vmatprep.mubr.bf16.mxu0 0
      %2220 = vmatmul.mubr.bf16.gmra.mrb[0].mxu0 %v1384
      %v2221 = vpop.f32.mrb[0].mxu0
      %v2222 = vadd.f32 %v470, %v2221
      %v2223 = vpop.f32.mrb[0].mxu0
      %v2224 = vpop.f32.mrb[0].mxu0
      %v2225 = vadd.f32 %v470, %v2224
      %v2226 = vpop.f32.mrb[0].mxu0
      %2227 = vmatprep.mubr.bf16.mxu0 0
      %2228 = vmatmul.mubr.bf16.gmra.mrb[0].mxu0 %v1387
      %v2229 = vpop.f32.mrb[0].mxu0
      %v2230 = vadd.f32 %v470, %v2229
      %v2231 = vpop.f32.mrb[0].mxu0
      %v2232 = vpop.f32.mrb[0].mxu0
      %v2233 = vadd.f32 %v470, %v2232
      %v2234 = vpop.f32.mrb[0].mxu0
      %2235 = vmatprep.mubr.bf16.mxu0 0
      %2236 = vmatmul.mubr.bf16.gmra.mrb[0].mxu0 %v1390
      %v2237 = vpop.f32.mrb[0].mxu0
      %v2238 = vadd.f32 %v470, %v2237
      %v2239 = vpop.f32.mrb[0].mxu0
      %v2240 = vpop.f32.mrb[0].mxu0
      %v2241 = vadd.f32 %v470, %v2240
      %v2242 = vpop.f32.mrb[0].mxu0
      %2243 = vmatprep.mubr.bf16.mxu0 0
      %2244 = vmatmul.mubr.bf16.gmra.mrb[0].mxu0 %v1393
      %v2245 = vpop.f32.mrb[0].mxu0
      %v2246 = vadd.f32 %v470, %v2245
      %v2247 = vpop.f32.mrb[0].mxu0
      %v2248 = vpop.f32.mrb[0].mxu0
      %v2249 = vadd.f32 %v470, %v2248
      %v2250 = vpop.f32.mrb[0].mxu0
      %2251 = vmatprep.mubr.bf16.mxu0 0
      %2252 = vmatmul.mubr.bf16.gmra.mrb[0].mxu0 %v1396
      %v2253 = vpop.f32.mrb[0].mxu0
      %v2254 = vadd.f32 %v470, %v2253
      %v2255 = vpop.f32.mrb[0].mxu0
      %v2256 = vpop.f32.mrb[0].mxu0
      %v2257 = vadd.f32 %v470, %v2256
      %v2258 = vpop.f32.mrb[0].mxu0
      %2259 = vmatprep.mubr.bf16.mxu0 0
      %2260 = vmatmul.mubr.bf16.gmra.mrb[0].mxu0 %v1399
      %v2261 = vpop.f32.mrb[0].mxu0
      %v2262 = vadd.f32 %v470, %v2261
      %v2263 = vpop.f32.mrb[0].mxu0
      %v2264 = vpop.f32.mrb[0].mxu0
      %v2265 = vadd.f32 %v470, %v2264
      %v2266 = vpop.f32.mrb[0].mxu0
      %2267 = vmatprep.mubr.bf16.mxu0 0
      %2268 = vmatmul.mubr.bf16.gmra.mrb[0].mxu0 %v1402
      %v2269 = vpop.f32.mrb[0].mxu0
      %v2270 = vadd.f32 %v470, %v2269
      %v2271 = vpop.f32.mrb[0].mxu0
      %v2272 = vpop.f32.mrb[0].mxu0
      %v2273 = vadd.f32 %v470, %v2272
      %v2274 = vpop.f32.mrb[0].mxu0
      %2275 = vmatprep.mubr.bf16.mxu0 0
      %2276 = vmatmul.mubr.bf16.gmra.mrb[0].mxu0 %v1405
      %v2277 = vpop.f32.mrb[0].mxu0
      %v2278 = vadd.f32 %v470, %v2277
      %v2279 = vpop.f32.mrb[0].mxu0
      %v2280 = vpop.f32.mrb[0].mxu0
      %v2281 = vadd.f32 %v470, %v2280
      %v2282 = vpop.f32.mrb[0].mxu0
      %2283 = vmatprep.mubr.bf16.mxu0 0
      %2284 = vmatmul.mubr.bf16.gmra.mrb[0].mxu0 %v1408
      %v2285 = vpop.f32.mrb[0].mxu0
      %v2286 = vadd.f32 %v470, %v2285
      %v2287 = vpop.f32.mrb[0].mxu0
      %v2288 = vpop.f32.mrb[0].mxu0
      %v2289 = vadd.f32 %v470, %v2288
      %v2290 = vpop.f32.mrb[0].mxu0
      %2291 = vmatprep.mubr.bf16.mxu0 0
      %2292 = vmatmul.mubr.bf16.gmra.mrb[0].mxu0 %v1411
      %v2293 = vpop.f32.mrb[0].mxu0
      %v2294 = vadd.f32 %v470, %v2293
      %v2295 = vpop.f32.mrb[0].mxu0
      %v2296 = vpop.f32.mrb[0].mxu0
      %v2297 = vadd.f32 %v470, %v2296
      %v2298 = vpop.f32.mrb[0].mxu0
      %2299 = vmatprep.mubr.bf16.mxu0 0
      %2300 = vmatmul.mubr.bf16.gmra.mrb[0].mxu0 %v1414
      %v2301 = vpop.f32.mrb[0].mxu0
      %v2302 = vadd.f32 %v470, %v2301
      %v2303 = vpop.f32.mrb[0].mxu0
      %v2304 = vpop.f32.mrb[0].mxu0
      %v2305 = vadd.f32 %v470, %v2304
      %v2306 = vpop.f32.mrb[0].mxu0
      %2307 = vmatprep.mubr.bf16.mxu0 0
      %2308 = vmatmul.mubr.bf16.gmra.mrb[0].mxu0 %v1417
      %v2309 = vpop.f32.mrb[0].mxu0
      %v2310 = vadd.f32 %v470, %v2309
      %v2311 = vpop.f32.mrb[0].mxu0
      %v2312 = vpop.f32.mrb[0].mxu0
      %v2313 = vadd.f32 %v470, %v2312
      %v2314 = vpop.f32.mrb[0].mxu0
      %2315 = vmatprep.mubr.bf16.mxu0 0
      %2316 = vmatmul.mubr.bf16.gmra.mrb[0].mxu0 %v1420
      %v2317 = vpop.f32.mrb[0].mxu0
      %v2318 = vadd.f32 %v470, %v2317
      %v2319 = vpop.f32.mrb[0].mxu0
      %v2320 = vpop.f32.mrb[0].mxu0
      %v2321 = vadd.f32 %v470, %v2320
      %v2322 = vpop.f32.mrb[0].mxu0
      %2323 = vmatprep.mubr.bf16.mxu0 0
      %2324 = vmatmul.mubr.bf16.gmra.mrb[0].mxu0 %v1423
      %v2325 = vpop.f32.mrb[0].mxu0
      %v2326 = vadd.f32 %v470, %v2325
      %v2327 = vpop.f32.mrb[0].mxu0
      %v2328 = vpop.f32.mrb[0].mxu0
      %v2329 = vadd.f32 %v470, %v2328
      %v2330 = vpop.f32.mrb[0].mxu0
      %2331 = vmatprep.mubr.bf16.mxu0 0
      %2332 = vmatmul.mubr.bf16.gmra.mrb[0].mxu0 %v1426
      %v2333 = vpop.f32.mrb[0].mxu0
      %v2334 = vadd.f32 %v470, %v2333
      %v2335 = vpop.f32.mrb[0].mxu0
      %v2336 = vpop.f32.mrb[0].mxu0
      %v2337 = vadd.f32 %v470, %v2336
      %v2338 = vpop.f32.mrb[0].mxu0
      %2339 = vmatprep.mubr.bf16.mxu0 0
      %2340 = vmatmul.mubr.bf16.gmra.mrb[0].mxu0 %v1429
      %v2341 = vpop.f32.mrb[0].mxu0
      %v2342 = vadd.f32 %v470, %v2341
      %v2343 = vpop.f32.mrb[0].mxu0
      %v2344 = vpop.f32.mrb[0].mxu0
      %v2345 = vadd.f32 %v470, %v2344
      %v2346 = vpop.f32.mrb[0].mxu0
      %2347 = vmatprep.mubr.bf16.mxu0 0
      %2348 = vmatmul.mubr.bf16.gmra.mrb[0].mxu0 %v1432
      %v2349 = vpop.f32.mrb[0].mxu0
      %v2350 = vadd.f32 %v470, %v2349
      %v2351 = vpop.f32.mrb[0].mxu0
      %v2352 = vpop.f32.mrb[0].mxu0
      %v2353 = vadd.f32 %v470, %v2352
      %v2354 = vpop.f32.mrb[0].mxu0
      %2355 = vmatprep.mubr.bf16.mxu0 0
      %2356 = vmatmul.mubr.bf16.gmra.mrb[0].mxu0 %v1435
      %v2357 = vpop.f32.mrb[0].mxu0
      %v2358 = vadd.f32 %v470, %v2357
      %v2359 = vpop.f32.mrb[0].mxu0
      %v2360 = vpop.f32.mrb[0].mxu0
      %v2361 = vadd.f32 %v470, %v2360
      %v2362 = vpop.f32.mrb[0].mxu0
      %2363 = vmatprep.mubr.bf16.mxu0 0
      %2364 = vmatmul.mubr.bf16.gmra.mrb[0].mxu0 %v1438
      %v2365 = vpop.f32.mrb[0].mxu0
      %v2366 = vadd.f32 %v470, %v2365
      %v2367 = vpop.f32.mrb[0].mxu0
      %v2368 = vpop.f32.mrb[0].mxu0
      %v2369 = vadd.f32 %v470, %v2368
      %v2370 = vpop.f32.mrb[0].mxu0
      %2371 = vmatprep.mubr.bf16.mxu0 0
      %2372 = vmatmul.mubr.bf16.gmra.mrb[0].mxu0 %v1441
      %v2373 = vpop.f32.mrb[0].mxu0
      %v2374 = vadd.f32 %v470, %v2373
      %v2375 = vpop.f32.mrb[0].mxu0
      %v2376 = vpop.f32.mrb[0].mxu0
      %v2377 = vadd.f32 %v470, %v2376
      %v2378 = vpop.f32.mrb[0].mxu0
      %2379 = vmatprep.mubr.bf16.mxu0 0
      %2380 = vmatmul.mubr.bf16.gmra.mrb[0].mxu0 %v1444
      %v2381 = vpop.f32.mrb[0].mxu0
      %v2382 = vadd.f32 %v470, %v2381
      %v2383 = vpop.f32.mrb[0].mxu0
      %v2384 = vpop.f32.mrb[0].mxu0
      %v2385 = vadd.f32 %v470, %v2384
      %v2386 = vpop.f32.mrb[0].mxu0
      %2387 = vmatprep.mubr.bf16.mxu0 0
      %2388 = vmatmul.mubr.bf16.gmra.mrb[0].mxu0 %v1447
      %v2389 = vpop.f32.mrb[0].mxu0
      %v2390 = vadd.f32 %v470, %v2389
      %v2391 = vpop.f32.mrb[0].mxu0
      %v2392 = vpop.f32.mrb[0].mxu0
      %v2393 = vadd.f32 %v470, %v2392
      %v2394 = vpop.f32.mrb[0].mxu0
      %2395 = vmatprep.mubr.bf16.mxu0 0
      %2396 = vmatmul.mubr.bf16.gmra.mrb[0].mxu0 %v1450
      %v2397 = vpop.f32.mrb[0].mxu0
      %v2398 = vadd.f32 %v470, %v2397
      %v2399 = vpop.f32.mrb[0].mxu0
      %v2400 = vpop.f32.mrb[0].mxu0
      %v2401 = vadd.f32 %v470, %v2400
      %v2402 = vpop.f32.mrb[0].mxu0
      %2403 = vmatprep.mubr.bf16.mxu0 0
      %2404 = vmatmul.mubr.bf16.gmra.mrb[0].mxu0 %v1453
      %v2405 = vpop.f32.mrb[0].mxu0
      %v2406 = vadd.f32 %v470, %v2405
      %v2407 = vpop.f32.mrb[0].mxu0
      %v2408 = vpop.f32.mrb[0].mxu0
      %v2409 = vadd.f32 %v470, %v2408
      %v2410 = vpop.f32.mrb[0].mxu0
      %2411 = vmatprep.mubr.bf16.mxu0 0
      %2412 = vmatmul.mubr.bf16.gmra.mrb[0].mxu0 %v1456
      %v2413 = vpop.f32.mrb[0].mxu0
      %v2414 = vadd.f32 %v470, %v2413
      %v2415 = vpop.f32.mrb[0].mxu0
      %v2416 = vpop.f32.mrb[0].mxu0
      %v2417 = vadd.f32 %v470, %v2416
      %v2418 = vpop.f32.mrb[0].mxu0
      %2419 = vmatprep.mubr.bf16.mxu0 0
      %2420 = vmatmul.mubr.bf16.gmra.mrb[0].mxu0 %v1459
      %v2421 = vpop.f32.mrb[0].mxu0
      %v2422 = vadd.f32 %v470, %v2421
      %v2423 = vpop.f32.mrb[0].mxu0
      %v2424 = vpop.f32.mrb[0].mxu0
      %v2425 = vadd.f32 %v470, %v2424
      %v2426 = vpop.f32.mrb[0].mxu0
      %2427 = vmatprep.mubr.bf16.mxu0 0
      %2428 = vmatmul.mubr.bf16.gmra.mrb[0].mxu0 %v1462
      %v2429 = vpop.f32.mrb[0].mxu0
      %v2430 = vadd.f32 %v470, %v2429
      %v2431 = vpop.f32.mrb[0].mxu0
      %v2432 = vpop.f32.mrb[0].mxu0
      %v2433 = vadd.f32 %v470, %v2432
      %v2434 = vpop.f32.mrb[0].mxu0
      %2435 = vmatprep.mubr.bf16.mxu0 0
      %2436 = vmatmul.mubr.bf16.gmra.mrb[0].mxu0 %v1465
      %v2437 = vpop.f32.mrb[0].mxu0
      %v2438 = vadd.f32 %v470, %v2437
      %v2439 = vpop.f32.mrb[0].mxu0
      %v2440 = vpop.f32.mrb[0].mxu0
      %v2441 = vadd.f32 %v470, %v2440
      %v2442 = vpop.f32.mrb[0].mxu0
      %2443 = vmatprep.mubr.bf16.mxu0 0
      %2444 = vmatmul.mubr.bf16.gmra.mrb[0].mxu0 %v1468
      %v2445 = vpop.f32.mrb[0].mxu0
      %v2446 = vadd.f32 %v470, %v2445
      %v2447 = vpop.f32.mrb[0].mxu0
      %v2448 = vpop.f32.mrb[0].mxu0
      %v2449 = vadd.f32 %v470, %v2448
      %v2450 = vpop.f32.mrb[0].mxu0
      %2451 = vmatprep.mubr.bf16.mxu0 0
      %2452 = vmatmul.mubr.bf16.gmra.mrb[0].mxu0 %v1471
      %v2453 = vpop.f32.mrb[0].mxu0
      %v2454 = vadd.f32 %v470, %v2453
      %v2455 = vpop.f32.mrb[0].mxu0
      %v2456 = vpop.f32.mrb[0].mxu0
      %v2457 = vadd.f32 %v470, %v2456
      %v2458 = vpop.f32.mrb[0].mxu0
      %2459 = vmatprep.mubr.bf16.mxu0 0
      %2460 = vmatmul.mubr.bf16.gmra.mrb[0].mxu0 %v1474
      %v2461 = vpop.f32.mrb[0].mxu0
      %v2462 = vadd.f32 %v470, %v2461
      %v2463 = vpop.f32.mrb[0].mxu0
      %v2464 = vpop.f32.mrb[0].mxu0
      %v2465 = vadd.f32 %v470, %v2464
      %v2466 = vpop.f32.mrb[0].mxu0
      %2467 = vmatprep.mubr.bf16.mxu0 0
      %2468 = vmatmul.mubr.bf16.gmra.mrb[0].mxu0 %v1477
      %v2469 = vpop.f32.mrb[0].mxu0
      %v2470 = vadd.f32 %v470, %v2469
      %v2471 = vpop.f32.mrb[0].mxu0
      %v2472 = vpop.f32.mrb[0].mxu0
      %v2473 = vadd.f32 %v470, %v2472
      %v2474 = vpop.f32.mrb[0].mxu0
      %2475 = vmatprep.mubr.bf16.mxu0 0
      %2476 = vmatmul.mubr.bf16.gmra.mrb[0].mxu0 %v1480
      %v2477 = vpop.f32.mrb[0].mxu0
      %v2478 = vadd.f32 %v470, %v2477
      %v2479 = vpop.f32.mrb[0].mxu0
      %v2480 = vpop.f32.mrb[0].mxu0
      %v2481 = vadd.f32 %v470, %v2480
      %v2482 = vpop.f32.mrb[0].mxu0
      %2483 = vmatprep.mubr.bf16.mxu0 0
      %2484 = vmatmul.mubr.bf16.gmra.mrb[0].mxu0 %v1483
      %v2485 = vpop.f32.mrb[0].mxu0
      %v2486 = vadd.f32 %v470, %v2485
      %v2487 = vpop.f32.mrb[0].mxu0
      %v2488 = vpop.f32.mrb[0].mxu0
      %v2489 = vadd.f32 %v470, %v2488
      %v2490 = vpop.f32.mrb[0].mxu0
      %2491 = vmatprep.mubr.bf16.mxu0 0
      %2492 = vmatmul.mubr.bf16.gmra.mrb[0].mxu0 %v1486
      %v2493 = vpop.f32.mrb[0].mxu0
      %v2494 = vadd.f32 %v470, %v2493
      %v2495 = vpop.f32.mrb[0].mxu0
      %v2496 = vpop.f32.mrb[0].mxu0
      %v2497 = vadd.f32 %v470, %v2496
      %v2498 = vpop.f32.mrb[0].mxu0
      %2499 = vmatprep.mubr.bf16.mxu0 0
      %2500 = vmatmul.mubr.bf16.gmra.mrb[0].mxu0 %v1489
      %v2501 = vpop.f32.mrb[0].mxu0
      %v2502 = vadd.f32 %v470, %v2501
      %v2503 = vpop.f32.mrb[0].mxu0
      %v2504 = vpop.f32.mrb[0].mxu0
      %v2505 = vadd.f32 %v470, %v2504
      %v2506 = vpop.f32.mrb[0].mxu0
      %2507 = vmatprep.mubr.bf16.mxu0 0
      %2508 = vmatmul.mubr.bf16.gmra.mrb[0].mxu0 %v1492
      %v2509 = vpop.f32.mrb[0].mxu0
      %v2510 = vadd.f32 %v470, %v2509
      %v2511 = vpop.f32.mrb[0].mxu0
      %v2512 = vpop.f32.mrb[0].mxu0
      %v2513 = vadd.f32 %v470, %v2512
      %v2514 = vpop.f32.mrb[0].mxu0
      %2515 = vmatprep.mubr.bf16.mxu0 0
      %2516 = vmatmul.mubr.bf16.gmra.mrb[0].mxu0 %v1495
      %v2517 = vpop.f32.mrb[0].mxu0
      %v2518 = vadd.f32 %v470, %v2517
      %v2519 = vpop.f32.mrb[0].mxu0
      %v2520 = vpop.f32.mrb[0].mxu0
      %v2521 = vadd.f32 %v470, %v2520
      %v2522 = vpop.f32.mrb[0].mxu0
      %2523 = vmatprep.mubr.bf16.mxu0 0
      %2524 = vmatmul.mubr.bf16.gmra.mrb[0].mxu0 %v1498
      %v2525 = vpop.f32.mrb[0].mxu0
      %v2526 = vadd.f32 %v470, %v2525
      %v2527 = vpop.f32.mrb[0].mxu0
      %v2528 = vpop.f32.mrb[0].mxu0
      %v2529 = vadd.f32 %v470, %v2528
      %v2530 = vpop.f32.mrb[0].mxu0
      %2531 = vmatprep.mubr.bf16.mxu0 0
      %2532 = vmatmul.mubr.bf16.gmra.mrb[0].mxu0 %v1501
      %v2533 = vpop.f32.mrb[0].mxu0
      %v2534 = vadd.f32 %v470, %v2533
      %v2535 = vpop.f32.mrb[0].mxu0
      %v2536 = vpop.f32.mrb[0].mxu0
      %v2537 = vadd.f32 %v470, %v2536
      %v2538 = vpop.f32.mrb[0].mxu0
      %2539 = vmatprep.mubr.bf16.mxu0 0
      %2540 = vmatmul.mubr.bf16.gmra.mrb[0].mxu0 %v1504
      %v2541 = vpop.f32.mrb[0].mxu0
      %v2542 = vadd.f32 %v470, %v2541
      %v2543 = vpop.f32.mrb[0].mxu0
      %v2544 = vpop.f32.mrb[0].mxu0
      %v2545 = vadd.f32 %v470, %v2544
      %v2546 = vpop.f32.mrb[0].mxu0
      %2547 = vmatprep.mubr.bf16.mxu0 0
      %2548 = vmatmul.mubr.bf16.gmra.mrb[0].mxu0 %v1507
      %v2549 = vpop.f32.mrb[0].mxu0
      %v2550 = vadd.f32 %v470, %v2549
      %v2551 = vpop.f32.mrb[0].mxu0
      %v2552 = vpop.f32.mrb[0].mxu0
      %v2553 = vadd.f32 %v470, %v2552
      %v2554 = vpop.f32.mrb[0].mxu0
      %2555 = vmatprep.mubr.bf16.mxu0 0
      %2556 = vmatmul.mubr.bf16.gmra.mrb[0].mxu0 %v1510
      %v2557 = vpop.f32.mrb[0].mxu0
      %v2558 = vadd.f32 %v470, %v2557
      %v2559 = vpop.f32.mrb[0].mxu0
      %v2560 = vpop.f32.mrb[0].mxu0
      %v2561 = vadd.f32 %v470, %v2560
      %v2562 = vpop.f32.mrb[0].mxu0
      %2563 = vmatprep.mubr.bf16.mxu0 0
      %2564 = vmatmul.mubr.bf16.gmra.mrb[0].mxu0 %v1513
      %v2565 = vpop.f32.mrb[0].mxu0
      %v2566 = vadd.f32 %v470, %v2565
      %v2567 = vpop.f32.mrb[0].mxu0
      %v2568 = vpop.f32.mrb[0].mxu0
      %v2569 = vadd.f32 %v470, %v2568
      %v2570 = vpop.f32.mrb[0].mxu0
      %2571 = vdwg.mxu0
      %v2572 = vmul.f32 %v1550, 0.2
      %v2573 = vmul.f32 %v1553, 0.2
      %v2574 = vmul.f32 %v1558, 0.2
      %v2575 = vmul.f32 %v1561, 0.2
      %v2576 = vmul.f32 %v1566, 0.2
      %v2577 = vmul.f32 %v1569, 0.2
      %v2578 = vmul.f32 %v1574, 0.2
      %v2579 = vmul.f32 %v1577, 0.2
      %v2580 = vmul.f32 %v1582, 0.2
      %v2581 = vmul.f32 %v1585, 0.2
      %v2582 = vmul.f32 %v1590, 0.2
      %v2583 = vmul.f32 %v1593, 0.2
      %v2584 = vmul.f32 %v1598, 0.2
      %v2585 = vmul.f32 %v1601, 0.2
      %v2586 = vmul.f32 %v1606, 0.2
      %v2587 = vmul.f32 %v1609, 0.2
      %v2588 = vmul.f32 %v1614, 0.2
      %v2589 = vmul.f32 %v1617, 0.2
      %v2590 = vmul.f32 %v1622, 0.2
      %v2591 = vmul.f32 %v1625, 0.2
      %v2592 = vmul.f32 %v1630, 0.2
      %v2593 = vmul.f32 %v1633, 0.2
      %v2594 = vmul.f32 %v1638, 0.2
      %v2595 = vmul.f32 %v1641, 0.2
      %v2596 = vmul.f32 %v1646, 0.2
      %v2597 = vmul.f32 %v1649, 0.2
      %v2598 = vmul.f32 %v1654, 0.2
      %v2599 = vmul.f32 %v1657, 0.2
      %v2600 = vmul.f32 %v1662, 0.2
      %v2601 = vmul.f32 %v1665, 0.2
      %v2602 = vmul.f32 %v1670, 0.2
      %v2603 = vmul.f32 %v1673, 0.2
      %v2604 = vmul.f32 %v1678, 0.2
      %v2605 = vmul.f32 %v1681, 0.2
      %v2606 = vmul.f32 %v1686, 0.2
      %v2607 = vmul.f32 %v1689, 0.2
      %v2608 = vmul.f32 %v1694, 0.2
      %v2609 = vmul.f32 %v1697, 0.2
      %v2610 = vmul.f32 %v1702, 0.2
      %v2611 = vmul.f32 %v1705, 0.2
      %v2612 = vmul.f32 %v1710, 0.2
      %v2613 = vmul.f32 %v1713, 0.2
      %v2614 = vmul.f32 %v1718, 0.2
      %v2615 = vmul.f32 %v1721, 0.2
      %v2616 = vmul.f32 %v1726, 0.2
      %v2617 = vmul.f32 %v1729, 0.2
      %v2618 = vmul.f32 %v1734, 0.2
      %v2619 = vmul.f32 %v1737, 0.2
      %v2620 = vmul.f32 %v1742, 0.2
      %v2621 = vmul.f32 %v1745, 0.2
      %v2622 = vmul.f32 %v1750, 0.2
      %v2623 = vmul.f32 %v1753, 0.2
      %v2624 = vmul.f32 %v1758, 0.2
      %v2625 = vmul.f32 %v1761, 0.2
      %v2626 = vmul.f32 %v1766, 0.2
      %v2627 = vmul.f32 %v1769, 0.2
      %v2628 = vmul.f32 %v1774, 0.2
      %v2629 = vmul.f32 %v1777, 0.2
      %v2630 = vmul.f32 %v1782, 0.2
      %v2631 = vmul.f32 %v1785, 0.2
      %v2632 = vmul.f32 %v1790, 0.2
      %v2633 = vmul.f32 %v1793, 0.2
      %v2634 = vmul.f32 %v1798, 0.2
      %v2635 = vmul.f32 %v1801, 0.2
      %v2636 = vmul.f32 %v1806, 0.2
      %v2637 = vmul.f32 %v1809, 0.2
      %v2638 = vmul.f32 %v1814, 0.2
      %v2639 = vmul.f32 %v1817, 0.2
      %v2640 = vmul.f32 %v1822, 0.2
      %v2641 = vmul.f32 %v1825, 0.2
      %v2642 = vmul.f32 %v1830, 0.2
      %v2643 = vmul.f32 %v1833, 0.2
      %v2644 = vmul.f32 %v1838, 0.2
      %v2645 = vmul.f32 %v1841, 0.2
      %v2646 = vmul.f32 %v1846, 0.2
      %v2647 = vmul.f32 %v1849, 0.2
      %v2648 = vmul.f32 %v1854, 0.2
      %v2649 = vmul.f32 %v1857, 0.2
      %v2650 = vmul.f32 %v1862, 0.2
      %v2651 = vmul.f32 %v1865, 0.2
      %v2652 = vmul.f32 %v1870, 0.2
      %v2653 = vmul.f32 %v1873, 0.2
      %v2654 = vmul.f32 %v1878, 0.2
      %v2655 = vmul.f32 %v1881, 0.2
      %v2656 = vmul.f32 %v1886, 0.2
      %v2657 = vmul.f32 %v1889, 0.2
      %v2658 = vmul.f32 %v1894, 0.2
      %v2659 = vmul.f32 %v1897, 0.2
      %v2660 = vmul.f32 %v1902, 0.2
      %v2661 = vmul.f32 %v1905, 0.2
      %v2662 = vmul.f32 %v1910, 0.2
      %v2663 = vmul.f32 %v1913, 0.2
      %v2664 = vmul.f32 %v1918, 0.2
      %v2665 = vmul.f32 %v1921, 0.2
      %v2666 = vmul.f32 %v1926, 0.2
      %v2667 = vmul.f32 %v1929, 0.2
      %v2668 = vmul.f32 %v1934, 0.2
      %v2669 = vmul.f32 %v1937, 0.2
      %v2670 = vmul.f32 %v1942, 0.2
      %v2671 = vmul.f32 %v1945, 0.2
      %v2672 = vmul.f32 %v1950, 0.2
      %v2673 = vmul.f32 %v1953, 0.2
      %v2674 = vmul.f32 %v1958, 0.2
      %v2675 = vmul.f32 %v1961, 0.2
      %v2676 = vmul.f32 %v1966, 0.2
      %v2677 = vmul.f32 %v1969, 0.2
      %v2678 = vmul.f32 %v1974, 0.2
      %v2679 = vmul.f32 %v1977, 0.2
      %v2680 = vmul.f32 %v1982, 0.2
      %v2681 = vmul.f32 %v1985, 0.2
      %v2682 = vmul.f32 %v1990, 0.2
      %v2683 = vmul.f32 %v1993, 0.2
      %v2684 = vmul.f32 %v1998, 0.2
      %v2685 = vmul.f32 %v2001, 0.2
      %v2686 = vmul.f32 %v2006, 0.2
      %v2687 = vmul.f32 %v2009, 0.2
      %v2688 = vmul.f32 %v2014, 0.2
      %v2689 = vmul.f32 %v2017, 0.2
      %v2690 = vmul.f32 %v2022, 0.2
      %v2691 = vmul.f32 %v2025, 0.2
      %v2692 = vmul.f32 %v2030, 0.2
      %v2693 = vmul.f32 %v2033, 0.2
      %v2694 = vmul.f32 %v2038, 0.2
      %v2695 = vmul.f32 %v2041, 0.2
      %v2696 = vmul.f32 %v2046, 0.2
      %v2697 = vmul.f32 %v2049, 0.2
      %v2698 = vmul.f32 %v2054, 0.2
      %v2699 = vmul.f32 %v2057, 0.2
      %v2700 = vmul.f32 %v2062, 0.2
      %v2701 = vmul.f32 %v2065, 0.2
      %v2702 = vmul.f32 %v2070, 0.2
      %v2703 = vmul.f32 %v2073, 0.2
      %v2704 = vmul.f32 %v2078, 0.2
      %v2705 = vmul.f32 %v2081, 0.2
      %v2706 = vmul.f32 %v2086, 0.2
      %v2707 = vmul.f32 %v2089, 0.2
      %v2708 = vmul.f32 %v2094, 0.2
      %v2709 = vmul.f32 %v2097, 0.2
      %v2710 = vmul.f32 %v2102, 0.2
      %v2711 = vmul.f32 %v2105, 0.2
      %v2712 = vmul.f32 %v2110, 0.2
      %v2713 = vmul.f32 %v2113, 0.2
      %v2714 = vmul.f32 %v2118, 0.2
      %v2715 = vmul.f32 %v2121, 0.2
      %v2716 = vmul.f32 %v2126, 0.2
      %v2717 = vmul.f32 %v2129, 0.2
      %v2718 = vmul.f32 %v2134, 0.2
      %v2719 = vmul.f32 %v2137, 0.2
      %v2720 = vmul.f32 %v2142, 0.2
      %v2721 = vmul.f32 %v2145, 0.2
      %v2722 = vmul.f32 %v2150, 0.2
      %v2723 = vmul.f32 %v2153, 0.2
      %v2724 = vmul.f32 %v2158, 0.2
      %v2725 = vmul.f32 %v2161, 0.2
      %v2726 = vmul.f32 %v2166, 0.2
      %v2727 = vmul.f32 %v2169, 0.2
      %v2728 = vmul.f32 %v2174, 0.2
      %v2729 = vmul.f32 %v2177, 0.2
      %v2730 = vmul.f32 %v2182, 0.2
      %v2731 = vmul.f32 %v2185, 0.2
      %v2732 = vmul.f32 %v2190, 0.2
      %v2733 = vmul.f32 %v2193, 0.2
      %v2734 = vmul.f32 %v2198, 0.2
      %v2735 = vmul.f32 %v2201, 0.2
      %v2736 = vmul.f32 %v2206, 0.2
      %v2737 = vmul.f32 %v2209, 0.2
      %v2738 = vmul.f32 %v2214, 0.2
      %v2739 = vmul.f32 %v2217, 0.2
      %v2740 = vmul.f32 %v2222, 0.2
      %v2741 = vmul.f32 %v2225, 0.2
      %v2742 = vmul.f32 %v2230, 0.2
      %v2743 = vmul.f32 %v2233, 0.2
      %v2744 = vmul.f32 %v2238, 0.2
      %v2745 = vmul.f32 %v2241, 0.2
      %v2746 = vmul.f32 %v2246, 0.2
      %v2747 = vmul.f32 %v2249, 0.2
      %v2748 = vmul.f32 %v2254, 0.2
      %v2749 = vmul.f32 %v2257, 0.2
      %v2750 = vmul.f32 %v2262, 0.2
      %v2751 = vmul.f32 %v2265, 0.2
      %v2752 = vmul.f32 %v2270, 0.2
      %v2753 = vmul.f32 %v2273, 0.2
      %v2754 = vmul.f32 %v2278, 0.2
      %v2755 = vmul.f32 %v2281, 0.2
      %v2756 = vmul.f32 %v2286, 0.2
      %v2757 = vmul.f32 %v2289, 0.2
      %v2758 = vmul.f32 %v2294, 0.2
      %v2759 = vmul.f32 %v2297, 0.2
      %v2760 = vmul.f32 %v2302, 0.2
      %v2761 = vmul.f32 %v2305, 0.2
      %v2762 = vmul.f32 %v2310, 0.2
      %v2763 = vmul.f32 %v2313, 0.2
      %v2764 = vmul.f32 %v2318, 0.2
      %v2765 = vmul.f32 %v2321, 0.2
      %v2766 = vmul.f32 %v2326, 0.2
      %v2767 = vmul.f32 %v2329, 0.2
      %v2768 = vmul.f32 %v2334, 0.2
      %v2769 = vmul.f32 %v2337, 0.2
      %v2770 = vmul.f32 %v2342, 0.2
      %v2771 = vmul.f32 %v2345, 0.2
      %v2772 = vmul.f32 %v2350, 0.2
      %v2773 = vmul.f32 %v2353, 0.2
      %v2774 = vmul.f32 %v2358, 0.2
      %v2775 = vmul.f32 %v2361, 0.2
      %v2776 = vmul.f32 %v2366, 0.2
      %v2777 = vmul.f32 %v2369, 0.2
      %v2778 = vmul.f32 %v2374, 0.2
      %v2779 = vmul.f32 %v2377, 0.2
      %v2780 = vmul.f32 %v2382, 0.2
      %v2781 = vmul.f32 %v2385, 0.2
      %v2782 = vmul.f32 %v2390, 0.2
      %v2783 = vmul.f32 %v2393, 0.2
      %v2784 = vmul.f32 %v2398, 0.2
      %v2785 = vmul.f32 %v2401, 0.2
      %v2786 = vmul.f32 %v2406, 0.2
      %v2787 = vmul.f32 %v2409, 0.2
      %v2788 = vmul.f32 %v2414, 0.2
      %v2789 = vmul.f32 %v2417, 0.2
      %v2790 = vmul.f32 %v2422, 0.2
      %v2791 = vmul.f32 %v2425, 0.2
      %v2792 = vmul.f32 %v2430, 0.2
      %v2793 = vmul.f32 %v2433, 0.2
      %v2794 = vmul.f32 %v2438, 0.2
      %v2795 = vmul.f32 %v2441, 0.2
      %v2796 = vmul.f32 %v2446, 0.2
      %v2797 = vmul.f32 %v2449, 0.2
      %v2798 = vmul.f32 %v2454, 0.2
      %v2799 = vmul.f32 %v2457, 0.2
      %v2800 = vmul.f32 %v2462, 0.2
      %v2801 = vmul.f32 %v2465, 0.2
      %v2802 = vmul.f32 %v2470, 0.2
      %v2803 = vmul.f32 %v2473, 0.2
      %v2804 = vmul.f32 %v2478, 0.2
      %v2805 = vmul.f32 %v2481, 0.2
      %v2806 = vmul.f32 %v2486, 0.2
      %v2807 = vmul.f32 %v2489, 0.2
      %v2808 = vmul.f32 %v2494, 0.2
      %v2809 = vmul.f32 %v2497, 0.2
      %v2810 = vmul.f32 %v2502, 0.2
      %v2811 = vmul.f32 %v2505, 0.2
      %v2812 = vmul.f32 %v2510, 0.2
      %v2813 = vmul.f32 %v2513, 0.2
      %v2814 = vmul.f32 %v2518, 0.2
      %v2815 = vmul.f32 %v2521, 0.2
      %v2816 = vmul.f32 %v2526, 0.2
      %v2817 = vmul.f32 %v2529, 0.2
      %v2818 = vmul.f32 %v2534, 0.2
      %v2819 = vmul.f32 %v2537, 0.2
      %v2820 = vmul.f32 %v2542, 0.2
      %v2821 = vmul.f32 %v2545, 0.2
      %v2822 = vmul.f32 %v2550, 0.2
      %v2823 = vmul.f32 %v2553, 0.2
      %v2824 = vmul.f32 %v2558, 0.2
      %v2825 = vmul.f32 %v2561, 0.2
      %v2826 = vmul.f32 %v2566, 0.2
      %v2827 = vmul.f32 %v2569, 0.2
      %v2828 = vmax.f32 %v1550, %v2572
      %v2829 = vmax.f32 %v1553, %v2573
      %v2830 = vmax.f32 %v1558, %v2574
      %v2831 = vmax.f32 %v1561, %v2575
      %v2832 = vmax.f32 %v1566, %v2576
      %v2833 = vmax.f32 %v1569, %v2577
      %v2834 = vmax.f32 %v1574, %v2578
      %v2835 = vmax.f32 %v1577, %v2579
      %v2836 = vmax.f32 %v1582, %v2580
      %v2837 = vmax.f32 %v1585, %v2581
      %v2838 = vmax.f32 %v1590, %v2582
      %v2839 = vmax.f32 %v1593, %v2583
      %v2840 = vmax.f32 %v1598, %v2584
      %v2841 = vmax.f32 %v1601, %v2585
      %v2842 = vmax.f32 %v1606, %v2586
      %v2843 = vmax.f32 %v1609, %v2587
      %v2844 = vmax.f32 %v1614, %v2588
      %v2845 = vmax.f32 %v1617, %v2589
      %v2846 = vmax.f32 %v1622, %v2590
      %v2847 = vmax.f32 %v1625, %v2591
      %v2848 = vmax.f32 %v1630, %v2592
      %v2849 = vmax.f32 %v1633, %v2593
      %v2850 = vmax.f32 %v1638, %v2594
      %v2851 = vmax.f32 %v1641, %v2595
      %v2852 = vmax.f32 %v1646, %v2596
      %v2853 = vmax.f32 %v1649, %v2597
      %v2854 = vmax.f32 %v1654, %v2598
      %v2855 = vmax.f32 %v1657, %v2599
      %v2856 = vmax.f32 %v1662, %v2600
      %v2857 = vmax.f32 %v1665, %v2601
      %v2858 = vmax.f32 %v1670, %v2602
      %v2859 = vmax.f32 %v1673, %v2603
      %v2860 = vmax.f32 %v1678, %v2604
      %v2861 = vmax.f32 %v1681, %v2605
      %v2862 = vmax.f32 %v1686, %v2606
      %v2863 = vmax.f32 %v1689, %v2607
      %v2864 = vmax.f32 %v1694, %v2608
      %v2865 = vmax.f32 %v1697, %v2609
      %v2866 = vmax.f32 %v1702, %v2610
      %v2867 = vmax.f32 %v1705, %v2611
      %v2868 = vmax.f32 %v1710, %v2612
      %v2869 = vmax.f32 %v1713, %v2613
      %v2870 = vmax.f32 %v1718, %v2614
      %v2871 = vmax.f32 %v1721, %v2615
      %v2872 = vmax.f32 %v1726, %v2616
      %v2873 = vmax.f32 %v1729, %v2617
      %v2874 = vmax.f32 %v1734, %v2618
      %v2875 = vmax.f32 %v1737, %v2619
      %v2876 = vmax.f32 %v1742, %v2620
      %v2877 = vmax.f32 %v1745, %v2621
      %v2878 = vmax.f32 %v1750, %v2622
      %v2879 = vmax.f32 %v1753, %v2623
      %v2880 = vmax.f32 %v1758, %v2624
      %v2881 = vmax.f32 %v1761, %v2625
      %v2882 = vmax.f32 %v1766, %v2626
      %v2883 = vmax.f32 %v1769, %v2627
      %v2884 = vmax.f32 %v1774, %v2628
      %v2885 = vmax.f32 %v1777, %v2629
      %v2886 = vmax.f32 %v1782, %v2630
      %v2887 = vmax.f32 %v1785, %v2631
      %v2888 = vmax.f32 %v1790, %v2632
      %v2889 = vmax.f32 %v1793, %v2633
      %v2890 = vmax.f32 %v1798, %v2634
      %v2891 = vmax.f32 %v1801, %v2635
      %v2892 = vmax.f32 %v1806, %v2636
      %v2893 = vmax.f32 %v1809, %v2637
      %v2894 = vmax.f32 %v1814, %v2638
      %v2895 = vmax.f32 %v1817, %v2639
      %v2896 = vmax.f32 %v1822, %v2640
      %v2897 = vmax.f32 %v1825, %v2641
      %v2898 = vmax.f32 %v1830, %v2642
      %v2899 = vmax.f32 %v1833, %v2643
      %v2900 = vmax.f32 %v1838, %v2644
      %v2901 = vmax.f32 %v1841, %v2645
      %v2902 = vmax.f32 %v1846, %v2646
      %v2903 = vmax.f32 %v1849, %v2647
      %v2904 = vmax.f32 %v1854, %v2648
      %v2905 = vmax.f32 %v1857, %v2649
      %v2906 = vmax.f32 %v1862, %v2650
      %v2907 = vmax.f32 %v1865, %v2651
      %v2908 = vmax.f32 %v1870, %v2652
      %v2909 = vmax.f32 %v1873, %v2653
      %v2910 = vmax.f32 %v1878, %v2654
      %v2911 = vmax.f32 %v1881, %v2655
      %v2912 = vmax.f32 %v1886, %v2656
      %v2913 = vmax.f32 %v1889, %v2657
      %v2914 = vmax.f32 %v1894, %v2658
      %v2915 = vmax.f32 %v1897, %v2659
      %v2916 = vmax.f32 %v1902, %v2660
      %v2917 = vmax.f32 %v1905, %v2661
      %v2918 = vmax.f32 %v1910, %v2662
      %v2919 = vmax.f32 %v1913, %v2663
      %v2920 = vmax.f32 %v1918, %v2664
      %v2921 = vmax.f32 %v1921, %v2665
      %v2922 = vmax.f32 %v1926, %v2666
      %v2923 = vmax.f32 %v1929, %v2667
      %v2924 = vmax.f32 %v1934, %v2668
      %v2925 = vmax.f32 %v1937, %v2669
      %v2926 = vmax.f32 %v1942, %v2670
      %v2927 = vmax.f32 %v1945, %v2671
      %v2928 = vmax.f32 %v1950, %v2672
      %v2929 = vmax.f32 %v1953, %v2673
      %v2930 = vmax.f32 %v1958, %v2674
      %v2931 = vmax.f32 %v1961, %v2675
      %v2932 = vmax.f32 %v1966, %v2676
      %v2933 = vmax.f32 %v1969, %v2677
      %v2934 = vmax.f32 %v1974, %v2678
      %v2935 = vmax.f32 %v1977, %v2679
      %v2936 = vmax.f32 %v1982, %v2680
      %v2937 = vmax.f32 %v1985, %v2681
      %v2938 = vmax.f32 %v1990, %v2682
      %v2939 = vmax.f32 %v1993, %v2683
      %v2940 = vmax.f32 %v1998, %v2684
      %v2941 = vmax.f32 %v2001, %v2685
      %v2942 = vmax.f32 %v2006, %v2686
      %v2943 = vmax.f32 %v2009, %v2687
      %v2944 = vmax.f32 %v2014, %v2688
      %v2945 = vmax.f32 %v2017, %v2689
      %v2946 = vmax.f32 %v2022, %v2690
      %v2947 = vmax.f32 %v2025, %v2691
      %v2948 = vmax.f32 %v2030, %v2692
      %v2949 = vmax.f32 %v2033, %v2693
      %v2950 = vmax.f32 %v2038, %v2694
      %v2951 = vmax.f32 %v2041, %v2695
      %v2952 = vmax.f32 %v2046, %v2696
      %v2953 = vmax.f32 %v2049, %v2697
      %v2954 = vmax.f32 %v2054, %v2698
      %v2955 = vmax.f32 %v2057, %v2699
      %v2956 = vmax.f32 %v2062, %v2700
      %v2957 = vmax.f32 %v2065, %v2701
      %v2958 = vmax.f32 %v2070, %v2702
      %v2959 = vmax.f32 %v2073, %v2703
      %v2960 = vmax.f32 %v2078, %v2704
      %v2961 = vmax.f32 %v2081, %v2705
      %v2962 = vmax.f32 %v2086, %v2706
      %v2963 = vmax.f32 %v2089, %v2707
      %v2964 = vmax.f32 %v2094, %v2708
      %v2965 = vmax.f32 %v2097, %v2709
      %v2966 = vmax.f32 %v2102, %v2710
      %v2967 = vmax.f32 %v2105, %v2711
      %v2968 = vmax.f32 %v2110, %v2712
      %v2969 = vmax.f32 %v2113, %v2713
      %v2970 = vmax.f32 %v2118, %v2714
      %v2971 = vmax.f32 %v2121, %v2715
      %v2972 = vmax.f32 %v2126, %v2716
      %v2973 = vmax.f32 %v2129, %v2717
      %v2974 = vmax.f32 %v2134, %v2718
      %v2975 = vmax.f32 %v2137, %v2719
      %v2976 = vmax.f32 %v2142, %v2720
      %v2977 = vmax.f32 %v2145, %v2721
      %v2978 = vmax.f32 %v2150, %v2722
      %v2979 = vmax.f32 %v2153, %v2723
      %v2980 = vmax.f32 %v2158, %v2724
      %v2981 = vmax.f32 %v2161, %v2725
      %v2982 = vmax.f32 %v2166, %v2726
      %v2983 = vmax.f32 %v2169, %v2727
      %v2984 = vmax.f32 %v2174, %v2728
      %v2985 = vmax.f32 %v2177, %v2729
      %v2986 = vmax.f32 %v2182, %v2730
      %v2987 = vmax.f32 %v2185, %v2731
      %v2988 = vmax.f32 %v2190, %v2732
      %v2989 = vmax.f32 %v2193, %v2733
      %v2990 = vmax.f32 %v2198, %v2734
      %v2991 = vmax.f32 %v2201, %v2735
      %v2992 = vmax.f32 %v2206, %v2736
      %v2993 = vmax.f32 %v2209, %v2737
      %v2994 = vmax.f32 %v2214, %v2738
      %v2995 = vmax.f32 %v2217, %v2739
      %v2996 = vmax.f32 %v2222, %v2740
      %v2997 = vmax.f32 %v2225, %v2741
      %v2998 = vmax.f32 %v2230, %v2742
      %v2999 = vmax.f32 %v2233, %v2743
      %v3000 = vmax.f32 %v2238, %v2744
      %v3001 = vmax.f32 %v2241, %v2745
      %v3002 = vmax.f32 %v2246, %v2746
      %v3003 = vmax.f32 %v2249, %v2747
      %v3004 = vmax.f32 %v2254, %v2748
      %v3005 = vmax.f32 %v2257, %v2749
      %v3006 = vmax.f32 %v2262, %v2750
      %v3007 = vmax.f32 %v2265, %v2751
      %v3008 = vmax.f32 %v2270, %v2752
      %v3009 = vmax.f32 %v2273, %v2753
      %v3010 = vmax.f32 %v2278, %v2754
      %v3011 = vmax.f32 %v2281, %v2755
      %v3012 = vmax.f32 %v2286, %v2756
      %v3013 = vmax.f32 %v2289, %v2757
      %v3014 = vmax.f32 %v2294, %v2758
      %v3015 = vmax.f32 %v2297, %v2759
      %v3016 = vmax.f32 %v2302, %v2760
      %v3017 = vmax.f32 %v2305, %v2761
      %v3018 = vmax.f32 %v2310, %v2762
      %v3019 = vmax.f32 %v2313, %v2763
      %v3020 = vmax.f32 %v2318, %v2764
      %v3021 = vmax.f32 %v2321, %v2765
      %v3022 = vmax.f32 %v2326, %v2766
      %v3023 = vmax.f32 %v2329, %v2767
      %v3024 = vmax.f32 %v2334, %v2768
      %v3025 = vmax.f32 %v2337, %v2769
      %v3026 = vmax.f32 %v2342, %v2770
      %v3027 = vmax.f32 %v2345, %v2771
      %v3028 = vmax.f32 %v2350, %v2772
      %v3029 = vmax.f32 %v2353, %v2773
      %v3030 = vmax.f32 %v2358, %v2774
      %v3031 = vmax.f32 %v2361, %v2775
      %v3032 = vmax.f32 %v2366, %v2776
      %v3033 = vmax.f32 %v2369, %v2777
      %v3034 = vmax.f32 %v2374, %v2778
      %v3035 = vmax.f32 %v2377, %v2779
      %v3036 = vmax.f32 %v2382, %v2780
      %v3037 = vmax.f32 %v2385, %v2781
      %v3038 = vmax.f32 %v2390, %v2782
      %v3039 = vmax.f32 %v2393, %v2783
      %v3040 = vmax.f32 %v2398, %v2784
      %v3041 = vmax.f32 %v2401, %v2785
      %v3042 = vmax.f32 %v2406, %v2786
      %v3043 = vmax.f32 %v2409, %v2787
      %v3044 = vmax.f32 %v2414, %v2788
      %v3045 = vmax.f32 %v2417, %v2789
      %v3046 = vmax.f32 %v2422, %v2790
      %v3047 = vmax.f32 %v2425, %v2791
      %v3048 = vmax.f32 %v2430, %v2792
      %v3049 = vmax.f32 %v2433, %v2793
      %v3050 = vmax.f32 %v2438, %v2794
      %v3051 = vmax.f32 %v2441, %v2795
      %v3052 = vmax.f32 %v2446, %v2796
      %v3053 = vmax.f32 %v2449, %v2797
      %v3054 = vmax.f32 %v2454, %v2798
      %v3055 = vmax.f32 %v2457, %v2799
      %v3056 = vmax.f32 %v2462, %v2800
      %v3057 = vmax.f32 %v2465, %v2801
      %v3058 = vmax.f32 %v2470, %v2802
      %v3059 = vmax.f32 %v2473, %v2803
      %v3060 = vmax.f32 %v2478, %v2804
      %v3061 = vmax.f32 %v2481, %v2805
      %v3062 = vmax.f32 %v2486, %v2806
      %v3063 = vmax.f32 %v2489, %v2807
      %v3064 = vmax.f32 %v2494, %v2808
      %v3065 = vmax.f32 %v2497, %v2809
      %v3066 = vmax.f32 %v2502, %v2810
      %v3067 = vmax.f32 %v2505, %v2811
      %v3068 = vmax.f32 %v2510, %v2812
      %v3069 = vmax.f32 %v2513, %v2813
      %v3070 = vmax.f32 %v2518, %v2814
      %v3071 = vmax.f32 %v2521, %v2815
      %v3072 = vmax.f32 %v2526, %v2816
      %v3073 = vmax.f32 %v2529, %v2817
      %v3074 = vmax.f32 %v2534, %v2818
      %v3075 = vmax.f32 %v2537, %v2819
      %v3076 = vmax.f32 %v2542, %v2820
      %v3077 = vmax.f32 %v2545, %v2821
      %v3078 = vmax.f32 %v2550, %v2822
      %v3079 = vmax.f32 %v2553, %v2823
      %v3080 = vmax.f32 %v2558, %v2824
      %v3081 = vmax.f32 %v2561, %v2825
      %v3082 = vmax.f32 %v2566, %v2826
      %v3083 = vmax.f32 %v2569, %v2827
      %v3084 = vadd.f32 %v2828, %v2836
      %v3085 = vadd.f32 %v2829, %v2837
      %v3086 = vadd.f32 %v2830, %v2838
      %v3087 = vadd.f32 %v2831, %v2839
      %v3088 = vadd.f32 %v2832, %v2840
      %v3089 = vadd.f32 %v2833, %v2841
      %v3090 = vadd.f32 %v2834, %v2842
      %v3091 = vadd.f32 %v2835, %v2843
      %v3092 = vpack.c.bf16 %v3085, %v3084
      %v3093 = vpack.c.bf16 %v3087, %v3086
      %v3094 = vpack.c.bf16 %v3089, %v3088
      %v3095 = vpack.c.bf16 %v3091, %v3090
      %v3100 = vunpack.c.l.b16 %v200
      %v3101 = vunpack.c.l.b16 %v201
      %v3102 = vunpack.c.l.b16 %v202
      %v3103 = vunpack.c.l.b16 %v203
      %v3104 = vpack.c.b16 %v3101, %v3100
      %v3105 = vpack.c.b16 %v3103, %v3102
      %vm3106 = vcmask 523264
      %v3108 = vsel %vm3106, %v3104, 0
      %v3111 = vsel %vm3106, %v3105, 0
      %3113 = vmatprep.subr.bf16.mxu0 0
      %3114 = vmatpush1.bf16.msra.mxu0 %v3092
      %3115 = vmatprep.subr.bf16.mxu0 0
      %3116 = vmatpush1.bf16.msra.mxu0 %v3093
      %3117 = vmatprep.subr.bf16.mxu0 0
      %3118 = vmatpush1.bf16.msra.mxu0 %v3094
      %3119 = vmatprep.subr.bf16.mxu0 0
      %3120 = vmatpush1.bf16.msra.mxu0 %v3095
      %3121 = vmatprep.subr.bf16.mxu0 0
      %3122 = vmatpush1.bf16.msra.mxu0 0
      %3123 = vmatprep.subr.bf16.mxu0 0
      %3124 = vmatpush1.bf16.msra.mxu0 0
      %3125 = vmatprep.subr.bf16.mxu0 0
      %3126 = vmatpush1.bf16.msra.mxu0 0
      %3127 = vmatprep.subr.bf16.mxu0 0
      %3128 = vmatpush1.bf16.msra.mxu0 0
      %3129 = vmatprep.subr.bf16.mxu0 0
      %3130 = vmatpush1.bf16.msra.mxu0 0
      %3131 = vmatprep.subr.bf16.mxu0 0
      %3132 = vmatpush1.bf16.msra.mxu0 0
      %3133 = vmatprep.subr.bf16.mxu0 0
      %3134 = vmatpush1.bf16.msra.mxu0 0
      %3135 = vmatprep.subr.bf16.mxu0 0
      %3136 = vmatpush1.bf16.msra.mxu0 0
      %3137 = vmatprep.subr.bf16.mxu0 0
      %3138 = vmatpush1.bf16.msra.mxu0 0
      %3139 = vmatprep.subr.bf16.mxu0 0
      %3140 = vmatpush1.bf16.msra.mxu0 0
      %3141 = vmatprep.subr.bf16.mxu0 0
      %3142 = vmatpush1.bf16.msra.mxu0 0
      %3143 = vmatprep.subr.bf16.mxu0 0
      %3144 = vmatpush1.bf16.msra.mxu0 0
      %3145 = vmatprep.mubr.bf16.mxu0 0
      %3146 = vmatmul.mubr.bf16.gmra.mrb[0].mxu0 %v3108
      %v3147 = vpop.f32.mrb[0].mxu0
      %v3148 = vadd.f32 0.0, %v3147
      %v3149 = vpop.f32.mrb[0].mxu0
      %v3150 = vpop.f32.mrb[0].mxu0
      %v3151 = vadd.f32 0.0, %v3150
      %v3152 = vpop.f32.mrb[0].mxu0
      %3153 = vmatprep.mubr.bf16.mxu0 0
      %3154 = vmatmul.mubr.bf16.gmra.mrb[0].mxu0 %v3111
      %v3155 = vpop.f32.mrb[0].mxu0
      %v3156 = vadd.f32 0.0, %v3155
      %v3157 = vpop.f32.mrb[0].mxu0
      %v3158 = vpop.f32.mrb[0].mxu0
      %v3159 = vadd.f32 0.0, %v3158
      %v3160 = vpop.f32.mrb[0].mxu0
      %3161 = vdwg.mxu0
      %v3162 = vadd.f32 %v2844, %v2852
      %v3163 = vadd.f32 %v2845, %v2853
      %v3164 = vadd.f32 %v2846, %v2854
      %v3165 = vadd.f32 %v2847, %v2855
      %v3166 = vadd.f32 %v2848, %v2856
      %v3167 = vadd.f32 %v2849, %v2857
      %v3168 = vadd.f32 %v2850, %v2858
      %v3169 = vadd.f32 %v2851, %v2859
      %v3170 = vpack.c.bf16 %v3163, %v3162
      %v3171 = vpack.c.bf16 %v3165, %v3164
      %v3172 = vpack.c.bf16 %v3167, %v3166
      %v3173 = vpack.c.bf16 %v3169, %v3168
      %3174 = vmatprep.subr.bf16.mxu0 0
      %3175 = vmatpush1.bf16.msra.mxu0 %v3170
      %3176 = vmatprep.subr.bf16.mxu0 0
      %3177 = vmatpush1.bf16.msra.mxu0 %v3171
      %3178 = vmatprep.subr.bf16.mxu0 0
      %3179 = vmatpush1.bf16.msra.mxu0 %v3172
      %3180 = vmatprep.subr.bf16.mxu0 0
      %3181 = vmatpush1.bf16.msra.mxu0 %v3173
      %3182 = vmatprep.subr.bf16.mxu0 0
      %3183 = vmatpush1.bf16.msra.mxu0 0
      %3184 = vmatprep.subr.bf16.mxu0 0
      %3185 = vmatpush1.bf16.msra.mxu0 0
      %3186 = vmatprep.subr.bf16.mxu0 0
      %3187 = vmatpush1.bf16.msra.mxu0 0
      %3188 = vmatprep.subr.bf16.mxu0 0
      %3189 = vmatpush1.bf16.msra.mxu0 0
      %3190 = vmatprep.subr.bf16.mxu0 0
      %3191 = vmatpush1.bf16.msra.mxu0 0
      %3192 = vmatprep.subr.bf16.mxu0 0
      %3193 = vmatpush1.bf16.msra.mxu0 0
      %3194 = vmatprep.subr.bf16.mxu0 0
      %3195 = vmatpush1.bf16.msra.mxu0 0
      %3196 = vmatprep.subr.bf16.mxu0 0
      %3197 = vmatpush1.bf16.msra.mxu0 0
      %3198 = vmatprep.subr.bf16.mxu0 0
      %3199 = vmatpush1.bf16.msra.mxu0 0
      %3200 = vmatprep.subr.bf16.mxu0 0
      %3201 = vmatpush1.bf16.msra.mxu0 0
      %3202 = vmatprep.subr.bf16.mxu0 0
      %3203 = vmatpush1.bf16.msra.mxu0 0
      %3204 = vmatprep.subr.bf16.mxu0 0
      %3205 = vmatpush1.bf16.msra.mxu0 0
      %3206 = vmatprep.mubr.bf16.mxu0 0
      %3207 = vmatmul.mubr.bf16.gmra.mrb[0].mxu0 %v3108
      %v3208 = vpop.f32.mrb[0].mxu0
      %v3209 = vadd.f32 0.0, %v3208
      %v3210 = vpop.f32.mrb[0].mxu0
      %v3211 = vpop.f32.mrb[0].mxu0
      %v3212 = vadd.f32 0.0, %v3211
      %v3213 = vpop.f32.mrb[0].mxu0
      %3214 = vmatprep.mubr.bf16.mxu0 0
      %3215 = vmatmul.mubr.bf16.gmra.mrb[0].mxu0 %v3111
      %v3216 = vpop.f32.mrb[0].mxu0
      %v3217 = vadd.f32 0.0, %v3216
      %v3218 = vpop.f32.mrb[0].mxu0
      %v3219 = vpop.f32.mrb[0].mxu0
      %v3220 = vadd.f32 0.0, %v3219
      %v3221 = vpop.f32.mrb[0].mxu0
      %3222 = vdwg.mxu0
      %v3223 = vadd.f32 %v2860, %v2868
      %v3224 = vadd.f32 %v2861, %v2869
      %v3225 = vadd.f32 %v2862, %v2870
      %v3226 = vadd.f32 %v2863, %v2871
      %v3227 = vadd.f32 %v2864, %v2872
      %v3228 = vadd.f32 %v2865, %v2873
      %v3229 = vadd.f32 %v2866, %v2874
      %v3230 = vadd.f32 %v2867, %v2875
      %v3231 = vpack.c.bf16 %v3224, %v3223
      %v3232 = vpack.c.bf16 %v3226, %v3225
      %v3233 = vpack.c.bf16 %v3228, %v3227
      %v3234 = vpack.c.bf16 %v3230, %v3229
      %3235 = vmatprep.subr.bf16.mxu0 0
      %3236 = vmatpush1.bf16.msra.mxu0 %v3231
      %3237 = vmatprep.subr.bf16.mxu0 0
      %3238 = vmatpush1.bf16.msra.mxu0 %v3232
      %3239 = vmatprep.subr.bf16.mxu0 0
      %3240 = vmatpush1.bf16.msra.mxu0 %v3233
      %3241 = vmatprep.subr.bf16.mxu0 0
      %3242 = vmatpush1.bf16.msra.mxu0 %v3234
      %3243 = vmatprep.subr.bf16.mxu0 0
      %3244 = vmatpush1.bf16.msra.mxu0 0
      %3245 = vmatprep.subr.bf16.mxu0 0
      %3246 = vmatpush1.bf16.msra.mxu0 0
      %3247 = vmatprep.subr.bf16.mxu0 0
      %3248 = vmatpush1.bf16.msra.mxu0 0
      %3249 = vmatprep.subr.bf16.mxu0 0
      %3250 = vmatpush1.bf16.msra.mxu0 0
      %3251 = vmatprep.subr.bf16.mxu0 0
      %3252 = vmatpush1.bf16.msra.mxu0 0
      %3253 = vmatprep.subr.bf16.mxu0 0
      %3254 = vmatpush1.bf16.msra.mxu0 0
      %3255 = vmatprep.subr.bf16.mxu0 0
      %3256 = vmatpush1.bf16.msra.mxu0 0
      %3257 = vmatprep.subr.bf16.mxu0 0
      %3258 = vmatpush1.bf16.msra.mxu0 0
      %3259 = vmatprep.subr.bf16.mxu0 0
      %3260 = vmatpush1.bf16.msra.mxu0 0
      %3261 = vmatprep.subr.bf16.mxu0 0
      %3262 = vmatpush1.bf16.msra.mxu0 0
      %3263 = vmatprep.subr.bf16.mxu0 0
      %3264 = vmatpush1.bf16.msra.mxu0 0
      %3265 = vmatprep.subr.bf16.mxu0 0
      %3266 = vmatpush1.bf16.msra.mxu0 0
      %3267 = vmatprep.mubr.bf16.mxu0 0
      %3268 = vmatmul.mubr.bf16.gmra.mrb[0].mxu0 %v3108
      %v3269 = vpop.f32.mrb[0].mxu0
      %v3270 = vadd.f32 0.0, %v3269
      %v3271 = vpop.f32.mrb[0].mxu0
      %v3272 = vpop.f32.mrb[0].mxu0
      %v3273 = vadd.f32 0.0, %v3272
      %v3274 = vpop.f32.mrb[0].mxu0
      %3275 = vmatprep.mubr.bf16.mxu0 0
      %3276 = vmatmul.mubr.bf16.gmra.mrb[0].mxu0 %v3111
      %v3277 = vpop.f32.mrb[0].mxu0
      %v3278 = vadd.f32 0.0, %v3277
      %v3279 = vpop.f32.mrb[0].mxu0
      %v3280 = vpop.f32.mrb[0].mxu0
      %v3281 = vadd.f32 0.0, %v3280
      %v3282 = vpop.f32.mrb[0].mxu0
      %3283 = vdwg.mxu0
      %v3284 = vadd.f32 %v2876, %v2884
      %v3285 = vadd.f32 %v2877, %v2885
      %v3286 = vadd.f32 %v2878, %v2886
      %v3287 = vadd.f32 %v2879, %v2887
      %v3288 = vadd.f32 %v2880, %v2888
      %v3289 = vadd.f32 %v2881, %v2889
      %v3290 = vadd.f32 %v2882, %v2890
      %v3291 = vadd.f32 %v2883, %v2891
      %v3292 = vpack.c.bf16 %v3285, %v3284
      %v3293 = vpack.c.bf16 %v3287, %v3286
      %v3294 = vpack.c.bf16 %v3289, %v3288
      %v3295 = vpack.c.bf16 %v3291, %v3290
      %3296 = vmatprep.subr.bf16.mxu0 0
      %3297 = vmatpush1.bf16.msra.mxu0 %v3292
      %3298 = vmatprep.subr.bf16.mxu0 0
      %3299 = vmatpush1.bf16.msra.mxu0 %v3293
      %3300 = vmatprep.subr.bf16.mxu0 0
      %3301 = vmatpush1.bf16.msra.mxu0 %v3294
      %3302 = vmatprep.subr.bf16.mxu0 0
      %3303 = vmatpush1.bf16.msra.mxu0 %v3295
      %3304 = vmatprep.subr.bf16.mxu0 0
      %3305 = vmatpush1.bf16.msra.mxu0 0
      %3306 = vmatprep.subr.bf16.mxu0 0
      %3307 = vmatpush1.bf16.msra.mxu0 0
      %3308 = vmatprep.subr.bf16.mxu0 0
      %3309 = vmatpush1.bf16.msra.mxu0 0
      %3310 = vmatprep.subr.bf16.mxu0 0
      %3311 = vmatpush1.bf16.msra.mxu0 0
      %3312 = vmatprep.subr.bf16.mxu0 0
      %3313 = vmatpush1.bf16.msra.mxu0 0
      %3314 = vmatprep.subr.bf16.mxu0 0
      %3315 = vmatpush1.bf16.msra.mxu0 0
      %3316 = vmatprep.subr.bf16.mxu0 0
      %3317 = vmatpush1.bf16.msra.mxu0 0
      %3318 = vmatprep.subr.bf16.mxu0 0
      %3319 = vmatpush1.bf16.msra.mxu0 0
      %3320 = vmatprep.subr.bf16.mxu0 0
      %3321 = vmatpush1.bf16.msra.mxu0 0
      %3322 = vmatprep.subr.bf16.mxu0 0
      %3323 = vmatpush1.bf16.msra.mxu0 0
      %3324 = vmatprep.subr.bf16.mxu0 0
      %3325 = vmatpush1.bf16.msra.mxu0 0
      %3326 = vmatprep.subr.bf16.mxu0 0
      %3327 = vmatpush1.bf16.msra.mxu0 0
      %3328 = vmatprep.mubr.bf16.mxu0 0
      %3329 = vmatmul.mubr.bf16.gmra.mrb[0].mxu0 %v3108
      %v3330 = vpop.f32.mrb[0].mxu0
      %v3331 = vadd.f32 0.0, %v3330
      %v3332 = vpop.f32.mrb[0].mxu0
      %v3333 = vpop.f32.mrb[0].mxu0
      %v3334 = vadd.f32 0.0, %v3333
      %v3335 = vpop.f32.mrb[0].mxu0
      %3336 = vmatprep.mubr.bf16.mxu0 0
      %3337 = vmatmul.mubr.bf16.gmra.mrb[0].mxu0 %v3111
      %v3338 = vpop.f32.mrb[0].mxu0
      %v3339 = vadd.f32 0.0, %v3338
      %v3340 = vpop.f32.mrb[0].mxu0
      %v3341 = vpop.f32.mrb[0].mxu0
      %v3342 = vadd.f32 0.0, %v3341
      %v3343 = vpop.f32.mrb[0].mxu0
      %3344 = vdwg.mxu0
      %v3345 = vadd.f32 %v2892, %v2900
      %v3346 = vadd.f32 %v2893, %v2901
      %v3347 = vadd.f32 %v2894, %v2902
      %v3348 = vadd.f32 %v2895, %v2903
      %v3349 = vadd.f32 %v2896, %v2904
      %v3350 = vadd.f32 %v2897, %v2905
      %v3351 = vadd.f32 %v2898, %v2906
      %v3352 = vadd.f32 %v2899, %v2907
      %v3353 = vpack.c.bf16 %v3346, %v3345
      %v3354 = vpack.c.bf16 %v3348, %v3347
      %v3355 = vpack.c.bf16 %v3350, %v3349
      %v3356 = vpack.c.bf16 %v3352, %v3351
      %3357 = vmatprep.subr.bf16.mxu0 0
      %3358 = vmatpush1.bf16.msra.mxu0 %v3353
      %3359 = vmatprep.subr.bf16.mxu0 0
      %3360 = vmatpush1.bf16.msra.mxu0 %v3354
      %3361 = vmatprep.subr.bf16.mxu0 0
      %3362 = vmatpush1.bf16.msra.mxu0 %v3355
      %3363 = vmatprep.subr.bf16.mxu0 0
      %3364 = vmatpush1.bf16.msra.mxu0 %v3356
      %3365 = vmatprep.subr.bf16.mxu0 0
      %3366 = vmatpush1.bf16.msra.mxu0 0
      %3367 = vmatprep.subr.bf16.mxu0 0
      %3368 = vmatpush1.bf16.msra.mxu0 0
      %3369 = vmatprep.subr.bf16.mxu0 0
      %3370 = vmatpush1.bf16.msra.mxu0 0
      %3371 = vmatprep.subr.bf16.mxu0 0
      %3372 = vmatpush1.bf16.msra.mxu0 0
      %3373 = vmatprep.subr.bf16.mxu0 0
      %3374 = vmatpush1.bf16.msra.mxu0 0
      %3375 = vmatprep.subr.bf16.mxu0 0
      %3376 = vmatpush1.bf16.msra.mxu0 0
      %3377 = vmatprep.subr.bf16.mxu0 0
      %3378 = vmatpush1.bf16.msra.mxu0 0
      %3379 = vmatprep.subr.bf16.mxu0 0
      %3380 = vmatpush1.bf16.msra.mxu0 0
      %3381 = vmatprep.subr.bf16.mxu0 0
      %3382 = vmatpush1.bf16.msra.mxu0 0
      %3383 = vmatprep.subr.bf16.mxu0 0
      %3384 = vmatpush1.bf16.msra.mxu0 0
      %3385 = vmatprep.subr.bf16.mxu0 0
      %3386 = vmatpush1.bf16.msra.mxu0 0
      %3387 = vmatprep.subr.bf16.mxu0 0
      %3388 = vmatpush1.bf16.msra.mxu0 0
      %3389 = vmatprep.mubr.bf16.mxu0 0
      %3390 = vmatmul.mubr.bf16.gmra.mrb[0].mxu0 %v3108
      %v3391 = vpop.f32.mrb[0].mxu0
      %v3392 = vadd.f32 0.0, %v3391
      %v3393 = vpop.f32.mrb[0].mxu0
      %v3394 = vpop.f32.mrb[0].mxu0
      %v3395 = vadd.f32 0.0, %v3394
      %v3396 = vpop.f32.mrb[0].mxu0
      %3397 = vmatprep.mubr.bf16.mxu0 0
      %3398 = vmatmul.mubr.bf16.gmra.mrb[0].mxu0 %v3111
      %v3399 = vpop.f32.mrb[0].mxu0
      %v3400 = vadd.f32 0.0, %v3399
      %v3401 = vpop.f32.mrb[0].mxu0
      %v3402 = vpop.f32.mrb[0].mxu0
      %v3403 = vadd.f32 0.0, %v3402
      %v3404 = vpop.f32.mrb[0].mxu0
      %3405 = vdwg.mxu0
      %v3406 = vadd.f32 %v2908, %v2916
      %v3407 = vadd.f32 %v2909, %v2917
      %v3408 = vadd.f32 %v2910, %v2918
      %v3409 = vadd.f32 %v2911, %v2919
      %v3410 = vadd.f32 %v2912, %v2920
      %v3411 = vadd.f32 %v2913, %v2921
      %v3412 = vadd.f32 %v2914, %v2922
      %v3413 = vadd.f32 %v2915, %v2923
      %v3414 = vpack.c.bf16 %v3407, %v3406
      %v3415 = vpack.c.bf16 %v3409, %v3408
      %v3416 = vpack.c.bf16 %v3411, %v3410
      %v3417 = vpack.c.bf16 %v3413, %v3412
      %3418 = vmatprep.subr.bf16.mxu0 0
      %3419 = vmatpush1.bf16.msra.mxu0 %v3414
      %3420 = vmatprep.subr.bf16.mxu0 0
      %3421 = vmatpush1.bf16.msra.mxu0 %v3415
      %3422 = vmatprep.subr.bf16.mxu0 0
      %3423 = vmatpush1.bf16.msra.mxu0 %v3416
      %3424 = vmatprep.subr.bf16.mxu0 0
      %3425 = vmatpush1.bf16.msra.mxu0 %v3417
      %3426 = vmatprep.subr.bf16.mxu0 0
      %3427 = vmatpush1.bf16.msra.mxu0 0
      %3428 = vmatprep.subr.bf16.mxu0 0
      %3429 = vmatpush1.bf16.msra.mxu0 0
      %3430 = vmatprep.subr.bf16.mxu0 0
      %3431 = vmatpush1.bf16.msra.mxu0 0
      %3432 = vmatprep.subr.bf16.mxu0 0
      %3433 = vmatpush1.bf16.msra.mxu0 0
      %3434 = vmatprep.subr.bf16.mxu0 0
      %3435 = vmatpush1.bf16.msra.mxu0 0
      %3436 = vmatprep.subr.bf16.mxu0 0
      %3437 = vmatpush1.bf16.msra.mxu0 0
      %3438 = vmatprep.subr.bf16.mxu0 0
      %3439 = vmatpush1.bf16.msra.mxu0 0
      %3440 = vmatprep.subr.bf16.mxu0 0
      %3441 = vmatpush1.bf16.msra.mxu0 0
      %3442 = vmatprep.subr.bf16.mxu0 0
      %3443 = vmatpush1.bf16.msra.mxu0 0
      %3444 = vmatprep.subr.bf16.mxu0 0
      %3445 = vmatpush1.bf16.msra.mxu0 0
      %3446 = vmatprep.subr.bf16.mxu0 0
      %3447 = vmatpush1.bf16.msra.mxu0 0
      %3448 = vmatprep.subr.bf16.mxu0 0
      %3449 = vmatpush1.bf16.msra.mxu0 0
      %3450 = vmatprep.mubr.bf16.mxu0 0
      %3451 = vmatmul.mubr.bf16.gmra.mrb[0].mxu0 %v3108
      %v3452 = vpop.f32.mrb[0].mxu0
      %v3453 = vadd.f32 0.0, %v3452
      %v3454 = vpop.f32.mrb[0].mxu0
      %v3455 = vpop.f32.mrb[0].mxu0
      %v3456 = vadd.f32 0.0, %v3455
      %v3457 = vpop.f32.mrb[0].mxu0
      %3458 = vmatprep.mubr.bf16.mxu0 0
      %3459 = vmatmul.mubr.bf16.gmra.mrb[0].mxu0 %v3111
      %v3460 = vpop.f32.mrb[0].mxu0
      %v3461 = vadd.f32 0.0, %v3460
      %v3462 = vpop.f32.mrb[0].mxu0
      %v3463 = vpop.f32.mrb[0].mxu0
      %v3464 = vadd.f32 0.0, %v3463
      %v3465 = vpop.f32.mrb[0].mxu0
      %3466 = vdwg.mxu0
      %v3467 = vadd.f32 %v2924, %v2932
      %v3468 = vadd.f32 %v2925, %v2933
      %v3469 = vadd.f32 %v2926, %v2934
      %v3470 = vadd.f32 %v2927, %v2935
      %v3471 = vadd.f32 %v2928, %v2936
      %v3472 = vadd.f32 %v2929, %v2937
      %v3473 = vadd.f32 %v2930, %v2938
      %v3474 = vadd.f32 %v2931, %v2939
      %v3475 = vpack.c.bf16 %v3468, %v3467
      %v3476 = vpack.c.bf16 %v3470, %v3469
      %v3477 = vpack.c.bf16 %v3472, %v3471
      %v3478 = vpack.c.bf16 %v3474, %v3473
      %3479 = vmatprep.subr.bf16.mxu0 0
      %3480 = vmatpush1.bf16.msra.mxu0 %v3475
      %3481 = vmatprep.subr.bf16.mxu0 0
      %3482 = vmatpush1.bf16.msra.mxu0 %v3476
      %3483 = vmatprep.subr.bf16.mxu0 0
      %3484 = vmatpush1.bf16.msra.mxu0 %v3477
      %3485 = vmatprep.subr.bf16.mxu0 0
      %3486 = vmatpush1.bf16.msra.mxu0 %v3478
      %3487 = vmatprep.subr.bf16.mxu0 0
      %3488 = vmatpush1.bf16.msra.mxu0 0
      %3489 = vmatprep.subr.bf16.mxu0 0
      %3490 = vmatpush1.bf16.msra.mxu0 0
      %3491 = vmatprep.subr.bf16.mxu0 0
      %3492 = vmatpush1.bf16.msra.mxu0 0
      %3493 = vmatprep.subr.bf16.mxu0 0
      %3494 = vmatpush1.bf16.msra.mxu0 0
      %3495 = vmatprep.subr.bf16.mxu0 0
      %3496 = vmatpush1.bf16.msra.mxu0 0
      %3497 = vmatprep.subr.bf16.mxu0 0
      %3498 = vmatpush1.bf16.msra.mxu0 0
      %3499 = vmatprep.subr.bf16.mxu0 0
      %3500 = vmatpush1.bf16.msra.mxu0 0
      %3501 = vmatprep.subr.bf16.mxu0 0
      %3502 = vmatpush1.bf16.msra.mxu0 0
      %3503 = vmatprep.subr.bf16.mxu0 0
      %3504 = vmatpush1.bf16.msra.mxu0 0
      %3505 = vmatprep.subr.bf16.mxu0 0
      %3506 = vmatpush1.bf16.msra.mxu0 0
      %3507 = vmatprep.subr.bf16.mxu0 0
      %3508 = vmatpush1.bf16.msra.mxu0 0
      %3509 = vmatprep.subr.bf16.mxu0 0
      %3510 = vmatpush1.bf16.msra.mxu0 0
      %3511 = vmatprep.mubr.bf16.mxu0 0
      %3512 = vmatmul.mubr.bf16.gmra.mrb[0].mxu0 %v3108
      %v3513 = vpop.f32.mrb[0].mxu0
      %v3514 = vadd.f32 0.0, %v3513
      %v3515 = vpop.f32.mrb[0].mxu0
      %v3516 = vpop.f32.mrb[0].mxu0
      %v3517 = vadd.f32 0.0, %v3516
      %v3518 = vpop.f32.mrb[0].mxu0
      %3519 = vmatprep.mubr.bf16.mxu0 0
      %3520 = vmatmul.mubr.bf16.gmra.mrb[0].mxu0 %v3111
      %v3521 = vpop.f32.mrb[0].mxu0
      %v3522 = vadd.f32 0.0, %v3521
      %v3523 = vpop.f32.mrb[0].mxu0
      %v3524 = vpop.f32.mrb[0].mxu0
      %v3525 = vadd.f32 0.0, %v3524
      %v3526 = vpop.f32.mrb[0].mxu0
      %3527 = vdwg.mxu0
      %v3528 = vadd.f32 %v2940, %v2948
      %v3529 = vadd.f32 %v2941, %v2949
      %v3530 = vadd.f32 %v2942, %v2950
      %v3531 = vadd.f32 %v2943, %v2951
      %v3532 = vadd.f32 %v2944, %v2952
      %v3533 = vadd.f32 %v2945, %v2953
      %v3534 = vadd.f32 %v2946, %v2954
      %v3535 = vadd.f32 %v2947, %v2955
      %v3536 = vpack.c.bf16 %v3529, %v3528
      %v3537 = vpack.c.bf16 %v3531, %v3530
      %v3538 = vpack.c.bf16 %v3533, %v3532
      %v3539 = vpack.c.bf16 %v3535, %v3534
      %3540 = vmatprep.subr.bf16.mxu0 0
      %3541 = vmatpush1.bf16.msra.mxu0 %v3536
      %3542 = vmatprep.subr.bf16.mxu0 0
      %3543 = vmatpush1.bf16.msra.mxu0 %v3537
      %3544 = vmatprep.subr.bf16.mxu0 0
      %3545 = vmatpush1.bf16.msra.mxu0 %v3538
      %3546 = vmatprep.subr.bf16.mxu0 0
      %3547 = vmatpush1.bf16.msra.mxu0 %v3539
      %3548 = vmatprep.subr.bf16.mxu0 0
      %3549 = vmatpush1.bf16.msra.mxu0 0
      %3550 = vmatprep.subr.bf16.mxu0 0
      %3551 = vmatpush1.bf16.msra.mxu0 0
      %3552 = vmatprep.subr.bf16.mxu0 0
      %3553 = vmatpush1.bf16.msra.mxu0 0
      %3554 = vmatprep.subr.bf16.mxu0 0
      %3555 = vmatpush1.bf16.msra.mxu0 0
      %3556 = vmatprep.subr.bf16.mxu0 0
      %3557 = vmatpush1.bf16.msra.mxu0 0
      %3558 = vmatprep.subr.bf16.mxu0 0
      %3559 = vmatpush1.bf16.msra.mxu0 0
      %3560 = vmatprep.subr.bf16.mxu0 0
      %3561 = vmatpush1.bf16.msra.mxu0 0
      %3562 = vmatprep.subr.bf16.mxu0 0
      %3563 = vmatpush1.bf16.msra.mxu0 0
      %3564 = vmatprep.subr.bf16.mxu0 0
      %3565 = vmatpush1.bf16.msra.mxu0 0
      %3566 = vmatprep.subr.bf16.mxu0 0
      %3567 = vmatpush1.bf16.msra.mxu0 0
      %3568 = vmatprep.subr.bf16.mxu0 0
      %3569 = vmatpush1.bf16.msra.mxu0 0
      %3570 = vmatprep.subr.bf16.mxu0 0
      %3571 = vmatpush1.bf16.msra.mxu0 0
      %3572 = vmatprep.mubr.bf16.mxu0 0
      %3573 = vmatmul.mubr.bf16.gmra.mrb[0].mxu0 %v3108
      %v3574 = vpop.f32.mrb[0].mxu0
      %v3575 = vadd.f32 0.0, %v3574
      %v3576 = vpop.f32.mrb[0].mxu0
      %v3577 = vpop.f32.mrb[0].mxu0
      %v3578 = vadd.f32 0.0, %v3577
      %v3579 = vpop.f32.mrb[0].mxu0
      %3580 = vmatprep.mubr.bf16.mxu0 0
      %3581 = vmatmul.mubr.bf16.gmra.mrb[0].mxu0 %v3111
      %v3582 = vpop.f32.mrb[0].mxu0
      %v3583 = vadd.f32 0.0, %v3582
      %v3584 = vpop.f32.mrb[0].mxu0
      %v3585 = vpop.f32.mrb[0].mxu0
      %v3586 = vadd.f32 0.0, %v3585
      %v3587 = vpop.f32.mrb[0].mxu0
      %3588 = vdwg.mxu0
      %v3589 = vadd.f32 %v2956, %v2964
      %v3590 = vadd.f32 %v2957, %v2965
      %v3591 = vadd.f32 %v2958, %v2966
      %v3592 = vadd.f32 %v2959, %v2967
      %v3593 = vadd.f32 %v2960, %v2968
      %v3594 = vadd.f32 %v2961, %v2969
      %v3595 = vadd.f32 %v2962, %v2970
      %v3596 = vadd.f32 %v2963, %v2971
      %v3597 = vpack.c.bf16 %v3590, %v3589
      %v3598 = vpack.c.bf16 %v3592, %v3591
      %v3599 = vpack.c.bf16 %v3594, %v3593
      %v3600 = vpack.c.bf16 %v3596, %v3595
      %3601 = vmatprep.subr.bf16.mxu0 0
      %3602 = vmatpush1.bf16.msra.mxu0 %v3597
      %3603 = vmatprep.subr.bf16.mxu0 0
      %3604 = vmatpush1.bf16.msra.mxu0 %v3598
      %3605 = vmatprep.subr.bf16.mxu0 0
      %3606 = vmatpush1.bf16.msra.mxu0 %v3599
      %3607 = vmatprep.subr.bf16.mxu0 0
      %3608 = vmatpush1.bf16.msra.mxu0 %v3600
      %3609 = vmatprep.subr.bf16.mxu0 0
      %3610 = vmatpush1.bf16.msra.mxu0 0
      %3611 = vmatprep.subr.bf16.mxu0 0
      %3612 = vmatpush1.bf16.msra.mxu0 0
      %3613 = vmatprep.subr.bf16.mxu0 0
      %3614 = vmatpush1.bf16.msra.mxu0 0
      %3615 = vmatprep.subr.bf16.mxu0 0
      %3616 = vmatpush1.bf16.msra.mxu0 0
      %3617 = vmatprep.subr.bf16.mxu0 0
      %3618 = vmatpush1.bf16.msra.mxu0 0
      %3619 = vmatprep.subr.bf16.mxu0 0
      %3620 = vmatpush1.bf16.msra.mxu0 0
      %3621 = vmatprep.subr.bf16.mxu0 0
      %3622 = vmatpush1.bf16.msra.mxu0 0
      %3623 = vmatprep.subr.bf16.mxu0 0
      %3624 = vmatpush1.bf16.msra.mxu0 0
      %3625 = vmatprep.subr.bf16.mxu0 0
      %3626 = vmatpush1.bf16.msra.mxu0 0
      %3627 = vmatprep.subr.bf16.mxu0 0
      %3628 = vmatpush1.bf16.msra.mxu0 0
      %3629 = vmatprep.subr.bf16.mxu0 0
      %3630 = vmatpush1.bf16.msra.mxu0 0
      %3631 = vmatprep.subr.bf16.mxu0 0
      %3632 = vmatpush1.bf16.msra.mxu0 0
      %3633 = vmatprep.mubr.bf16.mxu0 0
      %3634 = vmatmul.mubr.bf16.gmra.mrb[0].mxu0 %v3108
      %v3635 = vpop.f32.mrb[0].mxu0
      %v3636 = vadd.f32 0.0, %v3635
      %v3637 = vpop.f32.mrb[0].mxu0
      %v3638 = vpop.f32.mrb[0].mxu0
      %v3639 = vadd.f32 0.0, %v3638
      %v3640 = vpop.f32.mrb[0].mxu0
      %3641 = vmatprep.mubr.bf16.mxu0 0
      %3642 = vmatmul.mubr.bf16.gmra.mrb[0].mxu0 %v3111
      %v3643 = vpop.f32.mrb[0].mxu0
      %v3644 = vadd.f32 0.0, %v3643
      %v3645 = vpop.f32.mrb[0].mxu0
      %v3646 = vpop.f32.mrb[0].mxu0
      %v3647 = vadd.f32 0.0, %v3646
      %v3648 = vpop.f32.mrb[0].mxu0
      %3649 = vdwg.mxu0
      %v3650 = vadd.f32 %v2972, %v2980
      %v3651 = vadd.f32 %v2973, %v2981
      %v3652 = vadd.f32 %v2974, %v2982
      %v3653 = vadd.f32 %v2975, %v2983
      %v3654 = vadd.f32 %v2976, %v2984
      %v3655 = vadd.f32 %v2977, %v2985
      %v3656 = vadd.f32 %v2978, %v2986
      %v3657 = vadd.f32 %v2979, %v2987
      %v3658 = vpack.c.bf16 %v3651, %v3650
      %v3659 = vpack.c.bf16 %v3653, %v3652
      %v3660 = vpack.c.bf16 %v3655, %v3654
      %v3661 = vpack.c.bf16 %v3657, %v3656
      %3662 = vmatprep.subr.bf16.mxu0 0
      %3663 = vmatpush1.bf16.msra.mxu0 %v3658
      %3664 = vmatprep.subr.bf16.mxu0 0
      %3665 = vmatpush1.bf16.msra.mxu0 %v3659
      %3666 = vmatprep.subr.bf16.mxu0 0
      %3667 = vmatpush1.bf16.msra.mxu0 %v3660
      %3668 = vmatprep.subr.bf16.mxu0 0
      %3669 = vmatpush1.bf16.msra.mxu0 %v3661
      %3670 = vmatprep.subr.bf16.mxu0 0
      %3671 = vmatpush1.bf16.msra.mxu0 0
      %3672 = vmatprep.subr.bf16.mxu0 0
      %3673 = vmatpush1.bf16.msra.mxu0 0
      %3674 = vmatprep.subr.bf16.mxu0 0
      %3675 = vmatpush1.bf16.msra.mxu0 0
      %3676 = vmatprep.subr.bf16.mxu0 0
      %3677 = vmatpush1.bf16.msra.mxu0 0
      %3678 = vmatprep.subr.bf16.mxu0 0
      %3679 = vmatpush1.bf16.msra.mxu0 0
      %3680 = vmatprep.subr.bf16.mxu0 0
      %3681 = vmatpush1.bf16.msra.mxu0 0
      %3682 = vmatprep.subr.bf16.mxu0 0
      %3683 = vmatpush1.bf16.msra.mxu0 0
      %3684 = vmatprep.subr.bf16.mxu0 0
      %3685 = vmatpush1.bf16.msra.mxu0 0
      %3686 = vmatprep.subr.bf16.mxu0 0
      %3687 = vmatpush1.bf16.msra.mxu0 0
      %3688 = vmatprep.subr.bf16.mxu0 0
      %3689 = vmatpush1.bf16.msra.mxu0 0
      %3690 = vmatprep.subr.bf16.mxu0 0
      %3691 = vmatpush1.bf16.msra.mxu0 0
      %3692 = vmatprep.subr.bf16.mxu0 0
      %3693 = vmatpush1.bf16.msra.mxu0 0
      %3694 = vmatprep.mubr.bf16.mxu0 0
      %3695 = vmatmul.mubr.bf16.gmra.mrb[0].mxu0 %v3108
      %v3696 = vpop.f32.mrb[0].mxu0
      %v3697 = vadd.f32 0.0, %v3696
      %v3698 = vpop.f32.mrb[0].mxu0
      %v3699 = vpop.f32.mrb[0].mxu0
      %v3700 = vadd.f32 0.0, %v3699
      %v3701 = vpop.f32.mrb[0].mxu0
      %3702 = vmatprep.mubr.bf16.mxu0 0
      %3703 = vmatmul.mubr.bf16.gmra.mrb[0].mxu0 %v3111
      %v3704 = vpop.f32.mrb[0].mxu0
      %v3705 = vadd.f32 0.0, %v3704
      %v3706 = vpop.f32.mrb[0].mxu0
      %v3707 = vpop.f32.mrb[0].mxu0
      %v3708 = vadd.f32 0.0, %v3707
      %v3709 = vpop.f32.mrb[0].mxu0
      %3710 = vdwg.mxu0
      %v3711 = vadd.f32 %v2988, %v2996
      %v3712 = vadd.f32 %v2989, %v2997
      %v3713 = vadd.f32 %v2990, %v2998
      %v3714 = vadd.f32 %v2991, %v2999
      %v3715 = vadd.f32 %v2992, %v3000
      %v3716 = vadd.f32 %v2993, %v3001
      %v3717 = vadd.f32 %v2994, %v3002
      %v3718 = vadd.f32 %v2995, %v3003
      %v3719 = vpack.c.bf16 %v3712, %v3711
      %v3720 = vpack.c.bf16 %v3714, %v3713
      %v3721 = vpack.c.bf16 %v3716, %v3715
      %v3722 = vpack.c.bf16 %v3718, %v3717
      %3723 = vmatprep.subr.bf16.mxu0 0
      %3724 = vmatpush1.bf16.msra.mxu0 %v3719
      %3725 = vmatprep.subr.bf16.mxu0 0
      %3726 = vmatpush1.bf16.msra.mxu0 %v3720
      %3727 = vmatprep.subr.bf16.mxu0 0
      %3728 = vmatpush1.bf16.msra.mxu0 %v3721
      %3729 = vmatprep.subr.bf16.mxu0 0
      %3730 = vmatpush1.bf16.msra.mxu0 %v3722
      %3731 = vmatprep.subr.bf16.mxu0 0
      %3732 = vmatpush1.bf16.msra.mxu0 0
      %3733 = vmatprep.subr.bf16.mxu0 0
      %3734 = vmatpush1.bf16.msra.mxu0 0
      %3735 = vmatprep.subr.bf16.mxu0 0
      %3736 = vmatpush1.bf16.msra.mxu0 0
      %3737 = vmatprep.subr.bf16.mxu0 0
      %3738 = vmatpush1.bf16.msra.mxu0 0
      %3739 = vmatprep.subr.bf16.mxu0 0
      %3740 = vmatpush1.bf16.msra.mxu0 0
      %3741 = vmatprep.subr.bf16.mxu0 0
      %3742 = vmatpush1.bf16.msra.mxu0 0
      %3743 = vmatprep.subr.bf16.mxu0 0
      %3744 = vmatpush1.bf16.msra.mxu0 0
      %3745 = vmatprep.subr.bf16.mxu0 0
      %3746 = vmatpush1.bf16.msra.mxu0 0
      %3747 = vmatprep.subr.bf16.mxu0 0
      %3748 = vmatpush1.bf16.msra.mxu0 0
      %3749 = vmatprep.subr.bf16.mxu0 0
      %3750 = vmatpush1.bf16.msra.mxu0 0
      %3751 = vmatprep.subr.bf16.mxu0 0
      %3752 = vmatpush1.bf16.msra.mxu0 0
      %3753 = vmatprep.subr.bf16.mxu0 0
      %3754 = vmatpush1.bf16.msra.mxu0 0
      %3755 = vmatprep.mubr.bf16.mxu0 0
      %3756 = vmatmul.mubr.bf16.gmra.mrb[0].mxu0 %v3108
      %v3757 = vpop.f32.mrb[0].mxu0
      %v3758 = vadd.f32 0.0, %v3757
      %v3759 = vpop.f32.mrb[0].mxu0
      %v3760 = vpop.f32.mrb[0].mxu0
      %v3761 = vadd.f32 0.0, %v3760
      %v3762 = vpop.f32.mrb[0].mxu0
      %3763 = vmatprep.mubr.bf16.mxu0 0
      %3764 = vmatmul.mubr.bf16.gmra.mrb[0].mxu0 %v3111
      %v3765 = vpop.f32.mrb[0].mxu0
      %v3766 = vadd.f32 0.0, %v3765
      %v3767 = vpop.f32.mrb[0].mxu0
      %v3768 = vpop.f32.mrb[0].mxu0
      %v3769 = vadd.f32 0.0, %v3768
      %v3770 = vpop.f32.mrb[0].mxu0
      %3771 = vdwg.mxu0
      %v3772 = vadd.f32 %v3004, %v3012
      %v3773 = vadd.f32 %v3005, %v3013
      %v3774 = vadd.f32 %v3006, %v3014
      %v3775 = vadd.f32 %v3007, %v3015
      %v3776 = vadd.f32 %v3008, %v3016
      %v3777 = vadd.f32 %v3009, %v3017
      %v3778 = vadd.f32 %v3010, %v3018
      %v3779 = vadd.f32 %v3011, %v3019
      %v3780 = vpack.c.bf16 %v3773, %v3772
      %v3781 = vpack.c.bf16 %v3775, %v3774
      %v3782 = vpack.c.bf16 %v3777, %v3776
      %v3783 = vpack.c.bf16 %v3779, %v3778
      %3784 = vmatprep.subr.bf16.mxu0 0
      %3785 = vmatpush1.bf16.msra.mxu0 %v3780
      %3786 = vmatprep.subr.bf16.mxu0 0
      %3787 = vmatpush1.bf16.msra.mxu0 %v3781
      %3788 = vmatprep.subr.bf16.mxu0 0
      %3789 = vmatpush1.bf16.msra.mxu0 %v3782
      %3790 = vmatprep.subr.bf16.mxu0 0
      %3791 = vmatpush1.bf16.msra.mxu0 %v3783
      %3792 = vmatprep.subr.bf16.mxu0 0
      %3793 = vmatpush1.bf16.msra.mxu0 0
      %3794 = vmatprep.subr.bf16.mxu0 0
      %3795 = vmatpush1.bf16.msra.mxu0 0
      %3796 = vmatprep.subr.bf16.mxu0 0
      %3797 = vmatpush1.bf16.msra.mxu0 0
      %3798 = vmatprep.subr.bf16.mxu0 0
      %3799 = vmatpush1.bf16.msra.mxu0 0
      %3800 = vmatprep.subr.bf16.mxu0 0
      %3801 = vmatpush1.bf16.msra.mxu0 0
      %3802 = vmatprep.subr.bf16.mxu0 0
      %3803 = vmatpush1.bf16.msra.mxu0 0
      %3804 = vmatprep.subr.bf16.mxu0 0
      %3805 = vmatpush1.bf16.msra.mxu0 0
      %3806 = vmatprep.subr.bf16.mxu0 0
      %3807 = vmatpush1.bf16.msra.mxu0 0
      %3808 = vmatprep.subr.bf16.mxu0 0
      %3809 = vmatpush1.bf16.msra.mxu0 0
      %3810 = vmatprep.subr.bf16.mxu0 0
      %3811 = vmatpush1.bf16.msra.mxu0 0
      %3812 = vmatprep.subr.bf16.mxu0 0
      %3813 = vmatpush1.bf16.msra.mxu0 0
      %3814 = vmatprep.subr.bf16.mxu0 0
      %3815 = vmatpush1.bf16.msra.mxu0 0
      %3816 = vmatprep.mubr.bf16.mxu0 0
      %3817 = vmatmul.mubr.bf16.gmra.mrb[0].mxu0 %v3108
      %v3818 = vpop.f32.mrb[0].mxu0
      %v3819 = vadd.f32 0.0, %v3818
      %v3820 = vpop.f32.mrb[0].mxu0
      %v3821 = vpop.f32.mrb[0].mxu0
      %v3822 = vadd.f32 0.0, %v3821
      %v3823 = vpop.f32.mrb[0].mxu0
      %3824 = vmatprep.mubr.bf16.mxu0 0
      %3825 = vmatmul.mubr.bf16.gmra.mrb[0].mxu0 %v3111
      %v3826 = vpop.f32.mrb[0].mxu0
      %v3827 = vadd.f32 0.0, %v3826
      %v3828 = vpop.f32.mrb[0].mxu0
      %v3829 = vpop.f32.mrb[0].mxu0
      %v3830 = vadd.f32 0.0, %v3829
      %v3831 = vpop.f32.mrb[0].mxu0
      %3832 = vdwg.mxu0
      %v3833 = vadd.f32 %v3020, %v3028
      %v3834 = vadd.f32 %v3021, %v3029
      %v3835 = vadd.f32 %v3022, %v3030
      %v3836 = vadd.f32 %v3023, %v3031
      %v3837 = vadd.f32 %v3024, %v3032
      %v3838 = vadd.f32 %v3025, %v3033
      %v3839 = vadd.f32 %v3026, %v3034
      %v3840 = vadd.f32 %v3027, %v3035
      %v3841 = vpack.c.bf16 %v3834, %v3833
      %v3842 = vpack.c.bf16 %v3836, %v3835
      %v3843 = vpack.c.bf16 %v3838, %v3837
      %v3844 = vpack.c.bf16 %v3840, %v3839
      %3845 = vmatprep.subr.bf16.mxu0 0
      %3846 = vmatpush1.bf16.msra.mxu0 %v3841
      %3847 = vmatprep.subr.bf16.mxu0 0
      %3848 = vmatpush1.bf16.msra.mxu0 %v3842
      %3849 = vmatprep.subr.bf16.mxu0 0
      %3850 = vmatpush1.bf16.msra.mxu0 %v3843
      %3851 = vmatprep.subr.bf16.mxu0 0
      %3852 = vmatpush1.bf16.msra.mxu0 %v3844
      %3853 = vmatprep.subr.bf16.mxu0 0
      %3854 = vmatpush1.bf16.msra.mxu0 0
      %3855 = vmatprep.subr.bf16.mxu0 0
      %3856 = vmatpush1.bf16.msra.mxu0 0
      %3857 = vmatprep.subr.bf16.mxu0 0
      %3858 = vmatpush1.bf16.msra.mxu0 0
      %3859 = vmatprep.subr.bf16.mxu0 0
      %3860 = vmatpush1.bf16.msra.mxu0 0
      %3861 = vmatprep.subr.bf16.mxu0 0
      %3862 = vmatpush1.bf16.msra.mxu0 0
      %3863 = vmatprep.subr.bf16.mxu0 0
      %3864 = vmatpush1.bf16.msra.mxu0 0
      %3865 = vmatprep.subr.bf16.mxu0 0
      %3866 = vmatpush1.bf16.msra.mxu0 0
      %3867 = vmatprep.subr.bf16.mxu0 0
      %3868 = vmatpush1.bf16.msra.mxu0 0
      %3869 = vmatprep.subr.bf16.mxu0 0
      %3870 = vmatpush1.bf16.msra.mxu0 0
      %3871 = vmatprep.subr.bf16.mxu0 0
      %3872 = vmatpush1.bf16.msra.mxu0 0
      %3873 = vmatprep.subr.bf16.mxu0 0
      %3874 = vmatpush1.bf16.msra.mxu0 0
      %3875 = vmatprep.subr.bf16.mxu0 0
      %3876 = vmatpush1.bf16.msra.mxu0 0
      %3877 = vmatprep.mubr.bf16.mxu0 0
      %3878 = vmatmul.mubr.bf16.gmra.mrb[0].mxu0 %v3108
      %v3879 = vpop.f32.mrb[0].mxu0
      %v3880 = vadd.f32 0.0, %v3879
      %v3881 = vpop.f32.mrb[0].mxu0
      %v3882 = vpop.f32.mrb[0].mxu0
      %v3883 = vadd.f32 0.0, %v3882
      %v3884 = vpop.f32.mrb[0].mxu0
      %3885 = vmatprep.mubr.bf16.mxu0 0
      %3886 = vmatmul.mubr.bf16.gmra.mrb[0].mxu0 %v3111
      %v3887 = vpop.f32.mrb[0].mxu0
      %v3888 = vadd.f32 0.0, %v3887
      %v3889 = vpop.f32.mrb[0].mxu0
      %v3890 = vpop.f32.mrb[0].mxu0
      %v3891 = vadd.f32 0.0, %v3890
      %v3892 = vpop.f32.mrb[0].mxu0
      %3893 = vdwg.mxu0
      %v3894 = vadd.f32 %v3036, %v3044
      %v3895 = vadd.f32 %v3037, %v3045
      %v3896 = vadd.f32 %v3038, %v3046
      %v3897 = vadd.f32 %v3039, %v3047
      %v3898 = vadd.f32 %v3040, %v3048
      %v3899 = vadd.f32 %v3041, %v3049
      %v3900 = vadd.f32 %v3042, %v3050
      %v3901 = vadd.f32 %v3043, %v3051
      %v3902 = vpack.c.bf16 %v3895, %v3894
      %v3903 = vpack.c.bf16 %v3897, %v3896
      %v3904 = vpack.c.bf16 %v3899, %v3898
      %v3905 = vpack.c.bf16 %v3901, %v3900
      %3906 = vmatprep.subr.bf16.mxu0 0
      %3907 = vmatpush1.bf16.msra.mxu0 %v3902
      %3908 = vmatprep.subr.bf16.mxu0 0
      %3909 = vmatpush1.bf16.msra.mxu0 %v3903
      %3910 = vmatprep.subr.bf16.mxu0 0
      %3911 = vmatpush1.bf16.msra.mxu0 %v3904
      %3912 = vmatprep.subr.bf16.mxu0 0
      %3913 = vmatpush1.bf16.msra.mxu0 %v3905
      %3914 = vmatprep.subr.bf16.mxu0 0
      %3915 = vmatpush1.bf16.msra.mxu0 0
      %3916 = vmatprep.subr.bf16.mxu0 0
      %3917 = vmatpush1.bf16.msra.mxu0 0
      %3918 = vmatprep.subr.bf16.mxu0 0
      %3919 = vmatpush1.bf16.msra.mxu0 0
      %3920 = vmatprep.subr.bf16.mxu0 0
      %3921 = vmatpush1.bf16.msra.mxu0 0
      %3922 = vmatprep.subr.bf16.mxu0 0
      %3923 = vmatpush1.bf16.msra.mxu0 0
      %3924 = vmatprep.subr.bf16.mxu0 0
      %3925 = vmatpush1.bf16.msra.mxu0 0
      %3926 = vmatprep.subr.bf16.mxu0 0
      %3927 = vmatpush1.bf16.msra.mxu0 0
      %3928 = vmatprep.subr.bf16.mxu0 0
      %3929 = vmatpush1.bf16.msra.mxu0 0
      %3930 = vmatprep.subr.bf16.mxu0 0
      %3931 = vmatpush1.bf16.msra.mxu0 0
      %3932 = vmatprep.subr.bf16.mxu0 0
      %3933 = vmatpush1.bf16.msra.mxu0 0
      %3934 = vmatprep.subr.bf16.mxu0 0
      %3935 = vmatpush1.bf16.msra.mxu0 0
      %3936 = vmatprep.subr.bf16.mxu0 0
      %3937 = vmatpush1.bf16.msra.mxu0 0
      %3938 = vmatprep.mubr.bf16.mxu0 0
      %3939 = vmatmul.mubr.bf16.gmra.mrb[0].mxu0 %v3108
      %v3940 = vpop.f32.mrb[0].mxu0
      %v3941 = vadd.f32 0.0, %v3940
      %v3942 = vpop.f32.mrb[0].mxu0
      %v3943 = vpop.f32.mrb[0].mxu0
      %v3944 = vadd.f32 0.0, %v3943
      %v3945 = vpop.f32.mrb[0].mxu0
      %3946 = vmatprep.mubr.bf16.mxu0 0
      %3947 = vmatmul.mubr.bf16.gmra.mrb[0].mxu0 %v3111
      %v3948 = vpop.f32.mrb[0].mxu0
      %v3949 = vadd.f32 0.0, %v3948
      %v3950 = vpop.f32.mrb[0].mxu0
      %v3951 = vpop.f32.mrb[0].mxu0
      %v3952 = vadd.f32 0.0, %v3951
      %v3953 = vpop.f32.mrb[0].mxu0
      %3954 = vdwg.mxu0
      %v3955 = vadd.f32 %v3052, %v3060
      %v3956 = vadd.f32 %v3053, %v3061
      %v3957 = vadd.f32 %v3054, %v3062
      %v3958 = vadd.f32 %v3055, %v3063
      %v3959 = vadd.f32 %v3056, %v3064
      %v3960 = vadd.f32 %v3057, %v3065
      %v3961 = vadd.f32 %v3058, %v3066
      %v3962 = vadd.f32 %v3059, %v3067
      %v3963 = vpack.c.bf16 %v3956, %v3955
      %v3964 = vpack.c.bf16 %v3958, %v3957
      %v3965 = vpack.c.bf16 %v3960, %v3959
      %v3966 = vpack.c.bf16 %v3962, %v3961
      %3967 = vmatprep.subr.bf16.mxu0 0
      %3968 = vmatpush1.bf16.msra.mxu0 %v3963
      %3969 = vmatprep.subr.bf16.mxu0 0
      %3970 = vmatpush1.bf16.msra.mxu0 %v3964
      %3971 = vmatprep.subr.bf16.mxu0 0
      %3972 = vmatpush1.bf16.msra.mxu0 %v3965
      %3973 = vmatprep.subr.bf16.mxu0 0
      %3974 = vmatpush1.bf16.msra.mxu0 %v3966
      %3975 = vmatprep.subr.bf16.mxu0 0
      %3976 = vmatpush1.bf16.msra.mxu0 0
      %3977 = vmatprep.subr.bf16.mxu0 0
      %3978 = vmatpush1.bf16.msra.mxu0 0
      %3979 = vmatprep.subr.bf16.mxu0 0
      %3980 = vmatpush1.bf16.msra.mxu0 0
      %3981 = vmatprep.subr.bf16.mxu0 0
      %3982 = vmatpush1.bf16.msra.mxu0 0
      %3983 = vmatprep.subr.bf16.mxu0 0
      %3984 = vmatpush1.bf16.msra.mxu0 0
      %3985 = vmatprep.subr.bf16.mxu0 0
      %3986 = vmatpush1.bf16.msra.mxu0 0
      %3987 = vmatprep.subr.bf16.mxu0 0
      %3988 = vmatpush1.bf16.msra.mxu0 0
      %3989 = vmatprep.subr.bf16.mxu0 0
      %3990 = vmatpush1.bf16.msra.mxu0 0
      %3991 = vmatprep.subr.bf16.mxu0 0
      %3992 = vmatpush1.bf16.msra.mxu0 0
      %3993 = vmatprep.subr.bf16.mxu0 0
      %3994 = vmatpush1.bf16.msra.mxu0 0
      %3995 = vmatprep.subr.bf16.mxu0 0
      %3996 = vmatpush1.bf16.msra.mxu0 0
      %3997 = vmatprep.subr.bf16.mxu0 0
      %3998 = vmatpush1.bf16.msra.mxu0 0
      %3999 = vmatprep.mubr.bf16.mxu0 0
      %4000 = vmatmul.mubr.bf16.gmra.mrb[0].mxu0 %v3108
      %v4001 = vpop.f32.mrb[0].mxu0
      %v4002 = vadd.f32 0.0, %v4001
      %v4003 = vpop.f32.mrb[0].mxu0
      %v4004 = vpop.f32.mrb[0].mxu0
      %v4005 = vadd.f32 0.0, %v4004
      %v4006 = vpop.f32.mrb[0].mxu0
      %4007 = vmatprep.mubr.bf16.mxu0 0
      %4008 = vmatmul.mubr.bf16.gmra.mrb[0].mxu0 %v3111
      %v4009 = vpop.f32.mrb[0].mxu0
      %v4010 = vadd.f32 0.0, %v4009
      %v4011 = vpop.f32.mrb[0].mxu0
      %v4012 = vpop.f32.mrb[0].mxu0
      %v4013 = vadd.f32 0.0, %v4012
      %v4014 = vpop.f32.mrb[0].mxu0
      %4015 = vdwg.mxu0
      %v4016 = vadd.f32 %v3068, %v3076
      %v4017 = vadd.f32 %v3069, %v3077
      %v4018 = vadd.f32 %v3070, %v3078
      %v4019 = vadd.f32 %v3071, %v3079
      %v4020 = vadd.f32 %v3072, %v3080
      %v4021 = vadd.f32 %v3073, %v3081
      %v4022 = vadd.f32 %v3074, %v3082
      %v4023 = vadd.f32 %v3075, %v3083
      %v4024 = vpack.c.bf16 %v4017, %v4016
      %v4025 = vpack.c.bf16 %v4019, %v4018
      %v4026 = vpack.c.bf16 %v4021, %v4020
      %v4027 = vpack.c.bf16 %v4023, %v4022
      %4028 = vmatprep.subr.bf16.mxu0 0
      %4029 = vmatpush1.bf16.msra.mxu0 %v4024
      %4030 = vmatprep.subr.bf16.mxu0 0
      %4031 = vmatpush1.bf16.msra.mxu0 %v4025
      %4032 = vmatprep.subr.bf16.mxu0 0
      %4033 = vmatpush1.bf16.msra.mxu0 %v4026
      %4034 = vmatprep.subr.bf16.mxu0 0
      %4035 = vmatpush1.bf16.msra.mxu0 %v4027
      %4036 = vmatprep.subr.bf16.mxu0 0
      %4037 = vmatpush1.bf16.msra.mxu0 0
      %4038 = vmatprep.subr.bf16.mxu0 0
      %4039 = vmatpush1.bf16.msra.mxu0 0
      %4040 = vmatprep.subr.bf16.mxu0 0
      %4041 = vmatpush1.bf16.msra.mxu0 0
      %4042 = vmatprep.subr.bf16.mxu0 0
      %4043 = vmatpush1.bf16.msra.mxu0 0
      %4044 = vmatprep.subr.bf16.mxu0 0
      %4045 = vmatpush1.bf16.msra.mxu0 0
      %4046 = vmatprep.subr.bf16.mxu0 0
      %4047 = vmatpush1.bf16.msra.mxu0 0
      %4048 = vmatprep.subr.bf16.mxu0 0
      %4049 = vmatpush1.bf16.msra.mxu0 0
      %4050 = vmatprep.subr.bf16.mxu0 0
      %4051 = vmatpush1.bf16.msra.mxu0 0
      %4052 = vmatprep.subr.bf16.mxu0 0
      %4053 = vmatpush1.bf16.msra.mxu0 0
      %4054 = vmatprep.subr.bf16.mxu0 0
      %4055 = vmatpush1.bf16.msra.mxu0 0
      %4056 = vmatprep.subr.bf16.mxu0 0
      %4057 = vmatpush1.bf16.msra.mxu0 0
      %4058 = vmatprep.subr.bf16.mxu0 0
      %4059 = vmatpush1.bf16.msra.mxu0 0
      %4060 = vmatprep.mubr.bf16.mxu0 0
      %4061 = vmatmul.mubr.bf16.gmra.mrb[0].mxu0 %v3108
      %v4062 = vpop.f32.mrb[0].mxu0
      %v4063 = vadd.f32 0.0, %v4062
      %v4064 = vpop.f32.mrb[0].mxu0
      %v4065 = vpop.f32.mrb[0].mxu0
      %v4066 = vadd.f32 0.0, %v4065
      %v4067 = vpop.f32.mrb[0].mxu0
      %4068 = vmatprep.mubr.bf16.mxu0 0
      %4069 = vmatmul.mubr.bf16.gmra.mrb[0].mxu0 %v3111
      %v4070 = vpop.f32.mrb[0].mxu0
      %v4071 = vadd.f32 0.0, %v4070
      %v4072 = vpop.f32.mrb[0].mxu0
      %v4073 = vpop.f32.mrb[0].mxu0
      %v4074 = vadd.f32 0.0, %v4073
      %v4075 = vpop.f32.mrb[0].mxu0
      %4076 = vdwg.mxu0
      %vm4081 = vcmask 1045504
      %v4082 = vrot.slane %v3209, 2
      %v4083 = vrot.slane %v3212, 2
      %v4084 = vsel %vm4081, %v4082, %v4083
      %v4085 = vrot.slane %v3217, 2
      %v4086 = vsel %vm4081, %v4083, %v4085
      %v4087 = vrot.slane %v3220, 2
      %v4088 = vsel %vm4081, %v4085, %v4087
      %vm4098 = vcmask 1043456
      %v4099 = vrot.slane %v3270, 4
      %v4100 = vrot.slane %v3273, 4
      %v4101 = vsel %vm4098, %v4099, %v4100
      %v4102 = vrot.slane %v3278, 4
      %v4103 = vsel %vm4098, %v4100, %v4102
      %v4104 = vrot.slane %v3281, 4
      %v4105 = vsel %vm4098, %v4102, %v4104
      %vm4115 = vcmask 1041408
      %v4116 = vrot.slane %v3331, 6
      %v4117 = vrot.slane %v3334, 6
      %v4118 = vsel %vm4115, %v4116, %v4117
      %v4119 = vrot.slane %v3339, 6
      %v4120 = vsel %vm4115, %v4117, %v4119
      %v4121 = vrot.slane %v3342, 6
      %v4122 = vsel %vm4115, %v4119, %v4121
      %v4131 = vrot.slane %v3453, 2
      %v4132 = vrot.slane %v3456, 2
      %v4133 = vsel %vm4081, %v4131, %v4132
      %v4134 = vrot.slane %v3461, 2
      %v4135 = vsel %vm4081, %v4132, %v4134
      %v4136 = vrot.slane %v3464, 2
      %v4137 = vsel %vm4081, %v4134, %v4136
      %v4147 = vrot.slane %v3514, 4
      %v4148 = vrot.slane %v3517, 4
      %v4149 = vsel %vm4098, %v4147, %v4148
      %v4150 = vrot.slane %v3522, 4
      %v4151 = vsel %vm4098, %v4148, %v4150
      %v4152 = vrot.slane %v3525, 4
      %v4153 = vsel %vm4098, %v4150, %v4152
      %v4163 = vrot.slane %v3575, 6
      %v4164 = vrot.slane %v3578, 6
      %v4165 = vsel %vm4115, %v4163, %v4164
      %v4166 = vrot.slane %v3583, 6
      %v4167 = vsel %vm4115, %v4164, %v4166
      %v4168 = vrot.slane %v3586, 6
      %v4169 = vsel %vm4115, %v4166, %v4168
      %v4178 = vrot.slane %v3697, 2
      %v4179 = vrot.slane %v3700, 2
      %v4180 = vsel %vm4081, %v4178, %v4179
      %v4181 = vrot.slane %v3705, 2
      %v4182 = vsel %vm4081, %v4179, %v4181
      %v4183 = vrot.slane %v3708, 2
      %v4184 = vsel %vm4081, %v4181, %v4183
      %v4194 = vrot.slane %v3758, 4
      %v4195 = vrot.slane %v3761, 4
      %v4196 = vsel %vm4098, %v4194, %v4195
      %v4197 = vrot.slane %v3766, 4
      %v4198 = vsel %vm4098, %v4195, %v4197
      %v4199 = vrot.slane %v3769, 4
      %v4200 = vsel %vm4098, %v4197, %v4199
      %v4210 = vrot.slane %v3819, 6
      %v4211 = vrot.slane %v3822, 6
      %v4212 = vsel %vm4115, %v4210, %v4211
      %v4213 = vrot.slane %v3827, 6
      %v4214 = vsel %vm4115, %v4211, %v4213
      %v4215 = vrot.slane %v3830, 6
      %v4216 = vsel %vm4115, %v4213, %v4215
      %v4225 = vrot.slane %v3941, 2
      %v4226 = vrot.slane %v3944, 2
      %v4227 = vsel %vm4081, %v4225, %v4226
      %v4228 = vrot.slane %v3949, 2
      %v4229 = vsel %vm4081, %v4226, %v4228
      %v4230 = vrot.slane %v3952, 2
      %v4231 = vsel %vm4081, %v4228, %v4230
      %v4241 = vrot.slane %v4002, 4
      %v4242 = vrot.slane %v4005, 4
      %v4243 = vsel %vm4098, %v4241, %v4242
      %v4244 = vrot.slane %v4010, 4
      %v4245 = vsel %vm4098, %v4242, %v4244
      %v4246 = vrot.slane %v4013, 4
      %v4247 = vsel %vm4098, %v4244, %v4246
      %v4257 = vrot.slane %v4063, 6
      %v4258 = vrot.slane %v4066, 6
      %v4259 = vsel %vm4115, %v4257, %v4258
      %v4260 = vrot.slane %v4071, 6
      %v4261 = vsel %vm4115, %v4258, %v4260
      %v4262 = vrot.slane %v4074, 6
      %v4263 = vsel %vm4115, %v4260, %v4262
      %v4268 = vsel %vm4081, %v3159, %v4082
      %v4269 = vsel %vm4098, %v4087, %v4099
      %v4270 = vsel %vm4115, %v4104, %v4116
      %v4271 = vsel %vm4081, %v3403, %v4131
      %v4272 = vsel %vm4098, %v4136, %v4147
      %v4273 = vsel %vm4115, %v4152, %v4163
      %v4274 = vsel %vm4081, %v3647, %v4178
      %v4275 = vsel %vm4098, %v4183, %v4194
      %v4276 = vsel %vm4115, %v4199, %v4210
      %v4277 = vsel %vm4081, %v3891, %v4225
      %v4278 = vsel %vm4098, %v4230, %v4241
      %v4279 = vsel %vm4115, %v4246, %v4257
      %v4280 = vpack.c.bf16 %v3151, %v3148
      %v4281 = vpack.c.bf16 %v4268, %v3156
      %v4282 = vpack.c.bf16 %v4086, %v4084
      %v4283 = vpack.c.bf16 %v4269, %v4088
      %v4284 = vpack.c.bf16 %v4103, %v4101
      %v4285 = vpack.c.bf16 %v4270, %v4105
      %v4286 = vpack.c.bf16 %v4120, %v4118
      %v4287 = vpack.c.bf16 %v3392, %v4122
      %v4288 = vpack.c.bf16 %v3400, %v3395
      %v4289 = vpack.c.bf16 %v4133, %v4271
      %v4290 = vpack.c.bf16 %v4137, %v4135
      %v4291 = vpack.c.bf16 %v4149, %v4272
      %v4292 = vpack.c.bf16 %v4153, %v4151
      %v4293 = vpack.c.bf16 %v4165, %v4273
      %v4294 = vpack.c.bf16 %v4169, %v4167
      %v4295 = vpack.c.bf16 %v3639, %v3636
      %v4296 = vpack.c.bf16 %v4274, %v3644
      %v4297 = vpack.c.bf16 %v4182, %v4180
      %v4298 = vpack.c.bf16 %v4275, %v4184
      %v4299 = vpack.c.bf16 %v4198, %v4196
      %v4300 = vpack.c.bf16 %v4276, %v4200
      %v4301 = vpack.c.bf16 %v4214, %v4212
      %v4302 = vpack.c.bf16 %v3880, %v4216
      %v4303 = vpack.c.bf16 %v3888, %v3883
      %v4304 = vpack.c.bf16 %v4227, %v4277
      %v4305 = vpack.c.bf16 %v4231, %v4229
      %v4306 = vpack.c.bf16 %v4243, %v4278
      %v4307 = vpack.c.bf16 %v4247, %v4245
      %v4308 = vpack.c.bf16 %v4259, %v4279
      %v4309 = vpack.c.bf16 %v4263, %v4261
      %v4340 = vunpack.c.l.b16 %v4280
      %v4341 = vunpack.c.h.b16 %v4280
      %v4342 = vunpack.c.l.b16 %v4281
      %v4343 = vunpack.c.h.b16 %v4281
      %v4344 = vunpack.c.l.b16 %v4282
      %v4345 = vunpack.c.h.b16 %v4282
      %v4346 = vunpack.c.l.b16 %v4283
      %v4347 = vunpack.c.h.b16 %v4283
      %v4348 = vunpack.c.l.b16 %v4284
      %v4349 = vunpack.c.h.b16 %v4284
      %v4350 = vunpack.c.l.b16 %v4285
      %v4351 = vunpack.c.h.b16 %v4285
      %v4352 = vunpack.c.l.b16 %v4286
      %v4353 = vunpack.c.h.b16 %v4286
      %v4354 = vunpack.c.l.b16 %v4287
      %v4355 = vunpack.c.h.b16 %v4287
      %v4356 = vunpack.c.l.b16 %v4288
      %v4357 = vunpack.c.h.b16 %v4288
      %v4358 = vunpack.c.l.b16 %v4289
      %v4359 = vunpack.c.h.b16 %v4289
      %v4360 = vunpack.c.l.b16 %v4290
      %v4361 = vunpack.c.h.b16 %v4290
      %v4362 = vunpack.c.l.b16 %v4291
      %v4363 = vunpack.c.h.b16 %v4291
      %v4364 = vunpack.c.l.b16 %v4292
      %v4365 = vunpack.c.h.b16 %v4292
      %v4366 = vunpack.c.l.b16 %v4293
      %v4367 = vunpack.c.h.b16 %v4293
      %v4368 = vunpack.c.l.b16 %v4294
      %v4369 = vunpack.c.h.b16 %v4294
      %v4370 = vunpack.c.l.b16 %v4295
      %v4371 = vunpack.c.h.b16 %v4295
      %v4372 = vunpack.c.l.b16 %v4296
      %v4373 = vunpack.c.h.b16 %v4296
      %v4374 = vunpack.c.l.b16 %v4297
      %v4375 = vunpack.c.h.b16 %v4297
      %v4376 = vunpack.c.l.b16 %v4298
      %v4377 = vunpack.c.h.b16 %v4298
      %v4378 = vunpack.c.l.b16 %v4299
      %v4379 = vunpack.c.h.b16 %v4299
      %v4380 = vunpack.c.l.b16 %v4300
      %v4381 = vunpack.c.h.b16 %v4300
      %v4382 = vunpack.c.l.b16 %v4301
      %v4383 = vunpack.c.h.b16 %v4301
      %v4384 = vunpack.c.l.b16 %v4302
      %v4385 = vunpack.c.h.b16 %v4302
      %v4386 = vunpack.c.l.b16 %v4303
      %v4387 = vunpack.c.h.b16 %v4303
      %v4388 = vunpack.c.l.b16 %v4304
      %v4389 = vunpack.c.h.b16 %v4304
      %v4390 = vunpack.c.l.b16 %v4305
      %v4391 = vunpack.c.h.b16 %v4305
      %v4392 = vunpack.c.l.b16 %v4306
      %v4393 = vunpack.c.h.b16 %v4306
      %v4394 = vunpack.c.l.b16 %v4307
      %v4395 = vunpack.c.h.b16 %v4307
      %v4396 = vunpack.c.l.b16 %v4308
      %v4397 = vunpack.c.h.b16 %v4308
      %v4398 = vunpack.c.l.b16 %v4309
      %v4399 = vunpack.c.h.b16 %v4309
      %v4400 = vpack.c.b16 %v4340, %v4340
      %v4401 = vpack.c.b16 %v4341, %v4341
      %v4402 = vpack.c.b16 %v4342, %v4342
      %v4403 = vpack.c.b16 %v4343, %v4343
      %v4404 = vpack.c.b16 %v4344, %v4344
      %v4405 = vpack.c.b16 %v4345, %v4345
      %v4406 = vpack.c.b16 %v4346, %v4346
      %v4407 = vpack.c.b16 %v4347, %v4347
      %v4408 = vpack.c.b16 %v4348, %v4348
      %v4409 = vpack.c.b16 %v4349, %v4349
      %v4410 = vpack.c.b16 %v4350, %v4350
      %v4411 = vpack.c.b16 %v4351, %v4351
      %v4412 = vpack.c.b16 %v4352, %v4352
      %v4413 = vpack.c.b16 %v4353, %v4353
      %v4414 = vpack.c.b16 %v4354, %v4354
      %v4415 = vpack.c.b16 %v4355, %v4355
      %v4416 = vpack.c.b16 %v4356, %v4356
      %v4417 = vpack.c.b16 %v4357, %v4357
      %v4418 = vpack.c.b16 %v4358, %v4358
      %v4419 = vpack.c.b16 %v4359, %v4359
      %v4420 = vpack.c.b16 %v4360, %v4360
      %v4421 = vpack.c.b16 %v4361, %v4361
      %v4422 = vpack.c.b16 %v4362, %v4362
      %v4423 = vpack.c.b16 %v4363, %v4363
      %v4424 = vpack.c.b16 %v4364, %v4364
      %v4425 = vpack.c.b16 %v4365, %v4365
      %v4426 = vpack.c.b16 %v4366, %v4366
      %v4427 = vpack.c.b16 %v4367, %v4367
      %v4428 = vpack.c.b16 %v4368, %v4368
      %v4429 = vpack.c.b16 %v4369, %v4369
      %v4430 = vpack.c.b16 %v4370, %v4370
      %v4431 = vpack.c.b16 %v4371, %v4371
      %v4432 = vpack.c.b16 %v4372, %v4372
      %v4433 = vpack.c.b16 %v4373, %v4373
      %v4434 = vpack.c.b16 %v4374, %v4374
      %v4435 = vpack.c.b16 %v4375, %v4375
      %v4436 = vpack.c.b16 %v4376, %v4376
      %v4437 = vpack.c.b16 %v4377, %v4377
      %v4438 = vpack.c.b16 %v4378, %v4378
      %v4439 = vpack.c.b16 %v4379, %v4379
      %v4440 = vpack.c.b16 %v4380, %v4380
      %v4441 = vpack.c.b16 %v4381, %v4381
      %v4442 = vpack.c.b16 %v4382, %v4382
      %v4443 = vpack.c.b16 %v4383, %v4383
      %v4444 = vpack.c.b16 %v4384, %v4384
      %v4445 = vpack.c.b16 %v4385, %v4385
      %v4446 = vpack.c.b16 %v4386, %v4386
      %v4447 = vpack.c.b16 %v4387, %v4387
      %v4448 = vpack.c.b16 %v4388, %v4388
      %v4449 = vpack.c.b16 %v4389, %v4389
      %v4450 = vpack.c.b16 %v4390, %v4390
      %v4451 = vpack.c.b16 %v4391, %v4391
      %v4452 = vpack.c.b16 %v4392, %v4392
      %v4453 = vpack.c.b16 %v4393, %v4393
      %v4454 = vpack.c.b16 %v4394, %v4394
      %v4455 = vpack.c.b16 %v4395, %v4395
      %v4456 = vpack.c.b16 %v4396, %v4396
      %v4457 = vpack.c.b16 %v4397, %v4397
      %v4458 = vpack.c.b16 %v4398, %v4398
      %v4459 = vpack.c.b16 %v4399, %v4399
      %vm4520 = vcmask 257024
      %4521 = vst.msk [vmem:[%s197] sm:$0xf] %vm4520, %v4400
      %4522 = vst.msk [vmem:[%s197 + $0x4] sm:$0xf] %vm4520, %v4401
      %4523 = vst.msk [vmem:[%s197 + $0x8] sm:$0xf] %vm4520, %v4402
      %4524 = vst.msk [vmem:[%s197 + $0xc] sm:$0xf] %vm4520, %v4403
      %4525 = vst.msk [vmem:[%s197 + $0x10] sm:$0xf] %vm4520, %v4404
      %4526 = vst.msk [vmem:[%s197 + $0x14] sm:$0xf] %vm4520, %v4405
      %4527 = vst.msk [vmem:[%s197 + $0x18] sm:$0xf] %vm4520, %v4406
      %4528 = vst.msk [vmem:[%s197 + $0x1c] sm:$0xf] %vm4520, %v4407
      %4529 = vst.msk [vmem:[%s197 + $0x20] sm:$0xf] %vm4520, %v4408
      %4530 = vst.msk [vmem:[%s197 + $0x24] sm:$0xf] %vm4520, %v4409
      %4531 = vst.msk [vmem:[%s197 + $0x28] sm:$0xf] %vm4520, %v4410
      %4532 = vst.msk [vmem:[%s197 + $0x2c] sm:$0xf] %vm4520, %v4411
      %4533 = vst.msk [vmem:[%s197 + $0x30] sm:$0xf] %vm4520, %v4412
      %4534 = vst.msk [vmem:[%s197 + $0x34] sm:$0xf] %vm4520, %v4413
      %4535 = vst.msk [vmem:[%s197 + $0x38] sm:$0xf] %vm4520, %v4414
      %4536 = vst.msk [vmem:[%s197 + $0x3c] sm:$0xf] %vm4520, %v4415
      %4537 = vst.msk [vmem:[%s197 + $0x40] sm:$0xf] %vm4520, %v4416
      %4538 = vst.msk [vmem:[%s197 + $0x44] sm:$0xf] %vm4520, %v4417
      %4539 = vst.msk [vmem:[%s197 + $0x48] sm:$0xf] %vm4520, %v4418
      %4540 = vst.msk [vmem:[%s197 + $0x4c] sm:$0xf] %vm4520, %v4419
      %4541 = vst.msk [vmem:[%s197 + $0x50] sm:$0xf] %vm4520, %v4420
      %4542 = vst.msk [vmem:[%s197 + $0x54] sm:$0xf] %vm4520, %v4421
      %4543 = vst.msk [vmem:[%s197 + $0x58] sm:$0xf] %vm4520, %v4422
      %4544 = vst.msk [vmem:[%s197 + $0x5c] sm:$0xf] %vm4520, %v4423
      %4545 = vst.msk [vmem:[%s197 + $0x60] sm:$0xf] %vm4520, %v4424
      %4546 = vst.msk [vmem:[%s197 + $0x64] sm:$0xf] %vm4520, %v4425
      %4547 = vst.msk [vmem:[%s197 + $0x68] sm:$0xf] %vm4520, %v4426
      %4548 = vst.msk [vmem:[%s197 + $0x6c] sm:$0xf] %vm4520, %v4427
      %4549 = vst.msk [vmem:[%s197 + $0x70] sm:$0xf] %vm4520, %v4428
      %4550 = vst.msk [vmem:[%s197 + $0x74] sm:$0xf] %vm4520, %v4429
      %4551 = vst.msk [vmem:[%s197 + $0x78] sm:$0xf] %vm4520, %v4430
      %4552 = vst.msk [vmem:[%s197 + $0x7c] sm:$0xf] %vm4520, %v4431
      %4553 = vst.msk [vmem:[%s197 + $0x80] sm:$0xf] %vm4520, %v4432
      %4554 = vst.msk [vmem:[%s197 + $0x84] sm:$0xf] %vm4520, %v4433
      %4555 = vst.msk [vmem:[%s197 + $0x88] sm:$0xf] %vm4520, %v4434
      %4556 = vst.msk [vmem:[%s197 + $0x8c] sm:$0xf] %vm4520, %v4435
      %4557 = vst.msk [vmem:[%s197 + $0x90] sm:$0xf] %vm4520, %v4436
      %4558 = vst.msk [vmem:[%s197 + $0x94] sm:$0xf] %vm4520, %v4437
      %4559 = vst.msk [vmem:[%s197 + $0x98] sm:$0xf] %vm4520, %v4438
      %4560 = vst.msk [vmem:[%s197 + $0x9c] sm:$0xf] %vm4520, %v4439
      %4561 = vst.msk [vmem:[%s197 + $0xa0] sm:$0xf] %vm4520, %v4440
      %4562 = vst.msk [vmem:[%s197 + $0xa4] sm:$0xf] %vm4520, %v4441
      %4563 = vst.msk [vmem:[%s197 + $0xa8] sm:$0xf] %vm4520, %v4442
      %4564 = vst.msk [vmem:[%s197 + $0xac] sm:$0xf] %vm4520, %v4443
      %4565 = vst.msk [vmem:[%s197 + $0xb0] sm:$0xf] %vm4520, %v4444
      %4566 = vst.msk [vmem:[%s197 + $0xb4] sm:$0xf] %vm4520, %v4445
      %4567 = vst.msk [vmem:[%s197 + $0xb8] sm:$0xf] %vm4520, %v4446
      %4568 = vst.msk [vmem:[%s197 + $0xbc] sm:$0xf] %vm4520, %v4447
      %4569 = vst.msk [vmem:[%s197 + $0xc0] sm:$0xf] %vm4520, %v4448
      %4570 = vst.msk [vmem:[%s197 + $0xc4] sm:$0xf] %vm4520, %v4449
      %4571 = vst.msk [vmem:[%s197 + $0xc8] sm:$0xf] %vm4520, %v4450
      %4572 = vst.msk [vmem:[%s197 + $0xcc] sm:$0xf] %vm4520, %v4451
      %4573 = vst.msk [vmem:[%s197 + $0xd0] sm:$0xf] %vm4520, %v4452
      %4574 = vst.msk [vmem:[%s197 + $0xd4] sm:$0xf] %vm4520, %v4453
      %4575 = vst.msk [vmem:[%s197 + $0xd8] sm:$0xf] %vm4520, %v4454
      %4576 = vst.msk [vmem:[%s197 + $0xdc] sm:$0xf] %vm4520, %v4455
      %4577 = vst.msk [vmem:[%s197 + $0xe0] sm:$0xf] %vm4520, %v4456
      %4578 = vst.msk [vmem:[%s197 + $0xe4] sm:$0xf] %vm4520, %v4457
      %4579 = vst.msk [vmem:[%s197 + $0xe8] sm:$0xf] %vm4520, %v4458
      %4580 = vst.msk [vmem:[%s197 + $0xec] sm:$0xf] %vm4520, %v4459
      %v4581 = vld [vmem:[%s192 + $0x400] sm:$0xf]
      %v4582 = vld [vmem:[%s192 + $0x404] sm:$0xf]
      %v4583 = vld [vmem:[%s192 + $0x408] sm:$0xf]
      %v4584 = vld [vmem:[%s192 + $0x40c] sm:$0xf]
      %v4585 = vld [vmem:[%s192 + $0x410] sm:$0xf]
      %v4586 = vld [vmem:[%s192 + $0x414] sm:$0xf]
      %v4587 = vld [vmem:[%s192 + $0x418] sm:$0xf]
      %v4588 = vld [vmem:[%s192 + $0x41c] sm:$0xf]
      %v4589 = vld [vmem:[%s192 + $0x420] sm:$0xf]
      %v4590 = vld [vmem:[%s192 + $0x424] sm:$0xf]
      %v4591 = vld [vmem:[%s192 + $0x428] sm:$0xf]
      %v4592 = vld [vmem:[%s192 + $0x42c] sm:$0xf]
      %v4593 = vld [vmem:[%s192 + $0x430] sm:$0xf]
      %v4594 = vld [vmem:[%s192 + $0x434] sm:$0xf]
      %v4595 = vld [vmem:[%s192 + $0x438] sm:$0xf]
      %v4596 = vld [vmem:[%s192 + $0x43c] sm:$0xf]
      %v4597 = vld [vmem:[%s192 + $0x440] sm:$0xf]
      %v4598 = vld [vmem:[%s192 + $0x444] sm:$0xf]
      %v4599 = vld [vmem:[%s192 + $0x448] sm:$0xf]
      %v4600 = vld [vmem:[%s192 + $0x44c] sm:$0xf]
      %v4601 = vld [vmem:[%s192 + $0x450] sm:$0xf]
      %v4602 = vld [vmem:[%s192 + $0x454] sm:$0xf]
      %v4603 = vld [vmem:[%s192 + $0x458] sm:$0xf]
      %v4604 = vld [vmem:[%s192 + $0x45c] sm:$0xf]
      %v4605 = vld [vmem:[%s192 + $0x460] sm:$0xf]
      %v4606 = vld [vmem:[%s192 + $0x464] sm:$0xf]
      %v4607 = vld [vmem:[%s192 + $0x468] sm:$0xf]
      %v4608 = vld [vmem:[%s192 + $0x46c] sm:$0xf]
      %v4609 = vld [vmem:[%s192 + $0x470] sm:$0xf]
      %v4610 = vld [vmem:[%s192 + $0x474] sm:$0xf]
      %v4611 = vld [vmem:[%s192 + $0x478] sm:$0xf]
      %v4612 = vld [vmem:[%s192 + $0x47c] sm:$0xf]
      %v4613 = vld [vmem:[%s192 + $0x480] sm:$0xf]
      %v4614 = vld [vmem:[%s192 + $0x484] sm:$0xf]
      %v4615 = vld [vmem:[%s192 + $0x488] sm:$0xf]
      %v4616 = vld [vmem:[%s192 + $0x48c] sm:$0xf]
      %v4617 = vld [vmem:[%s192 + $0x490] sm:$0xf]
      %v4618 = vld [vmem:[%s192 + $0x494] sm:$0xf]
      %v4619 = vld [vmem:[%s192 + $0x498] sm:$0xf]
      %v4620 = vld [vmem:[%s192 + $0x49c] sm:$0xf]
      %v4621 = vld [vmem:[%s192 + $0x4a0] sm:$0xf]
      %v4622 = vld [vmem:[%s192 + $0x4a4] sm:$0xf]
      %v4623 = vld [vmem:[%s192 + $0x4a8] sm:$0xf]
      %v4624 = vld [vmem:[%s192 + $0x4ac] sm:$0xf]
      %v4625 = vld [vmem:[%s192 + $0x4b0] sm:$0xf]
      %v4626 = vld [vmem:[%s192 + $0x4b4] sm:$0xf]
      %v4627 = vld [vmem:[%s192 + $0x4b8] sm:$0xf]
      %v4628 = vld [vmem:[%s192 + $0x4bc] sm:$0xf]
      %v4629 = vld [vmem:[%s192 + $0x4c0] sm:$0xf]
      %v4630 = vld [vmem:[%s192 + $0x4c4] sm:$0xf]
      %v4631 = vld [vmem:[%s192 + $0x4c8] sm:$0xf]
      %v4632 = vld [vmem:[%s192 + $0x4cc] sm:$0xf]
      %v4633 = vld [vmem:[%s192 + $0x4d0] sm:$0xf]
      %v4634 = vld [vmem:[%s192 + $0x4d4] sm:$0xf]
      %v4635 = vld [vmem:[%s192 + $0x4d8] sm:$0xf]
      %v4636 = vld [vmem:[%s192 + $0x4dc] sm:$0xf]
      %v4637 = vld [vmem:[%s192 + $0x4e0] sm:$0xf]
      %v4638 = vld [vmem:[%s192 + $0x4e4] sm:$0xf]
      %v4639 = vld [vmem:[%s192 + $0x4e8] sm:$0xf]
      %v4640 = vld [vmem:[%s192 + $0x4ec] sm:$0xf]
      %v4641 = vld [vmem:[%s192 + $0x4f0] sm:$0xf]
      %v4642 = vld [vmem:[%s192 + $0x4f4] sm:$0xf]
      %v4643 = vld [vmem:[%s192 + $0x4f8] sm:$0xf]
      %v4644 = vld [vmem:[%s192 + $0x4fc] sm:$0xf]
      %v4645 = vld [vmem:[%s192 + $0x500] sm:$0xf]
      %v4646 = vld [vmem:[%s192 + $0x504] sm:$0xf]
      %v4647 = vld [vmem:[%s192 + $0x508] sm:$0xf]
      %v4648 = vld [vmem:[%s192 + $0x50c] sm:$0xf]
      %v4649 = vld [vmem:[%s192 + $0x510] sm:$0xf]
      %v4650 = vld [vmem:[%s192 + $0x514] sm:$0xf]
      %v4651 = vld [vmem:[%s192 + $0x518] sm:$0xf]
      %v4652 = vld [vmem:[%s192 + $0x51c] sm:$0xf]
      %v4653 = vld [vmem:[%s192 + $0x520] sm:$0xf]
      %v4654 = vld [vmem:[%s192 + $0x524] sm:$0xf]
      %v4655 = vld [vmem:[%s192 + $0x528] sm:$0xf]
      %v4656 = vld [vmem:[%s192 + $0x52c] sm:$0xf]
      %v4657 = vld [vmem:[%s192 + $0x530] sm:$0xf]
      %v4658 = vld [vmem:[%s192 + $0x534] sm:$0xf]
      %v4659 = vld [vmem:[%s192 + $0x538] sm:$0xf]
      %v4660 = vld [vmem:[%s192 + $0x53c] sm:$0xf]
      %v4661 = vld [vmem:[%s192 + $0x540] sm:$0xf]
      %v4662 = vld [vmem:[%s192 + $0x544] sm:$0xf]
      %v4663 = vld [vmem:[%s192 + $0x548] sm:$0xf]
      %v4664 = vld [vmem:[%s192 + $0x54c] sm:$0xf]
      %v4665 = vld [vmem:[%s192 + $0x550] sm:$0xf]
      %v4666 = vld [vmem:[%s192 + $0x554] sm:$0xf]
      %v4667 = vld [vmem:[%s192 + $0x558] sm:$0xf]
      %v4668 = vld [vmem:[%s192 + $0x55c] sm:$0xf]
      %v4669 = vld [vmem:[%s192 + $0x560] sm:$0xf]
      %v4670 = vld [vmem:[%s192 + $0x564] sm:$0xf]
      %v4671 = vld [vmem:[%s192 + $0x568] sm:$0xf]
      %v4672 = vld [vmem:[%s192 + $0x56c] sm:$0xf]
      %v4673 = vld [vmem:[%s192 + $0x570] sm:$0xf]
      %v4674 = vld [vmem:[%s192 + $0x574] sm:$0xf]
      %v4675 = vld [vmem:[%s192 + $0x578] sm:$0xf]
      %v4676 = vld [vmem:[%s192 + $0x57c] sm:$0xf]
      %v4677 = vld [vmem:[%s192 + $0x580] sm:$0xf]
      %v4678 = vld [vmem:[%s192 + $0x584] sm:$0xf]
      %v4679 = vld [vmem:[%s192 + $0x588] sm:$0xf]
      %v4680 = vld [vmem:[%s192 + $0x58c] sm:$0xf]
      %v4681 = vld [vmem:[%s192 + $0x590] sm:$0xf]
      %v4682 = vld [vmem:[%s192 + $0x594] sm:$0xf]
      %v4683 = vld [vmem:[%s192 + $0x598] sm:$0xf]
      %v4684 = vld [vmem:[%s192 + $0x59c] sm:$0xf]
      %v4685 = vld [vmem:[%s192 + $0x5a0] sm:$0xf]
      %v4686 = vld [vmem:[%s192 + $0x5a4] sm:$0xf]
      %v4687 = vld [vmem:[%s192 + $0x5a8] sm:$0xf]
      %v4688 = vld [vmem:[%s192 + $0x5ac] sm:$0xf]
      %v4689 = vld [vmem:[%s192 + $0x5b0] sm:$0xf]
      %v4690 = vld [vmem:[%s192 + $0x5b4] sm:$0xf]
      %v4691 = vld [vmem:[%s192 + $0x5b8] sm:$0xf]
      %v4692 = vld [vmem:[%s192 + $0x5bc] sm:$0xf]
      %v4693 = vld [vmem:[%s192 + $0x5c0] sm:$0xf]
      %v4694 = vld [vmem:[%s192 + $0x5c4] sm:$0xf]
      %v4695 = vld [vmem:[%s192 + $0x5c8] sm:$0xf]
      %v4696 = vld [vmem:[%s192 + $0x5cc] sm:$0xf]
      %v4697 = vld [vmem:[%s192 + $0x5d0] sm:$0xf]
      %v4698 = vld [vmem:[%s192 + $0x5d4] sm:$0xf]
      %v4699 = vld [vmem:[%s192 + $0x5d8] sm:$0xf]
      %v4700 = vld [vmem:[%s192 + $0x5dc] sm:$0xf]
      %v4701 = vld [vmem:[%s192 + $0x5e0] sm:$0xf]
      %v4702 = vld [vmem:[%s192 + $0x5e4] sm:$0xf]
      %v4703 = vld [vmem:[%s192 + $0x5e8] sm:$0xf]
      %v4704 = vld [vmem:[%s192 + $0x5ec] sm:$0xf]
      %v4705 = vld [vmem:[%s192 + $0x5f0] sm:$0xf]
      %v4706 = vld [vmem:[%s192 + $0x5f4] sm:$0xf]
      %v4707 = vld [vmem:[%s192 + $0x5f8] sm:$0xf]
      %v4708 = vld [vmem:[%s192 + $0x5fc] sm:$0xf]
      %v4709 = vld [vmem:[%s192 + $0x600] sm:$0xf]
      %v4710 = vld [vmem:[%s192 + $0x604] sm:$0xf]
      %v4711 = vld [vmem:[%s192 + $0x608] sm:$0xf]
      %v4712 = vld [vmem:[%s192 + $0x60c] sm:$0xf]
      %v4713 = vld [vmem:[%s192 + $0x610] sm:$0xf]
      %v4714 = vld [vmem:[%s192 + $0x614] sm:$0xf]
      %v4715 = vld [vmem:[%s192 + $0x618] sm:$0xf]
      %v4716 = vld [vmem:[%s192 + $0x61c] sm:$0xf]
      %v4717 = vld [vmem:[%s192 + $0x620] sm:$0xf]
      %v4718 = vld [vmem:[%s192 + $0x624] sm:$0xf]
      %v4719 = vld [vmem:[%s192 + $0x628] sm:$0xf]
      %v4720 = vld [vmem:[%s192 + $0x62c] sm:$0xf]
      %v4721 = vld [vmem:[%s192 + $0x630] sm:$0xf]
      %v4722 = vld [vmem:[%s192 + $0x634] sm:$0xf]
      %v4723 = vld [vmem:[%s192 + $0x638] sm:$0xf]
      %v4724 = vld [vmem:[%s192 + $0x63c] sm:$0xf]
      %v4725 = vld [vmem:[%s192 + $0x640] sm:$0xf]
      %v4726 = vld [vmem:[%s192 + $0x644] sm:$0xf]
      %v4727 = vld [vmem:[%s192 + $0x648] sm:$0xf]
      %v4728 = vld [vmem:[%s192 + $0x64c] sm:$0xf]
      %v4729 = vld [vmem:[%s192 + $0x650] sm:$0xf]
      %v4730 = vld [vmem:[%s192 + $0x654] sm:$0xf]
      %v4731 = vld [vmem:[%s192 + $0x658] sm:$0xf]
      %v4732 = vld [vmem:[%s192 + $0x65c] sm:$0xf]
      %v4733 = vld [vmem:[%s192 + $0x660] sm:$0xf]
      %v4734 = vld [vmem:[%s192 + $0x664] sm:$0xf]
      %v4735 = vld [vmem:[%s192 + $0x668] sm:$0xf]
      %v4736 = vld [vmem:[%s192 + $0x66c] sm:$0xf]
      %v4737 = vld [vmem:[%s192 + $0x670] sm:$0xf]
      %v4738 = vld [vmem:[%s192 + $0x674] sm:$0xf]
      %v4739 = vld [vmem:[%s192 + $0x678] sm:$0xf]
      %v4740 = vld [vmem:[%s192 + $0x67c] sm:$0xf]
      %v4741 = vld [vmem:[%s192 + $0x680] sm:$0xf]
      %v4742 = vld [vmem:[%s192 + $0x684] sm:$0xf]
      %v4743 = vld [vmem:[%s192 + $0x688] sm:$0xf]
      %v4744 = vld [vmem:[%s192 + $0x68c] sm:$0xf]
      %v4745 = vld [vmem:[%s192 + $0x690] sm:$0xf]
      %v4746 = vld [vmem:[%s192 + $0x694] sm:$0xf]
      %v4747 = vld [vmem:[%s192 + $0x698] sm:$0xf]
      %v4748 = vld [vmem:[%s192 + $0x69c] sm:$0xf]
      %v4749 = vld [vmem:[%s192 + $0x6a0] sm:$0xf]
      %v4750 = vld [vmem:[%s192 + $0x6a4] sm:$0xf]
      %v4751 = vld [vmem:[%s192 + $0x6a8] sm:$0xf]
      %v4752 = vld [vmem:[%s192 + $0x6ac] sm:$0xf]
      %v4753 = vld [vmem:[%s192 + $0x6b0] sm:$0xf]
      %v4754 = vld [vmem:[%s192 + $0x6b4] sm:$0xf]
      %v4755 = vld [vmem:[%s192 + $0x6b8] sm:$0xf]
      %v4756 = vld [vmem:[%s192 + $0x6bc] sm:$0xf]
      %v4757 = vld [vmem:[%s192 + $0x6c0] sm:$0xf]
      %v4758 = vld [vmem:[%s192 + $0x6c4] sm:$0xf]
      %v4759 = vld [vmem:[%s192 + $0x6c8] sm:$0xf]
      %v4760 = vld [vmem:[%s192 + $0x6cc] sm:$0xf]
      %v4761 = vld [vmem:[%s192 + $0x6d0] sm:$0xf]
      %v4762 = vld [vmem:[%s192 + $0x6d4] sm:$0xf]
      %v4763 = vld [vmem:[%s192 + $0x6d8] sm:$0xf]
      %v4764 = vld [vmem:[%s192 + $0x6dc] sm:$0xf]
      %v4765 = vld [vmem:[%s192 + $0x6e0] sm:$0xf]
      %v4766 = vld [vmem:[%s192 + $0x6e4] sm:$0xf]
      %v4767 = vld [vmem:[%s192 + $0x6e8] sm:$0xf]
      %v4768 = vld [vmem:[%s192 + $0x6ec] sm:$0xf]
      %v4769 = vld [vmem:[%s192 + $0x6f0] sm:$0xf]
      %v4770 = vld [vmem:[%s192 + $0x6f4] sm:$0xf]
      %v4771 = vld [vmem:[%s192 + $0x6f8] sm:$0xf]
      %v4772 = vld [vmem:[%s192 + $0x6fc] sm:$0xf]
      %v4773 = vld [vmem:[%s192 + $0x700] sm:$0xf]
      %v4774 = vld [vmem:[%s192 + $0x704] sm:$0xf]
      %v4775 = vld [vmem:[%s192 + $0x708] sm:$0xf]
      %v4776 = vld [vmem:[%s192 + $0x70c] sm:$0xf]
      %v4777 = vld [vmem:[%s192 + $0x710] sm:$0xf]
      %v4778 = vld [vmem:[%s192 + $0x714] sm:$0xf]
      %v4779 = vld [vmem:[%s192 + $0x718] sm:$0xf]
      %v4780 = vld [vmem:[%s192 + $0x71c] sm:$0xf]
      %v4781 = vld [vmem:[%s192 + $0x720] sm:$0xf]
      %v4782 = vld [vmem:[%s192 + $0x724] sm:$0xf]
      %v4783 = vld [vmem:[%s192 + $0x728] sm:$0xf]
      %v4784 = vld [vmem:[%s192 + $0x72c] sm:$0xf]
      %v4785 = vld [vmem:[%s192 + $0x730] sm:$0xf]
      %v4786 = vld [vmem:[%s192 + $0x734] sm:$0xf]
      %v4787 = vld [vmem:[%s192 + $0x738] sm:$0xf]
      %v4788 = vld [vmem:[%s192 + $0x73c] sm:$0xf]
      %v4789 = vld [vmem:[%s192 + $0x740] sm:$0xf]
      %v4790 = vld [vmem:[%s192 + $0x744] sm:$0xf]
      %v4791 = vld [vmem:[%s192 + $0x748] sm:$0xf]
      %v4792 = vld [vmem:[%s192 + $0x74c] sm:$0xf]
      %v4793 = vld [vmem:[%s192 + $0x750] sm:$0xf]
      %v4794 = vld [vmem:[%s192 + $0x754] sm:$0xf]
      %v4795 = vld [vmem:[%s192 + $0x758] sm:$0xf]
      %v4796 = vld [vmem:[%s192 + $0x75c] sm:$0xf]
      %v4797 = vld [vmem:[%s192 + $0x760] sm:$0xf]
      %v4798 = vld [vmem:[%s192 + $0x764] sm:$0xf]
      %v4799 = vld [vmem:[%s192 + $0x768] sm:$0xf]
      %v4800 = vld [vmem:[%s192 + $0x76c] sm:$0xf]
      %v4801 = vld [vmem:[%s192 + $0x770] sm:$0xf]
      %v4802 = vld [vmem:[%s192 + $0x774] sm:$0xf]
      %v4803 = vld [vmem:[%s192 + $0x778] sm:$0xf]
      %v4804 = vld [vmem:[%s192 + $0x77c] sm:$0xf]
      %v4805 = vld [vmem:[%s192 + $0x780] sm:$0xf]
      %v4806 = vld [vmem:[%s192 + $0x784] sm:$0xf]
      %v4807 = vld [vmem:[%s192 + $0x788] sm:$0xf]
      %v4808 = vld [vmem:[%s192 + $0x78c] sm:$0xf]
      %v4809 = vld [vmem:[%s192 + $0x790] sm:$0xf]
      %v4810 = vld [vmem:[%s192 + $0x794] sm:$0xf]
      %v4811 = vld [vmem:[%s192 + $0x798] sm:$0xf]
      %v4812 = vld [vmem:[%s192 + $0x79c] sm:$0xf]
      %v4813 = vld [vmem:[%s192 + $0x7a0] sm:$0xf]
      %v4814 = vld [vmem:[%s192 + $0x7a4] sm:$0xf]
      %v4815 = vld [vmem:[%s192 + $0x7a8] sm:$0xf]
      %v4816 = vld [vmem:[%s192 + $0x7ac] sm:$0xf]
      %v4817 = vld [vmem:[%s192 + $0x7b0] sm:$0xf]
      %v4818 = vld [vmem:[%s192 + $0x7b4] sm:$0xf]
      %v4819 = vld [vmem:[%s192 + $0x7b8] sm:$0xf]
      %v4820 = vld [vmem:[%s192 + $0x7bc] sm:$0xf]
      %v4821 = vld [vmem:[%s192 + $0x7c0] sm:$0xf]
      %v4822 = vld [vmem:[%s192 + $0x7c4] sm:$0xf]
      %v4823 = vld [vmem:[%s192 + $0x7c8] sm:$0xf]
      %v4824 = vld [vmem:[%s192 + $0x7cc] sm:$0xf]
      %v4825 = vld [vmem:[%s192 + $0x7d0] sm:$0xf]
      %v4826 = vld [vmem:[%s192 + $0x7d4] sm:$0xf]
      %v4827 = vld [vmem:[%s192 + $0x7d8] sm:$0xf]
      %v4828 = vld [vmem:[%s192 + $0x7dc] sm:$0xf]
      %v4829 = vld [vmem:[%s192 + $0x7e0] sm:$0xf]
      %v4830 = vld [vmem:[%s192 + $0x7e4] sm:$0xf]
      %v4831 = vld [vmem:[%s192 + $0x7e8] sm:$0xf]
      %v4832 = vld [vmem:[%s192 + $0x7ec] sm:$0xf]
      %v4833 = vld [vmem:[%s192 + $0x7f0] sm:$0xf]
      %v4834 = vld [vmem:[%s192 + $0x7f4] sm:$0xf]
      %v4835 = vld [vmem:[%s192 + $0x7f8] sm:$0xf]
      %v4836 = vld [vmem:[%s192 + $0x7fc] sm:$0xf]
      %v4837 = vld [vmem:[%s1] sm:$0xf]
      %v4838 = vld [vmem:[%s1 + $0x4] sm:$0xf]
      %v4839 = vld [vmem:[%s1 + $0x8] sm:$0xf]
      %v4840 = vld [vmem:[%s1 + $0xc] sm:$0xf]
      %v4841 = vld [vmem:[%s1 + $0x10] sm:$0xf]
      %v4842 = vld [vmem:[%s1 + $0x14] sm:$0xf]
      %v5099 = vunpack.c.l.b16 %v4581
      %v5100 = vunpack.c.l.b16 %v4582
      %v5101 = vunpack.c.l.b16 %v4583
      %v5102 = vunpack.c.l.b16 %v4584
      %v5103 = vunpack.c.l.b16 %v4585
      %v5104 = vunpack.c.l.b16 %v4586
      %v5105 = vunpack.c.l.b16 %v4587
      %v5106 = vunpack.c.l.b16 %v4588
      %v5107 = vunpack.c.l.b16 %v4589
      %v5108 = vunpack.c.l.b16 %v4590
      %v5109 = vunpack.c.l.b16 %v4591
      %v5110 = vunpack.c.l.b16 %v4592
      %v5111 = vunpack.c.l.b16 %v4593
      %v5112 = vunpack.c.l.b16 %v4594
      %v5113 = vunpack.c.l.b16 %v4595
      %v5114 = vunpack.c.l.b16 %v4596
      %v5115 = vunpack.c.l.b16 %v4597
      %v5116 = vunpack.c.l.b16 %v4598
      %v5117 = vunpack.c.l.b16 %v4599
      %v5118 = vunpack.c.l.b16 %v4600
      %v5119 = vunpack.c.l.b16 %v4601
      %v5120 = vunpack.c.l.b16 %v4602
      %v5121 = vunpack.c.l.b16 %v4603
      %v5122 = vunpack.c.l.b16 %v4604
      %v5123 = vunpack.c.l.b16 %v4605
      %v5124 = vunpack.c.l.b16 %v4606
      %v5125 = vunpack.c.l.b16 %v4607
      %v5126 = vunpack.c.l.b16 %v4608
      %v5127 = vunpack.c.l.b16 %v4609
      %v5128 = vunpack.c.l.b16 %v4610
      %v5129 = vunpack.c.l.b16 %v4611
      %v5130 = vunpack.c.l.b16 %v4612
      %v5131 = vunpack.c.l.b16 %v4613
      %v5132 = vunpack.c.l.b16 %v4614
      %v5133 = vunpack.c.l.b16 %v4615
      %v5134 = vunpack.c.l.b16 %v4616
      %v5135 = vunpack.c.l.b16 %v4617
      %v5136 = vunpack.c.l.b16 %v4618
      %v5137 = vunpack.c.l.b16 %v4619
      %v5138 = vunpack.c.l.b16 %v4620
      %v5139 = vunpack.c.l.b16 %v4621
      %v5140 = vunpack.c.l.b16 %v4622
      %v5141 = vunpack.c.l.b16 %v4623
      %v5142 = vunpack.c.l.b16 %v4624
      %v5143 = vunpack.c.l.b16 %v4625
      %v5144 = vunpack.c.l.b16 %v4626
      %v5145 = vunpack.c.l.b16 %v4627
      %v5146 = vunpack.c.l.b16 %v4628
      %v5147 = vunpack.c.l.b16 %v4629
      %v5148 = vunpack.c.l.b16 %v4630
      %v5149 = vunpack.c.l.b16 %v4631
      %v5150 = vunpack.c.l.b16 %v4632
      %v5151 = vunpack.c.l.b16 %v4633
      %v5152 = vunpack.c.l.b16 %v4634
      %v5153 = vunpack.c.l.b16 %v4635
      %v5154 = vunpack.c.l.b16 %v4636
      %v5155 = vunpack.c.l.b16 %v4637
      %v5156 = vunpack.c.l.b16 %v4638
      %v5157 = vunpack.c.l.b16 %v4639
      %v5158 = vunpack.c.l.b16 %v4640
      %v5159 = vunpack.c.l.b16 %v4641
      %v5160 = vunpack.c.l.b16 %v4642
      %v5161 = vunpack.c.l.b16 %v4643
      %v5162 = vunpack.c.l.b16 %v4644
      %v5163 = vunpack.c.l.b16 %v4645
      %v5164 = vunpack.c.l.b16 %v4646
      %v5165 = vunpack.c.l.b16 %v4647
      %v5166 = vunpack.c.l.b16 %v4648
      %v5167 = vunpack.c.l.b16 %v4649
      %v5168 = vunpack.c.l.b16 %v4650
      %v5169 = vunpack.c.l.b16 %v4651
      %v5170 = vunpack.c.l.b16 %v4652
      %v5171 = vunpack.c.l.b16 %v4653
      %v5172 = vunpack.c.l.b16 %v4654
      %v5173 = vunpack.c.l.b16 %v4655
      %v5174 = vunpack.c.l.b16 %v4656
      %v5175 = vunpack.c.l.b16 %v4657
      %v5176 = vunpack.c.l.b16 %v4658
      %v5177 = vunpack.c.l.b16 %v4659
      %v5178 = vunpack.c.l.b16 %v4660
      %v5179 = vunpack.c.l.b16 %v4661
      %v5180 = vunpack.c.l.b16 %v4662
      %v5181 = vunpack.c.l.b16 %v4663
      %v5182 = vunpack.c.l.b16 %v4664
      %v5183 = vunpack.c.l.b16 %v4665
      %v5184 = vunpack.c.l.b16 %v4666
      %v5185 = vunpack.c.l.b16 %v4667
      %v5186 = vunpack.c.l.b16 %v4668
      %v5187 = vunpack.c.l.b16 %v4669
      %v5188 = vunpack.c.l.b16 %v4670
      %v5189 = vunpack.c.l.b16 %v4671
      %v5190 = vunpack.c.l.b16 %v4672
      %v5191 = vunpack.c.l.b16 %v4673
      %v5192 = vunpack.c.l.b16 %v4674
      %v5193 = vunpack.c.l.b16 %v4675
      %v5194 = vunpack.c.l.b16 %v4676
      %v5195 = vunpack.c.l.b16 %v4677
      %v5196 = vunpack.c.l.b16 %v4678
      %v5197 = vunpack.c.l.b16 %v4679
      %v5198 = vunpack.c.l.b16 %v4680
      %v5199 = vunpack.c.l.b16 %v4681
      %v5200 = vunpack.c.l.b16 %v4682
      %v5201 = vunpack.c.l.b16 %v4683
      %v5202 = vunpack.c.l.b16 %v4684
      %v5203 = vunpack.c.l.b16 %v4685
      %v5204 = vunpack.c.l.b16 %v4686
      %v5205 = vunpack.c.l.b16 %v4687
      %v5206 = vunpack.c.l.b16 %v4688
      %v5207 = vunpack.c.l.b16 %v4689
      %v5208 = vunpack.c.l.b16 %v4690
      %v5209 = vunpack.c.l.b16 %v4691
      %v5210 = vunpack.c.l.b16 %v4692
      %v5211 = vunpack.c.l.b16 %v4693
      %v5212 = vunpack.c.l.b16 %v4694
      %v5213 = vunpack.c.l.b16 %v4695
      %v5214 = vunpack.c.l.b16 %v4696
      %v5215 = vunpack.c.l.b16 %v4697
      %v5216 = vunpack.c.l.b16 %v4698
      %v5217 = vunpack.c.l.b16 %v4699
      %v5218 = vunpack.c.l.b16 %v4700
      %v5219 = vunpack.c.l.b16 %v4701
      %v5220 = vunpack.c.l.b16 %v4702
      %v5221 = vunpack.c.l.b16 %v4703
      %v5222 = vunpack.c.l.b16 %v4704
      %v5223 = vunpack.c.l.b16 %v4705
      %v5224 = vunpack.c.l.b16 %v4706
      %v5225 = vunpack.c.l.b16 %v4707
      %v5226 = vunpack.c.l.b16 %v4708
      %v5227 = vunpack.c.l.b16 %v4709
      %v5228 = vunpack.c.l.b16 %v4710
      %v5229 = vunpack.c.l.b16 %v4711
      %v5230 = vunpack.c.l.b16 %v4712
      %v5231 = vunpack.c.l.b16 %v4713
      %v5232 = vunpack.c.l.b16 %v4714
      %v5233 = vunpack.c.l.b16 %v4715
      %v5234 = vunpack.c.l.b16 %v4716
      %v5235 = vunpack.c.l.b16 %v4717
      %v5236 = vunpack.c.l.b16 %v4718
      %v5237 = vunpack.c.l.b16 %v4719
      %v5238 = vunpack.c.l.b16 %v4720
      %v5239 = vunpack.c.l.b16 %v4721
      %v5240 = vunpack.c.l.b16 %v4722
      %v5241 = vunpack.c.l.b16 %v4723
      %v5242 = vunpack.c.l.b16 %v4724
      %v5243 = vunpack.c.l.b16 %v4725
      %v5244 = vunpack.c.l.b16 %v4726
      %v5245 = vunpack.c.l.b16 %v4727
      %v5246 = vunpack.c.l.b16 %v4728
      %v5247 = vunpack.c.l.b16 %v4729
      %v5248 = vunpack.c.l.b16 %v4730
      %v5249 = vunpack.c.l.b16 %v4731
      %v5250 = vunpack.c.l.b16 %v4732
      %v5251 = vunpack.c.l.b16 %v4733
      %v5252 = vunpack.c.l.b16 %v4734
      %v5253 = vunpack.c.l.b16 %v4735
      %v5254 = vunpack.c.l.b16 %v4736
      %v5255 = vunpack.c.l.b16 %v4737
      %v5256 = vunpack.c.l.b16 %v4738
      %v5257 = vunpack.c.l.b16 %v4739
      %v5258 = vunpack.c.l.b16 %v4740
      %v5259 = vunpack.c.l.b16 %v4741
      %v5260 = vunpack.c.l.b16 %v4742
      %v5261 = vunpack.c.l.b16 %v4743
      %v5262 = vunpack.c.l.b16 %v4744
      %v5263 = vunpack.c.l.b16 %v4745
      %v5264 = vunpack.c.l.b16 %v4746
      %v5265 = vunpack.c.l.b16 %v4747
      %v5266 = vunpack.c.l.b16 %v4748
      %v5267 = vunpack.c.l.b16 %v4749
      %v5268 = vunpack.c.l.b16 %v4750
      %v5269 = vunpack.c.l.b16 %v4751
      %v5270 = vunpack.c.l.b16 %v4752
      %v5271 = vunpack.c.l.b16 %v4753
      %v5272 = vunpack.c.l.b16 %v4754
      %v5273 = vunpack.c.l.b16 %v4755
      %v5274 = vunpack.c.l.b16 %v4756
      %v5275 = vunpack.c.l.b16 %v4757
      %v5276 = vunpack.c.l.b16 %v4758
      %v5277 = vunpack.c.l.b16 %v4759
      %v5278 = vunpack.c.l.b16 %v4760
      %v5279 = vunpack.c.l.b16 %v4761
      %v5280 = vunpack.c.l.b16 %v4762
      %v5281 = vunpack.c.l.b16 %v4763
      %v5282 = vunpack.c.l.b16 %v4764
      %v5283 = vunpack.c.l.b16 %v4765
      %v5284 = vunpack.c.l.b16 %v4766
      %v5285 = vunpack.c.l.b16 %v4767
      %v5286 = vunpack.c.l.b16 %v4768
      %v5287 = vunpack.c.l.b16 %v4769
      %v5288 = vunpack.c.l.b16 %v4770
      %v5289 = vunpack.c.l.b16 %v4771
      %v5290 = vunpack.c.l.b16 %v4772
      %v5291 = vunpack.c.l.b16 %v4773
      %v5292 = vunpack.c.l.b16 %v4774
      %v5293 = vunpack.c.l.b16 %v4775
      %v5294 = vunpack.c.l.b16 %v4776
      %v5295 = vunpack.c.l.b16 %v4777
      %v5296 = vunpack.c.l.b16 %v4778
      %v5297 = vunpack.c.l.b16 %v4779
      %v5298 = vunpack.c.l.b16 %v4780
      %v5299 = vunpack.c.l.b16 %v4781
      %v5300 = vunpack.c.l.b16 %v4782
      %v5301 = vunpack.c.l.b16 %v4783
      %v5302 = vunpack.c.l.b16 %v4784
      %v5303 = vunpack.c.l.b16 %v4785
      %v5304 = vunpack.c.l.b16 %v4786
      %v5305 = vunpack.c.l.b16 %v4787
      %v5306 = vunpack.c.l.b16 %v4788
      %v5307 = vunpack.c.l.b16 %v4789
      %v5308 = vunpack.c.l.b16 %v4790
      %v5309 = vunpack.c.l.b16 %v4791
      %v5310 = vunpack.c.l.b16 %v4792
      %v5311 = vunpack.c.l.b16 %v4793
      %v5312 = vunpack.c.l.b16 %v4794
      %v5313 = vunpack.c.l.b16 %v4795
      %v5314 = vunpack.c.l.b16 %v4796
      %v5315 = vunpack.c.l.b16 %v4797
      %v5316 = vunpack.c.l.b16 %v4798
      %v5317 = vunpack.c.l.b16 %v4799
      %v5318 = vunpack.c.l.b16 %v4800
      %v5319 = vunpack.c.l.b16 %v4801
      %v5320 = vunpack.c.l.b16 %v4802
      %v5321 = vunpack.c.l.b16 %v4803
      %v5322 = vunpack.c.l.b16 %v4804
      %v5323 = vunpack.c.l.b16 %v4805
      %v5324 = vunpack.c.l.b16 %v4806
      %v5325 = vunpack.c.l.b16 %v4807
      %v5326 = vunpack.c.l.b16 %v4808
      %v5327 = vunpack.c.l.b16 %v4809
      %v5328 = vunpack.c.l.b16 %v4810
      %v5329 = vunpack.c.l.b16 %v4811
      %v5330 = vunpack.c.l.b16 %v4812
      %v5331 = vunpack.c.l.b16 %v4813
      %v5332 = vunpack.c.l.b16 %v4814
      %v5333 = vunpack.c.l.b16 %v4815
      %v5334 = vunpack.c.l.b16 %v4816
      %v5335 = vunpack.c.l.b16 %v4817
      %v5336 = vunpack.c.l.b16 %v4818
      %v5337 = vunpack.c.l.b16 %v4819
      %v5338 = vunpack.c.l.b16 %v4820
      %v5339 = vunpack.c.l.b16 %v4821
      %v5340 = vunpack.c.l.b16 %v4822
      %v5341 = vunpack.c.l.b16 %v4823
      %v5342 = vunpack.c.l.b16 %v4824
      %v5343 = vunpack.c.l.b16 %v4825
      %v5344 = vunpack.c.l.b16 %v4826
      %v5345 = vunpack.c.l.b16 %v4827
      %v5346 = vunpack.c.l.b16 %v4828
      %v5347 = vunpack.c.l.b16 %v4829
      %v5348 = vunpack.c.l.b16 %v4830
      %v5349 = vunpack.c.l.b16 %v4831
      %v5350 = vunpack.c.l.b16 %v4832
      %v5351 = vunpack.c.l.b16 %v4833
      %v5352 = vunpack.c.l.b16 %v4834
      %v5353 = vunpack.c.l.b16 %v4835
      %v5354 = vunpack.c.l.b16 %v4836
      %v5355 = vpack.c.b16 %v5100, %v5099
      %v5356 = vpack.c.b16 %v5102, %v5101
      %v5357 = vpack.c.b16 %v5104, %v5103
      %v5358 = vpack.c.b16 %v5106, %v5105
      %v5359 = vpack.c.b16 %v5108, %v5107
      %v5360 = vpack.c.b16 %v5110, %v5109
      %v5361 = vpack.c.b16 %v5112, %v5111
      %v5362 = vpack.c.b16 %v5114, %v5113
      %v5363 = vpack.c.b16 %v5116, %v5115
      %v5364 = vpack.c.b16 %v5118, %v5117
      %v5365 = vpack.c.b16 %v5120, %v5119
      %v5366 = vpack.c.b16 %v5122, %v5121
      %v5367 = vpack.c.b16 %v5124, %v5123
      %v5368 = vpack.c.b16 %v5126, %v5125
      %v5369 = vpack.c.b16 %v5128, %v5127
      %v5370 = vpack.c.b16 %v5130, %v5129
      %v5371 = vpack.c.b16 %v5132, %v5131
      %v5372 = vpack.c.b16 %v5134, %v5133
      %v5373 = vpack.c.b16 %v5136, %v5135
      %v5374 = vpack.c.b16 %v5138, %v5137
      %v5375 = vpack.c.b16 %v5140, %v5139
      %v5376 = vpack.c.b16 %v5142, %v5141
      %v5377 = vpack.c.b16 %v5144, %v5143
      %v5378 = vpack.c.b16 %v5146, %v5145
      %v5379 = vpack.c.b16 %v5148, %v5147
      %v5380 = vpack.c.b16 %v5150, %v5149
      %v5381 = vpack.c.b16 %v5152, %v5151
      %v5382 = vpack.c.b16 %v5154, %v5153
      %v5383 = vpack.c.b16 %v5156, %v5155
      %v5384 = vpack.c.b16 %v5158, %v5157
      %v5385 = vpack.c.b16 %v5160, %v5159
      %v5386 = vpack.c.b16 %v5162, %v5161
      %v5387 = vpack.c.b16 %v5164, %v5163
      %v5388 = vpack.c.b16 %v5166, %v5165
      %v5389 = vpack.c.b16 %v5168, %v5167
      %v5390 = vpack.c.b16 %v5170, %v5169
      %v5391 = vpack.c.b16 %v5172, %v5171
      %v5392 = vpack.c.b16 %v5174, %v5173
      %v5393 = vpack.c.b16 %v5176, %v5175
      %v5394 = vpack.c.b16 %v5178, %v5177
      %v5395 = vpack.c.b16 %v5180, %v5179
      %v5396 = vpack.c.b16 %v5182, %v5181
      %v5397 = vpack.c.b16 %v5184, %v5183
      %v5398 = vpack.c.b16 %v5186, %v5185
      %v5399 = vpack.c.b16 %v5188, %v5187
      %v5400 = vpack.c.b16 %v5190, %v5189
      %v5401 = vpack.c.b16 %v5192, %v5191
      %v5402 = vpack.c.b16 %v5194, %v5193
      %v5403 = vpack.c.b16 %v5196, %v5195
      %v5404 = vpack.c.b16 %v5198, %v5197
      %v5405 = vpack.c.b16 %v5200, %v5199
      %v5406 = vpack.c.b16 %v5202, %v5201
      %v5407 = vpack.c.b16 %v5204, %v5203
      %v5408 = vpack.c.b16 %v5206, %v5205
      %v5409 = vpack.c.b16 %v5208, %v5207
      %v5410 = vpack.c.b16 %v5210, %v5209
      %v5411 = vpack.c.b16 %v5212, %v5211
      %v5412 = vpack.c.b16 %v5214, %v5213
      %v5413 = vpack.c.b16 %v5216, %v5215
      %v5414 = vpack.c.b16 %v5218, %v5217
      %v5415 = vpack.c.b16 %v5220, %v5219
      %v5416 = vpack.c.b16 %v5222, %v5221
      %v5417 = vpack.c.b16 %v5224, %v5223
      %v5418 = vpack.c.b16 %v5226, %v5225
      %v5419 = vpack.c.b16 %v5228, %v5227
      %v5420 = vpack.c.b16 %v5230, %v5229
      %v5421 = vpack.c.b16 %v5232, %v5231
      %v5422 = vpack.c.b16 %v5234, %v5233
      %v5423 = vpack.c.b16 %v5236, %v5235
      %v5424 = vpack.c.b16 %v5238, %v5237
      %v5425 = vpack.c.b16 %v5240, %v5239
      %v5426 = vpack.c.b16 %v5242, %v5241
      %v5427 = vpack.c.b16 %v5244, %v5243
      %v5428 = vpack.c.b16 %v5246, %v5245
      %v5429 = vpack.c.b16 %v5248, %v5247
      %v5430 = vpack.c.b16 %v5250, %v5249
      %v5431 = vpack.c.b16 %v5252, %v5251
      %v5432 = vpack.c.b16 %v5254, %v5253
      %v5433 = vpack.c.b16 %v5256, %v5255
      %v5434 = vpack.c.b16 %v5258, %v5257
      %v5435 = vpack.c.b16 %v5260, %v5259
      %v5436 = vpack.c.b16 %v5262, %v5261
      %v5437 = vpack.c.b16 %v5264, %v5263
      %v5438 = vpack.c.b16 %v5266, %v5265
      %v5439 = vpack.c.b16 %v5268, %v5267
      %v5440 = vpack.c.b16 %v5270, %v5269
      %v5441 = vpack.c.b16 %v5272, %v5271
      %v5442 = vpack.c.b16 %v5274, %v5273
      %v5443 = vpack.c.b16 %v5276, %v5275
      %v5444 = vpack.c.b16 %v5278, %v5277
      %v5445 = vpack.c.b16 %v5280, %v5279
      %v5446 = vpack.c.b16 %v5282, %v5281
      %v5447 = vpack.c.b16 %v5284, %v5283
      %v5448 = vpack.c.b16 %v5286, %v5285
      %v5449 = vpack.c.b16 %v5288, %v5287
      %v5450 = vpack.c.b16 %v5290, %v5289
      %v5451 = vpack.c.b16 %v5292, %v5291
      %v5452 = vpack.c.b16 %v5294, %v5293
      %v5453 = vpack.c.b16 %v5296, %v5295
      %v5454 = vpack.c.b16 %v5298, %v5297
      %v5455 = vpack.c.b16 %v5300, %v5299
      %v5456 = vpack.c.b16 %v5302, %v5301
      %v5457 = vpack.c.b16 %v5304, %v5303
      %v5458 = vpack.c.b16 %v5306, %v5305
      %v5459 = vpack.c.b16 %v5308, %v5307
      %v5460 = vpack.c.b16 %v5310, %v5309
      %v5461 = vpack.c.b16 %v5312, %v5311
      %v5462 = vpack.c.b16 %v5314, %v5313
      %v5463 = vpack.c.b16 %v5316, %v5315
      %v5464 = vpack.c.b16 %v5318, %v5317
      %v5465 = vpack.c.b16 %v5320, %v5319
      %v5466 = vpack.c.b16 %v5322, %v5321
      %v5467 = vpack.c.b16 %v5324, %v5323
      %v5468 = vpack.c.b16 %v5326, %v5325
      %v5469 = vpack.c.b16 %v5328, %v5327
      %v5470 = vpack.c.b16 %v5330, %v5329
      %v5471 = vpack.c.b16 %v5332, %v5331
      %v5472 = vpack.c.b16 %v5334, %v5333
      %v5473 = vpack.c.b16 %v5336, %v5335
      %v5474 = vpack.c.b16 %v5338, %v5337
      %v5475 = vpack.c.b16 %v5340, %v5339
      %v5476 = vpack.c.b16 %v5342, %v5341
      %v5477 = vpack.c.b16 %v5344, %v5343
      %v5478 = vpack.c.b16 %v5346, %v5345
      %v5479 = vpack.c.b16 %v5348, %v5347
      %v5480 = vpack.c.b16 %v5350, %v5349
      %v5481 = vpack.c.b16 %v5352, %v5351
      %v5482 = vpack.c.b16 %v5354, %v5353
      %v5489 = vunpack.c.l.b16 %v4837
      %v5490 = vunpack.c.l.b16 %v4838
      %v5491 = vunpack.c.l.b16 %v4839
      %v5492 = vunpack.c.l.b16 %v4840
      %v5493 = vunpack.c.l.b16 %v4841
      %v5494 = vunpack.c.l.b16 %v4842
      %v5495 = vpack.c.b16 %v5490, %v5489
      %v5496 = vpack.c.b16 %v5492, %v5491
      %v5497 = vpack.c.b16 %v5494, %v5493
      %v5502 = vsel %vm1130, %v5355, 0
      %v5505 = vsel %vm1130, %v5356, 0
      %v5508 = vsel %vm1130, %v5357, 0
      %v5511 = vsel %vm1130, %v5358, 0
      %v5514 = vsel %vm1130, %v5359, 0
      %v5517 = vsel %vm1130, %v5360, 0
      %v5520 = vsel %vm1130, %v5361, 0
      %v5523 = vsel %vm1130, %v5362, 0
      %v5526 = vsel %vm1130, %v5363, 0
      %v5529 = vsel %vm1130, %v5364, 0
      %v5532 = vsel %vm1130, %v5365, 0
      %v5535 = vsel %vm1130, %v5366, 0
      %v5538 = vsel %vm1130, %v5367, 0
      %v5541 = vsel %vm1130, %v5368, 0
      %v5544 = vsel %vm1130, %v5369, 0
      %v5547 = vsel %vm1130, %v5370, 0
      %v5550 = vsel %vm1130, %v5371, 0
      %v5553 = vsel %vm1130, %v5372, 0
      %v5556 = vsel %vm1130, %v5373, 0
      %v5559 = vsel %vm1130, %v5374, 0
      %v5562 = vsel %vm1130, %v5375, 0
      %v5565 = vsel %vm1130, %v5376, 0
      %v5568 = vsel %vm1130, %v5377, 0
      %v5571 = vsel %vm1130, %v5378, 0
      %v5574 = vsel %vm1130, %v5379, 0
      %v5577 = vsel %vm1130, %v5380, 0
      %v5580 = vsel %vm1130, %v5381, 0
      %v5583 = vsel %vm1130, %v5382, 0
      %v5586 = vsel %vm1130, %v5383, 0
      %v5589 = vsel %vm1130, %v5384, 0
      %v5592 = vsel %vm1130, %v5385, 0
      %v5595 = vsel %vm1130, %v5386, 0
      %v5598 = vsel %vm1130, %v5387, 0
      %v5601 = vsel %vm1130, %v5388, 0
      %v5604 = vsel %vm1130, %v5389, 0
      %v5607 = vsel %vm1130, %v5390, 0
      %v5610 = vsel %vm1130, %v5391, 0
      %v5613 = vsel %vm1130, %v5392, 0
      %v5616 = vsel %vm1130, %v5393, 0
      %v5619 = vsel %vm1130, %v5394, 0
      %v5622 = vsel %vm1130, %v5395, 0
      %v5625 = vsel %vm1130, %v5396, 0
      %v5628 = vsel %vm1130, %v5397, 0
      %v5631 = vsel %vm1130, %v5398, 0
      %v5634 = vsel %vm1130, %v5399, 0
      %v5637 = vsel %vm1130, %v5400, 0
      %v5640 = vsel %vm1130, %v5401, 0
      %v5643 = vsel %vm1130, %v5402, 0
      %v5646 = vsel %vm1130, %v5403, 0
      %v5649 = vsel %vm1130, %v5404, 0
      %v5652 = vsel %vm1130, %v5405, 0
      %v5655 = vsel %vm1130, %v5406, 0
      %v5658 = vsel %vm1130, %v5407, 0
      %v5661 = vsel %vm1130, %v5408, 0
      %v5664 = vsel %vm1130, %v5409, 0
      %v5667 = vsel %vm1130, %v5410, 0
      %v5670 = vsel %vm1130, %v5411, 0
      %v5673 = vsel %vm1130, %v5412, 0
      %v5676 = vsel %vm1130, %v5413, 0
      %v5679 = vsel %vm1130, %v5414, 0
      %v5682 = vsel %vm1130, %v5415, 0
      %v5685 = vsel %vm1130, %v5416, 0
      %v5688 = vsel %vm1130, %v5417, 0
      %v5691 = vsel %vm1130, %v5418, 0
      %v5694 = vsel %vm1130, %v5419, 0
      %v5697 = vsel %vm1130, %v5420, 0
      %v5700 = vsel %vm1130, %v5421, 0
      %v5703 = vsel %vm1130, %v5422, 0
      %v5706 = vsel %vm1130, %v5423, 0
      %v5709 = vsel %vm1130, %v5424, 0
      %v5712 = vsel %vm1130, %v5425, 0
      %v5715 = vsel %vm1130, %v5426, 0
      %v5718 = vsel %vm1130, %v5427, 0
      %v5721 = vsel %vm1130, %v5428, 0
      %v5724 = vsel %vm1130, %v5429, 0
      %v5727 = vsel %vm1130, %v5430, 0
      %v5730 = vsel %vm1130, %v5431, 0
      %v5733 = vsel %vm1130, %v5432, 0
      %v5736 = vsel %vm1130, %v5433, 0
      %v5739 = vsel %vm1130, %v5434, 0
      %v5742 = vsel %vm1130, %v5435, 0
      %v5745 = vsel %vm1130, %v5436, 0
      %v5748 = vsel %vm1130, %v5437, 0
      %v5751 = vsel %vm1130, %v5438, 0
      %v5754 = vsel %vm1130, %v5439, 0
      %v5757 = vsel %vm1130, %v5440, 0
      %v5760 = vsel %vm1130, %v5441, 0
      %v5763 = vsel %vm1130, %v5442, 0
      %v5766 = vsel %vm1130, %v5443, 0
      %v5769 = vsel %vm1130, %v5444, 0
      %v5772 = vsel %vm1130, %v5445, 0
      %v5775 = vsel %vm1130, %v5446, 0
      %v5778 = vsel %vm1130, %v5447, 0
      %v5781 = vsel %vm1130, %v5448, 0
      %v5784 = vsel %vm1130, %v5449, 0
      %v5787 = vsel %vm1130, %v5450, 0
      %v5790 = vsel %vm1130, %v5451, 0
      %v5793 = vsel %vm1130, %v5452, 0
      %v5796 = vsel %vm1130, %v5453, 0
      %v5799 = vsel %vm1130, %v5454, 0
      %v5802 = vsel %vm1130, %v5455, 0
      %v5805 = vsel %vm1130, %v5456, 0
      %v5808 = vsel %vm1130, %v5457, 0
      %v5811 = vsel %vm1130, %v5458, 0
      %v5814 = vsel %vm1130, %v5459, 0
      %v5817 = vsel %vm1130, %v5460, 0
      %v5820 = vsel %vm1130, %v5461, 0
      %v5823 = vsel %vm1130, %v5462, 0
      %v5826 = vsel %vm1130, %v5463, 0
      %v5829 = vsel %vm1130, %v5464, 0
      %v5832 = vsel %vm1130, %v5465, 0
      %v5835 = vsel %vm1130, %v5466, 0
      %v5838 = vsel %vm1130, %v5467, 0
      %v5841 = vsel %vm1130, %v5468, 0
      %v5844 = vsel %vm1130, %v5469, 0
      %v5847 = vsel %vm1130, %v5470, 0
      %v5850 = vsel %vm1130, %v5471, 0
      %v5853 = vsel %vm1130, %v5472, 0
      %v5856 = vsel %vm1130, %v5473, 0
      %v5859 = vsel %vm1130, %v5474, 0
      %v5862 = vsel %vm1130, %v5475, 0
      %v5865 = vsel %vm1130, %v5476, 0
      %v5868 = vsel %vm1130, %v5477, 0
      %v5871 = vsel %vm1130, %v5478, 0
      %v5874 = vsel %vm1130, %v5479, 0
      %v5877 = vsel %vm1130, %v5480, 0
      %v5880 = vsel %vm1130, %v5481, 0
      %v5883 = vsel %vm1130, %v5482, 0
      %5885 = vmatprep.subr.bf16.mxu0 0
      %5886 = vmatpush1.bf16.msra.mxu0 %v5495
      %5887 = vmatprep.subr.bf16.mxu0 0
      %5888 = vmatpush1.bf16.msra.mxu0 %v5496
      %5889 = vmatprep.subr.bf16.mxu0 0
      %5890 = vmatpush1.bf16.msra.mxu0 %v5497
      %5891 = vmatprep.subr.bf16.mxu0 0
      %5892 = vmatpush1.bf16.msra.mxu0 0
      %5893 = vmatprep.subr.bf16.mxu0 0
      %5894 = vmatpush1.bf16.msra.mxu0 0
      %5895 = vmatprep.subr.bf16.mxu0 0
      %5896 = vmatpush1.bf16.msra.mxu0 0
      %5897 = vmatprep.subr.bf16.mxu0 0
      %5898 = vmatpush1.bf16.msra.mxu0 0
      %5899 = vmatprep.subr.bf16.mxu0 0
      %5900 = vmatpush1.bf16.msra.mxu0 0
      %5901 = vmatprep.subr.bf16.mxu0 0
      %5902 = vmatpush1.bf16.msra.mxu0 0
      %5903 = vmatprep.subr.bf16.mxu0 0
      %5904 = vmatpush1.bf16.msra.mxu0 0
      %5905 = vmatprep.subr.bf16.mxu0 0
      %5906 = vmatpush1.bf16.msra.mxu0 0
      %5907 = vmatprep.subr.bf16.mxu0 0
      %5908 = vmatpush1.bf16.msra.mxu0 0
      %5909 = vmatprep.subr.bf16.mxu0 0
      %5910 = vmatpush1.bf16.msra.mxu0 0
      %5911 = vmatprep.subr.bf16.mxu0 0
      %5912 = vmatpush1.bf16.msra.mxu0 0
      %5913 = vmatprep.subr.bf16.mxu0 0
      %5914 = vmatpush1.bf16.msra.mxu0 0
      %5915 = vmatprep.subr.bf16.mxu0 0
      %5916 = vmatpush1.bf16.msra.mxu0 0
      %5917 = vmatprep.mubr.bf16.mxu0 0
      %5918 = vmatmul.mubr.bf16.gmra.mrb[0].mxu0 %v5502
      %v5919 = vpop.f32.mrb[0].mxu0
      %v5920 = vadd.f32 %v470, %v5919
      %v5921 = vpop.f32.mrb[0].mxu0
      %v5922 = vpop.f32.mrb[0].mxu0
      %v5923 = vadd.f32 %v470, %v5922
      %v5924 = vpop.f32.mrb[0].mxu0
      %5925 = vmatprep.mubr.bf16.mxu0 0
      %5926 = vmatmul.mubr.bf16.gmra.mrb[0].mxu0 %v5505
      %v5927 = vpop.f32.mrb[0].mxu0
      %v5928 = vadd.f32 %v470, %v5927
      %v5929 = vpop.f32.mrb[0].mxu0
      %v5930 = vpop.f32.mrb[0].mxu0
      %v5931 = vadd.f32 %v470, %v5930
      %v5932 = vpop.f32.mrb[0].mxu0
      %5933 = vmatprep.mubr.bf16.mxu0 0
      %5934 = vmatmul.mubr.bf16.gmra.mrb[0].mxu0 %v5508
      %v5935 = vpop.f32.mrb[0].mxu0
      %v5936 = vadd.f32 %v470, %v5935
      %v5937 = vpop.f32.mrb[0].mxu0
      %v5938 = vpop.f32.mrb[0].mxu0
      %v5939 = vadd.f32 %v470, %v5938
      %v5940 = vpop.f32.mrb[0].mxu0
      %5941 = vmatprep.mubr.bf16.mxu0 0
      %5942 = vmatmul.mubr.bf16.gmra.mrb[0].mxu0 %v5511
      %v5943 = vpop.f32.mrb[0].mxu0
      %v5944 = vadd.f32 %v470, %v5943
      %v5945 = vpop.f32.mrb[0].mxu0
      %v5946 = vpop.f32.mrb[0].mxu0
      %v5947 = vadd.f32 %v470, %v5946
      %v5948 = vpop.f32.mrb[0].mxu0
      %5949 = vmatprep.mubr.bf16.mxu0 0
      %5950 = vmatmul.mubr.bf16.gmra.mrb[0].mxu0 %v5514
      %v5951 = vpop.f32.mrb[0].mxu0
      %v5952 = vadd.f32 %v470, %v5951
      %v5953 = vpop.f32.mrb[0].mxu0
      %v5954 = vpop.f32.mrb[0].mxu0
      %v5955 = vadd.f32 %v470, %v5954
      %v5956 = vpop.f32.mrb[0].mxu0
      %5957 = vmatprep.mubr.bf16.mxu0 0
      %5958 = vmatmul.mubr.bf16.gmra.mrb[0].mxu0 %v5517
      %v5959 = vpop.f32.mrb[0].mxu0
      %v5960 = vadd.f32 %v470, %v5959
      %v5961 = vpop.f32.mrb[0].mxu0
      %v5962 = vpop.f32.mrb[0].mxu0
      %v5963 = vadd.f32 %v470, %v5962
      %v5964 = vpop.f32.mrb[0].mxu0
      %5965 = vmatprep.mubr.bf16.mxu0 0
      %5966 = vmatmul.mubr.bf16.gmra.mrb[0].mxu0 %v5520
      %v5967 = vpop.f32.mrb[0].mxu0
      %v5968 = vadd.f32 %v470, %v5967
      %v5969 = vpop.f32.mrb[0].mxu0
      %v5970 = vpop.f32.mrb[0].mxu0
      %v5971 = vadd.f32 %v470, %v5970
      %v5972 = vpop.f32.mrb[0].mxu0
      %5973 = vmatprep.mubr.bf16.mxu0 0
      %5974 = vmatmul.mubr.bf16.gmra.mrb[0].mxu0 %v5523
      %v5975 = vpop.f32.mrb[0].mxu0
      %v5976 = vadd.f32 %v470, %v5975
      %v5977 = vpop.f32.mrb[0].mxu0
      %v5978 = vpop.f32.mrb[0].mxu0
      %v5979 = vadd.f32 %v470, %v5978
      %v5980 = vpop.f32.mrb[0].mxu0
      %5981 = vmatprep.mubr.bf16.mxu0 0
      %5982 = vmatmul.mubr.bf16.gmra.mrb[0].mxu0 %v5526
      %v5983 = vpop.f32.mrb[0].mxu0
      %v5984 = vadd.f32 %v470, %v5983
      %v5985 = vpop.f32.mrb[0].mxu0
      %v5986 = vpop.f32.mrb[0].mxu0
      %v5987 = vadd.f32 %v470, %v5986
      %v5988 = vpop.f32.mrb[0].mxu0
      %5989 = vmatprep.mubr.bf16.mxu0 0
      %5990 = vmatmul.mubr.bf16.gmra.mrb[0].mxu0 %v5529
      %v5991 = vpop.f32.mrb[0].mxu0
      %v5992 = vadd.f32 %v470, %v5991
      %v5993 = vpop.f32.mrb[0].mxu0
      %v5994 = vpop.f32.mrb[0].mxu0
      %v5995 = vadd.f32 %v470, %v5994
      %v5996 = vpop.f32.mrb[0].mxu0
      %5997 = vmatprep.mubr.bf16.mxu0 0
      %5998 = vmatmul.mubr.bf16.gmra.mrb[0].mxu0 %v5532
      %v5999 = vpop.f32.mrb[0].mxu0
      %v6000 = vadd.f32 %v470, %v5999
      %v6001 = vpop.f32.mrb[0].mxu0
      %v6002 = vpop.f32.mrb[0].mxu0
      %v6003 = vadd.f32 %v470, %v6002
      %v6004 = vpop.f32.mrb[0].mxu0
      %6005 = vmatprep.mubr.bf16.mxu0 0
      %6006 = vmatmul.mubr.bf16.gmra.mrb[0].mxu0 %v5535
      %v6007 = vpop.f32.mrb[0].mxu0
      %v6008 = vadd.f32 %v470, %v6007
      %v6009 = vpop.f32.mrb[0].mxu0
      %v6010 = vpop.f32.mrb[0].mxu0
      %v6011 = vadd.f32 %v470, %v6010
      %v6012 = vpop.f32.mrb[0].mxu0
      %6013 = vmatprep.mubr.bf16.mxu0 0
      %6014 = vmatmul.mubr.bf16.gmra.mrb[0].mxu0 %v5538
      %v6015 = vpop.f32.mrb[0].mxu0
      %v6016 = vadd.f32 %v470, %v6015
      %v6017 = vpop.f32.mrb[0].mxu0
      %v6018 = vpop.f32.mrb[0].mxu0
      %v6019 = vadd.f32 %v470, %v6018
      %v6020 = vpop.f32.mrb[0].mxu0
      %6021 = vmatprep.mubr.bf16.mxu0 0
      %6022 = vmatmul.mubr.bf16.gmra.mrb[0].mxu0 %v5541
      %v6023 = vpop.f32.mrb[0].mxu0
      %v6024 = vadd.f32 %v470, %v6023
      %v6025 = vpop.f32.mrb[0].mxu0
      %v6026 = vpop.f32.mrb[0].mxu0
      %v6027 = vadd.f32 %v470, %v6026
      %v6028 = vpop.f32.mrb[0].mxu0
      %6029 = vmatprep.mubr.bf16.mxu0 0
      %6030 = vmatmul.mubr.bf16.gmra.mrb[0].mxu0 %v5544
      %v6031 = vpop.f32.mrb[0].mxu0
      %v6032 = vadd.f32 %v470, %v6031
      %v6033 = vpop.f32.mrb[0].mxu0
      %v6034 = vpop.f32.mrb[0].mxu0
      %v6035 = vadd.f32 %v470, %v6034
      %v6036 = vpop.f32.mrb[0].mxu0
      %6037 = vmatprep.mubr.bf16.mxu0 0
      %6038 = vmatmul.mubr.bf16.gmra.mrb[0].mxu0 %v5547
      %v6039 = vpop.f32.mrb[0].mxu0
      %v6040 = vadd.f32 %v470, %v6039
      %v6041 = vpop.f32.mrb[0].mxu0
      %v6042 = vpop.f32.mrb[0].mxu0
      %v6043 = vadd.f32 %v470, %v6042
      %v6044 = vpop.f32.mrb[0].mxu0
      %6045 = vmatprep.mubr.bf16.mxu0 0
      %6046 = vmatmul.mubr.bf16.gmra.mrb[0].mxu0 %v5550
      %v6047 = vpop.f32.mrb[0].mxu0
      %v6048 = vadd.f32 %v470, %v6047
      %v6049 = vpop.f32.mrb[0].mxu0
      %v6050 = vpop.f32.mrb[0].mxu0
      %v6051 = vadd.f32 %v470, %v6050
      %v6052 = vpop.f32.mrb[0].mxu0
      %6053 = vmatprep.mubr.bf16.mxu0 0
      %6054 = vmatmul.mubr.bf16.gmra.mrb[0].mxu0 %v5553
      %v6055 = vpop.f32.mrb[0].mxu0
      %v6056 = vadd.f32 %v470, %v6055
      %v6057 = vpop.f32.mrb[0].mxu0
      %v6058 = vpop.f32.mrb[0].mxu0
      %v6059 = vadd.f32 %v470, %v6058
      %v6060 = vpop.f32.mrb[0].mxu0
      %6061 = vmatprep.mubr.bf16.mxu0 0
      %6062 = vmatmul.mubr.bf16.gmra.mrb[0].mxu0 %v5556
      %v6063 = vpop.f32.mrb[0].mxu0
      %v6064 = vadd.f32 %v470, %v6063
      %v6065 = vpop.f32.mrb[0].mxu0
      %v6066 = vpop.f32.mrb[0].mxu0
      %v6067 = vadd.f32 %v470, %v6066
      %v6068 = vpop.f32.mrb[0].mxu0
      %6069 = vmatprep.mubr.bf16.mxu0 0
      %6070 = vmatmul.mubr.bf16.gmra.mrb[0].mxu0 %v5559
      %v6071 = vpop.f32.mrb[0].mxu0
      %v6072 = vadd.f32 %v470, %v6071
      %v6073 = vpop.f32.mrb[0].mxu0
      %v6074 = vpop.f32.mrb[0].mxu0
      %v6075 = vadd.f32 %v470, %v6074
      %v6076 = vpop.f32.mrb[0].mxu0
      %6077 = vmatprep.mubr.bf16.mxu0 0
      %6078 = vmatmul.mubr.bf16.gmra.mrb[0].mxu0 %v5562
      %v6079 = vpop.f32.mrb[0].mxu0
      %v6080 = vadd.f32 %v470, %v6079
      %v6081 = vpop.f32.mrb[0].mxu0
      %v6082 = vpop.f32.mrb[0].mxu0
      %v6083 = vadd.f32 %v470, %v6082
      %v6084 = vpop.f32.mrb[0].mxu0
      %6085 = vmatprep.mubr.bf16.mxu0 0
      %6086 = vmatmul.mubr.bf16.gmra.mrb[0].mxu0 %v5565
      %v6087 = vpop.f32.mrb[0].mxu0
      %v6088 = vadd.f32 %v470, %v6087
      %v6089 = vpop.f32.mrb[0].mxu0
      %v6090 = vpop.f32.mrb[0].mxu0
      %v6091 = vadd.f32 %v470, %v6090
      %v6092 = vpop.f32.mrb[0].mxu0
      %6093 = vmatprep.mubr.bf16.mxu0 0
      %6094 = vmatmul.mubr.bf16.gmra.mrb[0].mxu0 %v5568
      %v6095 = vpop.f32.mrb[0].mxu0
      %v6096 = vadd.f32 %v470, %v6095
      %v6097 = vpop.f32.mrb[0].mxu0
      %v6098 = vpop.f32.mrb[0].mxu0
      %v6099 = vadd.f32 %v470, %v6098
      %v6100 = vpop.f32.mrb[0].mxu0
      %6101 = vmatprep.mubr.bf16.mxu0 0
      %6102 = vmatmul.mubr.bf16.gmra.mrb[0].mxu0 %v5571
      %v6103 = vpop.f32.mrb[0].mxu0
      %v6104 = vadd.f32 %v470, %v6103
      %v6105 = vpop.f32.mrb[0].mxu0
      %v6106 = vpop.f32.mrb[0].mxu0
      %v6107 = vadd.f32 %v470, %v6106
      %v6108 = vpop.f32.mrb[0].mxu0
      %6109 = vmatprep.mubr.bf16.mxu0 0
      %6110 = vmatmul.mubr.bf16.gmra.mrb[0].mxu0 %v5574
      %v6111 = vpop.f32.mrb[0].mxu0
      %v6112 = vadd.f32 %v470, %v6111
      %v6113 = vpop.f32.mrb[0].mxu0
      %v6114 = vpop.f32.mrb[0].mxu0
      %v6115 = vadd.f32 %v470, %v6114
      %v6116 = vpop.f32.mrb[0].mxu0
      %6117 = vmatprep.mubr.bf16.mxu0 0
      %6118 = vmatmul.mubr.bf16.gmra.mrb[0].mxu0 %v5577
      %v6119 = vpop.f32.mrb[0].mxu0
      %v6120 = vadd.f32 %v470, %v6119
      %v6121 = vpop.f32.mrb[0].mxu0
      %v6122 = vpop.f32.mrb[0].mxu0
      %v6123 = vadd.f32 %v470, %v6122
      %v6124 = vpop.f32.mrb[0].mxu0
      %6125 = vmatprep.mubr.bf16.mxu0 0
      %6126 = vmatmul.mubr.bf16.gmra.mrb[0].mxu0 %v5580
      %v6127 = vpop.f32.mrb[0].mxu0
      %v6128 = vadd.f32 %v470, %v6127
      %v6129 = vpop.f32.mrb[0].mxu0
      %v6130 = vpop.f32.mrb[0].mxu0
      %v6131 = vadd.f32 %v470, %v6130
      %v6132 = vpop.f32.mrb[0].mxu0
      %6133 = vmatprep.mubr.bf16.mxu0 0
      %6134 = vmatmul.mubr.bf16.gmra.mrb[0].mxu0 %v5583
      %v6135 = vpop.f32.mrb[0].mxu0
      %v6136 = vadd.f32 %v470, %v6135
      %v6137 = vpop.f32.mrb[0].mxu0
      %v6138 = vpop.f32.mrb[0].mxu0
      %v6139 = vadd.f32 %v470, %v6138
      %v6140 = vpop.f32.mrb[0].mxu0
      %6141 = vmatprep.mubr.bf16.mxu0 0
      %6142 = vmatmul.mubr.bf16.gmra.mrb[0].mxu0 %v5586
      %v6143 = vpop.f32.mrb[0].mxu0
      %v6144 = vadd.f32 %v470, %v6143
      %v6145 = vpop.f32.mrb[0].mxu0
      %v6146 = vpop.f32.mrb[0].mxu0
      %v6147 = vadd.f32 %v470, %v6146
      %v6148 = vpop.f32.mrb[0].mxu0
      %6149 = vmatprep.mubr.bf16.mxu0 0
      %6150 = vmatmul.mubr.bf16.gmra.mrb[0].mxu0 %v5589
      %v6151 = vpop.f32.mrb[0].mxu0
      %v6152 = vadd.f32 %v470, %v6151
      %v6153 = vpop.f32.mrb[0].mxu0
      %v6154 = vpop.f32.mrb[0].mxu0
      %v6155 = vadd.f32 %v470, %v6154
      %v6156 = vpop.f32.mrb[0].mxu0
      %6157 = vmatprep.mubr.bf16.mxu0 0
      %6158 = vmatmul.mubr.bf16.gmra.mrb[0].mxu0 %v5592
      %v6159 = vpop.f32.mrb[0].mxu0
      %v6160 = vadd.f32 %v470, %v6159
      %v6161 = vpop.f32.mrb[0].mxu0
      %v6162 = vpop.f32.mrb[0].mxu0
      %v6163 = vadd.f32 %v470, %v6162
      %v6164 = vpop.f32.mrb[0].mxu0
      %6165 = vmatprep.mubr.bf16.mxu0 0
      %6166 = vmatmul.mubr.bf16.gmra.mrb[0].mxu0 %v5595
      %v6167 = vpop.f32.mrb[0].mxu0
      %v6168 = vadd.f32 %v470, %v6167
      %v6169 = vpop.f32.mrb[0].mxu0
      %v6170 = vpop.f32.mrb[0].mxu0
      %v6171 = vadd.f32 %v470, %v6170
      %v6172 = vpop.f32.mrb[0].mxu0
      %6173 = vmatprep.mubr.bf16.mxu0 0
      %6174 = vmatmul.mubr.bf16.gmra.mrb[0].mxu0 %v5598
      %v6175 = vpop.f32.mrb[0].mxu0
      %v6176 = vadd.f32 %v470, %v6175
      %v6177 = vpop.f32.mrb[0].mxu0
      %v6178 = vpop.f32.mrb[0].mxu0
      %v6179 = vadd.f32 %v470, %v6178
      %v6180 = vpop.f32.mrb[0].mxu0
      %6181 = vmatprep.mubr.bf16.mxu0 0
      %6182 = vmatmul.mubr.bf16.gmra.mrb[0].mxu0 %v5601
      %v6183 = vpop.f32.mrb[0].mxu0
      %v6184 = vadd.f32 %v470, %v6183
      %v6185 = vpop.f32.mrb[0].mxu0
      %v6186 = vpop.f32.mrb[0].mxu0
      %v6187 = vadd.f32 %v470, %v6186
      %v6188 = vpop.f32.mrb[0].mxu0
      %6189 = vmatprep.mubr.bf16.mxu0 0
      %6190 = vmatmul.mubr.bf16.gmra.mrb[0].mxu0 %v5604
      %v6191 = vpop.f32.mrb[0].mxu0
      %v6192 = vadd.f32 %v470, %v6191
      %v6193 = vpop.f32.mrb[0].mxu0
      %v6194 = vpop.f32.mrb[0].mxu0
      %v6195 = vadd.f32 %v470, %v6194
      %v6196 = vpop.f32.mrb[0].mxu0
      %6197 = vmatprep.mubr.bf16.mxu0 0
      %6198 = vmatmul.mubr.bf16.gmra.mrb[0].mxu0 %v5607
      %v6199 = vpop.f32.mrb[0].mxu0
      %v6200 = vadd.f32 %v470, %v6199
      %v6201 = vpop.f32.mrb[0].mxu0
      %v6202 = vpop.f32.mrb[0].mxu0
      %v6203 = vadd.f32 %v470, %v6202
      %v6204 = vpop.f32.mrb[0].mxu0
      %6205 = vmatprep.mubr.bf16.mxu0 0
      %6206 = vmatmul.mubr.bf16.gmra.mrb[0].mxu0 %v5610
      %v6207 = vpop.f32.mrb[0].mxu0
      %v6208 = vadd.f32 %v470, %v6207
      %v6209 = vpop.f32.mrb[0].mxu0
      %v6210 = vpop.f32.mrb[0].mxu0
      %v6211 = vadd.f32 %v470, %v6210
      %v6212 = vpop.f32.mrb[0].mxu0
      %6213 = vmatprep.mubr.bf16.mxu0 0
      %6214 = vmatmul.mubr.bf16.gmra.mrb[0].mxu0 %v5613
      %v6215 = vpop.f32.mrb[0].mxu0
      %v6216 = vadd.f32 %v470, %v6215
      %v6217 = vpop.f32.mrb[0].mxu0
      %v6218 = vpop.f32.mrb[0].mxu0
      %v6219 = vadd.f32 %v470, %v6218
      %v6220 = vpop.f32.mrb[0].mxu0
      %6221 = vmatprep.mubr.bf16.mxu0 0
      %6222 = vmatmul.mubr.bf16.gmra.mrb[0].mxu0 %v5616
      %v6223 = vpop.f32.mrb[0].mxu0
      %v6224 = vadd.f32 %v470, %v6223
      %v6225 = vpop.f32.mrb[0].mxu0
      %v6226 = vpop.f32.mrb[0].mxu0
      %v6227 = vadd.f32 %v470, %v6226
      %v6228 = vpop.f32.mrb[0].mxu0
      %6229 = vmatprep.mubr.bf16.mxu0 0
      %6230 = vmatmul.mubr.bf16.gmra.mrb[0].mxu0 %v5619
      %v6231 = vpop.f32.mrb[0].mxu0
      %v6232 = vadd.f32 %v470, %v6231
      %v6233 = vpop.f32.mrb[0].mxu0
      %v6234 = vpop.f32.mrb[0].mxu0
      %v6235 = vadd.f32 %v470, %v6234
      %v6236 = vpop.f32.mrb[0].mxu0
      %6237 = vmatprep.mubr.bf16.mxu0 0
      %6238 = vmatmul.mubr.bf16.gmra.mrb[0].mxu0 %v5622
      %v6239 = vpop.f32.mrb[0].mxu0
      %v6240 = vadd.f32 %v470, %v6239
      %v6241 = vpop.f32.mrb[0].mxu0
      %v6242 = vpop.f32.mrb[0].mxu0
      %v6243 = vadd.f32 %v470, %v6242
      %v6244 = vpop.f32.mrb[0].mxu0
      %6245 = vmatprep.mubr.bf16.mxu0 0
      %6246 = vmatmul.mubr.bf16.gmra.mrb[0].mxu0 %v5625
      %v6247 = vpop.f32.mrb[0].mxu0
      %v6248 = vadd.f32 %v470, %v6247
      %v6249 = vpop.f32.mrb[0].mxu0
      %v6250 = vpop.f32.mrb[0].mxu0
      %v6251 = vadd.f32 %v470, %v6250
      %v6252 = vpop.f32.mrb[0].mxu0
      %6253 = vmatprep.mubr.bf16.mxu0 0
      %6254 = vmatmul.mubr.bf16.gmra.mrb[0].mxu0 %v5628
      %v6255 = vpop.f32.mrb[0].mxu0
      %v6256 = vadd.f32 %v470, %v6255
      %v6257 = vpop.f32.mrb[0].mxu0
      %v6258 = vpop.f32.mrb[0].mxu0
      %v6259 = vadd.f32 %v470, %v6258
      %v6260 = vpop.f32.mrb[0].mxu0
      %6261 = vmatprep.mubr.bf16.mxu0 0
      %6262 = vmatmul.mubr.bf16.gmra.mrb[0].mxu0 %v5631
      %v6263 = vpop.f32.mrb[0].mxu0
      %v6264 = vadd.f32 %v470, %v6263
      %v6265 = vpop.f32.mrb[0].mxu0
      %v6266 = vpop.f32.mrb[0].mxu0
      %v6267 = vadd.f32 %v470, %v6266
      %v6268 = vpop.f32.mrb[0].mxu0
      %6269 = vmatprep.mubr.bf16.mxu0 0
      %6270 = vmatmul.mubr.bf16.gmra.mrb[0].mxu0 %v5634
      %v6271 = vpop.f32.mrb[0].mxu0
      %v6272 = vadd.f32 %v470, %v6271
      %v6273 = vpop.f32.mrb[0].mxu0
      %v6274 = vpop.f32.mrb[0].mxu0
      %v6275 = vadd.f32 %v470, %v6274
      %v6276 = vpop.f32.mrb[0].mxu0
      %6277 = vmatprep.mubr.bf16.mxu0 0
      %6278 = vmatmul.mubr.bf16.gmra.mrb[0].mxu0 %v5637
      %v6279 = vpop.f32.mrb[0].mxu0
      %v6280 = vadd.f32 %v470, %v6279
      %v6281 = vpop.f32.mrb[0].mxu0
      %v6282 = vpop.f32.mrb[0].mxu0
      %v6283 = vadd.f32 %v470, %v6282
      %v6284 = vpop.f32.mrb[0].mxu0
      %6285 = vmatprep.mubr.bf16.mxu0 0
      %6286 = vmatmul.mubr.bf16.gmra.mrb[0].mxu0 %v5640
      %v6287 = vpop.f32.mrb[0].mxu0
      %v6288 = vadd.f32 %v470, %v6287
      %v6289 = vpop.f32.mrb[0].mxu0
      %v6290 = vpop.f32.mrb[0].mxu0
      %v6291 = vadd.f32 %v470, %v6290
      %v6292 = vpop.f32.mrb[0].mxu0
      %6293 = vmatprep.mubr.bf16.mxu0 0
      %6294 = vmatmul.mubr.bf16.gmra.mrb[0].mxu0 %v5643
      %v6295 = vpop.f32.mrb[0].mxu0
      %v6296 = vadd.f32 %v470, %v6295
      %v6297 = vpop.f32.mrb[0].mxu0
      %v6298 = vpop.f32.mrb[0].mxu0
      %v6299 = vadd.f32 %v470, %v6298
      %v6300 = vpop.f32.mrb[0].mxu0
      %6301 = vmatprep.mubr.bf16.mxu0 0
      %6302 = vmatmul.mubr.bf16.gmra.mrb[0].mxu0 %v5646
      %v6303 = vpop.f32.mrb[0].mxu0
      %v6304 = vadd.f32 %v470, %v6303
      %v6305 = vpop.f32.mrb[0].mxu0
      %v6306 = vpop.f32.mrb[0].mxu0
      %v6307 = vadd.f32 %v470, %v6306
      %v6308 = vpop.f32.mrb[0].mxu0
      %6309 = vmatprep.mubr.bf16.mxu0 0
      %6310 = vmatmul.mubr.bf16.gmra.mrb[0].mxu0 %v5649
      %v6311 = vpop.f32.mrb[0].mxu0
      %v6312 = vadd.f32 %v470, %v6311
      %v6313 = vpop.f32.mrb[0].mxu0
      %v6314 = vpop.f32.mrb[0].mxu0
      %v6315 = vadd.f32 %v470, %v6314
      %v6316 = vpop.f32.mrb[0].mxu0
      %6317 = vmatprep.mubr.bf16.mxu0 0
      %6318 = vmatmul.mubr.bf16.gmra.mrb[0].mxu0 %v5652
      %v6319 = vpop.f32.mrb[0].mxu0
      %v6320 = vadd.f32 %v470, %v6319
      %v6321 = vpop.f32.mrb[0].mxu0
      %v6322 = vpop.f32.mrb[0].mxu0
      %v6323 = vadd.f32 %v470, %v6322
      %v6324 = vpop.f32.mrb[0].mxu0
      %6325 = vmatprep.mubr.bf16.mxu0 0
      %6326 = vmatmul.mubr.bf16.gmra.mrb[0].mxu0 %v5655
      %v6327 = vpop.f32.mrb[0].mxu0
      %v6328 = vadd.f32 %v470, %v6327
      %v6329 = vpop.f32.mrb[0].mxu0
      %v6330 = vpop.f32.mrb[0].mxu0
      %v6331 = vadd.f32 %v470, %v6330
      %v6332 = vpop.f32.mrb[0].mxu0
      %6333 = vmatprep.mubr.bf16.mxu0 0
      %6334 = vmatmul.mubr.bf16.gmra.mrb[0].mxu0 %v5658
      %v6335 = vpop.f32.mrb[0].mxu0
      %v6336 = vadd.f32 %v470, %v6335
      %v6337 = vpop.f32.mrb[0].mxu0
      %v6338 = vpop.f32.mrb[0].mxu0
      %v6339 = vadd.f32 %v470, %v6338
      %v6340 = vpop.f32.mrb[0].mxu0
      %6341 = vmatprep.mubr.bf16.mxu0 0
      %6342 = vmatmul.mubr.bf16.gmra.mrb[0].mxu0 %v5661
      %v6343 = vpop.f32.mrb[0].mxu0
      %v6344 = vadd.f32 %v470, %v6343
      %v6345 = vpop.f32.mrb[0].mxu0
      %v6346 = vpop.f32.mrb[0].mxu0
      %v6347 = vadd.f32 %v470, %v6346
      %v6348 = vpop.f32.mrb[0].mxu0
      %6349 = vmatprep.mubr.bf16.mxu0 0
      %6350 = vmatmul.mubr.bf16.gmra.mrb[0].mxu0 %v5664
      %v6351 = vpop.f32.mrb[0].mxu0
      %v6352 = vadd.f32 %v470, %v6351
      %v6353 = vpop.f32.mrb[0].mxu0
      %v6354 = vpop.f32.mrb[0].mxu0
      %v6355 = vadd.f32 %v470, %v6354
      %v6356 = vpop.f32.mrb[0].mxu0
      %6357 = vmatprep.mubr.bf16.mxu0 0
      %6358 = vmatmul.mubr.bf16.gmra.mrb[0].mxu0 %v5667
      %v6359 = vpop.f32.mrb[0].mxu0
      %v6360 = vadd.f32 %v470, %v6359
      %v6361 = vpop.f32.mrb[0].mxu0
      %v6362 = vpop.f32.mrb[0].mxu0
      %v6363 = vadd.f32 %v470, %v6362
      %v6364 = vpop.f32.mrb[0].mxu0
      %6365 = vmatprep.mubr.bf16.mxu0 0
      %6366 = vmatmul.mubr.bf16.gmra.mrb[0].mxu0 %v5670
      %v6367 = vpop.f32.mrb[0].mxu0
      %v6368 = vadd.f32 %v470, %v6367
      %v6369 = vpop.f32.mrb[0].mxu0
      %v6370 = vpop.f32.mrb[0].mxu0
      %v6371 = vadd.f32 %v470, %v6370
      %v6372 = vpop.f32.mrb[0].mxu0
      %6373 = vmatprep.mubr.bf16.mxu0 0
      %6374 = vmatmul.mubr.bf16.gmra.mrb[0].mxu0 %v5673
      %v6375 = vpop.f32.mrb[0].mxu0
      %v6376 = vadd.f32 %v470, %v6375
      %v6377 = vpop.f32.mrb[0].mxu0
      %v6378 = vpop.f32.mrb[0].mxu0
      %v6379 = vadd.f32 %v470, %v6378
      %v6380 = vpop.f32.mrb[0].mxu0
      %6381 = vmatprep.mubr.bf16.mxu0 0
      %6382 = vmatmul.mubr.bf16.gmra.mrb[0].mxu0 %v5676
      %v6383 = vpop.f32.mrb[0].mxu0
      %v6384 = vadd.f32 %v470, %v6383
      %v6385 = vpop.f32.mrb[0].mxu0
      %v6386 = vpop.f32.mrb[0].mxu0
      %v6387 = vadd.f32 %v470, %v6386
      %v6388 = vpop.f32.mrb[0].mxu0
      %6389 = vmatprep.mubr.bf16.mxu0 0
      %6390 = vmatmul.mubr.bf16.gmra.mrb[0].mxu0 %v5679
      %v6391 = vpop.f32.mrb[0].mxu0
      %v6392 = vadd.f32 %v470, %v6391
      %v6393 = vpop.f32.mrb[0].mxu0
      %v6394 = vpop.f32.mrb[0].mxu0
      %v6395 = vadd.f32 %v470, %v6394
      %v6396 = vpop.f32.mrb[0].mxu0
      %6397 = vmatprep.mubr.bf16.mxu0 0
      %6398 = vmatmul.mubr.bf16.gmra.mrb[0].mxu0 %v5682
      %v6399 = vpop.f32.mrb[0].mxu0
      %v6400 = vadd.f32 %v470, %v6399
      %v6401 = vpop.f32.mrb[0].mxu0
      %v6402 = vpop.f32.mrb[0].mxu0
      %v6403 = vadd.f32 %v470, %v6402
      %v6404 = vpop.f32.mrb[0].mxu0
      %6405 = vmatprep.mubr.bf16.mxu0 0
      %6406 = vmatmul.mubr.bf16.gmra.mrb[0].mxu0 %v5685
      %v6407 = vpop.f32.mrb[0].mxu0
      %v6408 = vadd.f32 %v470, %v6407
      %v6409 = vpop.f32.mrb[0].mxu0
      %v6410 = vpop.f32.mrb[0].mxu0
      %v6411 = vadd.f32 %v470, %v6410
      %v6412 = vpop.f32.mrb[0].mxu0
      %6413 = vmatprep.mubr.bf16.mxu0 0
      %6414 = vmatmul.mubr.bf16.gmra.mrb[0].mxu0 %v5688
      %v6415 = vpop.f32.mrb[0].mxu0
      %v6416 = vadd.f32 %v470, %v6415
      %v6417 = vpop.f32.mrb[0].mxu0
      %v6418 = vpop.f32.mrb[0].mxu0
      %v6419 = vadd.f32 %v470, %v6418
      %v6420 = vpop.f32.mrb[0].mxu0
      %6421 = vmatprep.mubr.bf16.mxu0 0
      %6422 = vmatmul.mubr.bf16.gmra.mrb[0].mxu0 %v5691
      %v6423 = vpop.f32.mrb[0].mxu0
      %v6424 = vadd.f32 %v470, %v6423
      %v6425 = vpop.f32.mrb[0].mxu0
      %v6426 = vpop.f32.mrb[0].mxu0
      %v6427 = vadd.f32 %v470, %v6426
      %v6428 = vpop.f32.mrb[0].mxu0
      %6429 = vmatprep.mubr.bf16.mxu0 0
      %6430 = vmatmul.mubr.bf16.gmra.mrb[0].mxu0 %v5694
      %v6431 = vpop.f32.mrb[0].mxu0
      %v6432 = vadd.f32 %v470, %v6431
      %v6433 = vpop.f32.mrb[0].mxu0
      %v6434 = vpop.f32.mrb[0].mxu0
      %v6435 = vadd.f32 %v470, %v6434
      %v6436 = vpop.f32.mrb[0].mxu0
      %6437 = vmatprep.mubr.bf16.mxu0 0
      %6438 = vmatmul.mubr.bf16.gmra.mrb[0].mxu0 %v5697
      %v6439 = vpop.f32.mrb[0].mxu0
      %v6440 = vadd.f32 %v470, %v6439
      %v6441 = vpop.f32.mrb[0].mxu0
      %v6442 = vpop.f32.mrb[0].mxu0
      %v6443 = vadd.f32 %v470, %v6442
      %v6444 = vpop.f32.mrb[0].mxu0
      %6445 = vmatprep.mubr.bf16.mxu0 0
      %6446 = vmatmul.mubr.bf16.gmra.mrb[0].mxu0 %v5700
      %v6447 = vpop.f32.mrb[0].mxu0
      %v6448 = vadd.f32 %v470, %v6447
      %v6449 = vpop.f32.mrb[0].mxu0
      %v6450 = vpop.f32.mrb[0].mxu0
      %v6451 = vadd.f32 %v470, %v6450
      %v6452 = vpop.f32.mrb[0].mxu0
      %6453 = vmatprep.mubr.bf16.mxu0 0
      %6454 = vmatmul.mubr.bf16.gmra.mrb[0].mxu0 %v5703
      %v6455 = vpop.f32.mrb[0].mxu0
      %v6456 = vadd.f32 %v470, %v6455
      %v6457 = vpop.f32.mrb[0].mxu0
      %v6458 = vpop.f32.mrb[0].mxu0
      %v6459 = vadd.f32 %v470, %v6458
      %v6460 = vpop.f32.mrb[0].mxu0
      %6461 = vmatprep.mubr.bf16.mxu0 0
      %6462 = vmatmul.mubr.bf16.gmra.mrb[0].mxu0 %v5706
      %v6463 = vpop.f32.mrb[0].mxu0
      %v6464 = vadd.f32 %v470, %v6463
      %v6465 = vpop.f32.mrb[0].mxu0
      %v6466 = vpop.f32.mrb[0].mxu0
      %v6467 = vadd.f32 %v470, %v6466
      %v6468 = vpop.f32.mrb[0].mxu0
      %6469 = vmatprep.mubr.bf16.mxu0 0
      %6470 = vmatmul.mubr.bf16.gmra.mrb[0].mxu0 %v5709
      %v6471 = vpop.f32.mrb[0].mxu0
      %v6472 = vadd.f32 %v470, %v6471
      %v6473 = vpop.f32.mrb[0].mxu0
      %v6474 = vpop.f32.mrb[0].mxu0
      %v6475 = vadd.f32 %v470, %v6474
      %v6476 = vpop.f32.mrb[0].mxu0
      %6477 = vmatprep.mubr.bf16.mxu0 0
      %6478 = vmatmul.mubr.bf16.gmra.mrb[0].mxu0 %v5712
      %v6479 = vpop.f32.mrb[0].mxu0
      %v6480 = vadd.f32 %v470, %v6479
      %v6481 = vpop.f32.mrb[0].mxu0
      %v6482 = vpop.f32.mrb[0].mxu0
      %v6483 = vadd.f32 %v470, %v6482
      %v6484 = vpop.f32.mrb[0].mxu0
      %6485 = vmatprep.mubr.bf16.mxu0 0
      %6486 = vmatmul.mubr.bf16.gmra.mrb[0].mxu0 %v5715
      %v6487 = vpop.f32.mrb[0].mxu0
      %v6488 = vadd.f32 %v470, %v6487
      %v6489 = vpop.f32.mrb[0].mxu0
      %v6490 = vpop.f32.mrb[0].mxu0
      %v6491 = vadd.f32 %v470, %v6490
      %v6492 = vpop.f32.mrb[0].mxu0
      %6493 = vmatprep.mubr.bf16.mxu0 0
      %6494 = vmatmul.mubr.bf16.gmra.mrb[0].mxu0 %v5718
      %v6495 = vpop.f32.mrb[0].mxu0
      %v6496 = vadd.f32 %v470, %v6495
      %v6497 = vpop.f32.mrb[0].mxu0
      %v6498 = vpop.f32.mrb[0].mxu0
      %v6499 = vadd.f32 %v470, %v6498
      %v6500 = vpop.f32.mrb[0].mxu0
      %6501 = vmatprep.mubr.bf16.mxu0 0
      %6502 = vmatmul.mubr.bf16.gmra.mrb[0].mxu0 %v5721
      %v6503 = vpop.f32.mrb[0].mxu0
      %v6504 = vadd.f32 %v470, %v6503
      %v6505 = vpop.f32.mrb[0].mxu0
      %v6506 = vpop.f32.mrb[0].mxu0
      %v6507 = vadd.f32 %v470, %v6506
      %v6508 = vpop.f32.mrb[0].mxu0
      %6509 = vmatprep.mubr.bf16.mxu0 0
      %6510 = vmatmul.mubr.bf16.gmra.mrb[0].mxu0 %v5724
      %v6511 = vpop.f32.mrb[0].mxu0
      %v6512 = vadd.f32 %v470, %v6511
      %v6513 = vpop.f32.mrb[0].mxu0
      %v6514 = vpop.f32.mrb[0].mxu0
      %v6515 = vadd.f32 %v470, %v6514
      %v6516 = vpop.f32.mrb[0].mxu0
      %6517 = vmatprep.mubr.bf16.mxu0 0
      %6518 = vmatmul.mubr.bf16.gmra.mrb[0].mxu0 %v5727
      %v6519 = vpop.f32.mrb[0].mxu0
      %v6520 = vadd.f32 %v470, %v6519
      %v6521 = vpop.f32.mrb[0].mxu0
      %v6522 = vpop.f32.mrb[0].mxu0
      %v6523 = vadd.f32 %v470, %v6522
      %v6524 = vpop.f32.mrb[0].mxu0
      %6525 = vmatprep.mubr.bf16.mxu0 0
      %6526 = vmatmul.mubr.bf16.gmra.mrb[0].mxu0 %v5730
      %v6527 = vpop.f32.mrb[0].mxu0
      %v6528 = vadd.f32 %v470, %v6527
      %v6529 = vpop.f32.mrb[0].mxu0
      %v6530 = vpop.f32.mrb[0].mxu0
      %v6531 = vadd.f32 %v470, %v6530
      %v6532 = vpop.f32.mrb[0].mxu0
      %6533 = vmatprep.mubr.bf16.mxu0 0
      %6534 = vmatmul.mubr.bf16.gmra.mrb[0].mxu0 %v5733
      %v6535 = vpop.f32.mrb[0].mxu0
      %v6536 = vadd.f32 %v470, %v6535
      %v6537 = vpop.f32.mrb[0].mxu0
      %v6538 = vpop.f32.mrb[0].mxu0
      %v6539 = vadd.f32 %v470, %v6538
      %v6540 = vpop.f32.mrb[0].mxu0
      %6541 = vmatprep.mubr.bf16.mxu0 0
      %6542 = vmatmul.mubr.bf16.gmra.mrb[0].mxu0 %v5736
      %v6543 = vpop.f32.mrb[0].mxu0
      %v6544 = vadd.f32 %v470, %v6543
      %v6545 = vpop.f32.mrb[0].mxu0
      %v6546 = vpop.f32.mrb[0].mxu0
      %v6547 = vadd.f32 %v470, %v6546
      %v6548 = vpop.f32.mrb[0].mxu0
      %6549 = vmatprep.mubr.bf16.mxu0 0
      %6550 = vmatmul.mubr.bf16.gmra.mrb[0].mxu0 %v5739
      %v6551 = vpop.f32.mrb[0].mxu0
      %v6552 = vadd.f32 %v470, %v6551
      %v6553 = vpop.f32.mrb[0].mxu0
      %v6554 = vpop.f32.mrb[0].mxu0
      %v6555 = vadd.f32 %v470, %v6554
      %v6556 = vpop.f32.mrb[0].mxu0
      %6557 = vmatprep.mubr.bf16.mxu0 0
      %6558 = vmatmul.mubr.bf16.gmra.mrb[0].mxu0 %v5742
      %v6559 = vpop.f32.mrb[0].mxu0
      %v6560 = vadd.f32 %v470, %v6559
      %v6561 = vpop.f32.mrb[0].mxu0
      %v6562 = vpop.f32.mrb[0].mxu0
      %v6563 = vadd.f32 %v470, %v6562
      %v6564 = vpop.f32.mrb[0].mxu0
      %6565 = vmatprep.mubr.bf16.mxu0 0
      %6566 = vmatmul.mubr.bf16.gmra.mrb[0].mxu0 %v5745
      %v6567 = vpop.f32.mrb[0].mxu0
      %v6568 = vadd.f32 %v470, %v6567
      %v6569 = vpop.f32.mrb[0].mxu0
      %v6570 = vpop.f32.mrb[0].mxu0
      %v6571 = vadd.f32 %v470, %v6570
      %v6572 = vpop.f32.mrb[0].mxu0
      %6573 = vmatprep.mubr.bf16.mxu0 0
      %6574 = vmatmul.mubr.bf16.gmra.mrb[0].mxu0 %v5748
      %v6575 = vpop.f32.mrb[0].mxu0
      %v6576 = vadd.f32 %v470, %v6575
      %v6577 = vpop.f32.mrb[0].mxu0
      %v6578 = vpop.f32.mrb[0].mxu0
      %v6579 = vadd.f32 %v470, %v6578
      %v6580 = vpop.f32.mrb[0].mxu0
      %6581 = vmatprep.mubr.bf16.mxu0 0
      %6582 = vmatmul.mubr.bf16.gmra.mrb[0].mxu0 %v5751
      %v6583 = vpop.f32.mrb[0].mxu0
      %v6584 = vadd.f32 %v470, %v6583
      %v6585 = vpop.f32.mrb[0].mxu0
      %v6586 = vpop.f32.mrb[0].mxu0
      %v6587 = vadd.f32 %v470, %v6586
      %v6588 = vpop.f32.mrb[0].mxu0
      %6589 = vmatprep.mubr.bf16.mxu0 0
      %6590 = vmatmul.mubr.bf16.gmra.mrb[0].mxu0 %v5754
      %v6591 = vpop.f32.mrb[0].mxu0
      %v6592 = vadd.f32 %v470, %v6591
      %v6593 = vpop.f32.mrb[0].mxu0
      %v6594 = vpop.f32.mrb[0].mxu0
      %v6595 = vadd.f32 %v470, %v6594
      %v6596 = vpop.f32.mrb[0].mxu0
      %6597 = vmatprep.mubr.bf16.mxu0 0
      %6598 = vmatmul.mubr.bf16.gmra.mrb[0].mxu0 %v5757
      %v6599 = vpop.f32.mrb[0].mxu0
      %v6600 = vadd.f32 %v470, %v6599
      %v6601 = vpop.f32.mrb[0].mxu0
      %v6602 = vpop.f32.mrb[0].mxu0
      %v6603 = vadd.f32 %v470, %v6602
      %v6604 = vpop.f32.mrb[0].mxu0
      %6605 = vmatprep.mubr.bf16.mxu0 0
      %6606 = vmatmul.mubr.bf16.gmra.mrb[0].mxu0 %v5760
      %v6607 = vpop.f32.mrb[0].mxu0
      %v6608 = vadd.f32 %v470, %v6607
      %v6609 = vpop.f32.mrb[0].mxu0
      %v6610 = vpop.f32.mrb[0].mxu0
      %v6611 = vadd.f32 %v470, %v6610
      %v6612 = vpop.f32.mrb[0].mxu0
      %6613 = vmatprep.mubr.bf16.mxu0 0
      %6614 = vmatmul.mubr.bf16.gmra.mrb[0].mxu0 %v5763
      %v6615 = vpop.f32.mrb[0].mxu0
      %v6616 = vadd.f32 %v470, %v6615
      %v6617 = vpop.f32.mrb[0].mxu0
      %v6618 = vpop.f32.mrb[0].mxu0
      %v6619 = vadd.f32 %v470, %v6618
      %v6620 = vpop.f32.mrb[0].mxu0
      %6621 = vmatprep.mubr.bf16.mxu0 0
      %6622 = vmatmul.mubr.bf16.gmra.mrb[0].mxu0 %v5766
      %v6623 = vpop.f32.mrb[0].mxu0
      %v6624 = vadd.f32 %v470, %v6623
      %v6625 = vpop.f32.mrb[0].mxu0
      %v6626 = vpop.f32.mrb[0].mxu0
      %v6627 = vadd.f32 %v470, %v6626
      %v6628 = vpop.f32.mrb[0].mxu0
      %6629 = vmatprep.mubr.bf16.mxu0 0
      %6630 = vmatmul.mubr.bf16.gmra.mrb[0].mxu0 %v5769
      %v6631 = vpop.f32.mrb[0].mxu0
      %v6632 = vadd.f32 %v470, %v6631
      %v6633 = vpop.f32.mrb[0].mxu0
      %v6634 = vpop.f32.mrb[0].mxu0
      %v6635 = vadd.f32 %v470, %v6634
      %v6636 = vpop.f32.mrb[0].mxu0
      %6637 = vmatprep.mubr.bf16.mxu0 0
      %6638 = vmatmul.mubr.bf16.gmra.mrb[0].mxu0 %v5772
      %v6639 = vpop.f32.mrb[0].mxu0
      %v6640 = vadd.f32 %v470, %v6639
      %v6641 = vpop.f32.mrb[0].mxu0
      %v6642 = vpop.f32.mrb[0].mxu0
      %v6643 = vadd.f32 %v470, %v6642
      %v6644 = vpop.f32.mrb[0].mxu0
      %6645 = vmatprep.mubr.bf16.mxu0 0
      %6646 = vmatmul.mubr.bf16.gmra.mrb[0].mxu0 %v5775
      %v6647 = vpop.f32.mrb[0].mxu0
      %v6648 = vadd.f32 %v470, %v6647
      %v6649 = vpop.f32.mrb[0].mxu0
      %v6650 = vpop.f32.mrb[0].mxu0
      %v6651 = vadd.f32 %v470, %v6650
      %v6652 = vpop.f32.mrb[0].mxu0
      %6653 = vmatprep.mubr.bf16.mxu0 0
      %6654 = vmatmul.mubr.bf16.gmra.mrb[0].mxu0 %v5778
      %v6655 = vpop.f32.mrb[0].mxu0
      %v6656 = vadd.f32 %v470, %v6655
      %v6657 = vpop.f32.mrb[0].mxu0
      %v6658 = vpop.f32.mrb[0].mxu0
      %v6659 = vadd.f32 %v470, %v6658
      %v6660 = vpop.f32.mrb[0].mxu0
      %6661 = vmatprep.mubr.bf16.mxu0 0
      %6662 = vmatmul.mubr.bf16.gmra.mrb[0].mxu0 %v5781
      %v6663 = vpop.f32.mrb[0].mxu0
      %v6664 = vadd.f32 %v470, %v6663
      %v6665 = vpop.f32.mrb[0].mxu0
      %v6666 = vpop.f32.mrb[0].mxu0
      %v6667 = vadd.f32 %v470, %v6666
      %v6668 = vpop.f32.mrb[0].mxu0
      %6669 = vmatprep.mubr.bf16.mxu0 0
      %6670 = vmatmul.mubr.bf16.gmra.mrb[0].mxu0 %v5784
      %v6671 = vpop.f32.mrb[0].mxu0
      %v6672 = vadd.f32 %v470, %v6671
      %v6673 = vpop.f32.mrb[0].mxu0
      %v6674 = vpop.f32.mrb[0].mxu0
      %v6675 = vadd.f32 %v470, %v6674
      %v6676 = vpop.f32.mrb[0].mxu0
      %6677 = vmatprep.mubr.bf16.mxu0 0
      %6678 = vmatmul.mubr.bf16.gmra.mrb[0].mxu0 %v5787
      %v6679 = vpop.f32.mrb[0].mxu0
      %v6680 = vadd.f32 %v470, %v6679
      %v6681 = vpop.f32.mrb[0].mxu0
      %v6682 = vpop.f32.mrb[0].mxu0
      %v6683 = vadd.f32 %v470, %v6682
      %v6684 = vpop.f32.mrb[0].mxu0
      %6685 = vmatprep.mubr.bf16.mxu0 0
      %6686 = vmatmul.mubr.bf16.gmra.mrb[0].mxu0 %v5790
      %v6687 = vpop.f32.mrb[0].mxu0
      %v6688 = vadd.f32 %v470, %v6687
      %v6689 = vpop.f32.mrb[0].mxu0
      %v6690 = vpop.f32.mrb[0].mxu0
      %v6691 = vadd.f32 %v470, %v6690
      %v6692 = vpop.f32.mrb[0].mxu0
      %6693 = vmatprep.mubr.bf16.mxu0 0
      %6694 = vmatmul.mubr.bf16.gmra.mrb[0].mxu0 %v5793
      %v6695 = vpop.f32.mrb[0].mxu0
      %v6696 = vadd.f32 %v470, %v6695
      %v6697 = vpop.f32.mrb[0].mxu0
      %v6698 = vpop.f32.mrb[0].mxu0
      %v6699 = vadd.f32 %v470, %v6698
      %v6700 = vpop.f32.mrb[0].mxu0
      %6701 = vmatprep.mubr.bf16.mxu0 0
      %6702 = vmatmul.mubr.bf16.gmra.mrb[0].mxu0 %v5796
      %v6703 = vpop.f32.mrb[0].mxu0
      %v6704 = vadd.f32 %v470, %v6703
      %v6705 = vpop.f32.mrb[0].mxu0
      %v6706 = vpop.f32.mrb[0].mxu0
      %v6707 = vadd.f32 %v470, %v6706
      %v6708 = vpop.f32.mrb[0].mxu0
      %6709 = vmatprep.mubr.bf16.mxu0 0
      %6710 = vmatmul.mubr.bf16.gmra.mrb[0].mxu0 %v5799
      %v6711 = vpop.f32.mrb[0].mxu0
      %v6712 = vadd.f32 %v470, %v6711
      %v6713 = vpop.f32.mrb[0].mxu0
      %v6714 = vpop.f32.mrb[0].mxu0
      %v6715 = vadd.f32 %v470, %v6714
      %v6716 = vpop.f32.mrb[0].mxu0
      %6717 = vmatprep.mubr.bf16.mxu0 0
      %6718 = vmatmul.mubr.bf16.gmra.mrb[0].mxu0 %v5802
      %v6719 = vpop.f32.mrb[0].mxu0
      %v6720 = vadd.f32 %v470, %v6719
      %v6721 = vpop.f32.mrb[0].mxu0
      %v6722 = vpop.f32.mrb[0].mxu0
      %v6723 = vadd.f32 %v470, %v6722
      %v6724 = vpop.f32.mrb[0].mxu0
      %6725 = vmatprep.mubr.bf16.mxu0 0
      %6726 = vmatmul.mubr.bf16.gmra.mrb[0].mxu0 %v5805
      %v6727 = vpop.f32.mrb[0].mxu0
      %v6728 = vadd.f32 %v470, %v6727
      %v6729 = vpop.f32.mrb[0].mxu0
      %v6730 = vpop.f32.mrb[0].mxu0
      %v6731 = vadd.f32 %v470, %v6730
      %v6732 = vpop.f32.mrb[0].mxu0
      %6733 = vmatprep.mubr.bf16.mxu0 0
      %6734 = vmatmul.mubr.bf16.gmra.mrb[0].mxu0 %v5808
      %v6735 = vpop.f32.mrb[0].mxu0
      %v6736 = vadd.f32 %v470, %v6735
      %v6737 = vpop.f32.mrb[0].mxu0
      %v6738 = vpop.f32.mrb[0].mxu0
      %v6739 = vadd.f32 %v470, %v6738
      %v6740 = vpop.f32.mrb[0].mxu0
      %6741 = vmatprep.mubr.bf16.mxu0 0
      %6742 = vmatmul.mubr.bf16.gmra.mrb[0].mxu0 %v5811
      %v6743 = vpop.f32.mrb[0].mxu0
      %v6744 = vadd.f32 %v470, %v6743
      %v6745 = vpop.f32.mrb[0].mxu0
      %v6746 = vpop.f32.mrb[0].mxu0
      %v6747 = vadd.f32 %v470, %v6746
      %v6748 = vpop.f32.mrb[0].mxu0
      %6749 = vmatprep.mubr.bf16.mxu0 0
      %6750 = vmatmul.mubr.bf16.gmra.mrb[0].mxu0 %v5814
      %v6751 = vpop.f32.mrb[0].mxu0
      %v6752 = vadd.f32 %v470, %v6751
      %v6753 = vpop.f32.mrb[0].mxu0
      %v6754 = vpop.f32.mrb[0].mxu0
      %v6755 = vadd.f32 %v470, %v6754
      %v6756 = vpop.f32.mrb[0].mxu0
      %6757 = vmatprep.mubr.bf16.mxu0 0
      %6758 = vmatmul.mubr.bf16.gmra.mrb[0].mxu0 %v5817
      %v6759 = vpop.f32.mrb[0].mxu0
      %v6760 = vadd.f32 %v470, %v6759
      %v6761 = vpop.f32.mrb[0].mxu0
      %v6762 = vpop.f32.mrb[0].mxu0
      %v6763 = vadd.f32 %v470, %v6762
      %v6764 = vpop.f32.mrb[0].mxu0
      %6765 = vmatprep.mubr.bf16.mxu0 0
      %6766 = vmatmul.mubr.bf16.gmra.mrb[0].mxu0 %v5820
      %v6767 = vpop.f32.mrb[0].mxu0
      %v6768 = vadd.f32 %v470, %v6767
      %v6769 = vpop.f32.mrb[0].mxu0
      %v6770 = vpop.f32.mrb[0].mxu0
      %v6771 = vadd.f32 %v470, %v6770
      %v6772 = vpop.f32.mrb[0].mxu0
      %6773 = vmatprep.mubr.bf16.mxu0 0
      %6774 = vmatmul.mubr.bf16.gmra.mrb[0].mxu0 %v5823
      %v6775 = vpop.f32.mrb[0].mxu0
      %v6776 = vadd.f32 %v470, %v6775
      %v6777 = vpop.f32.mrb[0].mxu0
      %v6778 = vpop.f32.mrb[0].mxu0
      %v6779 = vadd.f32 %v470, %v6778
      %v6780 = vpop.f32.mrb[0].mxu0
      %6781 = vmatprep.mubr.bf16.mxu0 0
      %6782 = vmatmul.mubr.bf16.gmra.mrb[0].mxu0 %v5826
      %v6783 = vpop.f32.mrb[0].mxu0
      %v6784 = vadd.f32 %v470, %v6783
      %v6785 = vpop.f32.mrb[0].mxu0
      %v6786 = vpop.f32.mrb[0].mxu0
      %v6787 = vadd.f32 %v470, %v6786
      %v6788 = vpop.f32.mrb[0].mxu0
      %6789 = vmatprep.mubr.bf16.mxu0 0
      %6790 = vmatmul.mubr.bf16.gmra.mrb[0].mxu0 %v5829
      %v6791 = vpop.f32.mrb[0].mxu0
      %v6792 = vadd.f32 %v470, %v6791
      %v6793 = vpop.f32.mrb[0].mxu0
      %v6794 = vpop.f32.mrb[0].mxu0
      %v6795 = vadd.f32 %v470, %v6794
      %v6796 = vpop.f32.mrb[0].mxu0
      %6797 = vmatprep.mubr.bf16.mxu0 0
      %6798 = vmatmul.mubr.bf16.gmra.mrb[0].mxu0 %v5832
      %v6799 = vpop.f32.mrb[0].mxu0
      %v6800 = vadd.f32 %v470, %v6799
      %v6801 = vpop.f32.mrb[0].mxu0
      %v6802 = vpop.f32.mrb[0].mxu0
      %v6803 = vadd.f32 %v470, %v6802
      %v6804 = vpop.f32.mrb[0].mxu0
      %6805 = vmatprep.mubr.bf16.mxu0 0
      %6806 = vmatmul.mubr.bf16.gmra.mrb[0].mxu0 %v5835
      %v6807 = vpop.f32.mrb[0].mxu0
      %v6808 = vadd.f32 %v470, %v6807
      %v6809 = vpop.f32.mrb[0].mxu0
      %v6810 = vpop.f32.mrb[0].mxu0
      %v6811 = vadd.f32 %v470, %v6810
      %v6812 = vpop.f32.mrb[0].mxu0
      %6813 = vmatprep.mubr.bf16.mxu0 0
      %6814 = vmatmul.mubr.bf16.gmra.mrb[0].mxu0 %v5838
      %v6815 = vpop.f32.mrb[0].mxu0
      %v6816 = vadd.f32 %v470, %v6815
      %v6817 = vpop.f32.mrb[0].mxu0
      %v6818 = vpop.f32.mrb[0].mxu0
      %v6819 = vadd.f32 %v470, %v6818
      %v6820 = vpop.f32.mrb[0].mxu0
      %6821 = vmatprep.mubr.bf16.mxu0 0
      %6822 = vmatmul.mubr.bf16.gmra.mrb[0].mxu0 %v5841
      %v6823 = vpop.f32.mrb[0].mxu0
      %v6824 = vadd.f32 %v470, %v6823
      %v6825 = vpop.f32.mrb[0].mxu0
      %v6826 = vpop.f32.mrb[0].mxu0
      %v6827 = vadd.f32 %v470, %v6826
      %v6828 = vpop.f32.mrb[0].mxu0
      %6829 = vmatprep.mubr.bf16.mxu0 0
      %6830 = vmatmul.mubr.bf16.gmra.mrb[0].mxu0 %v5844
      %v6831 = vpop.f32.mrb[0].mxu0
      %v6832 = vadd.f32 %v470, %v6831
      %v6833 = vpop.f32.mrb[0].mxu0
      %v6834 = vpop.f32.mrb[0].mxu0
      %v6835 = vadd.f32 %v470, %v6834
      %v6836 = vpop.f32.mrb[0].mxu0
      %6837 = vmatprep.mubr.bf16.mxu0 0
      %6838 = vmatmul.mubr.bf16.gmra.mrb[0].mxu0 %v5847
      %v6839 = vpop.f32.mrb[0].mxu0
      %v6840 = vadd.f32 %v470, %v6839
      %v6841 = vpop.f32.mrb[0].mxu0
      %v6842 = vpop.f32.mrb[0].mxu0
      %v6843 = vadd.f32 %v470, %v6842
      %v6844 = vpop.f32.mrb[0].mxu0
      %6845 = vmatprep.mubr.bf16.mxu0 0
      %6846 = vmatmul.mubr.bf16.gmra.mrb[0].mxu0 %v5850
      %v6847 = vpop.f32.mrb[0].mxu0
      %v6848 = vadd.f32 %v470, %v6847
      %v6849 = vpop.f32.mrb[0].mxu0
      %v6850 = vpop.f32.mrb[0].mxu0
      %v6851 = vadd.f32 %v470, %v6850
      %v6852 = vpop.f32.mrb[0].mxu0
      %6853 = vmatprep.mubr.bf16.mxu0 0
      %6854 = vmatmul.mubr.bf16.gmra.mrb[0].mxu0 %v5853
      %v6855 = vpop.f32.mrb[0].mxu0
      %v6856 = vadd.f32 %v470, %v6855
      %v6857 = vpop.f32.mrb[0].mxu0
      %v6858 = vpop.f32.mrb[0].mxu0
      %v6859 = vadd.f32 %v470, %v6858
      %v6860 = vpop.f32.mrb[0].mxu0
      %6861 = vmatprep.mubr.bf16.mxu0 0
      %6862 = vmatmul.mubr.bf16.gmra.mrb[0].mxu0 %v5856
      %v6863 = vpop.f32.mrb[0].mxu0
      %v6864 = vadd.f32 %v470, %v6863
      %v6865 = vpop.f32.mrb[0].mxu0
      %v6866 = vpop.f32.mrb[0].mxu0
      %v6867 = vadd.f32 %v470, %v6866
      %v6868 = vpop.f32.mrb[0].mxu0
      %6869 = vmatprep.mubr.bf16.mxu0 0
      %6870 = vmatmul.mubr.bf16.gmra.mrb[0].mxu0 %v5859
      %v6871 = vpop.f32.mrb[0].mxu0
      %v6872 = vadd.f32 %v470, %v6871
      %v6873 = vpop.f32.mrb[0].mxu0
      %v6874 = vpop.f32.mrb[0].mxu0
      %v6875 = vadd.f32 %v470, %v6874
      %v6876 = vpop.f32.mrb[0].mxu0
      %6877 = vmatprep.mubr.bf16.mxu0 0
      %6878 = vmatmul.mubr.bf16.gmra.mrb[0].mxu0 %v5862
      %v6879 = vpop.f32.mrb[0].mxu0
      %v6880 = vadd.f32 %v470, %v6879
      %v6881 = vpop.f32.mrb[0].mxu0
      %v6882 = vpop.f32.mrb[0].mxu0
      %v6883 = vadd.f32 %v470, %v6882
      %v6884 = vpop.f32.mrb[0].mxu0
      %6885 = vmatprep.mubr.bf16.mxu0 0
      %6886 = vmatmul.mubr.bf16.gmra.mrb[0].mxu0 %v5865
      %v6887 = vpop.f32.mrb[0].mxu0
      %v6888 = vadd.f32 %v470, %v6887
      %v6889 = vpop.f32.mrb[0].mxu0
      %v6890 = vpop.f32.mrb[0].mxu0
      %v6891 = vadd.f32 %v470, %v6890
      %v6892 = vpop.f32.mrb[0].mxu0
      %6893 = vmatprep.mubr.bf16.mxu0 0
      %6894 = vmatmul.mubr.bf16.gmra.mrb[0].mxu0 %v5868
      %v6895 = vpop.f32.mrb[0].mxu0
      %v6896 = vadd.f32 %v470, %v6895
      %v6897 = vpop.f32.mrb[0].mxu0
      %v6898 = vpop.f32.mrb[0].mxu0
      %v6899 = vadd.f32 %v470, %v6898
      %v6900 = vpop.f32.mrb[0].mxu0
      %6901 = vmatprep.mubr.bf16.mxu0 0
      %6902 = vmatmul.mubr.bf16.gmra.mrb[0].mxu0 %v5871
      %v6903 = vpop.f32.mrb[0].mxu0
      %v6904 = vadd.f32 %v470, %v6903
      %v6905 = vpop.f32.mrb[0].mxu0
      %v6906 = vpop.f32.mrb[0].mxu0
      %v6907 = vadd.f32 %v470, %v6906
      %v6908 = vpop.f32.mrb[0].mxu0
      %6909 = vmatprep.mubr.bf16.mxu0 0
      %6910 = vmatmul.mubr.bf16.gmra.mrb[0].mxu0 %v5874
      %v6911 = vpop.f32.mrb[0].mxu0
      %v6912 = vadd.f32 %v470, %v6911
      %v6913 = vpop.f32.mrb[0].mxu0
      %v6914 = vpop.f32.mrb[0].mxu0
      %v6915 = vadd.f32 %v470, %v6914
      %v6916 = vpop.f32.mrb[0].mxu0
      %6917 = vmatprep.mubr.bf16.mxu0 0
      %6918 = vmatmul.mubr.bf16.gmra.mrb[0].mxu0 %v5877
      %v6919 = vpop.f32.mrb[0].mxu0
      %v6920 = vadd.f32 %v470, %v6919
      %v6921 = vpop.f32.mrb[0].mxu0
      %v6922 = vpop.f32.mrb[0].mxu0
      %v6923 = vadd.f32 %v470, %v6922
      %v6924 = vpop.f32.mrb[0].mxu0
      %6925 = vmatprep.mubr.bf16.mxu0 0
      %6926 = vmatmul.mubr.bf16.gmra.mrb[0].mxu0 %v5880
      %v6927 = vpop.f32.mrb[0].mxu0
      %v6928 = vadd.f32 %v470, %v6927
      %v6929 = vpop.f32.mrb[0].mxu0
      %v6930 = vpop.f32.mrb[0].mxu0
      %v6931 = vadd.f32 %v470, %v6930
      %v6932 = vpop.f32.mrb[0].mxu0
      %6933 = vmatprep.mubr.bf16.mxu0 0
      %6934 = vmatmul.mubr.bf16.gmra.mrb[0].mxu0 %v5883
      %v6935 = vpop.f32.mrb[0].mxu0
      %v6936 = vadd.f32 %v470, %v6935
      %v6937 = vpop.f32.mrb[0].mxu0
      %v6938 = vpop.f32.mrb[0].mxu0
      %v6939 = vadd.f32 %v470, %v6938
      %v6940 = vpop.f32.mrb[0].mxu0
      %6941 = vdwg.mxu0
      %v6942 = vmul.f32 %v5920, 0.2
      %v6943 = vmul.f32 %v5923, 0.2
      %v6944 = vmul.f32 %v5928, 0.2
      %v6945 = vmul.f32 %v5931, 0.2
      %v6946 = vmul.f32 %v5936, 0.2
      %v6947 = vmul.f32 %v5939, 0.2
      %v6948 = vmul.f32 %v5944, 0.2
      %v6949 = vmul.f32 %v5947, 0.2
      %v6950 = vmul.f32 %v5952, 0.2
      %v6951 = vmul.f32 %v5955, 0.2
      %v6952 = vmul.f32 %v5960, 0.2
      %v6953 = vmul.f32 %v5963, 0.2
      %v6954 = vmul.f32 %v5968, 0.2
      %v6955 = vmul.f32 %v5971, 0.2
      %v6956 = vmul.f32 %v5976, 0.2
      %v6957 = vmul.f32 %v5979, 0.2
      %v6958 = vmul.f32 %v5984, 0.2
      %v6959 = vmul.f32 %v5987, 0.2
      %v6960 = vmul.f32 %v5992, 0.2
      %v6961 = vmul.f32 %v5995, 0.2
      %v6962 = vmul.f32 %v6000, 0.2
      %v6963 = vmul.f32 %v6003, 0.2
      %v6964 = vmul.f32 %v6008, 0.2
      %v6965 = vmul.f32 %v6011, 0.2
      %v6966 = vmul.f32 %v6016, 0.2
      %v6967 = vmul.f32 %v6019, 0.2
      %v6968 = vmul.f32 %v6024, 0.2
      %v6969 = vmul.f32 %v6027, 0.2
      %v6970 = vmul.f32 %v6032, 0.2
      %v6971 = vmul.f32 %v6035, 0.2
      %v6972 = vmul.f32 %v6040, 0.2
      %v6973 = vmul.f32 %v6043, 0.2
      %v6974 = vmul.f32 %v6048, 0.2
      %v6975 = vmul.f32 %v6051, 0.2
      %v6976 = vmul.f32 %v6056, 0.2
      %v6977 = vmul.f32 %v6059, 0.2
      %v6978 = vmul.f32 %v6064, 0.2
      %v6979 = vmul.f32 %v6067, 0.2
      %v6980 = vmul.f32 %v6072, 0.2
      %v6981 = vmul.f32 %v6075, 0.2
      %v6982 = vmul.f32 %v6080, 0.2
      %v6983 = vmul.f32 %v6083, 0.2
      %v6984 = vmul.f32 %v6088, 0.2
      %v6985 = vmul.f32 %v6091, 0.2
      %v6986 = vmul.f32 %v6096, 0.2
      %v6987 = vmul.f32 %v6099, 0.2
      %v6988 = vmul.f32 %v6104, 0.2
      %v6989 = vmul.f32 %v6107, 0.2
      %v6990 = vmul.f32 %v6112, 0.2
      %v6991 = vmul.f32 %v6115, 0.2
      %v6992 = vmul.f32 %v6120, 0.2
      %v6993 = vmul.f32 %v6123, 0.2
      %v6994 = vmul.f32 %v6128, 0.2
      %v6995 = vmul.f32 %v6131, 0.2
      %v6996 = vmul.f32 %v6136, 0.2
      %v6997 = vmul.f32 %v6139, 0.2
      %v6998 = vmul.f32 %v6144, 0.2
      %v6999 = vmul.f32 %v6147, 0.2
      %v7000 = vmul.f32 %v6152, 0.2
      %v7001 = vmul.f32 %v6155, 0.2
      %v7002 = vmul.f32 %v6160, 0.2
      %v7003 = vmul.f32 %v6163, 0.2
      %v7004 = vmul.f32 %v6168, 0.2
      %v7005 = vmul.f32 %v6171, 0.2
      %v7006 = vmul.f32 %v6176, 0.2
      %v7007 = vmul.f32 %v6179, 0.2
      %v7008 = vmul.f32 %v6184, 0.2
      %v7009 = vmul.f32 %v6187, 0.2
      %v7010 = vmul.f32 %v6192, 0.2
      %v7011 = vmul.f32 %v6195, 0.2
      %v7012 = vmul.f32 %v6200, 0.2
      %v7013 = vmul.f32 %v6203, 0.2
      %v7014 = vmul.f32 %v6208, 0.2
      %v7015 = vmul.f32 %v6211, 0.2
      %v7016 = vmul.f32 %v6216, 0.2
      %v7017 = vmul.f32 %v6219, 0.2
      %v7018 = vmul.f32 %v6224, 0.2
      %v7019 = vmul.f32 %v6227, 0.2
      %v7020 = vmul.f32 %v6232, 0.2
      %v7021 = vmul.f32 %v6235, 0.2
      %v7022 = vmul.f32 %v6240, 0.2
      %v7023 = vmul.f32 %v6243, 0.2
      %v7024 = vmul.f32 %v6248, 0.2
      %v7025 = vmul.f32 %v6251, 0.2
      %v7026 = vmul.f32 %v6256, 0.2
      %v7027 = vmul.f32 %v6259, 0.2
      %v7028 = vmul.f32 %v6264, 0.2
      %v7029 = vmul.f32 %v6267, 0.2
      %v7030 = vmul.f32 %v6272, 0.2
      %v7031 = vmul.f32 %v6275, 0.2
      %v7032 = vmul.f32 %v6280, 0.2
      %v7033 = vmul.f32 %v6283, 0.2
      %v7034 = vmul.f32 %v6288, 0.2
      %v7035 = vmul.f32 %v6291, 0.2
      %v7036 = vmul.f32 %v6296, 0.2
      %v7037 = vmul.f32 %v6299, 0.2
      %v7038 = vmul.f32 %v6304, 0.2
      %v7039 = vmul.f32 %v6307, 0.2
      %v7040 = vmul.f32 %v6312, 0.2
      %v7041 = vmul.f32 %v6315, 0.2
      %v7042 = vmul.f32 %v6320, 0.2
      %v7043 = vmul.f32 %v6323, 0.2
      %v7044 = vmul.f32 %v6328, 0.2
      %v7045 = vmul.f32 %v6331, 0.2
      %v7046 = vmul.f32 %v6336, 0.2
      %v7047 = vmul.f32 %v6339, 0.2
      %v7048 = vmul.f32 %v6344, 0.2
      %v7049 = vmul.f32 %v6347, 0.2
      %v7050 = vmul.f32 %v6352, 0.2
      %v7051 = vmul.f32 %v6355, 0.2
      %v7052 = vmul.f32 %v6360, 0.2
      %v7053 = vmul.f32 %v6363, 0.2
      %v7054 = vmul.f32 %v6368, 0.2
      %v7055 = vmul.f32 %v6371, 0.2
      %v7056 = vmul.f32 %v6376, 0.2
      %v7057 = vmul.f32 %v6379, 0.2
      %v7058 = vmul.f32 %v6384, 0.2
      %v7059 = vmul.f32 %v6387, 0.2
      %v7060 = vmul.f32 %v6392, 0.2
      %v7061 = vmul.f32 %v6395, 0.2
      %v7062 = vmul.f32 %v6400, 0.2
      %v7063 = vmul.f32 %v6403, 0.2
      %v7064 = vmul.f32 %v6408, 0.2
      %v7065 = vmul.f32 %v6411, 0.2
      %v7066 = vmul.f32 %v6416, 0.2
      %v7067 = vmul.f32 %v6419, 0.2
      %v7068 = vmul.f32 %v6424, 0.2
      %v7069 = vmul.f32 %v6427, 0.2
      %v7070 = vmul.f32 %v6432, 0.2
      %v7071 = vmul.f32 %v6435, 0.2
      %v7072 = vmul.f32 %v6440, 0.2
      %v7073 = vmul.f32 %v6443, 0.2
      %v7074 = vmul.f32 %v6448, 0.2
      %v7075 = vmul.f32 %v6451, 0.2
      %v7076 = vmul.f32 %v6456, 0.2
      %v7077 = vmul.f32 %v6459, 0.2
      %v7078 = vmul.f32 %v6464, 0.2
      %v7079 = vmul.f32 %v6467, 0.2
      %v7080 = vmul.f32 %v6472, 0.2
      %v7081 = vmul.f32 %v6475, 0.2
      %v7082 = vmul.f32 %v6480, 0.2
      %v7083 = vmul.f32 %v6483, 0.2
      %v7084 = vmul.f32 %v6488, 0.2
      %v7085 = vmul.f32 %v6491, 0.2
      %v7086 = vmul.f32 %v6496, 0.2
      %v7087 = vmul.f32 %v6499, 0.2
      %v7088 = vmul.f32 %v6504, 0.2
      %v7089 = vmul.f32 %v6507, 0.2
      %v7090 = vmul.f32 %v6512, 0.2
      %v7091 = vmul.f32 %v6515, 0.2
      %v7092 = vmul.f32 %v6520, 0.2
      %v7093 = vmul.f32 %v6523, 0.2
      %v7094 = vmul.f32 %v6528, 0.2
      %v7095 = vmul.f32 %v6531, 0.2
      %v7096 = vmul.f32 %v6536, 0.2
      %v7097 = vmul.f32 %v6539, 0.2
      %v7098 = vmul.f32 %v6544, 0.2
      %v7099 = vmul.f32 %v6547, 0.2
      %v7100 = vmul.f32 %v6552, 0.2
      %v7101 = vmul.f32 %v6555, 0.2
      %v7102 = vmul.f32 %v6560, 0.2
      %v7103 = vmul.f32 %v6563, 0.2
      %v7104 = vmul.f32 %v6568, 0.2
      %v7105 = vmul.f32 %v6571, 0.2
      %v7106 = vmul.f32 %v6576, 0.2
      %v7107 = vmul.f32 %v6579, 0.2
      %v7108 = vmul.f32 %v6584, 0.2
      %v7109 = vmul.f32 %v6587, 0.2
      %v7110 = vmul.f32 %v6592, 0.2
      %v7111 = vmul.f32 %v6595, 0.2
      %v7112 = vmul.f32 %v6600, 0.2
      %v7113 = vmul.f32 %v6603, 0.2
      %v7114 = vmul.f32 %v6608, 0.2
      %v7115 = vmul.f32 %v6611, 0.2
      %v7116 = vmul.f32 %v6616, 0.2
      %v7117 = vmul.f32 %v6619, 0.2
      %v7118 = vmul.f32 %v6624, 0.2
      %v7119 = vmul.f32 %v6627, 0.2
      %v7120 = vmul.f32 %v6632, 0.2
      %v7121 = vmul.f32 %v6635, 0.2
      %v7122 = vmul.f32 %v6640, 0.2
      %v7123 = vmul.f32 %v6643, 0.2
      %v7124 = vmul.f32 %v6648, 0.2
      %v7125 = vmul.f32 %v6651, 0.2
      %v7126 = vmul.f32 %v6656, 0.2
      %v7127 = vmul.f32 %v6659, 0.2
      %v7128 = vmul.f32 %v6664, 0.2
      %v7129 = vmul.f32 %v6667, 0.2
      %v7130 = vmul.f32 %v6672, 0.2
      %v7131 = vmul.f32 %v6675, 0.2
      %v7132 = vmul.f32 %v6680, 0.2
      %v7133 = vmul.f32 %v6683, 0.2
      %v7134 = vmul.f32 %v6688, 0.2
      %v7135 = vmul.f32 %v6691, 0.2
      %v7136 = vmul.f32 %v6696, 0.2
      %v7137 = vmul.f32 %v6699, 0.2
      %v7138 = vmul.f32 %v6704, 0.2
      %v7139 = vmul.f32 %v6707, 0.2
      %v7140 = vmul.f32 %v6712, 0.2
      %v7141 = vmul.f32 %v6715, 0.2
      %v7142 = vmul.f32 %v6720, 0.2
      %v7143 = vmul.f32 %v6723, 0.2
      %v7144 = vmul.f32 %v6728, 0.2
      %v7145 = vmul.f32 %v6731, 0.2
      %v7146 = vmul.f32 %v6736, 0.2
      %v7147 = vmul.f32 %v6739, 0.2
      %v7148 = vmul.f32 %v6744, 0.2
      %v7149 = vmul.f32 %v6747, 0.2
      %v7150 = vmul.f32 %v6752, 0.2
      %v7151 = vmul.f32 %v6755, 0.2
      %v7152 = vmul.f32 %v6760, 0.2
      %v7153 = vmul.f32 %v6763, 0.2
      %v7154 = vmul.f32 %v6768, 0.2
      %v7155 = vmul.f32 %v6771, 0.2
      %v7156 = vmul.f32 %v6776, 0.2
      %v7157 = vmul.f32 %v6779, 0.2
      %v7158 = vmul.f32 %v6784, 0.2
      %v7159 = vmul.f32 %v6787, 0.2
      %v7160 = vmul.f32 %v6792, 0.2
      %v7161 = vmul.f32 %v6795, 0.2
      %v7162 = vmul.f32 %v6800, 0.2
      %v7163 = vmul.f32 %v6803, 0.2
      %v7164 = vmul.f32 %v6808, 0.2
      %v7165 = vmul.f32 %v6811, 0.2
      %v7166 = vmul.f32 %v6816, 0.2
      %v7167 = vmul.f32 %v6819, 0.2
      %v7168 = vmul.f32 %v6824, 0.2
      %v7169 = vmul.f32 %v6827, 0.2
      %v7170 = vmul.f32 %v6832, 0.2
      %v7171 = vmul.f32 %v6835, 0.2
      %v7172 = vmul.f32 %v6840, 0.2
      %v7173 = vmul.f32 %v6843, 0.2
      %v7174 = vmul.f32 %v6848, 0.2
      %v7175 = vmul.f32 %v6851, 0.2
      %v7176 = vmul.f32 %v6856, 0.2
      %v7177 = vmul.f32 %v6859, 0.2
      %v7178 = vmul.f32 %v6864, 0.2
      %v7179 = vmul.f32 %v6867, 0.2
      %v7180 = vmul.f32 %v6872, 0.2
      %v7181 = vmul.f32 %v6875, 0.2
      %v7182 = vmul.f32 %v6880, 0.2
      %v7183 = vmul.f32 %v6883, 0.2
      %v7184 = vmul.f32 %v6888, 0.2
      %v7185 = vmul.f32 %v6891, 0.2
      %v7186 = vmul.f32 %v6896, 0.2
      %v7187 = vmul.f32 %v6899, 0.2
      %v7188 = vmul.f32 %v6904, 0.2
      %v7189 = vmul.f32 %v6907, 0.2
      %v7190 = vmul.f32 %v6912, 0.2
      %v7191 = vmul.f32 %v6915, 0.2
      %v7192 = vmul.f32 %v6920, 0.2
      %v7193 = vmul.f32 %v6923, 0.2
      %v7194 = vmul.f32 %v6928, 0.2
      %v7195 = vmul.f32 %v6931, 0.2
      %v7196 = vmul.f32 %v6936, 0.2
      %v7197 = vmul.f32 %v6939, 0.2
      %v7198 = vmax.f32 %v5920, %v6942
      %v7199 = vmax.f32 %v5923, %v6943
      %v7200 = vmax.f32 %v5928, %v6944
      %v7201 = vmax.f32 %v5931, %v6945
      %v7202 = vmax.f32 %v5936, %v6946
      %v7203 = vmax.f32 %v5939, %v6947
      %v7204 = vmax.f32 %v5944, %v6948
      %v7205 = vmax.f32 %v5947, %v6949
      %v7206 = vmax.f32 %v5952, %v6950
      %v7207 = vmax.f32 %v5955, %v6951
      %v7208 = vmax.f32 %v5960, %v6952
      %v7209 = vmax.f32 %v5963, %v6953
      %v7210 = vmax.f32 %v5968, %v6954
      %v7211 = vmax.f32 %v5971, %v6955
      %v7212 = vmax.f32 %v5976, %v6956
      %v7213 = vmax.f32 %v5979, %v6957
      %v7214 = vmax.f32 %v5984, %v6958
      %v7215 = vmax.f32 %v5987, %v6959
      %v7216 = vmax.f32 %v5992, %v6960
      %v7217 = vmax.f32 %v5995, %v6961
      %v7218 = vmax.f32 %v6000, %v6962
      %v7219 = vmax.f32 %v6003, %v6963
      %v7220 = vmax.f32 %v6008, %v6964
      %v7221 = vmax.f32 %v6011, %v6965
      %v7222 = vmax.f32 %v6016, %v6966
      %v7223 = vmax.f32 %v6019, %v6967
      %v7224 = vmax.f32 %v6024, %v6968
      %v7225 = vmax.f32 %v6027, %v6969
      %v7226 = vmax.f32 %v6032, %v6970
      %v7227 = vmax.f32 %v6035, %v6971
      %v7228 = vmax.f32 %v6040, %v6972
      %v7229 = vmax.f32 %v6043, %v6973
      %v7230 = vmax.f32 %v6048, %v6974
      %v7231 = vmax.f32 %v6051, %v6975
      %v7232 = vmax.f32 %v6056, %v6976
      %v7233 = vmax.f32 %v6059, %v6977
      %v7234 = vmax.f32 %v6064, %v6978
      %v7235 = vmax.f32 %v6067, %v6979
      %v7236 = vmax.f32 %v6072, %v6980
      %v7237 = vmax.f32 %v6075, %v6981
      %v7238 = vmax.f32 %v6080, %v6982
      %v7239 = vmax.f32 %v6083, %v6983
      %v7240 = vmax.f32 %v6088, %v6984
      %v7241 = vmax.f32 %v6091, %v6985
      %v7242 = vmax.f32 %v6096, %v6986
      %v7243 = vmax.f32 %v6099, %v6987
      %v7244 = vmax.f32 %v6104, %v6988
      %v7245 = vmax.f32 %v6107, %v6989
      %v7246 = vmax.f32 %v6112, %v6990
      %v7247 = vmax.f32 %v6115, %v6991
      %v7248 = vmax.f32 %v6120, %v6992
      %v7249 = vmax.f32 %v6123, %v6993
      %v7250 = vmax.f32 %v6128, %v6994
      %v7251 = vmax.f32 %v6131, %v6995
      %v7252 = vmax.f32 %v6136, %v6996
      %v7253 = vmax.f32 %v6139, %v6997
      %v7254 = vmax.f32 %v6144, %v6998
      %v7255 = vmax.f32 %v6147, %v6999
      %v7256 = vmax.f32 %v6152, %v7000
      %v7257 = vmax.f32 %v6155, %v7001
      %v7258 = vmax.f32 %v6160, %v7002
      %v7259 = vmax.f32 %v6163, %v7003
      %v7260 = vmax.f32 %v6168, %v7004
      %v7261 = vmax.f32 %v6171, %v7005
      %v7262 = vmax.f32 %v6176, %v7006
      %v7263 = vmax.f32 %v6179, %v7007
      %v7264 = vmax.f32 %v6184, %v7008
      %v7265 = vmax.f32 %v6187, %v7009
      %v7266 = vmax.f32 %v6192, %v7010
      %v7267 = vmax.f32 %v6195, %v7011
      %v7268 = vmax.f32 %v6200, %v7012
      %v7269 = vmax.f32 %v6203, %v7013
      %v7270 = vmax.f32 %v6208, %v7014
      %v7271 = vmax.f32 %v6211, %v7015
      %v7272 = vmax.f32 %v6216, %v7016
      %v7273 = vmax.f32 %v6219, %v7017
      %v7274 = vmax.f32 %v6224, %v7018
      %v7275 = vmax.f32 %v6227, %v7019
      %v7276 = vmax.f32 %v6232, %v7020
      %v7277 = vmax.f32 %v6235, %v7021
      %v7278 = vmax.f32 %v6240, %v7022
      %v7279 = vmax.f32 %v6243, %v7023
      %v7280 = vmax.f32 %v6248, %v7024
      %v7281 = vmax.f32 %v6251, %v7025
      %v7282 = vmax.f32 %v6256, %v7026
      %v7283 = vmax.f32 %v6259, %v7027
      %v7284 = vmax.f32 %v6264, %v7028
      %v7285 = vmax.f32 %v6267, %v7029
      %v7286 = vmax.f32 %v6272, %v7030
      %v7287 = vmax.f32 %v6275, %v7031
      %v7288 = vmax.f32 %v6280, %v7032
      %v7289 = vmax.f32 %v6283, %v7033
      %v7290 = vmax.f32 %v6288, %v7034
      %v7291 = vmax.f32 %v6291, %v7035
      %v7292 = vmax.f32 %v6296, %v7036
      %v7293 = vmax.f32 %v6299, %v7037
      %v7294 = vmax.f32 %v6304, %v7038
      %v7295 = vmax.f32 %v6307, %v7039
      %v7296 = vmax.f32 %v6312, %v7040
      %v7297 = vmax.f32 %v6315, %v7041
      %v7298 = vmax.f32 %v6320, %v7042
      %v7299 = vmax.f32 %v6323, %v7043
      %v7300 = vmax.f32 %v6328, %v7044
      %v7301 = vmax.f32 %v6331, %v7045
      %v7302 = vmax.f32 %v6336, %v7046
      %v7303 = vmax.f32 %v6339, %v7047
      %v7304 = vmax.f32 %v6344, %v7048
      %v7305 = vmax.f32 %v6347, %v7049
      %v7306 = vmax.f32 %v6352, %v7050
      %v7307 = vmax.f32 %v6355, %v7051
      %v7308 = vmax.f32 %v6360, %v7052
      %v7309 = vmax.f32 %v6363, %v7053
      %v7310 = vmax.f32 %v6368, %v7054
      %v7311 = vmax.f32 %v6371, %v7055
      %v7312 = vmax.f32 %v6376, %v7056
      %v7313 = vmax.f32 %v6379, %v7057
      %v7314 = vmax.f32 %v6384, %v7058
      %v7315 = vmax.f32 %v6387, %v7059
      %v7316 = vmax.f32 %v6392, %v7060
      %v7317 = vmax.f32 %v6395, %v7061
      %v7318 = vmax.f32 %v6400, %v7062
      %v7319 = vmax.f32 %v6403, %v7063
      %v7320 = vmax.f32 %v6408, %v7064
      %v7321 = vmax.f32 %v6411, %v7065
      %v7322 = vmax.f32 %v6416, %v7066
      %v7323 = vmax.f32 %v6419, %v7067
      %v7324 = vmax.f32 %v6424, %v7068
      %v7325 = vmax.f32 %v6427, %v7069
      %v7326 = vmax.f32 %v6432, %v7070
      %v7327 = vmax.f32 %v6435, %v7071
      %v7328 = vmax.f32 %v6440, %v7072
      %v7329 = vmax.f32 %v6443, %v7073
      %v7330 = vmax.f32 %v6448, %v7074
      %v7331 = vmax.f32 %v6451, %v7075
      %v7332 = vmax.f32 %v6456, %v7076
      %v7333 = vmax.f32 %v6459, %v7077
      %v7334 = vmax.f32 %v6464, %v7078
      %v7335 = vmax.f32 %v6467, %v7079
      %v7336 = vmax.f32 %v6472, %v7080
      %v7337 = vmax.f32 %v6475, %v7081
      %v7338 = vmax.f32 %v6480, %v7082
      %v7339 = vmax.f32 %v6483, %v7083
      %v7340 = vmax.f32 %v6488, %v7084
      %v7341 = vmax.f32 %v6491, %v7085
      %v7342 = vmax.f32 %v6496, %v7086
      %v7343 = vmax.f32 %v6499, %v7087
      %v7344 = vmax.f32 %v6504, %v7088
      %v7345 = vmax.f32 %v6507, %v7089
      %v7346 = vmax.f32 %v6512, %v7090
      %v7347 = vmax.f32 %v6515, %v7091
      %v7348 = vmax.f32 %v6520, %v7092
      %v7349 = vmax.f32 %v6523, %v7093
      %v7350 = vmax.f32 %v6528, %v7094
      %v7351 = vmax.f32 %v6531, %v7095
      %v7352 = vmax.f32 %v6536, %v7096
      %v7353 = vmax.f32 %v6539, %v7097
      %v7354 = vmax.f32 %v6544, %v7098
      %v7355 = vmax.f32 %v6547, %v7099
      %v7356 = vmax.f32 %v6552, %v7100
      %v7357 = vmax.f32 %v6555, %v7101
      %v7358 = vmax.f32 %v6560, %v7102
      %v7359 = vmax.f32 %v6563, %v7103
      %v7360 = vmax.f32 %v6568, %v7104
      %v7361 = vmax.f32 %v6571, %v7105
      %v7362 = vmax.f32 %v6576, %v7106
      %v7363 = vmax.f32 %v6579, %v7107
      %v7364 = vmax.f32 %v6584, %v7108
      %v7365 = vmax.f32 %v6587, %v7109
      %v7366 = vmax.f32 %v6592, %v7110
      %v7367 = vmax.f32 %v6595, %v7111
      %v7368 = vmax.f32 %v6600, %v7112
      %v7369 = vmax.f32 %v6603, %v7113
      %v7370 = vmax.f32 %v6608, %v7114
      %v7371 = vmax.f32 %v6611, %v7115
      %v7372 = vmax.f32 %v6616, %v7116
      %v7373 = vmax.f32 %v6619, %v7117
      %v7374 = vmax.f32 %v6624, %v7118
      %v7375 = vmax.f32 %v6627, %v7119
      %v7376 = vmax.f32 %v6632, %v7120
      %v7377 = vmax.f32 %v6635, %v7121
      %v7378 = vmax.f32 %v6640, %v7122
      %v7379 = vmax.f32 %v6643, %v7123
      %v7380 = vmax.f32 %v6648, %v7124
      %v7381 = vmax.f32 %v6651, %v7125
      %v7382 = vmax.f32 %v6656, %v7126
      %v7383 = vmax.f32 %v6659, %v7127
      %v7384 = vmax.f32 %v6664, %v7128
      %v7385 = vmax.f32 %v6667, %v7129
      %v7386 = vmax.f32 %v6672, %v7130
      %v7387 = vmax.f32 %v6675, %v7131
      %v7388 = vmax.f32 %v6680, %v7132
      %v7389 = vmax.f32 %v6683, %v7133
      %v7390 = vmax.f32 %v6688, %v7134
      %v7391 = vmax.f32 %v6691, %v7135
      %v7392 = vmax.f32 %v6696, %v7136
      %v7393 = vmax.f32 %v6699, %v7137
      %v7394 = vmax.f32 %v6704, %v7138
      %v7395 = vmax.f32 %v6707, %v7139
      %v7396 = vmax.f32 %v6712, %v7140
      %v7397 = vmax.f32 %v6715, %v7141
      %v7398 = vmax.f32 %v6720, %v7142
      %v7399 = vmax.f32 %v6723, %v7143
      %v7400 = vmax.f32 %v6728, %v7144
      %v7401 = vmax.f32 %v6731, %v7145
      %v7402 = vmax.f32 %v6736, %v7146
      %v7403 = vmax.f32 %v6739, %v7147
      %v7404 = vmax.f32 %v6744, %v7148
      %v7405 = vmax.f32 %v6747, %v7149
      %v7406 = vmax.f32 %v6752, %v7150
      %v7407 = vmax.f32 %v6755, %v7151
      %v7408 = vmax.f32 %v6760, %v7152
      %v7409 = vmax.f32 %v6763, %v7153
      %v7410 = vmax.f32 %v6768, %v7154
      %v7411 = vmax.f32 %v6771, %v7155
      %v7412 = vmax.f32 %v6776, %v7156
      %v7413 = vmax.f32 %v6779, %v7157
      %v7414 = vmax.f32 %v6784, %v7158
      %v7415 = vmax.f32 %v6787, %v7159
      %v7416 = vmax.f32 %v6792, %v7160
      %v7417 = vmax.f32 %v6795, %v7161
      %v7418 = vmax.f32 %v6800, %v7162
      %v7419 = vmax.f32 %v6803, %v7163
      %v7420 = vmax.f32 %v6808, %v7164
      %v7421 = vmax.f32 %v6811, %v7165
      %v7422 = vmax.f32 %v6816, %v7166
      %v7423 = vmax.f32 %v6819, %v7167
      %v7424 = vmax.f32 %v6824, %v7168
      %v7425 = vmax.f32 %v6827, %v7169
      %v7426 = vmax.f32 %v6832, %v7170
      %v7427 = vmax.f32 %v6835, %v7171
      %v7428 = vmax.f32 %v6840, %v7172
      %v7429 = vmax.f32 %v6843, %v7173
      %v7430 = vmax.f32 %v6848, %v7174
      %v7431 = vmax.f32 %v6851, %v7175
      %v7432 = vmax.f32 %v6856, %v7176
      %v7433 = vmax.f32 %v6859, %v7177
      %v7434 = vmax.f32 %v6864, %v7178
      %v7435 = vmax.f32 %v6867, %v7179
      %v7436 = vmax.f32 %v6872, %v7180
      %v7437 = vmax.f32 %v6875, %v7181
      %v7438 = vmax.f32 %v6880, %v7182
      %v7439 = vmax.f32 %v6883, %v7183
      %v7440 = vmax.f32 %v6888, %v7184
      %v7441 = vmax.f32 %v6891, %v7185
      %v7442 = vmax.f32 %v6896, %v7186
      %v7443 = vmax.f32 %v6899, %v7187
      %v7444 = vmax.f32 %v6904, %v7188
      %v7445 = vmax.f32 %v6907, %v7189
      %v7446 = vmax.f32 %v6912, %v7190
      %v7447 = vmax.f32 %v6915, %v7191
      %v7448 = vmax.f32 %v6920, %v7192
      %v7449 = vmax.f32 %v6923, %v7193
      %v7450 = vmax.f32 %v6928, %v7194
      %v7451 = vmax.f32 %v6931, %v7195
      %v7452 = vmax.f32 %v6936, %v7196
      %v7453 = vmax.f32 %v6939, %v7197
      %v7454 = vadd.f32 %v7198, %v7206
      %v7455 = vadd.f32 %v7199, %v7207
      %v7456 = vadd.f32 %v7200, %v7208
      %v7457 = vadd.f32 %v7201, %v7209
      %v7458 = vadd.f32 %v7202, %v7210
      %v7459 = vadd.f32 %v7203, %v7211
      %v7460 = vadd.f32 %v7204, %v7212
      %v7461 = vadd.f32 %v7205, %v7213
      %v7462 = vpack.c.bf16 %v7455, %v7454
      %v7463 = vpack.c.bf16 %v7457, %v7456
      %v7464 = vpack.c.bf16 %v7459, %v7458
      %v7465 = vpack.c.bf16 %v7461, %v7460
      %7466 = vmatprep.subr.bf16.mxu0 0
      %7467 = vmatpush1.bf16.msra.mxu0 %v7462
      %7468 = vmatprep.subr.bf16.mxu0 0
      %7469 = vmatpush1.bf16.msra.mxu0 %v7463
      %7470 = vmatprep.subr.bf16.mxu0 0
      %7471 = vmatpush1.bf16.msra.mxu0 %v7464
      %7472 = vmatprep.subr.bf16.mxu0 0
      %7473 = vmatpush1.bf16.msra.mxu0 %v7465
      %7474 = vmatprep.subr.bf16.mxu0 0
      %7475 = vmatpush1.bf16.msra.mxu0 0
      %7476 = vmatprep.subr.bf16.mxu0 0
      %7477 = vmatpush1.bf16.msra.mxu0 0
      %7478 = vmatprep.subr.bf16.mxu0 0
      %7479 = vmatpush1.bf16.msra.mxu0 0
      %7480 = vmatprep.subr.bf16.mxu0 0
      %7481 = vmatpush1.bf16.msra.mxu0 0
      %7482 = vmatprep.subr.bf16.mxu0 0
      %7483 = vmatpush1.bf16.msra.mxu0 0
      %7484 = vmatprep.subr.bf16.mxu0 0
      %7485 = vmatpush1.bf16.msra.mxu0 0
      %7486 = vmatprep.subr.bf16.mxu0 0
      %7487 = vmatpush1.bf16.msra.mxu0 0
      %7488 = vmatprep.subr.bf16.mxu0 0
      %7489 = vmatpush1.bf16.msra.mxu0 0
      %7490 = vmatprep.subr.bf16.mxu0 0
      %7491 = vmatpush1.bf16.msra.mxu0 0
      %7492 = vmatprep.subr.bf16.mxu0 0
      %7493 = vmatpush1.bf16.msra.mxu0 0
      %7494 = vmatprep.subr.bf16.mxu0 0
      %7495 = vmatpush1.bf16.msra.mxu0 0
      %7496 = vmatprep.subr.bf16.mxu0 0
      %7497 = vmatpush1.bf16.msra.mxu0 0
      %7498 = vmatprep.mubr.bf16.mxu0 0
      %7499 = vmatmul.mubr.bf16.gmra.mrb[0].mxu0 %v3108
      %v7500 = vpop.f32.mrb[0].mxu0
      %v7501 = vadd.f32 0.0, %v7500
      %v7502 = vpop.f32.mrb[0].mxu0
      %v7503 = vpop.f32.mrb[0].mxu0
      %v7504 = vadd.f32 0.0, %v7503
      %v7505 = vpop.f32.mrb[0].mxu0
      %7506 = vmatprep.mubr.bf16.mxu0 0
      %7507 = vmatmul.mubr.bf16.gmra.mrb[0].mxu0 %v3111
      %v7508 = vpop.f32.mrb[0].mxu0
      %v7509 = vadd.f32 0.0, %v7508
      %v7510 = vpop.f32.mrb[0].mxu0
      %v7511 = vpop.f32.mrb[0].mxu0
      %v7512 = vadd.f32 0.0, %v7511
      %v7513 = vpop.f32.mrb[0].mxu0
      %7514 = vdwg.mxu0
      %v7515 = vadd.f32 %v7214, %v7222
      %v7516 = vadd.f32 %v7215, %v7223
      %v7517 = vadd.f32 %v7216, %v7224
      %v7518 = vadd.f32 %v7217, %v7225
      %v7519 = vadd.f32 %v7218, %v7226
      %v7520 = vadd.f32 %v7219, %v7227
      %v7521 = vadd.f32 %v7220, %v7228
      %v7522 = vadd.f32 %v7221, %v7229
      %v7523 = vpack.c.bf16 %v7516, %v7515
      %v7524 = vpack.c.bf16 %v7518, %v7517
      %v7525 = vpack.c.bf16 %v7520, %v7519
      %v7526 = vpack.c.bf16 %v7522, %v7521
      %7527 = vmatprep.subr.bf16.mxu0 0
      %7528 = vmatpush1.bf16.msra.mxu0 %v7523
      %7529 = vmatprep.subr.bf16.mxu0 0
      %7530 = vmatpush1.bf16.msra.mxu0 %v7524
      %7531 = vmatprep.subr.bf16.mxu0 0
      %7532 = vmatpush1.bf16.msra.mxu0 %v7525
      %7533 = vmatprep.subr.bf16.mxu0 0
      %7534 = vmatpush1.bf16.msra.mxu0 %v7526
      %7535 = vmatprep.subr.bf16.mxu0 0
      %7536 = vmatpush1.bf16.msra.mxu0 0
      %7537 = vmatprep.subr.bf16.mxu0 0
      %7538 = vmatpush1.bf16.msra.mxu0 0
      %7539 = vmatprep.subr.bf16.mxu0 0
      %7540 = vmatpush1.bf16.msra.mxu0 0
      %7541 = vmatprep.subr.bf16.mxu0 0
      %7542 = vmatpush1.bf16.msra.mxu0 0
      %7543 = vmatprep.subr.bf16.mxu0 0
      %7544 = vmatpush1.bf16.msra.mxu0 0
      %7545 = vmatprep.subr.bf16.mxu0 0
      %7546 = vmatpush1.bf16.msra.mxu0 0
      %7547 = vmatprep.subr.bf16.mxu0 0
      %7548 = vmatpush1.bf16.msra.mxu0 0
      %7549 = vmatprep.subr.bf16.mxu0 0
      %7550 = vmatpush1.bf16.msra.mxu0 0
      %7551 = vmatprep.subr.bf16.mxu0 0
      %7552 = vmatpush1.bf16.msra.mxu0 0
      %7553 = vmatprep.subr.bf16.mxu0 0
      %7554 = vmatpush1.bf16.msra.mxu0 0
      %7555 = vmatprep.subr.bf16.mxu0 0
      %7556 = vmatpush1.bf16.msra.mxu0 0
      %7557 = vmatprep.subr.bf16.mxu0 0
      %7558 = vmatpush1.bf16.msra.mxu0 0
      %7559 = vmatprep.mubr.bf16.mxu0 0
      %7560 = vmatmul.mubr.bf16.gmra.mrb[0].mxu0 %v3108
      %v7561 = vpop.f32.mrb[0].mxu0
      %v7562 = vadd.f32 0.0, %v7561
      %v7563 = vpop.f32.mrb[0].mxu0
      %v7564 = vpop.f32.mrb[0].mxu0
      %v7565 = vadd.f32 0.0, %v7564
      %v7566 = vpop.f32.mrb[0].mxu0
      %7567 = vmatprep.mubr.bf16.mxu0 0
      %7568 = vmatmul.mubr.bf16.gmra.mrb[0].mxu0 %v3111
      %v7569 = vpop.f32.mrb[0].mxu0
      %v7570 = vadd.f32 0.0, %v7569
      %v7571 = vpop.f32.mrb[0].mxu0
      %v7572 = vpop.f32.mrb[0].mxu0
      %v7573 = vadd.f32 0.0, %v7572
      %v7574 = vpop.f32.mrb[0].mxu0
      %7575 = vdwg.mxu0
      %v7576 = vadd.f32 %v7230, %v7238
      %v7577 = vadd.f32 %v7231, %v7239
      %v7578 = vadd.f32 %v7232, %v7240
      %v7579 = vadd.f32 %v7233, %v7241
      %v7580 = vadd.f32 %v7234, %v7242
      %v7581 = vadd.f32 %v7235, %v7243
      %v7582 = vadd.f32 %v7236, %v7244
      %v7583 = vadd.f32 %v7237, %v7245
      %v7584 = vpack.c.bf16 %v7577, %v7576
      %v7585 = vpack.c.bf16 %v7579, %v7578
      %v7586 = vpack.c.bf16 %v7581, %v7580
      %v7587 = vpack.c.bf16 %v7583, %v7582
      %7588 = vmatprep.subr.bf16.mxu0 0
      %7589 = vmatpush1.bf16.msra.mxu0 %v7584
      %7590 = vmatprep.subr.bf16.mxu0 0
      %7591 = vmatpush1.bf16.msra.mxu0 %v7585
      %7592 = vmatprep.subr.bf16.mxu0 0
      %7593 = vmatpush1.bf16.msra.mxu0 %v7586
      %7594 = vmatprep.subr.bf16.mxu0 0
      %7595 = vmatpush1.bf16.msra.mxu0 %v7587
      %7596 = vmatprep.subr.bf16.mxu0 0
      %7597 = vmatpush1.bf16.msra.mxu0 0
      %7598 = vmatprep.subr.bf16.mxu0 0
      %7599 = vmatpush1.bf16.msra.mxu0 0
      %7600 = vmatprep.subr.bf16.mxu0 0
      %7601 = vmatpush1.bf16.msra.mxu0 0
      %7602 = vmatprep.subr.bf16.mxu0 0
      %7603 = vmatpush1.bf16.msra.mxu0 0
      %7604 = vmatprep.subr.bf16.mxu0 0
      %7605 = vmatpush1.bf16.msra.mxu0 0
      %7606 = vmatprep.subr.bf16.mxu0 0
      %7607 = vmatpush1.bf16.msra.mxu0 0
      %7608 = vmatprep.subr.bf16.mxu0 0
      %7609 = vmatpush1.bf16.msra.mxu0 0
      %7610 = vmatprep.subr.bf16.mxu0 0
      %7611 = vmatpush1.bf16.msra.mxu0 0
      %7612 = vmatprep.subr.bf16.mxu0 0
      %7613 = vmatpush1.bf16.msra.mxu0 0
      %7614 = vmatprep.subr.bf16.mxu0 0
      %7615 = vmatpush1.bf16.msra.mxu0 0
      %7616 = vmatprep.subr.bf16.mxu0 0
      %7617 = vmatpush1.bf16.msra.mxu0 0
      %7618 = vmatprep.subr.bf16.mxu0 0
      %7619 = vmatpush1.bf16.msra.mxu0 0
      %7620 = vmatprep.mubr.bf16.mxu0 0
      %7621 = vmatmul.mubr.bf16.gmra.mrb[0].mxu0 %v3108
      %v7622 = vpop.f32.mrb[0].mxu0
      %v7623 = vadd.f32 0.0, %v7622
      %v7624 = vpop.f32.mrb[0].mxu0
      %v7625 = vpop.f32.mrb[0].mxu0
      %v7626 = vadd.f32 0.0, %v7625
      %v7627 = vpop.f32.mrb[0].mxu0
      %7628 = vmatprep.mubr.bf16.mxu0 0
      %7629 = vmatmul.mubr.bf16.gmra.mrb[0].mxu0 %v3111
      %v7630 = vpop.f32.mrb[0].mxu0
      %v7631 = vadd.f32 0.0, %v7630
      %v7632 = vpop.f32.mrb[0].mxu0
      %v7633 = vpop.f32.mrb[0].mxu0
      %v7634 = vadd.f32 0.0, %v7633
      %v7635 = vpop.f32.mrb[0].mxu0
      %7636 = vdwg.mxu0
      %v7637 = vadd.f32 %v7246, %v7254
      %v7638 = vadd.f32 %v7247, %v7255
      %v7639 = vadd.f32 %v7248, %v7256
      %v7640 = vadd.f32 %v7249, %v7257
      %v7641 = vadd.f32 %v7250, %v7258
      %v7642 = vadd.f32 %v7251, %v7259
      %v7643 = vadd.f32 %v7252, %v7260
      %v7644 = vadd.f32 %v7253, %v7261
      %v7645 = vpack.c.bf16 %v7638, %v7637
      %v7646 = vpack.c.bf16 %v7640, %v7639
      %v7647 = vpack.c.bf16 %v7642, %v7641
      %v7648 = vpack.c.bf16 %v7644, %v7643
      %7649 = vmatprep.subr.bf16.mxu0 0
      %7650 = vmatpush1.bf16.msra.mxu0 %v7645
      %7651 = vmatprep.subr.bf16.mxu0 0
      %7652 = vmatpush1.bf16.msra.mxu0 %v7646
      %7653 = vmatprep.subr.bf16.mxu0 0
      %7654 = vmatpush1.bf16.msra.mxu0 %v7647
      %7655 = vmatprep.subr.bf16.mxu0 0
      %7656 = vmatpush1.bf16.msra.mxu0 %v7648
      %7657 = vmatprep.subr.bf16.mxu0 0
      %7658 = vmatpush1.bf16.msra.mxu0 0
      %7659 = vmatprep.subr.bf16.mxu0 0
      %7660 = vmatpush1.bf16.msra.mxu0 0
      %7661 = vmatprep.subr.bf16.mxu0 0
      %7662 = vmatpush1.bf16.msra.mxu0 0
      %7663 = vmatprep.subr.bf16.mxu0 0
      %7664 = vmatpush1.bf16.msra.mxu0 0
      %7665 = vmatprep.subr.bf16.mxu0 0
      %7666 = vmatpush1.bf16.msra.mxu0 0
      %7667 = vmatprep.subr.bf16.mxu0 0
      %7668 = vmatpush1.bf16.msra.mxu0 0
      %7669 = vmatprep.subr.bf16.mxu0 0
      %7670 = vmatpush1.bf16.msra.mxu0 0
      %7671 = vmatprep.subr.bf16.mxu0 0
      %7672 = vmatpush1.bf16.msra.mxu0 0
      %7673 = vmatprep.subr.bf16.mxu0 0
      %7674 = vmatpush1.bf16.msra.mxu0 0
      %7675 = vmatprep.subr.bf16.mxu0 0
      %7676 = vmatpush1.bf16.msra.mxu0 0
      %7677 = vmatprep.subr.bf16.mxu0 0
      %7678 = vmatpush1.bf16.msra.mxu0 0
      %7679 = vmatprep.subr.bf16.mxu0 0
      %7680 = vmatpush1.bf16.msra.mxu0 0
      %7681 = vmatprep.mubr.bf16.mxu0 0
      %7682 = vmatmul.mubr.bf16.gmra.mrb[0].mxu0 %v3108
      %v7683 = vpop.f32.mrb[0].mxu0
      %v7684 = vadd.f32 0.0, %v7683
      %v7685 = vpop.f32.mrb[0].mxu0
      %v7686 = vpop.f32.mrb[0].mxu0
      %v7687 = vadd.f32 0.0, %v7686
      %v7688 = vpop.f32.mrb[0].mxu0
      %7689 = vmatprep.mubr.bf16.mxu0 0
      %7690 = vmatmul.mubr.bf16.gmra.mrb[0].mxu0 %v3111
      %v7691 = vpop.f32.mrb[0].mxu0
      %v7692 = vadd.f32 0.0, %v7691
      %v7693 = vpop.f32.mrb[0].mxu0
      %v7694 = vpop.f32.mrb[0].mxu0
      %v7695 = vadd.f32 0.0, %v7694
      %v7696 = vpop.f32.mrb[0].mxu0
      %7697 = vdwg.mxu0
      %v7698 = vadd.f32 %v7262, %v7270
      %v7699 = vadd.f32 %v7263, %v7271
      %v7700 = vadd.f32 %v7264, %v7272
      %v7701 = vadd.f32 %v7265, %v7273
      %v7702 = vadd.f32 %v7266, %v7274
      %v7703 = vadd.f32 %v7267, %v7275
      %v7704 = vadd.f32 %v7268, %v7276
      %v7705 = vadd.f32 %v7269, %v7277
      %v7706 = vpack.c.bf16 %v7699, %v7698
      %v7707 = vpack.c.bf16 %v7701, %v7700
      %v7708 = vpack.c.bf16 %v7703, %v7702
      %v7709 = vpack.c.bf16 %v7705, %v7704
      %7710 = vmatprep.subr.bf16.mxu0 0
      %7711 = vmatpush1.bf16.msra.mxu0 %v7706
      %7712 = vmatprep.subr.bf16.mxu0 0
      %7713 = vmatpush1.bf16.msra.mxu0 %v7707
      %7714 = vmatprep.subr.bf16.mxu0 0
      %7715 = vmatpush1.bf16.msra.mxu0 %v7708
      %7716 = vmatprep.subr.bf16.mxu0 0
      %7717 = vmatpush1.bf16.msra.mxu0 %v7709
      %7718 = vmatprep.subr.bf16.mxu0 0
      %7719 = vmatpush1.bf16.msra.mxu0 0
      %7720 = vmatprep.subr.bf16.mxu0 0
      %7721 = vmatpush1.bf16.msra.mxu0 0
      %7722 = vmatprep.subr.bf16.mxu0 0
      %7723 = vmatpush1.bf16.msra.mxu0 0
      %7724 = vmatprep.subr.bf16.mxu0 0
      %7725 = vmatpush1.bf16.msra.mxu0 0
      %7726 = vmatprep.subr.bf16.mxu0 0
      %7727 = vmatpush1.bf16.msra.mxu0 0
      %7728 = vmatprep.subr.bf16.mxu0 0
      %7729 = vmatpush1.bf16.msra.mxu0 0
      %7730 = vmatprep.subr.bf16.mxu0 0
      %7731 = vmatpush1.bf16.msra.mxu0 0
      %7732 = vmatprep.subr.bf16.mxu0 0
      %7733 = vmatpush1.bf16.msra.mxu0 0
      %7734 = vmatprep.subr.bf16.mxu0 0
      %7735 = vmatpush1.bf16.msra.mxu0 0
      %7736 = vmatprep.subr.bf16.mxu0 0
      %7737 = vmatpush1.bf16.msra.mxu0 0
      %7738 = vmatprep.subr.bf16.mxu0 0
      %7739 = vmatpush1.bf16.msra.mxu0 0
      %7740 = vmatprep.subr.bf16.mxu0 0
      %7741 = vmatpush1.bf16.msra.mxu0 0
      %7742 = vmatprep.mubr.bf16.mxu0 0
      %7743 = vmatmul.mubr.bf16.gmra.mrb[0].mxu0 %v3108
      %v7744 = vpop.f32.mrb[0].mxu0
      %v7745 = vadd.f32 0.0, %v7744
      %v7746 = vpop.f32.mrb[0].mxu0
      %v7747 = vpop.f32.mrb[0].mxu0
      %v7748 = vadd.f32 0.0, %v7747
      %v7749 = vpop.f32.mrb[0].mxu0
      %7750 = vmatprep.mubr.bf16.mxu0 0
      %7751 = vmatmul.mubr.bf16.gmra.mrb[0].mxu0 %v3111
      %v7752 = vpop.f32.mrb[0].mxu0
      %v7753 = vadd.f32 0.0, %v7752
      %v7754 = vpop.f32.mrb[0].mxu0
      %v7755 = vpop.f32.mrb[0].mxu0
      %v7756 = vadd.f32 0.0, %v7755
      %v7757 = vpop.f32.mrb[0].mxu0
      %7758 = vdwg.mxu0
      %v7759 = vadd.f32 %v7278, %v7286
      %v7760 = vadd.f32 %v7279, %v7287
      %v7761 = vadd.f32 %v7280, %v7288
      %v7762 = vadd.f32 %v7281, %v7289
      %v7763 = vadd.f32 %v7282, %v7290
      %v7764 = vadd.f32 %v7283, %v7291
      %v7765 = vadd.f32 %v7284, %v7292
      %v7766 = vadd.f32 %v7285, %v7293
      %v7767 = vpack.c.bf16 %v7760, %v7759
      %v7768 = vpack.c.bf16 %v7762, %v7761
      %v7769 = vpack.c.bf16 %v7764, %v7763
      %v7770 = vpack.c.bf16 %v7766, %v7765
      %7771 = vmatprep.subr.bf16.mxu0 0
      %7772 = vmatpush1.bf16.msra.mxu0 %v7767
      %7773 = vmatprep.subr.bf16.mxu0 0
      %7774 = vmatpush1.bf16.msra.mxu0 %v7768
      %7775 = vmatprep.subr.bf16.mxu0 0
      %7776 = vmatpush1.bf16.msra.mxu0 %v7769
      %7777 = vmatprep.subr.bf16.mxu0 0
      %7778 = vmatpush1.bf16.msra.mxu0 %v7770
      %7779 = vmatprep.subr.bf16.mxu0 0
      %7780 = vmatpush1.bf16.msra.mxu0 0
      %7781 = vmatprep.subr.bf16.mxu0 0
      %7782 = vmatpush1.bf16.msra.mxu0 0
      %7783 = vmatprep.subr.bf16.mxu0 0
      %7784 = vmatpush1.bf16.msra.mxu0 0
      %7785 = vmatprep.subr.bf16.mxu0 0
      %7786 = vmatpush1.bf16.msra.mxu0 0
      %7787 = vmatprep.subr.bf16.mxu0 0
      %7788 = vmatpush1.bf16.msra.mxu0 0
      %7789 = vmatprep.subr.bf16.mxu0 0
      %7790 = vmatpush1.bf16.msra.mxu0 0
      %7791 = vmatprep.subr.bf16.mxu0 0
      %7792 = vmatpush1.bf16.msra.mxu0 0
      %7793 = vmatprep.subr.bf16.mxu0 0
      %7794 = vmatpush1.bf16.msra.mxu0 0
      %7795 = vmatprep.subr.bf16.mxu0 0
      %7796 = vmatpush1.bf16.msra.mxu0 0
      %7797 = vmatprep.subr.bf16.mxu0 0
      %7798 = vmatpush1.bf16.msra.mxu0 0
      %7799 = vmatprep.subr.bf16.mxu0 0
      %7800 = vmatpush1.bf16.msra.mxu0 0
      %7801 = vmatprep.subr.bf16.mxu0 0
      %7802 = vmatpush1.bf16.msra.mxu0 0
      %7803 = vmatprep.mubr.bf16.mxu0 0
      %7804 = vmatmul.mubr.bf16.gmra.mrb[0].mxu0 %v3108
      %v7805 = vpop.f32.mrb[0].mxu0
      %v7806 = vadd.f32 0.0, %v7805
      %v7807 = vpop.f32.mrb[0].mxu0
      %v7808 = vpop.f32.mrb[0].mxu0
      %v7809 = vadd.f32 0.0, %v7808
      %v7810 = vpop.f32.mrb[0].mxu0
      %7811 = vmatprep.mubr.bf16.mxu0 0
      %7812 = vmatmul.mubr.bf16.gmra.mrb[0].mxu0 %v3111
      %v7813 = vpop.f32.mrb[0].mxu0
      %v7814 = vadd.f32 0.0, %v7813
      %v7815 = vpop.f32.mrb[0].mxu0
      %v7816 = vpop.f32.mrb[0].mxu0
      %v7817 = vadd.f32 0.0, %v7816
      %v7818 = vpop.f32.mrb[0].mxu0
      %7819 = vdwg.mxu0
      %v7820 = vadd.f32 %v7294, %v7302
      %v7821 = vadd.f32 %v7295, %v7303
      %v7822 = vadd.f32 %v7296, %v7304
      %v7823 = vadd.f32 %v7297, %v7305
      %v7824 = vadd.f32 %v7298, %v7306
      %v7825 = vadd.f32 %v7299, %v7307
      %v7826 = vadd.f32 %v7300, %v7308
      %v7827 = vadd.f32 %v7301, %v7309
      %v7828 = vpack.c.bf16 %v7821, %v7820
      %v7829 = vpack.c.bf16 %v7823, %v7822
      %v7830 = vpack.c.bf16 %v7825, %v7824
      %v7831 = vpack.c.bf16 %v7827, %v7826
      %7832 = vmatprep.subr.bf16.mxu0 0
      %7833 = vmatpush1.bf16.msra.mxu0 %v7828
      %7834 = vmatprep.subr.bf16.mxu0 0
      %7835 = vmatpush1.bf16.msra.mxu0 %v7829
      %7836 = vmatprep.subr.bf16.mxu0 0
      %7837 = vmatpush1.bf16.msra.mxu0 %v7830
      %7838 = vmatprep.subr.bf16.mxu0 0
      %7839 = vmatpush1.bf16.msra.mxu0 %v7831
      %7840 = vmatprep.subr.bf16.mxu0 0
      %7841 = vmatpush1.bf16.msra.mxu0 0
      %7842 = vmatprep.subr.bf16.mxu0 0
      %7843 = vmatpush1.bf16.msra.mxu0 0
      %7844 = vmatprep.subr.bf16.mxu0 0
      %7845 = vmatpush1.bf16.msra.mxu0 0
      %7846 = vmatprep.subr.bf16.mxu0 0
      %7847 = vmatpush1.bf16.msra.mxu0 0
      %7848 = vmatprep.subr.bf16.mxu0 0
      %7849 = vmatpush1.bf16.msra.mxu0 0
      %7850 = vmatprep.subr.bf16.mxu0 0
      %7851 = vmatpush1.bf16.msra.mxu0 0
      %7852 = vmatprep.subr.bf16.mxu0 0
      %7853 = vmatpush1.bf16.msra.mxu0 0
      %7854 = vmatprep.subr.bf16.mxu0 0
      %7855 = vmatpush1.bf16.msra.mxu0 0
      %7856 = vmatprep.subr.bf16.mxu0 0
      %7857 = vmatpush1.bf16.msra.mxu0 0
      %7858 = vmatprep.subr.bf16.mxu0 0
      %7859 = vmatpush1.bf16.msra.mxu0 0
      %7860 = vmatprep.subr.bf16.mxu0 0
      %7861 = vmatpush1.bf16.msra.mxu0 0
      %7862 = vmatprep.subr.bf16.mxu0 0
      %7863 = vmatpush1.bf16.msra.mxu0 0
      %7864 = vmatprep.mubr.bf16.mxu0 0
      %7865 = vmatmul.mubr.bf16.gmra.mrb[0].mxu0 %v3108
      %v7866 = vpop.f32.mrb[0].mxu0
      %v7867 = vadd.f32 0.0, %v7866
      %v7868 = vpop.f32.mrb[0].mxu0
      %v7869 = vpop.f32.mrb[0].mxu0
      %v7870 = vadd.f32 0.0, %v7869
      %v7871 = vpop.f32.mrb[0].mxu0
      %7872 = vmatprep.mubr.bf16.mxu0 0
      %7873 = vmatmul.mubr.bf16.gmra.mrb[0].mxu0 %v3111
      %v7874 = vpop.f32.mrb[0].mxu0
      %v7875 = vadd.f32 0.0, %v7874
      %v7876 = vpop.f32.mrb[0].mxu0
      %v7877 = vpop.f32.mrb[0].mxu0
      %v7878 = vadd.f32 0.0, %v7877
      %v7879 = vpop.f32.mrb[0].mxu0
      %7880 = vdwg.mxu0
      %v7881 = vadd.f32 %v7310, %v7318
      %v7882 = vadd.f32 %v7311, %v7319
      %v7883 = vadd.f32 %v7312, %v7320
      %v7884 = vadd.f32 %v7313, %v7321
      %v7885 = vadd.f32 %v7314, %v7322
      %v7886 = vadd.f32 %v7315, %v7323
      %v7887 = vadd.f32 %v7316, %v7324
      %v7888 = vadd.f32 %v7317, %v7325
      %v7889 = vpack.c.bf16 %v7882, %v7881
      %v7890 = vpack.c.bf16 %v7884, %v7883
      %v7891 = vpack.c.bf16 %v7886, %v7885
      %v7892 = vpack.c.bf16 %v7888, %v7887
      %7893 = vmatprep.subr.bf16.mxu0 0
      %7894 = vmatpush1.bf16.msra.mxu0 %v7889
      %7895 = vmatprep.subr.bf16.mxu0 0
      %7896 = vmatpush1.bf16.msra.mxu0 %v7890
      %7897 = vmatprep.subr.bf16.mxu0 0
      %7898 = vmatpush1.bf16.msra.mxu0 %v7891
      %7899 = vmatprep.subr.bf16.mxu0 0
      %7900 = vmatpush1.bf16.msra.mxu0 %v7892
      %7901 = vmatprep.subr.bf16.mxu0 0
      %7902 = vmatpush1.bf16.msra.mxu0 0
      %7903 = vmatprep.subr.bf16.mxu0 0
      %7904 = vmatpush1.bf16.msra.mxu0 0
      %7905 = vmatprep.subr.bf16.mxu0 0
      %7906 = vmatpush1.bf16.msra.mxu0 0
      %7907 = vmatprep.subr.bf16.mxu0 0
      %7908 = vmatpush1.bf16.msra.mxu0 0
      %7909 = vmatprep.subr.bf16.mxu0 0
      %7910 = vmatpush1.bf16.msra.mxu0 0
      %7911 = vmatprep.subr.bf16.mxu0 0
      %7912 = vmatpush1.bf16.msra.mxu0 0
      %7913 = vmatprep.subr.bf16.mxu0 0
      %7914 = vmatpush1.bf16.msra.mxu0 0
      %7915 = vmatprep.subr.bf16.mxu0 0
      %7916 = vmatpush1.bf16.msra.mxu0 0
      %7917 = vmatprep.subr.bf16.mxu0 0
      %7918 = vmatpush1.bf16.msra.mxu0 0
      %7919 = vmatprep.subr.bf16.mxu0 0
      %7920 = vmatpush1.bf16.msra.mxu0 0
      %7921 = vmatprep.subr.bf16.mxu0 0
      %7922 = vmatpush1.bf16.msra.mxu0 0
      %7923 = vmatprep.subr.bf16.mxu0 0
      %7924 = vmatpush1.bf16.msra.mxu0 0
      %7925 = vmatprep.mubr.bf16.mxu0 0
      %7926 = vmatmul.mubr.bf16.gmra.mrb[0].mxu0 %v3108
      %v7927 = vpop.f32.mrb[0].mxu0
      %v7928 = vadd.f32 0.0, %v7927
      %v7929 = vpop.f32.mrb[0].mxu0
      %v7930 = vpop.f32.mrb[0].mxu0
      %v7931 = vadd.f32 0.0, %v7930
      %v7932 = vpop.f32.mrb[0].mxu0
      %7933 = vmatprep.mubr.bf16.mxu0 0
      %7934 = vmatmul.mubr.bf16.gmra.mrb[0].mxu0 %v3111
      %v7935 = vpop.f32.mrb[0].mxu0
      %v7936 = vadd.f32 0.0, %v7935
      %v7937 = vpop.f32.mrb[0].mxu0
      %v7938 = vpop.f32.mrb[0].mxu0
      %v7939 = vadd.f32 0.0, %v7938
      %v7940 = vpop.f32.mrb[0].mxu0
      %7941 = vdwg.mxu0
      %v7942 = vadd.f32 %v7326, %v7334
      %v7943 = vadd.f32 %v7327, %v7335
      %v7944 = vadd.f32 %v7328, %v7336
      %v7945 = vadd.f32 %v7329, %v7337
      %v7946 = vadd.f32 %v7330, %v7338
      %v7947 = vadd.f32 %v7331, %v7339
      %v7948 = vadd.f32 %v7332, %v7340
      %v7949 = vadd.f32 %v7333, %v7341
      %v7950 = vpack.c.bf16 %v7943, %v7942
      %v7951 = vpack.c.bf16 %v7945, %v7944
      %v7952 = vpack.c.bf16 %v7947, %v7946
      %v7953 = vpack.c.bf16 %v7949, %v7948
      %7954 = vmatprep.subr.bf16.mxu0 0
      %7955 = vmatpush1.bf16.msra.mxu0 %v7950
      %7956 = vmatprep.subr.bf16.mxu0 0
      %7957 = vmatpush1.bf16.msra.mxu0 %v7951
      %7958 = vmatprep.subr.bf16.mxu0 0
      %7959 = vmatpush1.bf16.msra.mxu0 %v7952
      %7960 = vmatprep.subr.bf16.mxu0 0
      %7961 = vmatpush1.bf16.msra.mxu0 %v7953
      %7962 = vmatprep.subr.bf16.mxu0 0
      %7963 = vmatpush1.bf16.msra.mxu0 0
      %7964 = vmatprep.subr.bf16.mxu0 0
      %7965 = vmatpush1.bf16.msra.mxu0 0
      %7966 = vmatprep.subr.bf16.mxu0 0
      %7967 = vmatpush1.bf16.msra.mxu0 0
      %7968 = vmatprep.subr.bf16.mxu0 0
      %7969 = vmatpush1.bf16.msra.mxu0 0
      %7970 = vmatprep.subr.bf16.mxu0 0
      %7971 = vmatpush1.bf16.msra.mxu0 0
      %7972 = vmatprep.subr.bf16.mxu0 0
      %7973 = vmatpush1.bf16.msra.mxu0 0
      %7974 = vmatprep.subr.bf16.mxu0 0
      %7975 = vmatpush1.bf16.msra.mxu0 0
      %7976 = vmatprep.subr.bf16.mxu0 0
      %7977 = vmatpush1.bf16.msra.mxu0 0
      %7978 = vmatprep.subr.bf16.mxu0 0
      %7979 = vmatpush1.bf16.msra.mxu0 0
      %7980 = vmatprep.subr.bf16.mxu0 0
      %7981 = vmatpush1.bf16.msra.mxu0 0
      %7982 = vmatprep.subr.bf16.mxu0 0
      %7983 = vmatpush1.bf16.msra.mxu0 0
      %7984 = vmatprep.subr.bf16.mxu0 0
      %7985 = vmatpush1.bf16.msra.mxu0 0
      %7986 = vmatprep.mubr.bf16.mxu0 0
      %7987 = vmatmul.mubr.bf16.gmra.mrb[0].mxu0 %v3108
      %v7988 = vpop.f32.mrb[0].mxu0
      %v7989 = vadd.f32 0.0, %v7988
      %v7990 = vpop.f32.mrb[0].mxu0
      %v7991 = vpop.f32.mrb[0].mxu0
      %v7992 = vadd.f32 0.0, %v7991
      %v7993 = vpop.f32.mrb[0].mxu0
      %7994 = vmatprep.mubr.bf16.mxu0 0
      %7995 = vmatmul.mubr.bf16.gmra.mrb[0].mxu0 %v3111
      %v7996 = vpop.f32.mrb[0].mxu0
      %v7997 = vadd.f32 0.0, %v7996
      %v7998 = vpop.f32.mrb[0].mxu0
      %v7999 = vpop.f32.mrb[0].mxu0
      %v8000 = vadd.f32 0.0, %v7999
      %v8001 = vpop.f32.mrb[0].mxu0
      %8002 = vdwg.mxu0
      %v8003 = vadd.f32 %v7342, %v7350
      %v8004 = vadd.f32 %v7343, %v7351
      %v8005 = vadd.f32 %v7344, %v7352
      %v8006 = vadd.f32 %v7345, %v7353
      %v8007 = vadd.f32 %v7346, %v7354
      %v8008 = vadd.f32 %v7347, %v7355
      %v8009 = vadd.f32 %v7348, %v7356
      %v8010 = vadd.f32 %v7349, %v7357
      %v8011 = vpack.c.bf16 %v8004, %v8003
      %v8012 = vpack.c.bf16 %v8006, %v8005
      %v8013 = vpack.c.bf16 %v8008, %v8007
      %v8014 = vpack.c.bf16 %v8010, %v8009
      %8015 = vmatprep.subr.bf16.mxu0 0
      %8016 = vmatpush1.bf16.msra.mxu0 %v8011
      %8017 = vmatprep.subr.bf16.mxu0 0
      %8018 = vmatpush1.bf16.msra.mxu0 %v8012
      %8019 = vmatprep.subr.bf16.mxu0 0
      %8020 = vmatpush1.bf16.msra.mxu0 %v8013
      %8021 = vmatprep.subr.bf16.mxu0 0
      %8022 = vmatpush1.bf16.msra.mxu0 %v8014
      %8023 = vmatprep.subr.bf16.mxu0 0
      %8024 = vmatpush1.bf16.msra.mxu0 0
      %8025 = vmatprep.subr.bf16.mxu0 0
      %8026 = vmatpush1.bf16.msra.mxu0 0
      %8027 = vmatprep.subr.bf16.mxu0 0
      %8028 = vmatpush1.bf16.msra.mxu0 0
      %8029 = vmatprep.subr.bf16.mxu0 0
      %8030 = vmatpush1.bf16.msra.mxu0 0
      %8031 = vmatprep.subr.bf16.mxu0 0
      %8032 = vmatpush1.bf16.msra.mxu0 0
      %8033 = vmatprep.subr.bf16.mxu0 0
      %8034 = vmatpush1.bf16.msra.mxu0 0
      %8035 = vmatprep.subr.bf16.mxu0 0
      %8036 = vmatpush1.bf16.msra.mxu0 0
      %8037 = vmatprep.subr.bf16.mxu0 0
      %8038 = vmatpush1.bf16.msra.mxu0 0
      %8039 = vmatprep.subr.bf16.mxu0 0
      %8040 = vmatpush1.bf16.msra.mxu0 0
      %8041 = vmatprep.subr.bf16.mxu0 0
      %8042 = vmatpush1.bf16.msra.mxu0 0
      %8043 = vmatprep.subr.bf16.mxu0 0
      %8044 = vmatpush1.bf16.msra.mxu0 0
      %8045 = vmatprep.subr.bf16.mxu0 0
      %8046 = vmatpush1.bf16.msra.mxu0 0
      %8047 = vmatprep.mubr.bf16.mxu0 0
      %8048 = vmatmul.mubr.bf16.gmra.mrb[0].mxu0 %v3108
      %v8049 = vpop.f32.mrb[0].mxu0
      %v8050 = vadd.f32 0.0, %v8049
      %v8051 = vpop.f32.mrb[0].mxu0
      %v8052 = vpop.f32.mrb[0].mxu0
      %v8053 = vadd.f32 0.0, %v8052
      %v8054 = vpop.f32.mrb[0].mxu0
      %8055 = vmatprep.mubr.bf16.mxu0 0
      %8056 = vmatmul.mubr.bf16.gmra.mrb[0].mxu0 %v3111
      %v8057 = vpop.f32.mrb[0].mxu0
      %v8058 = vadd.f32 0.0, %v8057
      %v8059 = vpop.f32.mrb[0].mxu0
      %v8060 = vpop.f32.mrb[0].mxu0
      %v8061 = vadd.f32 0.0, %v8060
      %v8062 = vpop.f32.mrb[0].mxu0
      %8063 = vdwg.mxu0
      %v8064 = vadd.f32 %v7358, %v7366
      %v8065 = vadd.f32 %v7359, %v7367
      %v8066 = vadd.f32 %v7360, %v7368
      %v8067 = vadd.f32 %v7361, %v7369
      %v8068 = vadd.f32 %v7362, %v7370
      %v8069 = vadd.f32 %v7363, %v7371
      %v8070 = vadd.f32 %v7364, %v7372
      %v8071 = vadd.f32 %v7365, %v7373
      %v8072 = vpack.c.bf16 %v8065, %v8064
      %v8073 = vpack.c.bf16 %v8067, %v8066
      %v8074 = vpack.c.bf16 %v8069, %v8068
      %v8075 = vpack.c.bf16 %v8071, %v8070
      %8076 = vmatprep.subr.bf16.mxu0 0
      %8077 = vmatpush1.bf16.msra.mxu0 %v8072
      %8078 = vmatprep.subr.bf16.mxu0 0
      %8079 = vmatpush1.bf16.msra.mxu0 %v8073
      %8080 = vmatprep.subr.bf16.mxu0 0
      %8081 = vmatpush1.bf16.msra.mxu0 %v8074
      %8082 = vmatprep.subr.bf16.mxu0 0
      %8083 = vmatpush1.bf16.msra.mxu0 %v8075
      %8084 = vmatprep.subr.bf16.mxu0 0
      %8085 = vmatpush1.bf16.msra.mxu0 0
      %8086 = vmatprep.subr.bf16.mxu0 0
      %8087 = vmatpush1.bf16.msra.mxu0 0
      %8088 = vmatprep.subr.bf16.mxu0 0
      %8089 = vmatpush1.bf16.msra.mxu0 0
      %8090 = vmatprep.subr.bf16.mxu0 0
      %8091 = vmatpush1.bf16.msra.mxu0 0
      %8092 = vmatprep.subr.bf16.mxu0 0
      %8093 = vmatpush1.bf16.msra.mxu0 0
      %8094 = vmatprep.subr.bf16.mxu0 0
      %8095 = vmatpush1.bf16.msra.mxu0 0
      %8096 = vmatprep.subr.bf16.mxu0 0
      %8097 = vmatpush1.bf16.msra.mxu0 0
      %8098 = vmatprep.subr.bf16.mxu0 0
      %8099 = vmatpush1.bf16.msra.mxu0 0
      %8100 = vmatprep.subr.bf16.mxu0 0
      %8101 = vmatpush1.bf16.msra.mxu0 0
      %8102 = vmatprep.subr.bf16.mxu0 0
      %8103 = vmatpush1.bf16.msra.mxu0 0
      %8104 = vmatprep.subr.bf16.mxu0 0
      %8105 = vmatpush1.bf16.msra.mxu0 0
      %8106 = vmatprep.subr.bf16.mxu0 0
      %8107 = vmatpush1.bf16.msra.mxu0 0
      %8108 = vmatprep.mubr.bf16.mxu0 0
      %8109 = vmatmul.mubr.bf16.gmra.mrb[0].mxu0 %v3108
      %v8110 = vpop.f32.mrb[0].mxu0
      %v8111 = vadd.f32 0.0, %v8110
      %v8112 = vpop.f32.mrb[0].mxu0
      %v8113 = vpop.f32.mrb[0].mxu0
      %v8114 = vadd.f32 0.0, %v8113
      %v8115 = vpop.f32.mrb[0].mxu0
      %8116 = vmatprep.mubr.bf16.mxu0 0
      %8117 = vmatmul.mubr.bf16.gmra.mrb[0].mxu0 %v3111
      %v8118 = vpop.f32.mrb[0].mxu0
      %v8119 = vadd.f32 0.0, %v8118
      %v8120 = vpop.f32.mrb[0].mxu0
      %v8121 = vpop.f32.mrb[0].mxu0
      %v8122 = vadd.f32 0.0, %v8121
      %v8123 = vpop.f32.mrb[0].mxu0
      %8124 = vdwg.mxu0
      %v8125 = vadd.f32 %v7374, %v7382
      %v8126 = vadd.f32 %v7375, %v7383
      %v8127 = vadd.f32 %v7376, %v7384
      %v8128 = vadd.f32 %v7377, %v7385
      %v8129 = vadd.f32 %v7378, %v7386
      %v8130 = vadd.f32 %v7379, %v7387
      %v8131 = vadd.f32 %v7380, %v7388
      %v8132 = vadd.f32 %v7381, %v7389
      %v8133 = vpack.c.bf16 %v8126, %v8125
      %v8134 = vpack.c.bf16 %v8128, %v8127
      %v8135 = vpack.c.bf16 %v8130, %v8129
      %v8136 = vpack.c.bf16 %v8132, %v8131
      %8137 = vmatprep.subr.bf16.mxu0 0
      %8138 = vmatpush1.bf16.msra.mxu0 %v8133
      %8139 = vmatprep.subr.bf16.mxu0 0
      %8140 = vmatpush1.bf16.msra.mxu0 %v8134
      %8141 = vmatprep.subr.bf16.mxu0 0
      %8142 = vmatpush1.bf16.msra.mxu0 %v8135
      %8143 = vmatprep.subr.bf16.mxu0 0
      %8144 = vmatpush1.bf16.msra.mxu0 %v8136
      %8145 = vmatprep.subr.bf16.mxu0 0
      %8146 = vmatpush1.bf16.msra.mxu0 0
      %8147 = vmatprep.subr.bf16.mxu0 0
      %8148 = vmatpush1.bf16.msra.mxu0 0
      %8149 = vmatprep.subr.bf16.mxu0 0
      %8150 = vmatpush1.bf16.msra.mxu0 0
      %8151 = vmatprep.subr.bf16.mxu0 0
      %8152 = vmatpush1.bf16.msra.mxu0 0
      %8153 = vmatprep.subr.bf16.mxu0 0
      %8154 = vmatpush1.bf16.msra.mxu0 0
      %8155 = vmatprep.subr.bf16.mxu0 0
      %8156 = vmatpush1.bf16.msra.mxu0 0
      %8157 = vmatprep.subr.bf16.mxu0 0
      %8158 = vmatpush1.bf16.msra.mxu0 0
      %8159 = vmatprep.subr.bf16.mxu0 0
      %8160 = vmatpush1.bf16.msra.mxu0 0
      %8161 = vmatprep.subr.bf16.mxu0 0
      %8162 = vmatpush1.bf16.msra.mxu0 0
      %8163 = vmatprep.subr.bf16.mxu0 0
      %8164 = vmatpush1.bf16.msra.mxu0 0
      %8165 = vmatprep.subr.bf16.mxu0 0
      %8166 = vmatpush1.bf16.msra.mxu0 0
      %8167 = vmatprep.subr.bf16.mxu0 0
      %8168 = vmatpush1.bf16.msra.mxu0 0
      %8169 = vmatprep.mubr.bf16.mxu0 0
      %8170 = vmatmul.mubr.bf16.gmra.mrb[0].mxu0 %v3108
      %v8171 = vpop.f32.mrb[0].mxu0
      %v8172 = vadd.f32 0.0, %v8171
      %v8173 = vpop.f32.mrb[0].mxu0
      %v8174 = vpop.f32.mrb[0].mxu0
      %v8175 = vadd.f32 0.0, %v8174
      %v8176 = vpop.f32.mrb[0].mxu0
      %8177 = vmatprep.mubr.bf16.mxu0 0
      %8178 = vmatmul.mubr.bf16.gmra.mrb[0].mxu0 %v3111
      %v8179 = vpop.f32.mrb[0].mxu0
      %v8180 = vadd.f32 0.0, %v8179
      %v8181 = vpop.f32.mrb[0].mxu0
      %v8182 = vpop.f32.mrb[0].mxu0
      %v8183 = vadd.f32 0.0, %v8182
      %v8184 = vpop.f32.mrb[0].mxu0
      %8185 = vdwg.mxu0
      %v8186 = vadd.f32 %v7390, %v7398
      %v8187 = vadd.f32 %v7391, %v7399
      %v8188 = vadd.f32 %v7392, %v7400
      %v8189 = vadd.f32 %v7393, %v7401
      %v8190 = vadd.f32 %v7394, %v7402
      %v8191 = vadd.f32 %v7395, %v7403
      %v8192 = vadd.f32 %v7396, %v7404
      %v8193 = vadd.f32 %v7397, %v7405
      %v8194 = vpack.c.bf16 %v8187, %v8186
      %v8195 = vpack.c.bf16 %v8189, %v8188
      %v8196 = vpack.c.bf16 %v8191, %v8190
      %v8197 = vpack.c.bf16 %v8193, %v8192
      %8198 = vmatprep.subr.bf16.mxu0 0
      %8199 = vmatpush1.bf16.msra.mxu0 %v8194
      %8200 = vmatprep.subr.bf16.mxu0 0
      %8201 = vmatpush1.bf16.msra.mxu0 %v8195
      %8202 = vmatprep.subr.bf16.mxu0 0
      %8203 = vmatpush1.bf16.msra.mxu0 %v8196
      %8204 = vmatprep.subr.bf16.mxu0 0
      %8205 = vmatpush1.bf16.msra.mxu0 %v8197
      %8206 = vmatprep.subr.bf16.mxu0 0
      %8207 = vmatpush1.bf16.msra.mxu0 0
      %8208 = vmatprep.subr.bf16.mxu0 0
      %8209 = vmatpush1.bf16.msra.mxu0 0
      %8210 = vmatprep.subr.bf16.mxu0 0
      %8211 = vmatpush1.bf16.msra.mxu0 0
      %8212 = vmatprep.subr.bf16.mxu0 0
      %8213 = vmatpush1.bf16.msra.mxu0 0
      %8214 = vmatprep.subr.bf16.mxu0 0
      %8215 = vmatpush1.bf16.msra.mxu0 0
      %8216 = vmatprep.subr.bf16.mxu0 0
      %8217 = vmatpush1.bf16.msra.mxu0 0
      %8218 = vmatprep.subr.bf16.mxu0 0
      %8219 = vmatpush1.bf16.msra.mxu0 0
      %8220 = vmatprep.subr.bf16.mxu0 0
      %8221 = vmatpush1.bf16.msra.mxu0 0
      %8222 = vmatprep.subr.bf16.mxu0 0
      %8223 = vmatpush1.bf16.msra.mxu0 0
      %8224 = vmatprep.subr.bf16.mxu0 0
      %8225 = vmatpush1.bf16.msra.mxu0 0
      %8226 = vmatprep.subr.bf16.mxu0 0
      %8227 = vmatpush1.bf16.msra.mxu0 0
      %8228 = vmatprep.subr.bf16.mxu0 0
      %8229 = vmatpush1.bf16.msra.mxu0 0
      %8230 = vmatprep.mubr.bf16.mxu0 0
      %8231 = vmatmul.mubr.bf16.gmra.mrb[0].mxu0 %v3108
      %v8232 = vpop.f32.mrb[0].mxu0
      %v8233 = vadd.f32 0.0, %v8232
      %v8234 = vpop.f32.mrb[0].mxu0
      %v8235 = vpop.f32.mrb[0].mxu0
      %v8236 = vadd.f32 0.0, %v8235
      %v8237 = vpop.f32.mrb[0].mxu0
      %8238 = vmatprep.mubr.bf16.mxu0 0
      %8239 = vmatmul.mubr.bf16.gmra.mrb[0].mxu0 %v3111
      %v8240 = vpop.f32.mrb[0].mxu0
      %v8241 = vadd.f32 0.0, %v8240
      %v8242 = vpop.f32.mrb[0].mxu0
      %v8243 = vpop.f32.mrb[0].mxu0
      %v8244 = vadd.f32 0.0, %v8243
      %v8245 = vpop.f32.mrb[0].mxu0
      %8246 = vdwg.mxu0
      %v8247 = vadd.f32 %v7406, %v7414
      %v8248 = vadd.f32 %v7407, %v7415
      %v8249 = vadd.f32 %v7408, %v7416
      %v8250 = vadd.f32 %v7409, %v7417
      %v8251 = vadd.f32 %v7410, %v7418
      %v8252 = vadd.f32 %v7411, %v7419
      %v8253 = vadd.f32 %v7412, %v7420
      %v8254 = vadd.f32 %v7413, %v7421
      %v8255 = vpack.c.bf16 %v8248, %v8247
      %v8256 = vpack.c.bf16 %v8250, %v8249
      %v8257 = vpack.c.bf16 %v8252, %v8251
      %v8258 = vpack.c.bf16 %v8254, %v8253
      %8259 = vmatprep.subr.bf16.mxu0 0
      %8260 = vmatpush1.bf16.msra.mxu0 %v8255
      %8261 = vmatprep.subr.bf16.mxu0 0
      %8262 = vmatpush1.bf16.msra.mxu0 %v8256
      %8263 = vmatprep.subr.bf16.mxu0 0
      %8264 = vmatpush1.bf16.msra.mxu0 %v8257
      %8265 = vmatprep.subr.bf16.mxu0 0
      %8266 = vmatpush1.bf16.msra.mxu0 %v8258
      %8267 = vmatprep.subr.bf16.mxu0 0
      %8268 = vmatpush1.bf16.msra.mxu0 0
      %8269 = vmatprep.subr.bf16.mxu0 0
      %8270 = vmatpush1.bf16.msra.mxu0 0
      %8271 = vmatprep.subr.bf16.mxu0 0
      %8272 = vmatpush1.bf16.msra.mxu0 0
      %8273 = vmatprep.subr.bf16.mxu0 0
      %8274 = vmatpush1.bf16.msra.mxu0 0
      %8275 = vmatprep.subr.bf16.mxu0 0
      %8276 = vmatpush1.bf16.msra.mxu0 0
      %8277 = vmatprep.subr.bf16.mxu0 0
      %8278 = vmatpush1.bf16.msra.mxu0 0
      %8279 = vmatprep.subr.bf16.mxu0 0
      %8280 = vmatpush1.bf16.msra.mxu0 0
      %8281 = vmatprep.subr.bf16.mxu0 0
      %8282 = vmatpush1.bf16.msra.mxu0 0
      %8283 = vmatprep.subr.bf16.mxu0 0
      %8284 = vmatpush1.bf16.msra.mxu0 0
      %8285 = vmatprep.subr.bf16.mxu0 0
      %8286 = vmatpush1.bf16.msra.mxu0 0
      %8287 = vmatprep.subr.bf16.mxu0 0
      %8288 = vmatpush1.bf16.msra.mxu0 0
      %8289 = vmatprep.subr.bf16.mxu0 0
      %8290 = vmatpush1.bf16.msra.mxu0 0
      %8291 = vmatprep.mubr.bf16.mxu0 0
      %8292 = vmatmul.mubr.bf16.gmra.mrb[0].mxu0 %v3108
      %v8293 = vpop.f32.mrb[0].mxu0
      %v8294 = vadd.f32 0.0, %v8293
      %v8295 = vpop.f32.mrb[0].mxu0
      %v8296 = vpop.f32.mrb[0].mxu0
      %v8297 = vadd.f32 0.0, %v8296
      %v8298 = vpop.f32.mrb[0].mxu0
      %8299 = vmatprep.mubr.bf16.mxu0 0
      %8300 = vmatmul.mubr.bf16.gmra.mrb[0].mxu0 %v3111
      %v8301 = vpop.f32.mrb[0].mxu0
      %v8302 = vadd.f32 0.0, %v8301
      %v8303 = vpop.f32.mrb[0].mxu0
      %v8304 = vpop.f32.mrb[0].mxu0
      %v8305 = vadd.f32 0.0, %v8304
      %v8306 = vpop.f32.mrb[0].mxu0
      %8307 = vdwg.mxu0
      %v8308 = vadd.f32 %v7422, %v7430
      %v8309 = vadd.f32 %v7423, %v7431
      %v8310 = vadd.f32 %v7424, %v7432
      %v8311 = vadd.f32 %v7425, %v7433
      %v8312 = vadd.f32 %v7426, %v7434
      %v8313 = vadd.f32 %v7427, %v7435
      %v8314 = vadd.f32 %v7428, %v7436
      %v8315 = vadd.f32 %v7429, %v7437
      %v8316 = vpack.c.bf16 %v8309, %v8308
      %v8317 = vpack.c.bf16 %v8311, %v8310
      %v8318 = vpack.c.bf16 %v8313, %v8312
      %v8319 = vpack.c.bf16 %v8315, %v8314
      %8320 = vmatprep.subr.bf16.mxu0 0
      %8321 = vmatpush1.bf16.msra.mxu0 %v8316
      %8322 = vmatprep.subr.bf16.mxu0 0
      %8323 = vmatpush1.bf16.msra.mxu0 %v8317
      %8324 = vmatprep.subr.bf16.mxu0 0
      %8325 = vmatpush1.bf16.msra.mxu0 %v8318
      %8326 = vmatprep.subr.bf16.mxu0 0
      %8327 = vmatpush1.bf16.msra.mxu0 %v8319
      %8328 = vmatprep.subr.bf16.mxu0 0
      %8329 = vmatpush1.bf16.msra.mxu0 0
      %8330 = vmatprep.subr.bf16.mxu0 0
      %8331 = vmatpush1.bf16.msra.mxu0 0
      %8332 = vmatprep.subr.bf16.mxu0 0
      %8333 = vmatpush1.bf16.msra.mxu0 0
      %8334 = vmatprep.subr.bf16.mxu0 0
      %8335 = vmatpush1.bf16.msra.mxu0 0
      %8336 = vmatprep.subr.bf16.mxu0 0
      %8337 = vmatpush1.bf16.msra.mxu0 0
      %8338 = vmatprep.subr.bf16.mxu0 0
      %8339 = vmatpush1.bf16.msra.mxu0 0
      %8340 = vmatprep.subr.bf16.mxu0 0
      %8341 = vmatpush1.bf16.msra.mxu0 0
      %8342 = vmatprep.subr.bf16.mxu0 0
      %8343 = vmatpush1.bf16.msra.mxu0 0
      %8344 = vmatprep.subr.bf16.mxu0 0
      %8345 = vmatpush1.bf16.msra.mxu0 0
      %8346 = vmatprep.subr.bf16.mxu0 0
      %8347 = vmatpush1.bf16.msra.mxu0 0
      %8348 = vmatprep.subr.bf16.mxu0 0
      %8349 = vmatpush1.bf16.msra.mxu0 0
      %8350 = vmatprep.subr.bf16.mxu0 0
      %8351 = vmatpush1.bf16.msra.mxu0 0
      %8352 = vmatprep.mubr.bf16.mxu0 0
      %8353 = vmatmul.mubr.bf16.gmra.mrb[0].mxu0 %v3108
      %v8354 = vpop.f32.mrb[0].mxu0
      %v8355 = vadd.f32 0.0, %v8354
      %v8356 = vpop.f32.mrb[0].mxu0
      %v8357 = vpop.f32.mrb[0].mxu0
      %v8358 = vadd.f32 0.0, %v8357
      %v8359 = vpop.f32.mrb[0].mxu0
      %8360 = vmatprep.mubr.bf16.mxu0 0
      %8361 = vmatmul.mubr.bf16.gmra.mrb[0].mxu0 %v3111
      %v8362 = vpop.f32.mrb[0].mxu0
      %v8363 = vadd.f32 0.0, %v8362
      %v8364 = vpop.f32.mrb[0].mxu0
      %v8365 = vpop.f32.mrb[0].mxu0
      %v8366 = vadd.f32 0.0, %v8365
      %v8367 = vpop.f32.mrb[0].mxu0
      %8368 = vdwg.mxu0
      %v8369 = vadd.f32 %v7438, %v7446
      %v8370 = vadd.f32 %v7439, %v7447
      %v8371 = vadd.f32 %v7440, %v7448
      %v8372 = vadd.f32 %v7441, %v7449
      %v8373 = vadd.f32 %v7442, %v7450
      %v8374 = vadd.f32 %v7443, %v7451
      %v8375 = vadd.f32 %v7444, %v7452
      %v8376 = vadd.f32 %v7445, %v7453
      %v8377 = vpack.c.bf16 %v8370, %v8369
      %v8378 = vpack.c.bf16 %v8372, %v8371
      %v8379 = vpack.c.bf16 %v8374, %v8373
      %v8380 = vpack.c.bf16 %v8376, %v8375
      %8381 = vmatprep.subr.bf16.mxu0 0
      %8382 = vmatpush1.bf16.msra.mxu0 %v8377
      %8383 = vmatprep.subr.bf16.mxu0 0
      %8384 = vmatpush1.bf16.msra.mxu0 %v8378
      %8385 = vmatprep.subr.bf16.mxu0 0
      %8386 = vmatpush1.bf16.msra.mxu0 %v8379
      %8387 = vmatprep.subr.bf16.mxu0 0
      %8388 = vmatpush1.bf16.msra.mxu0 %v8380
      %8389 = vmatprep.subr.bf16.mxu0 0
      %8390 = vmatpush1.bf16.msra.mxu0 0
      %8391 = vmatprep.subr.bf16.mxu0 0
      %8392 = vmatpush1.bf16.msra.mxu0 0
      %8393 = vmatprep.subr.bf16.mxu0 0
      %8394 = vmatpush1.bf16.msra.mxu0 0
      %8395 = vmatprep.subr.bf16.mxu0 0
      %8396 = vmatpush1.bf16.msra.mxu0 0
      %8397 = vmatprep.subr.bf16.mxu0 0
      %8398 = vmatpush1.bf16.msra.mxu0 0
      %8399 = vmatprep.subr.bf16.mxu0 0
      %8400 = vmatpush1.bf16.msra.mxu0 0
      %8401 = vmatprep.subr.bf16.mxu0 0
      %8402 = vmatpush1.bf16.msra.mxu0 0
      %8403 = vmatprep.subr.bf16.mxu0 0
      %8404 = vmatpush1.bf16.msra.mxu0 0
      %8405 = vmatprep.subr.bf16.mxu0 0
      %8406 = vmatpush1.bf16.msra.mxu0 0
      %8407 = vmatprep.subr.bf16.mxu0 0
      %8408 = vmatpush1.bf16.msra.mxu0 0
      %8409 = vmatprep.subr.bf16.mxu0 0
      %8410 = vmatpush1.bf16.msra.mxu0 0
      %8411 = vmatprep.subr.bf16.mxu0 0
      %8412 = vmatpush1.bf16.msra.mxu0 0
      %8413 = vmatprep.mubr.bf16.mxu0 0
      %8414 = vmatmul.mubr.bf16.gmra.mrb[0].mxu0 %v3108
      %v8415 = vpop.f32.mrb[0].mxu0
      %v8416 = vadd.f32 0.0, %v8415
      %v8417 = vpop.f32.mrb[0].mxu0
      %v8418 = vpop.f32.mrb[0].mxu0
      %v8419 = vadd.f32 0.0, %v8418
      %v8420 = vpop.f32.mrb[0].mxu0
      %8421 = vmatprep.mubr.bf16.mxu0 0
      %8422 = vmatmul.mubr.bf16.gmra.mrb[0].mxu0 %v3111
      %v8423 = vpop.f32.mrb[0].mxu0
      %v8424 = vadd.f32 0.0, %v8423
      %v8425 = vpop.f32.mrb[0].mxu0
      %v8426 = vpop.f32.mrb[0].mxu0
      %v8427 = vadd.f32 0.0, %v8426
      %v8428 = vpop.f32.mrb[0].mxu0
      %8429 = vdwg.mxu0
      %v8434 = vrot.slane %v7562, 2
      %v8435 = vrot.slane %v7565, 2
      %v8436 = vsel %vm4081, %v8434, %v8435
      %v8437 = vrot.slane %v7570, 2
      %v8438 = vsel %vm4081, %v8435, %v8437
      %v8439 = vrot.slane %v7573, 2
      %v8440 = vsel %vm4081, %v8437, %v8439
      %v8450 = vrot.slane %v7623, 4
      %v8451 = vrot.slane %v7626, 4
      %v8452 = vsel %vm4098, %v8450, %v8451
      %v8453 = vrot.slane %v7631, 4
      %v8454 = vsel %vm4098, %v8451, %v8453
      %v8455 = vrot.slane %v7634, 4
      %v8456 = vsel %vm4098, %v8453, %v8455
      %v8466 = vrot.slane %v7684, 6
      %v8467 = vrot.slane %v7687, 6
      %v8468 = vsel %vm4115, %v8466, %v8467
      %v8469 = vrot.slane %v7692, 6
      %v8470 = vsel %vm4115, %v8467, %v8469
      %v8471 = vrot.slane %v7695, 6
      %v8472 = vsel %vm4115, %v8469, %v8471
      %v8481 = vrot.slane %v7806, 2
      %v8482 = vrot.slane %v7809, 2
      %v8483 = vsel %vm4081, %v8481, %v8482
      %v8484 = vrot.slane %v7814, 2
      %v8485 = vsel %vm4081, %v8482, %v8484
      %v8486 = vrot.slane %v7817, 2
      %v8487 = vsel %vm4081, %v8484, %v8486
      %v8497 = vrot.slane %v7867, 4
      %v8498 = vrot.slane %v7870, 4
      %v8499 = vsel %vm4098, %v8497, %v8498
      %v8500 = vrot.slane %v7875, 4
      %v8501 = vsel %vm4098, %v8498, %v8500
      %v8502 = vrot.slane %v7878, 4
      %v8503 = vsel %vm4098, %v8500, %v8502
      %v8513 = vrot.slane %v7928, 6
      %v8514 = vrot.slane %v7931, 6
      %v8515 = vsel %vm4115, %v8513, %v8514
      %v8516 = vrot.slane %v7936, 6
      %v8517 = vsel %vm4115, %v8514, %v8516
      %v8518 = vrot.slane %v7939, 6
      %v8519 = vsel %vm4115, %v8516, %v8518
      %v8528 = vrot.slane %v8050, 2
      %v8529 = vrot.slane %v8053, 2
      %v8530 = vsel %vm4081, %v8528, %v8529
      %v8531 = vrot.slane %v8058, 2
      %v8532 = vsel %vm4081, %v8529, %v8531
      %v8533 = vrot.slane %v8061, 2
      %v8534 = vsel %vm4081, %v8531, %v8533
      %v8544 = vrot.slane %v8111, 4
      %v8545 = vrot.slane %v8114, 4
      %v8546 = vsel %vm4098, %v8544, %v8545
      %v8547 = vrot.slane %v8119, 4
      %v8548 = vsel %vm4098, %v8545, %v8547
      %v8549 = vrot.slane %v8122, 4
      %v8550 = vsel %vm4098, %v8547, %v8549
      %v8560 = vrot.slane %v8172, 6
      %v8561 = vrot.slane %v8175, 6
      %v8562 = vsel %vm4115, %v8560, %v8561
      %v8563 = vrot.slane %v8180, 6
      %v8564 = vsel %vm4115, %v8561, %v8563
      %v8565 = vrot.slane %v8183, 6
      %v8566 = vsel %vm4115, %v8563, %v8565
      %v8575 = vrot.slane %v8294, 2
      %v8576 = vrot.slane %v8297, 2
      %v8577 = vsel %vm4081, %v8575, %v8576
      %v8578 = vrot.slane %v8302, 2
      %v8579 = vsel %vm4081, %v8576, %v8578
      %v8580 = vrot.slane %v8305, 2
      %v8581 = vsel %vm4081, %v8578, %v8580
      %v8591 = vrot.slane %v8355, 4
      %v8592 = vrot.slane %v8358, 4
      %v8593 = vsel %vm4098, %v8591, %v8592
      %v8594 = vrot.slane %v8363, 4
      %v8595 = vsel %vm4098, %v8592, %v8594
      %v8596 = vrot.slane %v8366, 4
      %v8597 = vsel %vm4098, %v8594, %v8596
      %v8607 = vrot.slane %v8416, 6
      %v8608 = vrot.slane %v8419, 6
      %v8609 = vsel %vm4115, %v8607, %v8608
      %v8610 = vrot.slane %v8424, 6
      %v8611 = vsel %vm4115, %v8608, %v8610
      %v8612 = vrot.slane %v8427, 6
      %v8613 = vsel %vm4115, %v8610, %v8612
      %v8618 = vsel %vm4081, %v7512, %v8434
      %v8619 = vsel %vm4098, %v8439, %v8450
      %v8620 = vsel %vm4115, %v8455, %v8466
      %v8621 = vsel %vm4081, %v7756, %v8481
      %v8622 = vsel %vm4098, %v8486, %v8497
      %v8623 = vsel %vm4115, %v8502, %v8513
      %v8624 = vsel %vm4081, %v8000, %v8528
      %v8625 = vsel %vm4098, %v8533, %v8544
      %v8626 = vsel %vm4115, %v8549, %v8560
      %v8627 = vsel %vm4081, %v8244, %v8575
      %v8628 = vsel %vm4098, %v8580, %v8591
      %v8629 = vsel %vm4115, %v8596, %v8607
      %v8630 = vpack.c.bf16 %v7504, %v7501
      %v8631 = vpack.c.bf16 %v8618, %v7509
      %v8632 = vpack.c.bf16 %v8438, %v8436
      %v8633 = vpack.c.bf16 %v8619, %v8440
      %v8634 = vpack.c.bf16 %v8454, %v8452
      %v8635 = vpack.c.bf16 %v8620, %v8456
      %v8636 = vpack.c.bf16 %v8470, %v8468
      %v8637 = vpack.c.bf16 %v7745, %v8472
      %v8638 = vpack.c.bf16 %v7753, %v7748
      %v8639 = vpack.c.bf16 %v8483, %v8621
      %v8640 = vpack.c.bf16 %v8487, %v8485
      %v8641 = vpack.c.bf16 %v8499, %v8622
      %v8642 = vpack.c.bf16 %v8503, %v8501
      %v8643 = vpack.c.bf16 %v8515, %v8623
      %v8644 = vpack.c.bf16 %v8519, %v8517
      %v8645 = vpack.c.bf16 %v7992, %v7989
      %v8646 = vpack.c.bf16 %v8624, %v7997
      %v8647 = vpack.c.bf16 %v8532, %v8530
      %v8648 = vpack.c.bf16 %v8625, %v8534
      %v8649 = vpack.c.bf16 %v8548, %v8546
      %v8650 = vpack.c.bf16 %v8626, %v8550
      %v8651 = vpack.c.bf16 %v8564, %v8562
      %v8652 = vpack.c.bf16 %v8233, %v8566
      %v8653 = vpack.c.bf16 %v8241, %v8236
      %v8654 = vpack.c.bf16 %v8577, %v8627
      %v8655 = vpack.c.bf16 %v8581, %v8579
      %v8656 = vpack.c.bf16 %v8593, %v8628
      %v8657 = vpack.c.bf16 %v8597, %v8595
      %v8658 = vpack.c.bf16 %v8609, %v8629
      %v8659 = vpack.c.bf16 %v8613, %v8611
      %v8690 = vunpack.c.l.b16 %v8630
      %v8691 = vunpack.c.h.b16 %v8630
      %v8692 = vunpack.c.l.b16 %v8631
      %v8693 = vunpack.c.h.b16 %v8631
      %v8694 = vunpack.c.l.b16 %v8632
      %v8695 = vunpack.c.h.b16 %v8632
      %v8696 = vunpack.c.l.b16 %v8633
      %v8697 = vunpack.c.h.b16 %v8633
      %v8698 = vunpack.c.l.b16 %v8634
      %v8699 = vunpack.c.h.b16 %v8634
      %v8700 = vunpack.c.l.b16 %v8635
      %v8701 = vunpack.c.h.b16 %v8635
      %v8702 = vunpack.c.l.b16 %v8636
      %v8703 = vunpack.c.h.b16 %v8636
      %v8704 = vunpack.c.l.b16 %v8637
      %v8705 = vunpack.c.h.b16 %v8637
      %v8706 = vunpack.c.l.b16 %v8638
      %v8707 = vunpack.c.h.b16 %v8638
      %v8708 = vunpack.c.l.b16 %v8639
      %v8709 = vunpack.c.h.b16 %v8639
      %v8710 = vunpack.c.l.b16 %v8640
      %v8711 = vunpack.c.h.b16 %v8640
      %v8712 = vunpack.c.l.b16 %v8641
      %v8713 = vunpack.c.h.b16 %v8641
      %v8714 = vunpack.c.l.b16 %v8642
      %v8715 = vunpack.c.h.b16 %v8642
      %v8716 = vunpack.c.l.b16 %v8643
      %v8717 = vunpack.c.h.b16 %v8643
      %v8718 = vunpack.c.l.b16 %v8644
      %v8719 = vunpack.c.h.b16 %v8644
      %v8720 = vunpack.c.l.b16 %v8645
      %v8721 = vunpack.c.h.b16 %v8645
      %v8722 = vunpack.c.l.b16 %v8646
      %v8723 = vunpack.c.h.b16 %v8646
      %v8724 = vunpack.c.l.b16 %v8647
      %v8725 = vunpack.c.h.b16 %v8647
      %v8726 = vunpack.c.l.b16 %v8648
      %v8727 = vunpack.c.h.b16 %v8648
      %v8728 = vunpack.c.l.b16 %v8649
      %v8729 = vunpack.c.h.b16 %v8649
      %v8730 = vunpack.c.l.b16 %v8650
      %v8731 = vunpack.c.h.b16 %v8650
      %v8732 = vunpack.c.l.b16 %v8651
      %v8733 = vunpack.c.h.b16 %v8651
      %v8734 = vunpack.c.l.b16 %v8652
      %v8735 = vunpack.c.h.b16 %v8652
      %v8736 = vunpack.c.l.b16 %v8653
      %v8737 = vunpack.c.h.b16 %v8653
      %v8738 = vunpack.c.l.b16 %v8654
      %v8739 = vunpack.c.h.b16 %v8654
      %v8740 = vunpack.c.l.b16 %v8655
      %v8741 = vunpack.c.h.b16 %v8655
      %v8742 = vunpack.c.l.b16 %v8656
      %v8743 = vunpack.c.h.b16 %v8656
      %v8744 = vunpack.c.l.b16 %v8657
      %v8745 = vunpack.c.h.b16 %v8657
      %v8746 = vunpack.c.l.b16 %v8658
      %v8747 = vunpack.c.h.b16 %v8658
      %v8748 = vunpack.c.l.b16 %v8659
      %v8749 = vunpack.c.h.b16 %v8659
      %v8750 = vpack.c.b16 %v8690, %v8690
      %v8751 = vpack.c.b16 %v8691, %v8691
      %v8752 = vpack.c.b16 %v8692, %v8692
      %v8753 = vpack.c.b16 %v8693, %v8693
      %v8754 = vpack.c.b16 %v8694, %v8694
      %v8755 = vpack.c.b16 %v8695, %v8695
      %v8756 = vpack.c.b16 %v8696, %v8696
      %v8757 = vpack.c.b16 %v8697, %v8697
      %v8758 = vpack.c.b16 %v8698, %v8698
      %v8759 = vpack.c.b16 %v8699, %v8699
      %v8760 = vpack.c.b16 %v8700, %v8700
      %v8761 = vpack.c.b16 %v8701, %v8701
      %v8762 = vpack.c.b16 %v8702, %v8702
      %v8763 = vpack.c.b16 %v8703, %v8703
      %v8764 = vpack.c.b16 %v8704, %v8704
      %v8765 = vpack.c.b16 %v8705, %v8705
      %v8766 = vpack.c.b16 %v8706, %v8706
      %v8767 = vpack.c.b16 %v8707, %v8707
      %v8768 = vpack.c.b16 %v8708, %v8708
      %v8769 = vpack.c.b16 %v8709, %v8709
      %v8770 = vpack.c.b16 %v8710, %v8710
      %v8771 = vpack.c.b16 %v8711, %v8711
      %v8772 = vpack.c.b16 %v8712, %v8712
      %v8773 = vpack.c.b16 %v8713, %v8713
      %v8774 = vpack.c.b16 %v8714, %v8714
      %v8775 = vpack.c.b16 %v8715, %v8715
      %v8776 = vpack.c.b16 %v8716, %v8716
      %v8777 = vpack.c.b16 %v8717, %v8717
      %v8778 = vpack.c.b16 %v8718, %v8718
      %v8779 = vpack.c.b16 %v8719, %v8719
      %v8780 = vpack.c.b16 %v8720, %v8720
      %v8781 = vpack.c.b16 %v8721, %v8721
      %v8782 = vpack.c.b16 %v8722, %v8722
      %v8783 = vpack.c.b16 %v8723, %v8723
      %v8784 = vpack.c.b16 %v8724, %v8724
      %v8785 = vpack.c.b16 %v8725, %v8725
      %v8786 = vpack.c.b16 %v8726, %v8726
      %v8787 = vpack.c.b16 %v8727, %v8727
      %v8788 = vpack.c.b16 %v8728, %v8728
      %v8789 = vpack.c.b16 %v8729, %v8729
      %v8790 = vpack.c.b16 %v8730, %v8730
      %v8791 = vpack.c.b16 %v8731, %v8731
      %v8792 = vpack.c.b16 %v8732, %v8732
      %v8793 = vpack.c.b16 %v8733, %v8733
      %v8794 = vpack.c.b16 %v8734, %v8734
      %v8795 = vpack.c.b16 %v8735, %v8735
      %v8796 = vpack.c.b16 %v8736, %v8736
      %v8797 = vpack.c.b16 %v8737, %v8737
      %v8798 = vpack.c.b16 %v8738, %v8738
      %v8799 = vpack.c.b16 %v8739, %v8739
      %v8800 = vpack.c.b16 %v8740, %v8740
      %v8801 = vpack.c.b16 %v8741, %v8741
      %v8802 = vpack.c.b16 %v8742, %v8742
      %v8803 = vpack.c.b16 %v8743, %v8743
      %v8804 = vpack.c.b16 %v8744, %v8744
      %v8805 = vpack.c.b16 %v8745, %v8745
      %v8806 = vpack.c.b16 %v8746, %v8746
      %v8807 = vpack.c.b16 %v8747, %v8747
      %v8808 = vpack.c.b16 %v8748, %v8748
      %v8809 = vpack.c.b16 %v8749, %v8749
      %8870 = vst.msk [vmem:[%s197 + $0xf0] sm:$0xf] %vm4520, %v8750
      %8871 = vst.msk [vmem:[%s197 + $0xf4] sm:$0xf] %vm4520, %v8751
      %8872 = vst.msk [vmem:[%s197 + $0xf8] sm:$0xf] %vm4520, %v8752
      %8873 = vst.msk [vmem:[%s197 + $0xfc] sm:$0xf] %vm4520, %v8753
      %8874 = vst.msk [vmem:[%s197 + $0x100] sm:$0xf] %vm4520, %v8754
      %8875 = vst.msk [vmem:[%s197 + $0x104] sm:$0xf] %vm4520, %v8755
      %8876 = vst.msk [vmem:[%s197 + $0x108] sm:$0xf] %vm4520, %v8756
      %8877 = vst.msk [vmem:[%s197 + $0x10c] sm:$0xf] %vm4520, %v8757
      %8878 = vst.msk [vmem:[%s197 + $0x110] sm:$0xf] %vm4520, %v8758
      %8879 = vst.msk [vmem:[%s197 + $0x114] sm:$0xf] %vm4520, %v8759
      %8880 = vst.msk [vmem:[%s197 + $0x118] sm:$0xf] %vm4520, %v8760
      %8881 = vst.msk [vmem:[%s197 + $0x11c] sm:$0xf] %vm4520, %v8761
      %8882 = vst.msk [vmem:[%s197 + $0x120] sm:$0xf] %vm4520, %v8762
      %8883 = vst.msk [vmem:[%s197 + $0x124] sm:$0xf] %vm4520, %v8763
      %8884 = vst.msk [vmem:[%s197 + $0x128] sm:$0xf] %vm4520, %v8764
      %8885 = vst.msk [vmem:[%s197 + $0x12c] sm:$0xf] %vm4520, %v8765
      %8886 = vst.msk [vmem:[%s197 + $0x130] sm:$0xf] %vm4520, %v8766
      %8887 = vst.msk [vmem:[%s197 + $0x134] sm:$0xf] %vm4520, %v8767
      %8888 = vst.msk [vmem:[%s197 + $0x138] sm:$0xf] %vm4520, %v8768
      %8889 = vst.msk [vmem:[%s197 + $0x13c] sm:$0xf] %vm4520, %v8769
      %8890 = vst.msk [vmem:[%s197 + $0x140] sm:$0xf] %vm4520, %v8770
      %8891 = vst.msk [vmem:[%s197 + $0x144] sm:$0xf] %vm4520, %v8771
      %8892 = vst.msk [vmem:[%s197 + $0x148] sm:$0xf] %vm4520, %v8772
      %8893 = vst.msk [vmem:[%s197 + $0x14c] sm:$0xf] %vm4520, %v8773
      %8894 = vst.msk [vmem:[%s197 + $0x150] sm:$0xf] %vm4520, %v8774
      %8895 = vst.msk [vmem:[%s197 + $0x154] sm:$0xf] %vm4520, %v8775
      %8896 = vst.msk [vmem:[%s197 + $0x158] sm:$0xf] %vm4520, %v8776
      %8897 = vst.msk [vmem:[%s197 + $0x15c] sm:$0xf] %vm4520, %v8777
      %8898 = vst.msk [vmem:[%s197 + $0x160] sm:$0xf] %vm4520, %v8778
      %8899 = vst.msk [vmem:[%s197 + $0x164] sm:$0xf] %vm4520, %v8779
      %8900 = vst.msk [vmem:[%s197 + $0x168] sm:$0xf] %vm4520, %v8780
      %8901 = vst.msk [vmem:[%s197 + $0x16c] sm:$0xf] %vm4520, %v8781
      %8902 = vst.msk [vmem:[%s197 + $0x170] sm:$0xf] %vm4520, %v8782
      %8903 = vst.msk [vmem:[%s197 + $0x174] sm:$0xf] %vm4520, %v8783
      %8904 = vst.msk [vmem:[%s197 + $0x178] sm:$0xf] %vm4520, %v8784
      %8905 = vst.msk [vmem:[%s197 + $0x17c] sm:$0xf] %vm4520, %v8785
      %8906 = vst.msk [vmem:[%s197 + $0x180] sm:$0xf] %vm4520, %v8786
      %8907 = vst.msk [vmem:[%s197 + $0x184] sm:$0xf] %vm4520, %v8787
      %8908 = vst.msk [vmem:[%s197 + $0x188] sm:$0xf] %vm4520, %v8788
      %8909 = vst.msk [vmem:[%s197 + $0x18c] sm:$0xf] %vm4520, %v8789
      %8910 = vst.msk [vmem:[%s197 + $0x190] sm:$0xf] %vm4520, %v8790
      %8911 = vst.msk [vmem:[%s197 + $0x194] sm:$0xf] %vm4520, %v8791
      %8912 = vst.msk [vmem:[%s197 + $0x198] sm:$0xf] %vm4520, %v8792
      %8913 = vst.msk [vmem:[%s197 + $0x19c] sm:$0xf] %vm4520, %v8793
      %8914 = vst.msk [vmem:[%s197 + $0x1a0] sm:$0xf] %vm4520, %v8794
      %8915 = vst.msk [vmem:[%s197 + $0x1a4] sm:$0xf] %vm4520, %v8795
      %8916 = vst.msk [vmem:[%s197 + $0x1a8] sm:$0xf] %vm4520, %v8796
      %8917 = vst.msk [vmem:[%s197 + $0x1ac] sm:$0xf] %vm4520, %v8797
      %8918 = vst.msk [vmem:[%s197 + $0x1b0] sm:$0xf] %vm4520, %v8798
      %8919 = vst.msk [vmem:[%s197 + $0x1b4] sm:$0xf] %vm4520, %v8799
      %8920 = vst.msk [vmem:[%s197 + $0x1b8] sm:$0xf] %vm4520, %v8800
      %8921 = vst.msk [vmem:[%s197 + $0x1bc] sm:$0xf] %vm4520, %v8801
      %8922 = vst.msk [vmem:[%s197 + $0x1c0] sm:$0xf] %vm4520, %v8802
      %8923 = vst.msk [vmem:[%s197 + $0x1c4] sm:$0xf] %vm4520, %v8803
      %8924 = vst.msk [vmem:[%s197 + $0x1c8] sm:$0xf] %vm4520, %v8804
      %8925 = vst.msk [vmem:[%s197 + $0x1cc] sm:$0xf] %vm4520, %v8805
      %8926 = vst.msk [vmem:[%s197 + $0x1d0] sm:$0xf] %vm4520, %v8806
      %8927 = vst.msk [vmem:[%s197 + $0x1d4] sm:$0xf] %vm4520, %v8807
      %8928 = vst.msk [vmem:[%s197 + $0x1d8] sm:$0xf] %vm4520, %v8808
      %8929 = vst.msk [vmem:[%s197 + $0x1dc] sm:$0xf] %vm4520, %v8809
      %p8930 = scmp.lt.s32.totalorder %s15, 1
      %s8931 = scalar_select %p8930, %s15, 1
      %s8932 = smul.addr %s8931, 120
      %s8933 = smul.addr %s8932, 4
      %s8934 = scalar_lea.vmem %s4, %s8933
      // Predicated region
      $region37: #{tpu_custom_call.1} parent=35 // pred_check
        %p8935 = pneg %p122
      $region38: #{tpu_custom_call.1} parent=35 // pred_check_branch
        %8937 = sbr.rel (%p8935) target = $region40
      $region39: #{tpu_custom_call.1} parent=35 // pred_region
        _
      $region40: #{tpu_custom_call.1} parent=35 // pred_fallthru
        _
    $region36: #{tpu_custom_call.1} parent=5 // pred_fallthru
      _
    %p8938 = scmp.le.s32.totalorder 2, %s10
    // Predicated region
    $region41: #{tpu_custom_call.1} parent=5 // pred_check
      %p8939 = pneg %p8938
    $region42: #{tpu_custom_call.1} parent=5 // pred_check_branch
      %8941 = sbr.rel (%p8939) target = $region44
    $region43: #{tpu_custom_call.1} parent=5 // pred_region
      %s8942 = ssub.s32 %s10, 2
      // Predicated region
      $region45: #{tpu_custom_call.1} parent=43 // pred_check
        %p8943 = pneg %p128
      $region46: #{tpu_custom_call.1} parent=43 // pred_check_branch
        %8945 = sbr.rel (%p8943) target = $region48
      $region47: #{tpu_custom_call.1} parent=43 // pred_region
        %p8946 = scmp.lt.s32.totalorder %s16, 1
        %s8947 = scalar_select %p8946, %s16, 1
        %s8948 = smul.addr %s8947, 120
        %s8949 = smul.addr %s8948, 4
        %s8950 = scalar_lea.vmem %s4, %s8949
      $region48: #{tpu_custom_call.1} parent=43 // pred_fallthru
        _
    $region44: #{tpu_custom_call.1} parent=5 // pred_fallthru
      _
  $region6: #{tpu_custom_call.1} parent=0 // loop_footer
    %s14 = sadd.s32 1, %s10
  $region7: #{tpu_custom_call.1} parent=0 // loop_footer_branch
    %9 = sbr.rel target = $region3
  $region8: #{tpu_custom_call.1} parent=0 // loop_exit
    _

</llo_original>
